<compile_context>
chip_gen: v6e
topology: v6e:2x2x1
jax: 0.10.0
libtpu: 0.0.40
codegen_flags: <defaults>
</compile_context>

<pallas_src>
import numpy as np
import jax
import jax.numpy as jnp
from jax.experimental import pallas as pl
from jax.experimental.pallas import tpu as pltpu

# ---- model dimensions (from Actor.__init__ / TransformerEncoder) -------------
STATE_DIM  = 24                 # d_in
ACTION_DIM = 4
D_MODEL    = 96
D_ATTN     = 32                 # per-head attention dim
NHEAD      = 4
D_QKV      = NHEAD * D_ATTN     # 128
D_FF       = 192
SEQ_LEN    = 8                  # small test seq (<= module default 18)
LN_EPS     = 1e-5
BLOCK_B    = 128                # max batch block; wrapper caps for >= 2 grid blocks
OUT_LANES  = 128                # lane-dense output padding (first ACTION_DIM valid)


def _layernorm(x, g, b):
    mu = jnp.mean(x, axis=-1, keepdims=True)
    var = jnp.mean((x - mu) ** 2, axis=-1, keepdims=True)
    return (x - mu) * jax.lax.rsqrt(var + LN_EPS) * g + b


# ---- Pallas kernel: block_b batch elements per grid step ----------------------
def actor_kernel(xf_ref, xl_ref, posb_ref, wi_ref, wkv_ref, bkv_ref,
                 wq_ref, bq_ref, wo_ref, vec_ref, w1_ref, bf1_ref, w2_ref,
                 wfc_ref, out_ref):
    bb = xl_ref.shape[0]
    s = xf_ref.shape[0] // bb

    # input embedding + (input bias + positional encoding), all rows (feeds K/V)
    h = jnp.dot(xf_ref[...], wi_ref[...],
                preferred_element_type=jnp.float32) + posb_ref[...]      # (bb*S, Dm)
    # last-row embedding (the only row consumed downstream); vec row 0 = bi + pos[-1]
    h_last = (jnp.dot(xl_ref[...], wi_ref[...],
                      preferred_element_type=jnp.float32) + vec_ref[0:1, :])  # (bb, Dm)

    # K/V over all rows; Q for the last row only (softmax scale pre-folded into wq/bq)
    kv = jnp.dot(h, wkv_ref[...], preferred_element_type=jnp.float32) + bkv_ref[...]
    q_last = (jnp.dot(h_last, wq_ref[...],
                      preferred_element_type=jnp.float32) + bq_ref[...])      # (bb, 128)

    k3 = kv[:, :D_QKV].reshape(bb, s, D_QKV)                                  # (bb, S, 128)
    v3 = kv[:, D_QKV:].reshape(bb, s, D_QKV)

    # ---- last-query attention on the VPU/XLU (no tiny batched matmuls) ----
    attn_parts = []
    for hd in range(NHEAD):                       # static 4-iteration loop over heads
        lo = hd * D_ATTN
        qh = q_last[:, lo:lo + D_ATTN]            # (bb, 32)
        kh = k3[:, :, lo:lo + D_ATTN]             # (bb, S, 32)
        vh = v3[:, :, lo:lo + D_ATTN]
        sc = jnp.sum(qh[:, None, :] * kh, axis=-1)            # (bb, S)  scores
        sc = sc - jnp.max(sc, axis=-1, keepdims=True)
        p = jnp.exp(sc)
        p = p / jnp.sum(p, axis=-1, keepdims=True)            # exact softmax (tiny)
        attn_parts.append(jnp.sum(p[:, :, None] * vh, axis=1))  # (bb, 32) = p @ V
    attn_last = jnp.concatenate(attn_parts, axis=-1)          # (bb, 128) lane-contig heads

    # single output projection + bo (vec row 1)
    attn_out = (jnp.dot(attn_last, wo_ref[...],
                        preferred_element_type=jnp.float32) + vec_ref[1:2, :])

    h1 = _layernorm(h_last + attn_out, vec_ref[2:3, :], vec_ref[3:4, :])   # LN1 (bb, Dm)

    # FFN + LN2 on the last row only
    ff = jnp.maximum(
        jnp.dot(h1, w1_ref[...], preferred_element_type=jnp.float32) + bf1_ref[...], 0.0)
    ff = jnp.dot(ff, w2_ref[...], preferred_element_type=jnp.float32) + vec_ref[4:5, :]
    h2 = _layernorm(h1 + ff, vec_ref[5:6, :], vec_ref[6:7, :])             # LN2

    # lane-dense store: wfc zero-padded to 128 lanes -> tanh(0)=0 in pad lanes
    out_ref[...] = jnp.tanh(jnp.dot(h2, wfc_ref[...],
                                    preferred_element_type=jnp.float32))   # (bb, 128)


# ---- wrapper -------------------------------------------------------------------
def _const_spec(shape):
    zeros = (0,) * len(shape)
    return pl.BlockSpec(shape, lambda b, _z=zeros: _z)


def actor_forward(x, params, block_b=BLOCK_B):
    (wi, bi, pos, wq, bq, wk, bk, wv, bv, wo, bo,
     g1, be1, w1, bf1, w2, bf2, g2, be2, wfc) = params
    B, S, Din = x.shape

    # batch block: cap so the grid keeps >= 2 blocks when possible (v7x: 2 TCs),
    # rounded up to a sublane multiple of 8.
    bb = min(block_b, max(8, pl.cdiv(B, 2)))
    bb = int(pl.cdiv(bb, 8) * 8)
    bp = pl.cdiv(B, bb) * bb
    if bp != B:
        x = jnp.pad(x, ((0, bp - B), (0, 0), (0, 0)))          # zero-pad batch

    # reshapes / slices hoisted out of the kernel
    x_flat = x.reshape(bp * S, Din)
    x_last = x[:, -1, :]

    # parameter packing (20 arrays -> 12 kernel constants)
    scale = np.float32(1.0 / np.sqrt(D_ATTN))
    posb_blk = jnp.tile(pos[:S] + bi, (bb, 1))                  # (bb*S, Dm)
    wkv = jnp.concatenate([wk, wv], axis=1)                     # (Dm, 256)
    bkv = jnp.concatenate([bk, bv], axis=1)                     # (1, 256)
    wq_s = wq * scale                                           # 1/sqrt(d) folded into Q
    bq_s = bq * scale
    vec = jnp.concatenate([pos[S - 1:S] + bi, bo, g1, be1, bf2, g2, be2], axis=0)  # (7, Dm)
    wfc_pad = jnp.pad(wfc, ((0, 0), (0, OUT_LANES - ACTION_DIM)))  # (Dm, 128)

    consts = (posb_blk, wi, wkv, bkv, wq_s, bq_s, wo, vec, w1, bf1, w2, wfc_pad)

    in_specs = [pl.BlockSpec((bb * S, Din), lambda b: (b, 0)),
                pl.BlockSpec((bb, Din), lambda b: (b, 0))] + \
               [_const_spec(p.shape) for p in consts]

    out = pl.pallas_call(
        actor_kernel,
        out_shape=jax.ShapeDtypeStruct((bp, OUT_LANES), jnp.float32),
        grid=(bp // bb,),
        in_specs=in_specs,
        out_specs=pl.BlockSpec((bb, OUT_LANES), lambda b: (b, 0)),
        compiler_params=pltpu.CompilerParams(dimension_semantics=("parallel",)),
    )(x_flat, x_last, *consts)
    return out[:B, :ACTION_DIM]


# ---- deterministic parameter construction --------------------------------------
def sinusoidal_pe(seq_len, d_model):
    pos = np.arange(seq_len, dtype=np.float32)[:, None]
    div = np.exp(np.arange(0, d_model, 2, dtype=np.float32) *
                 (-np.log(10000.0) / d_model))
    pe = np.zeros((seq_len, d_model), np.float32)
    pe[:, 0::2] = np.sin(pos * div)
    pe[:, 1::2] = np.cos(pos * div)
    return jnp.asarray(pe)


def init_params(key):
    def xavier(k, shape):
        lim = np.sqrt(6.0 / (shape[0] + shape[1])).astype(np.float32)
        return jax.random.uniform(k, shape, jnp.float32, -lim, lim)

    ks = jax.random.split(key, 8)
    wi  = xavier(ks[0], (STATE_DIM, D_MODEL))
    bi  = jnp.zeros((1, D_MODEL), jnp.float32)
    pos = sinusoidal_pe(SEQ_LEN, D_MODEL)

    wq = xavier(ks[1], (D_MODEL, D_QKV)); bq = jnp.zeros((1, D_QKV), jnp.float32)
    wk = xavier(ks[2], (D_MODEL, D_QKV)); bk = jnp.zeros((1, D_QKV), jnp.float32)
    wv = xavier(ks[3], (D_MODEL, D_QKV)); bv = jnp.zeros((1, D_QKV), jnp.float32)
    wo = xavier(ks[4], (D_QKV, D_MODEL)); bo = jnp.zeros((1, D_MODEL), jnp.float32)

    g1  = jnp.ones((1, D_MODEL), jnp.float32); be1 = jnp.zeros((1, D_MODEL), jnp.float32)
    w1  = xavier(ks[5], (D_MODEL, D_FF));      bf1 = jnp.zeros((1, D_FF), jnp.float32)
    w2  = xavier(ks[6], (D_FF, D_MODEL));      bf2 = jnp.zeros((1, D_MODEL), jnp.float32)
    g2  = jnp.ones((1, D_MODEL), jnp.float32); be2 = jnp.zeros((1, D_MODEL), jnp.float32)

    # nn.init.uniform_(self.fc.weight, -0.003, +0.003), no bias
    wfc = jax.random.uniform(ks[7], (D_MODEL, ACTION_DIM), jnp.float32, -0.003, 0.003)

    return (wi, bi, pos, wq, bq, wk, bk, wv, bv, wo, bo,
            g1, be1, w1, bf1, w2, bf2, g2, be2, wfc)


# ---- pure-JAX reference (full attention, take last row — same math) -------------
def actor_ref(x, params):
    (wi, bi, pos, wq, bq, wk, bk, wv, bv, wo, bo,
     g1, be1, w1, bf1, w2, bf2, g2, be2, wfc) = params

    def ln(t, g, b):
        mu = t.mean(-1, keepdims=True)
        var = ((t - mu) ** 2).mean(-1, keepdims=True)
        return (t - mu) / jnp.sqrt(var + LN_EPS) * g + b

    B, S, _ = x.shape
    h = x @ wi + bi + pos[:S]
    q = h @ wq + bq; k = h @ wk + bk; v = h @ wv + bv
    qh = q.reshape(B, S, NHEAD, D_ATTN).transpose(0, 2, 1, 3)
    kh = k.reshape(B, S, NHEAD, D_ATTN).transpose(0, 2, 1, 3)
    vh = v.reshape(B, S, NHEAD, D_ATTN).transpose(0, 2, 1, 3)
    s = jnp.einsum('bhqd,bhkd->bhqk', qh, kh) / np.sqrt(D_ATTN)
    p = jax.nn.softmax(s, axis=-1)
    o = jnp.einsum('bhqk,bhkd->bhqd', p, vh).transpose(0, 2, 1, 3).reshape(B, S, D_QKV)
    attn = o @ wo + bo
    h = ln(h + attn, g1, be1)
    ff = jax.nn.relu(h @ w1 + bf1) @ w2 + bf2
    h = ln(h + ff, g2, be2)
    return jnp.tanh(h[:, -1] @ wfc)


if __name__ == "__main__":
    key = jax.random.PRNGKey(0)
    kx, kp = jax.random.split(key)
    params = init_params(kp)

    # main test: 64 batch elements -> 2 grid blocks of 32 (>= 2 blocks for v7x)
    B = 64
    x = jax.random.normal(kx, (B, SEQ_LEN, STATE_DIM), jnp.float32)
    out = jax.block_until_ready(actor_forward(x, params))
    assert out.shape == (B, ACTION_DIM)
    ref = actor_ref(x, params)
    np.testing.assert_allclose(np.asarray(out), np.asarray(ref), atol=2e-5, rtol=2e-5)

    # small-batch path (exercises batch padding to the block size)
    x2 = x[:2]
    out2 = jax.block_until_ready(actor_forward(x2, params))
    np.testing.assert_allclose(np.asarray(out2), np.asarray(ref[:2]), atol=2e-5, rtol=2e-5)

    print("KERNEL_OK")
</pallas_src>

<mosaic_0001>
module attributes {stable_mosaic.version = 11 : i64} {
  func.func @actor_kernel(%arg0: i32, %arg1: memref<256x24xf32, #tpu.memory_space<vmem>>, %arg2: memref<32x24xf32, #tpu.memory_space<vmem>>, %arg3: memref<256x96xf32, #tpu.memory_space<vmem>>, %arg4: memref<24x96xf32, #tpu.memory_space<vmem>>, %arg5: memref<96x256xf32, #tpu.memory_space<vmem>>, %arg6: memref<1x256xf32, #tpu.memory_space<vmem>>, %arg7: memref<96x128xf32, #tpu.memory_space<vmem>>, %arg8: memref<1x128xf32, #tpu.memory_space<vmem>>, %arg9: memref<128x96xf32, #tpu.memory_space<vmem>>, %arg10: memref<7x96xf32, #tpu.memory_space<vmem>>, %arg11: memref<96x192xf32, #tpu.memory_space<vmem>>, %arg12: memref<1x192xf32, #tpu.memory_space<vmem>>, %arg13: memref<192x96xf32, #tpu.memory_space<vmem>>, %arg14: memref<96x128xf32, #tpu.memory_space<vmem>>, %arg15: memref<32x128xf32, #tpu.memory_space<vmem>>) attributes {dimension_semantics = [#tpu.dimension_semantics<parallel>], iteration_bounds = array<i64: 2>, scalar_prefetch = 0 : i64, scratch_operands = 0 : i64, tpu.core_type = #tpu.core_type<tc>, window_params = [{transform_indices = @transform_0, window_bounds = array<i64: 256, 24>}, {transform_indices = @transform_1, window_bounds = array<i64: 32, 24>}, {pipeline_mode = #tpu.pipeline_mode<synchronous>, transform_indices = @transform_2, window_bounds = array<i64: 256, 96>}, {pipeline_mode = #tpu.pipeline_mode<synchronous>, transform_indices = @transform_3, window_bounds = array<i64: 24, 96>}, {pipeline_mode = #tpu.pipeline_mode<synchronous>, transform_indices = @transform_4, window_bounds = array<i64: 96, 256>}, {pipeline_mode = #tpu.pipeline_mode<synchronous>, transform_indices = @transform_5, window_bounds = array<i64: 1, 256>}, {pipeline_mode = #tpu.pipeline_mode<synchronous>, transform_indices = @transform_6, window_bounds = array<i64: 96, 128>}, {pipeline_mode = #tpu.pipeline_mode<synchronous>, transform_indices = @transform_7, window_bounds = array<i64: 1, 128>}, {pipeline_mode = #tpu.pipeline_mode<synchronous>, transform_indices = @transform_8, window_bounds = array<i64: 128, 96>}, {pipeline_mode = #tpu.pipeline_mode<synchronous>, transform_indices = @transform_9, window_bounds = array<i64: 7, 96>}, {pipeline_mode = #tpu.pipeline_mode<synchronous>, transform_indices = @transform_10, window_bounds = array<i64: 96, 192>}, {pipeline_mode = #tpu.pipeline_mode<synchronous>, transform_indices = @transform_11, window_bounds = array<i64: 1, 192>}, {pipeline_mode = #tpu.pipeline_mode<synchronous>, transform_indices = @transform_12, window_bounds = array<i64: 192, 96>}, {pipeline_mode = #tpu.pipeline_mode<synchronous>, transform_indices = @transform_13, window_bounds = array<i64: 96, 128>}, {transform_indices = @transform_14, window_bounds = array<i64: 32, 128>}]} {
    %c0 = arith.constant 0 : index
    %c0_0 = arith.constant 0 : index
    %0 = vector.load %arg1[%c0, %c0_0] : memref<256x24xf32, #tpu.memory_space<vmem>>, vector<256x24xf32>
    %c0_1 = arith.constant 0 : index
    %c0_2 = arith.constant 0 : index
    %1 = vector.load %arg4[%c0_1, %c0_2] : memref<24x96xf32, #tpu.memory_space<vmem>>, vector<24x96xf32>
    %cst = arith.constant dense<0.000000e+00> : vector<256x96xf32>
    %2 = tpu.matmul %0, %1, %cst {dimension_numbers = #tpu.dot_dimension_numbers<[1], [0], [0], [1], [0, 0, 1, 1], [], []>} : vector<256x24xf32>, vector<24x96xf32>, vector<256x96xf32> -> vector<256x96xf32>
    %c0_3 = arith.constant 0 : index
    %c0_4 = arith.constant 0 : index
    %3 = vector.load %arg3[%c0_3, %c0_4] : memref<256x96xf32, #tpu.memory_space<vmem>>, vector<256x96xf32>
    %4 = arith.addf %2, %3 : vector<256x96xf32>
    %c0_5 = arith.constant 0 : index
    %c0_6 = arith.constant 0 : index
    %5 = vector.load %arg2[%c0_5, %c0_6] : memref<32x24xf32, #tpu.memory_space<vmem>>, vector<32x24xf32>
    %c0_7 = arith.constant 0 : index
    %c0_8 = arith.constant 0 : index
    %6 = vector.load %arg4[%c0_7, %c0_8] : memref<24x96xf32, #tpu.memory_space<vmem>>, vector<24x96xf32>
    %cst_9 = arith.constant dense<0.000000e+00> : vector<32x96xf32>
    %7 = tpu.matmul %5, %6, %cst_9 {dimension_numbers = #tpu.dot_dimension_numbers<[1], [0], [0], [1], [0, 0, 1, 1], [], []>} : vector<32x24xf32>, vector<24x96xf32>, vector<32x96xf32> -> vector<32x96xf32>
    %c0_10 = arith.constant 0 : index
    %c0_11 = arith.constant 0 : index
    %8 = vector.load %arg10[%c0_10, %c0_11] : memref<7x96xf32, #tpu.memory_space<vmem>>, vector<1x96xf32>
    %9 = vector.broadcast %8 : vector<1x96xf32> to vector<32x96xf32>
    %10 = arith.addf %7, %9 : vector<32x96xf32>
    %c0_12 = arith.constant 0 : index
    %c0_13 = arith.constant 0 : index
    %11 = vector.load %arg5[%c0_12, %c0_13] : memref<96x256xf32, #tpu.memory_space<vmem>>, vector<96x256xf32>
    %cst_14 = arith.constant dense<0.000000e+00> : vector<256x256xf32>
    %12 = tpu.matmul %4, %11, %cst_14 {dimension_numbers = #tpu.dot_dimension_numbers<[1], [0], [0], [1], [0, 0, 1, 1], [], []>} : vector<256x96xf32>, vector<96x256xf32>, vector<256x256xf32> -> vector<256x256xf32>
    %c0_15 = arith.constant 0 : index
    %c0_16 = arith.constant 0 : index
    %13 = vector.load %arg6[%c0_15, %c0_16] : memref<1x256xf32, #tpu.memory_space<vmem>>, vector<1x256xf32>
    %14 = vector.broadcast %13 : vector<1x256xf32> to vector<256x256xf32>
    %15 = arith.addf %12, %14 : vector<256x256xf32>
    %c0_17 = arith.constant 0 : index
    %c0_18 = arith.constant 0 : index
    %16 = vector.load %arg7[%c0_17, %c0_18] : memref<96x128xf32, #tpu.memory_space<vmem>>, vector<96x128xf32>
    %cst_19 = arith.constant dense<0.000000e+00> : vector<32x128xf32>
    %17 = tpu.matmul %10, %16, %cst_19 {dimension_numbers = #tpu.dot_dimension_numbers<[1], [0], [0], [1], [0, 0, 1, 1], [], []>} : vector<32x96xf32>, vector<96x128xf32>, vector<32x128xf32> -> vector<32x128xf32>
    %c0_20 = arith.constant 0 : index
    %c0_21 = arith.constant 0 : index
    %18 = vector.load %arg8[%c0_20, %c0_21] : memref<1x128xf32, #tpu.memory_space<vmem>>, vector<1x128xf32>
    %19 = vector.broadcast %18 : vector<1x128xf32> to vector<32x128xf32>
    %20 = arith.addf %17, %19 : vector<32x128xf32>
    %21 = vector.extract_strided_slice %15 {offsets = [0, 0], sizes = [256, 128], strides = [1, 1]} : vector<256x256xf32> to vector<256x128xf32>
    %22 = vector.shape_cast %21 : vector<256x128xf32> to vector<32x8x128xf32>
    %23 = vector.extract_strided_slice %15 {offsets = [0, 128], sizes = [256, 128], strides = [1, 1]} : vector<256x256xf32> to vector<256x128xf32>
    %24 = vector.shape_cast %23 : vector<256x128xf32> to vector<32x8x128xf32>
    %25 = vector.extract_strided_slice %20 {offsets = [0, 0], sizes = [32, 32], strides = [1, 1]} : vector<32x128xf32> to vector<32x32xf32>
    %26 = vector.extract_strided_slice %22 {offsets = [0, 0, 0], sizes = [32, 8, 32], strides = [1, 1, 1]} : vector<32x8x128xf32> to vector<32x8x32xf32>
    %27 = vector.extract_strided_slice %24 {offsets = [0, 0, 0], sizes = [32, 8, 32], strides = [1, 1, 1]} : vector<32x8x128xf32> to vector<32x8x32xf32>
    %28 = vector.shape_cast %25 : vector<32x32xf32> to vector<32x1x32xf32>
    %29 = vector.broadcast %28 : vector<32x1x32xf32> to vector<32x8x32xf32>
    %30 = arith.mulf %29, %26 : vector<32x8x32xf32>
    %cst_22 = arith.constant dense<0.000000e+00> : vector<32x8xf32>
    %31 = vector.multi_reduction <add>, %30, %cst_22 [2] : vector<32x8x32xf32> to vector<32x8xf32>
    %cst_23 = arith.constant dense<0xFF800000> : vector<32xf32>
    %32 = vector.multi_reduction <maximumf>, %31, %cst_23 [1] : vector<32x8xf32> to vector<32xf32>
    %33 = vector.shape_cast %32 : vector<32xf32> to vector<32x1xf32>
    %34 = vector.broadcast %33 : vector<32x1xf32> to vector<32x8xf32>
    %35 = arith.subf %31, %34 : vector<32x8xf32>
    %36 = math.exp %35 : vector<32x8xf32>
    %cst_24 = arith.constant dense<0.000000e+00> : vector<32xf32>
    %37 = vector.multi_reduction <add>, %36, %cst_24 [1] : vector<32x8xf32> to vector<32xf32>
    %38 = vector.shape_cast %37 : vector<32xf32> to vector<32x1xf32>
    %39 = vector.broadcast %38 : vector<32x1xf32> to vector<32x8xf32>
    %40 = arith.divf %36, %39 : vector<32x8xf32>
    %41 = vector.shape_cast %40 : vector<32x8xf32> to vector<32x8x1xf32>
    %42 = vector.broadcast %41 : vector<32x8x1xf32> to vector<32x8x32xf32>
    %43 = arith.mulf %42, %27 : vector<32x8x32xf32>
    %cst_25 = arith.constant dense<0.000000e+00> : vector<32x32xf32>
    %44 = vector.multi_reduction <add>, %43, %cst_25 [1] : vector<32x8x32xf32> to vector<32x32xf32>
    %45 = vector.extract_strided_slice %20 {offsets = [0, 32], sizes = [32, 32], strides = [1, 1]} : vector<32x128xf32> to vector<32x32xf32>
    %46 = vector.extract_strided_slice %22 {offsets = [0, 0, 32], sizes = [32, 8, 32], strides = [1, 1, 1]} : vector<32x8x128xf32> to vector<32x8x32xf32>
    %47 = vector.extract_strided_slice %24 {offsets = [0, 0, 32], sizes = [32, 8, 32], strides = [1, 1, 1]} : vector<32x8x128xf32> to vector<32x8x32xf32>
    %48 = vector.shape_cast %45 : vector<32x32xf32> to vector<32x1x32xf32>
    %49 = vector.broadcast %48 : vector<32x1x32xf32> to vector<32x8x32xf32>
    %50 = arith.mulf %49, %46 : vector<32x8x32xf32>
    %cst_26 = arith.constant dense<0.000000e+00> : vector<32x8xf32>
    %51 = vector.multi_reduction <add>, %50, %cst_26 [2] : vector<32x8x32xf32> to vector<32x8xf32>
    %cst_27 = arith.constant dense<0xFF800000> : vector<32xf32>
    %52 = vector.multi_reduction <maximumf>, %51, %cst_27 [1] : vector<32x8xf32> to vector<32xf32>
    %53 = vector.shape_cast %52 : vector<32xf32> to vector<32x1xf32>
    %54 = vector.broadcast %53 : vector<32x1xf32> to vector<32x8xf32>
    %55 = arith.subf %51, %54 : vector<32x8xf32>
    %56 = math.exp %55 : vector<32x8xf32>
    %cst_28 = arith.constant dense<0.000000e+00> : vector<32xf32>
    %57 = vector.multi_reduction <add>, %56, %cst_28 [1] : vector<32x8xf32> to vector<32xf32>
    %58 = vector.shape_cast %57 : vector<32xf32> to vector<32x1xf32>
    %59 = vector.broadcast %58 : vector<32x1xf32> to vector<32x8xf32>
    %60 = arith.divf %56, %59 : vector<32x8xf32>
    %61 = vector.shape_cast %60 : vector<32x8xf32> to vector<32x8x1xf32>
    %62 = vector.broadcast %61 : vector<32x8x1xf32> to vector<32x8x32xf32>
    %63 = arith.mulf %62, %47 : vector<32x8x32xf32>
    %cst_29 = arith.constant dense<0.000000e+00> : vector<32x32xf32>
    %64 = vector.multi_reduction <add>, %63, %cst_29 [1] : vector<32x8x32xf32> to vector<32x32xf32>
    %65 = vector.extract_strided_slice %20 {offsets = [0, 64], sizes = [32, 32], strides = [1, 1]} : vector<32x128xf32> to vector<32x32xf32>
    %66 = vector.extract_strided_slice %22 {offsets = [0, 0, 64], sizes = [32, 8, 32], strides = [1, 1, 1]} : vector<32x8x128xf32> to vector<32x8x32xf32>
    %67 = vector.extract_strided_slice %24 {offsets = [0, 0, 64], sizes = [32, 8, 32], strides = [1, 1, 1]} : vector<32x8x128xf32> to vector<32x8x32xf32>
    %68 = vector.shape_cast %65 : vector<32x32xf32> to vector<32x1x32xf32>
    %69 = vector.broadcast %68 : vector<32x1x32xf32> to vector<32x8x32xf32>
    %70 = arith.mulf %69, %66 : vector<32x8x32xf32>
    %cst_30 = arith.constant dense<0.000000e+00> : vector<32x8xf32>
    %71 = vector.multi_reduction <add>, %70, %cst_30 [2] : vector<32x8x32xf32> to vector<32x8xf32>
    %cst_31 = arith.constant dense<0xFF800000> : vector<32xf32>
    %72 = vector.multi_reduction <maximumf>, %71, %cst_31 [1] : vector<32x8xf32> to vector<32xf32>
    %73 = vector.shape_cast %72 : vector<32xf32> to vector<32x1xf32>
    %74 = vector.broadcast %73 : vector<32x1xf32> to vector<32x8xf32>
    %75 = arith.subf %71, %74 : vector<32x8xf32>
    %76 = math.exp %75 : vector<32x8xf32>
    %cst_32 = arith.constant dense<0.000000e+00> : vector<32xf32>
    %77 = vector.multi_reduction <add>, %76, %cst_32 [1] : vector<32x8xf32> to vector<32xf32>
    %78 = vector.shape_cast %77 : vector<32xf32> to vector<32x1xf32>
    %79 = vector.broadcast %78 : vector<32x1xf32> to vector<32x8xf32>
    %80 = arith.divf %76, %79 : vector<32x8xf32>
    %81 = vector.shape_cast %80 : vector<32x8xf32> to vector<32x8x1xf32>
    %82 = vector.broadcast %81 : vector<32x8x1xf32> to vector<32x8x32xf32>
    %83 = arith.mulf %82, %67 : vector<32x8x32xf32>
    %cst_33 = arith.constant dense<0.000000e+00> : vector<32x32xf32>
    %84 = vector.multi_reduction <add>, %83, %cst_33 [1] : vector<32x8x32xf32> to vector<32x32xf32>
    %85 = vector.extract_strided_slice %20 {offsets = [0, 96], sizes = [32, 32], strides = [1, 1]} : vector<32x128xf32> to vector<32x32xf32>
    %86 = vector.extract_strided_slice %22 {offsets = [0, 0, 96], sizes = [32, 8, 32], strides = [1, 1, 1]} : vector<32x8x128xf32> to vector<32x8x32xf32>
    %87 = vector.extract_strided_slice %24 {offsets = [0, 0, 96], sizes = [32, 8, 32], strides = [1, 1, 1]} : vector<32x8x128xf32> to vector<32x8x32xf32>
    %88 = vector.shape_cast %85 : vector<32x32xf32> to vector<32x1x32xf32>
    %89 = vector.broadcast %88 : vector<32x1x32xf32> to vector<32x8x32xf32>
    %90 = arith.mulf %89, %86 : vector<32x8x32xf32>
    %cst_34 = arith.constant dense<0.000000e+00> : vector<32x8xf32>
    %91 = vector.multi_reduction <add>, %90, %cst_34 [2] : vector<32x8x32xf32> to vector<32x8xf32>
    %cst_35 = arith.constant dense<0xFF800000> : vector<32xf32>
    %92 = vector.multi_reduction <maximumf>, %91, %cst_35 [1] : vector<32x8xf32> to vector<32xf32>
    %93 = vector.shape_cast %92 : vector<32xf32> to vector<32x1xf32>
    %94 = vector.broadcast %93 : vector<32x1xf32> to vector<32x8xf32>
    %95 = arith.subf %91, %94 : vector<32x8xf32>
    %96 = math.exp %95 : vector<32x8xf32>
    %cst_36 = arith.constant dense<0.000000e+00> : vector<32xf32>
    %97 = vector.multi_reduction <add>, %96, %cst_36 [1] : vector<32x8xf32> to vector<32xf32>
    %98 = vector.shape_cast %97 : vector<32xf32> to vector<32x1xf32>
    %99 = vector.broadcast %98 : vector<32x1xf32> to vector<32x8xf32>
    %100 = arith.divf %96, %99 : vector<32x8xf32>
    %101 = vector.shape_cast %100 : vector<32x8xf32> to vector<32x8x1xf32>
    %102 = vector.broadcast %101 : vector<32x8x1xf32> to vector<32x8x32xf32>
    %103 = arith.mulf %102, %87 : vector<32x8x32xf32>
    %cst_37 = arith.constant dense<0.000000e+00> : vector<32x32xf32>
    %104 = vector.multi_reduction <add>, %103, %cst_37 [1] : vector<32x8x32xf32> to vector<32x32xf32>
    %105 = tpu.concatenate %44, %64, %84, %104 in 1 : vector<32x32xf32>, vector<32x32xf32>, vector<32x32xf32>, vector<32x32xf32> -> vector<32x128xf32>
    %c0_38 = arith.constant 0 : index
    %c0_39 = arith.constant 0 : index
    %106 = vector.load %arg9[%c0_38, %c0_39] : memref<128x96xf32, #tpu.memory_space<vmem>>, vector<128x96xf32>
    %cst_40 = arith.constant dense<0.000000e+00> : vector<32x96xf32>
    %107 = tpu.matmul %105, %106, %cst_40 {dimension_numbers = #tpu.dot_dimension_numbers<[1], [0], [0], [1], [0, 0, 1, 1], [], []>} : vector<32x128xf32>, vector<128x96xf32>, vector<32x96xf32> -> vector<32x96xf32>
    %c1 = arith.constant 1 : index
    %c0_41 = arith.constant 0 : index
    %108 = vector.load %arg10[%c1, %c0_41] : memref<7x96xf32, #tpu.memory_space<vmem>>, vector<1x96xf32>
    %109 = vector.broadcast %108 : vector<1x96xf32> to vector<32x96xf32>
    %110 = arith.addf %107, %109 : vector<32x96xf32>
    %111 = arith.addf %10, %110 : vector<32x96xf32>
    %c2 = arith.constant 2 : index
    %c0_42 = arith.constant 0 : index
    %112 = vector.load %arg10[%c2, %c0_42] : memref<7x96xf32, #tpu.memory_space<vmem>>, vector<1x96xf32>
    %c3 = arith.constant 3 : index
    %c0_43 = arith.constant 0 : index
    %113 = vector.load %arg10[%c3, %c0_43] : memref<7x96xf32, #tpu.memory_space<vmem>>, vector<1x96xf32>
    %cst_44 = arith.constant dense<0.000000e+00> : vector<32xf32>
    %114 = vector.multi_reduction <add>, %111, %cst_44 [1] : vector<32x96xf32> to vector<32xf32>
    %115 = vector.shape_cast %114 : vector<32xf32> to vector<32x1xf32>
    %cst_45 = arith.constant 9.600000e+01 : f32
    %116 = vector.broadcast %cst_45 : f32 to vector<32x1xf32>
    %117 = arith.divf %115, %116 : vector<32x1xf32>
    %118 = vector.broadcast %117 : vector<32x1xf32> to vector<32x96xf32>
    %119 = arith.subf %111, %118 : vector<32x96xf32>
    %120 = arith.mulf %119, %119 : vector<32x96xf32>
    %cst_46 = arith.constant dense<0.000000e+00> : vector<32xf32>
    %121 = vector.multi_reduction <add>, %120, %cst_46 [1] : vector<32x96xf32> to vector<32xf32>
    %122 = vector.shape_cast %121 : vector<32xf32> to vector<32x1xf32>
    %cst_47 = arith.constant 9.600000e+01 : f32
    %123 = vector.broadcast %cst_47 : f32 to vector<32x1xf32>
    %124 = arith.divf %122, %123 : vector<32x1xf32>
    %125 = vector.broadcast %117 : vector<32x1xf32> to vector<32x96xf32>
    %126 = arith.subf %111, %125 : vector<32x96xf32>
    %cst_48 = arith.constant 9.99999974E-6 : f32
    %127 = vector.broadcast %cst_48 : f32 to vector<32x1xf32>
    %128 = arith.addf %124, %127 : vector<32x1xf32>
    %129 = math.rsqrt %128 : vector<32x1xf32>
    %130 = vector.broadcast %129 : vector<32x1xf32> to vector<32x96xf32>
    %131 = arith.mulf %126, %130 : vector<32x96xf32>
    %132 = vector.broadcast %112 : vector<1x96xf32> to vector<32x96xf32>
    %133 = arith.mulf %131, %132 : vector<32x96xf32>
    %134 = vector.broadcast %113 : vector<1x96xf32> to vector<32x96xf32>
    %135 = arith.addf %133, %134 : vector<32x96xf32>
    %c0_49 = arith.constant 0 : index
    %c0_50 = arith.constant 0 : index
    %136 = vector.load %arg11[%c0_49, %c0_50] : memref<96x192xf32, #tpu.memory_space<vmem>>, vector<96x192xf32>
    %cst_51 = arith.constant dense<0.000000e+00> : vector<32x192xf32>
    %137 = tpu.matmul %135, %136, %cst_51 {dimension_numbers = #tpu.dot_dimension_numbers<[1], [0], [0], [1], [0, 0, 1, 1], [], []>} : vector<32x96xf32>, vector<96x192xf32>, vector<32x192xf32> -> vector<32x192xf32>
    %c0_52 = arith.constant 0 : index
    %c0_53 = arith.constant 0 : index
    %138 = vector.load %arg12[%c0_52, %c0_53] : memref<1x192xf32, #tpu.memory_space<vmem>>, vector<1x192xf32>
    %139 = vector.broadcast %138 : vector<1x192xf32> to vector<32x192xf32>
    %140 = arith.addf %137, %139 : vector<32x192xf32>
    %cst_54 = arith.constant 0.000000e+00 : f32
    %141 = vector.broadcast %cst_54 : f32 to vector<32x192xf32>
    %142 = arith.maximumf %140, %141 : vector<32x192xf32>
    %c0_55 = arith.constant 0 : index
    %c0_56 = arith.constant 0 : index
    %143 = vector.load %arg13[%c0_55, %c0_56] : memref<192x96xf32, #tpu.memory_space<vmem>>, vector<192x96xf32>
    %cst_57 = arith.constant dense<0.000000e+00> : vector<32x96xf32>
    %144 = tpu.matmul %142, %143, %cst_57 {dimension_numbers = #tpu.dot_dimension_numbers<[1], [0], [0], [1], [0, 0, 1, 1], [], []>} : vector<32x192xf32>, vector<192x96xf32>, vector<32x96xf32> -> vector<32x96xf32>
    %c4 = arith.constant 4 : index
    %c0_58 = arith.constant 0 : index
    %145 = vector.load %arg10[%c4, %c0_58] : memref<7x96xf32, #tpu.memory_space<vmem>>, vector<1x96xf32>
    %146 = vector.broadcast %145 : vector<1x96xf32> to vector<32x96xf32>
    %147 = arith.addf %144, %146 : vector<32x96xf32>
    %148 = arith.addf %135, %147 : vector<32x96xf32>
    %c5 = arith.constant 5 : index
    %c0_59 = arith.constant 0 : index
    %149 = vector.load %arg10[%c5, %c0_59] : memref<7x96xf32, #tpu.memory_space<vmem>>, vector<1x96xf32>
    %c6 = arith.constant 6 : index
    %c0_60 = arith.constant 0 : index
    %150 = vector.load %arg10[%c6, %c0_60] : memref<7x96xf32, #tpu.memory_space<vmem>>, vector<1x96xf32>
    %cst_61 = arith.constant dense<0.000000e+00> : vector<32xf32>
    %151 = vector.multi_reduction <add>, %148, %cst_61 [1] : vector<32x96xf32> to vector<32xf32>
    %152 = vector.shape_cast %151 : vector<32xf32> to vector<32x1xf32>
    %cst_62 = arith.constant 9.600000e+01 : f32
    %153 = vector.broadcast %cst_62 : f32 to vector<32x1xf32>
    %154 = arith.divf %152, %153 : vector<32x1xf32>
    %155 = vector.broadcast %154 : vector<32x1xf32> to vector<32x96xf32>
    %156 = arith.subf %148, %155 : vector<32x96xf32>
    %157 = arith.mulf %156, %156 : vector<32x96xf32>
    %cst_63 = arith.constant dense<0.000000e+00> : vector<32xf32>
    %158 = vector.multi_reduction <add>, %157, %cst_63 [1] : vector<32x96xf32> to vector<32xf32>
    %159 = vector.shape_cast %158 : vector<32xf32> to vector<32x1xf32>
    %cst_64 = arith.constant 9.600000e+01 : f32
    %160 = vector.broadcast %cst_64 : f32 to vector<32x1xf32>
    %161 = arith.divf %159, %160 : vector<32x1xf32>
    %162 = vector.broadcast %154 : vector<32x1xf32> to vector<32x96xf32>
    %163 = arith.subf %148, %162 : vector<32x96xf32>
    %cst_65 = arith.constant 9.99999974E-6 : f32
    %164 = vector.broadcast %cst_65 : f32 to vector<32x1xf32>
    %165 = arith.addf %161, %164 : vector<32x1xf32>
    %166 = math.rsqrt %165 : vector<32x1xf32>
    %167 = vector.broadcast %166 : vector<32x1xf32> to vector<32x96xf32>
    %168 = arith.mulf %163, %167 : vector<32x96xf32>
    %169 = vector.broadcast %149 : vector<1x96xf32> to vector<32x96xf32>
    %170 = arith.mulf %168, %169 : vector<32x96xf32>
    %171 = vector.broadcast %150 : vector<1x96xf32> to vector<32x96xf32>
    %172 = arith.addf %170, %171 : vector<32x96xf32>
    %c0_66 = arith.constant 0 : index
    %c0_67 = arith.constant 0 : index
    %173 = vector.load %arg14[%c0_66, %c0_67] : memref<96x128xf32, #tpu.memory_space<vmem>>, vector<96x128xf32>
    %cst_68 = arith.constant dense<0.000000e+00> : vector<32x128xf32>
    %174 = tpu.matmul %172, %173, %cst_68 {dimension_numbers = #tpu.dot_dimension_numbers<[1], [0], [0], [1], [0, 0, 1, 1], [], []>} : vector<32x96xf32>, vector<96x128xf32>, vector<32x128xf32> -> vector<32x128xf32>
    %175 = math.tanh %174 : vector<32x128xf32>
    %c0_69 = arith.constant 0 : index
    %c0_70 = arith.constant 0 : index
    %176 = vector.load %arg15[%c0_69, %c0_70] : memref<32x128xf32, #tpu.memory_space<vmem>>, vector<32x128xf32>
    tpu.vector_store %arg15[%c0_69, %c0_70], %175 {strides = array<i32>} : memref<32x128xf32, #tpu.memory_space<vmem>>, vector<32x128xf32>,
    return
  }
  func.func @transform_0(%arg0: i32) -> (i32, i32) {
    %c0_i32 = arith.constant 0 : i32
    %c0_i32_0 = arith.constant 0 : i32
    return %arg0, %c0_i32 : i32, i32
  }
  func.func @transform_1(%arg0: i32) -> (i32, i32) {
    %c0_i32 = arith.constant 0 : i32
    %c0_i32_0 = arith.constant 0 : i32
    return %arg0, %c0_i32 : i32, i32
  }
  func.func @transform_2(%arg0: i32) -> (i32, i32) {
    %c0_i32 = arith.constant 0 : i32
    %c0_i32_0 = arith.constant 0 : i32
    %c0_i32_1 = arith.constant 0 : i32
    return %c0_i32, %c0_i32_0 : i32, i32
  }
  func.func @transform_3(%arg0: i32) -> (i32, i32) {
    %c0_i32 = arith.constant 0 : i32
    %c0_i32_0 = arith.constant 0 : i32
    %c0_i32_1 = arith.constant 0 : i32
    return %c0_i32, %c0_i32_0 : i32, i32
  }
  func.func @transform_4(%arg0: i32) -> (i32, i32) {
    %c0_i32 = arith.constant 0 : i32
    %c0_i32_0 = arith.constant 0 : i32
    %c0_i32_1 = arith.constant 0 : i32
    return %c0_i32, %c0_i32_0 : i32, i32
  }
  func.func @transform_5(%arg0: i32) -> (i32, i32) {
    %c0_i32 = arith.constant 0 : i32
    %c0_i32_0 = arith.constant 0 : i32
    %c0_i32_1 = arith.constant 0 : i32
    return %c0_i32, %c0_i32_0 : i32, i32
  }
  func.func @transform_6(%arg0: i32) -> (i32, i32) {
    %c0_i32 = arith.constant 0 : i32
    %c0_i32_0 = arith.constant 0 : i32
    %c0_i32_1 = arith.constant 0 : i32
    return %c0_i32, %c0_i32_0 : i32, i32
  }
  func.func @transform_7(%arg0: i32) -> (i32, i32) {
    %c0_i32 = arith.constant 0 : i32
    %c0_i32_0 = arith.constant 0 : i32
    %c0_i32_1 = arith.constant 0 : i32
    return %c0_i32, %c0_i32_0 : i32, i32
  }
  func.func @transform_8(%arg0: i32) -> (i32, i32) {
    %c0_i32 = arith.constant 0 : i32
    %c0_i32_0 = arith.constant 0 : i32
    %c0_i32_1 = arith.constant 0 : i32
    return %c0_i32, %c0_i32_0 : i32, i32
  }
  func.func @transform_9(%arg0: i32) -> (i32, i32) {
    %c0_i32 = arith.constant 0 : i32
    %c0_i32_0 = arith.constant 0 : i32
    %c0_i32_1 = arith.constant 0 : i32
    return %c0_i32, %c0_i32_0 : i32, i32
  }
  func.func @transform_10(%arg0: i32) -> (i32, i32) {
    %c0_i32 = arith.constant 0 : i32
    %c0_i32_0 = arith.constant 0 : i32
    %c0_i32_1 = arith.constant 0 : i32
    return %c0_i32, %c0_i32_0 : i32, i32
  }
  func.func @transform_11(%arg0: i32) -> (i32, i32) {
    %c0_i32 = arith.constant 0 : i32
    %c0_i32_0 = arith.constant 0 : i32
    %c0_i32_1 = arith.constant 0 : i32
    return %c0_i32, %c0_i32_0 : i32, i32
  }
  func.func @transform_12(%arg0: i32) -> (i32, i32) {
    %c0_i32 = arith.constant 0 : i32
    %c0_i32_0 = arith.constant 0 : i32
    %c0_i32_1 = arith.constant 0 : i32
    return %c0_i32, %c0_i32_0 : i32, i32
  }
  func.func @transform_13(%arg0: i32) -> (i32, i32) {
    %c0_i32 = arith.constant 0 : i32
    %c0_i32_0 = arith.constant 0 : i32
    %c0_i32_1 = arith.constant 0 : i32
    return %c0_i32, %c0_i32_0 : i32, i32
  }
  func.func @transform_14(%arg0: i32) -> (i32, i32) {
    %c0_i32 = arith.constant 0 : i32
    %c0_i32_0 = arith.constant 0 : i32
    return %arg0, %c0_i32 : i32, i32
  }
}

</mosaic_0001>

<llo_original>
// kernel: tpu_custom_call.1
$region0: #{tpu_custom_call.1}
  #allocation0 [shape = 'u32[]', space=smem, size = 0x4, offset = 0x4, fixed_abs, tag = 'smem constant byte address 0x4 - core index']
  #allocation1 [shape = 'u32[144,128]{1,0:T(1,128)}', space=vmem, size = 0x12000, scoped, tag = 'internal scratch']
  %s0 = inlined_call_operand.vmem [shape: f32[512,24], index: 0, kind: input, shape index: {}]
  %s1 = inlined_call_operand.vmem [shape: f32[64,24], index: 1, kind: input, shape index: {}]
  %s2 = inlined_call_operand.vmem [shape: f32[256,96], index: 2, kind: input, shape index: {}]
  %s3 = inlined_call_operand.vmem [shape: f32[24,96], index: 3, kind: input, shape index: {}]
  %s4 = inlined_call_operand.vmem [shape: f32[96,256], index: 4, kind: input, shape index: {}]
  %s5 = inlined_call_operand.vmem [shape: f32[1,256], index: 5, kind: input, shape index: {}]
  %s6 = inlined_call_operand.vmem [shape: f32[96,128], index: 6, kind: input, shape index: {}]
  %s7 = inlined_call_operand.vmem [shape: f32[1,128], index: 7, kind: input, shape index: {}]
  %s8 = inlined_call_operand.vmem [shape: f32[128,96], index: 8, kind: input, shape index: {}]
  %s9 = inlined_call_operand.vmem [shape: f32[7,96], index: 9, kind: input, shape index: {}]
  %s10 = inlined_call_operand.vmem [shape: f32[96,192], index: 10, kind: input, shape index: {}]
  %s11 = inlined_call_operand.vmem [shape: f32[1,192], index: 11, kind: input, shape index: {}]
  %s12 = inlined_call_operand.vmem [shape: f32[192,96], index: 12, kind: input, shape index: {}]
  %s13 = inlined_call_operand.vmem [shape: f32[96,128], index: 13, kind: input, shape index: {}]
  %s14 = inlined_call_operand.hbm [shape: f32[64,128], index: 14, kind: output, shape index: {}]
  %s15 = sld [smem:[#allocation0]]
  $region89: #{tpu_custom_call.1} parent=0
    _
  %s17 = ssub.s32 1, %s15
  %s18 = scalar_select 0, %s17, %s15
  $region1: #{tpu_custom_call.1} parent=0
    #allocation2 [shape = 'u8[32768]{0}', space=vmem, size = 0x8000, scoped, tag = 'output window, operand 0']
    #allocation3 [shape = 's32[2]{0}', space=sflag, size = 0x8, scoped, tag = 'scoped memory for tpu_custom_call.1']
    %19 = vsyncpa [#allocation3], 0
    %s20 = scalar_lea.sflag [#allocation3], 1
    %21 = vsyncpa %s20, 0
    loop: start=0, step=1, limit=4
    $region2: #{tpu_custom_call.1} parent=1 // loop_pre_header
      _
    $region3: #{tpu_custom_call.1} parent=1 // loop_header
      %s23 = sphi 0, %s27
      %p24 = scmp.ge.s32.totalorder %s23, 4
      %s33 = sphi 0, %s35
      %s36 = sphi 0, %s33
      %s37 = sphi 0, %s36
      %s53 = sphi 0, %s37
      %s59 = sphi 0, %s61
      %s62 = sphi 0, %s59
      %s63 = sphi 0, %s62
      %s79 = sphi 0, %s63
      %s83 = sphi 0, %s83
      %s85 = sphi 0, %s83
      %s86 = sphi 0, %s85
      %s100 = sphi 0, %s86
      %s104 = sphi 0, %s104
      %s106 = sphi 0, %s104
      %s107 = sphi 0, %s106
      %s121 = sphi 0, %s107
      %s125 = sphi 0, %s125
      %s127 = sphi 0, %s125
      %s128 = sphi 0, %s127
      %s142 = sphi 0, %s128
      %s146 = sphi 0, %s146
      %s148 = sphi 0, %s146
      %s149 = sphi 0, %s148
      %s163 = sphi 0, %s149
      %s167 = sphi 0, %s167
      %s169 = sphi 0, %s167
      %s170 = sphi 0, %s169
      %s184 = sphi 0, %s170
      %s188 = sphi 0, %s188
      %s190 = sphi 0, %s188
      %s191 = sphi 0, %s190
      %s205 = sphi 0, %s191
      %s209 = sphi 0, %s209
      %s211 = sphi 0, %s209
      %s212 = sphi 0, %s211
      %s226 = sphi 0, %s212
      %s230 = sphi 0, %s230
      %s232 = sphi 0, %s230
      %s233 = sphi 0, %s232
      %s247 = sphi 0, %s233
      %s251 = sphi 0, %s251
      %s253 = sphi 0, %s251
      %s254 = sphi 0, %s253
      %s268 = sphi 0, %s254
      %s272 = sphi 0, %s272
      %s274 = sphi 0, %s272
      %s275 = sphi 0, %s274
      %s289 = sphi 0, %s275
      %s293 = sphi 0, %s293
      %s295 = sphi 0, %s293
      %s296 = sphi 0, %s295
      %s310 = sphi 0, %s296
      %s314 = sphi 0, %s314
      %s316 = sphi 0, %s314
      %s317 = sphi 0, %s316
      %s331 = sphi 0, %s317
      %s337 = sphi 0, %s339
      %s340 = sphi 0, %s337
      %s341 = sphi 0, %s340
      %s357 = sphi 0, %s341
    $region4: #{tpu_custom_call.1} parent=1 // loop_header_branch
      %26 = sbr.rel (%p24) target = $region8
    $region5: #{tpu_custom_call.1} parent=1 // loop_body
      %s28 = ssub.s32 %s23, 1
      %s29 = ssub.s32 %s23, 2
      %s30 = sadd.s32 %s23, 1
      %s31 = ssub.s32 %s23, %s30
      %p32 = scmp.eq.s32.totalorder %s31, 0
      %s34 = sadd.s32 %s33, 1
      %s35 = scalar_select %p32, %s33, %s34
      %p38 = pneg %p32
      %p39 = scmp.eq.s32.totalorder %s23, 1
      %p40 = por %p38, %p39
      %p41 = scmp.ne.s32.totalorder %s33, %s36
      %p42 = scmp.eq.s32.totalorder %s23, 0
      %p43 = por %p41, %p42
      %p44 = scmp.ne.s32.totalorder %s33, %s36
      %p45 = scmp.eq.s32.totalorder %s28, 1
      %p46 = por %p44, %p45
      %p47 = scmp.ne.s32.totalorder %s36, %s37
      %p48 = scmp.eq.s32.totalorder %s28, 0
      %p49 = por %p47, %p48
      %p50 = scmp.ne.s32.totalorder %s36, %s37
      %p51 = scmp.eq.s32.totalorder %s29, 1
      %p52 = por %p50, %p51
      %p54 = scmp.ne.s32.totalorder %s37, %s53
      %p55 = scmp.eq.s32.totalorder %s29, 0
      %p56 = por %p54, %p55
      %s57 = ssub.s32 %s23, %s30
      %p58 = scmp.eq.s32.totalorder %s57, 0
      %s60 = sadd.s32 %s59, 1
      %s61 = scalar_select %p58, %s59, %s60
      %p64 = pneg %p58
      %p65 = scmp.eq.s32.totalorder %s23, 1
      %p66 = por %p64, %p65
      %p67 = scmp.ne.s32.totalorder %s59, %s62
      %p68 = scmp.eq.s32.totalorder %s23, 0
      %p69 = por %p67, %p68
      %p70 = scmp.ne.s32.totalorder %s59, %s62
      %p71 = scmp.eq.s32.totalorder %s28, 1
      %p72 = por %p70, %p71
      %p73 = scmp.ne.s32.totalorder %s62, %s63
      %p74 = scmp.eq.s32.totalorder %s28, 0
      %p75 = por %p73, %p74
      %p76 = scmp.ne.s32.totalorder %s62, %s63
      %p77 = scmp.eq.s32.totalorder %s29, 1
      %p78 = por %p76, %p77
      %p80 = scmp.ne.s32.totalorder %s63, %s79
      %p81 = scmp.eq.s32.totalorder %s29, 0
      %p82 = por %p80, %p81
      %s84 = sadd.s32 %s83, 1
      %p87 = scmp.eq.s32.totalorder %s23, 1
      %p88 = scmp.ne.s32.totalorder %s83, %s85
      %p89 = scmp.eq.s32.totalorder %s23, 0
      %p90 = por %p88, %p89
      %p91 = scmp.ne.s32.totalorder %s83, %s85
      %p92 = scmp.eq.s32.totalorder %s28, 1
      %p93 = por %p91, %p92
      %p94 = scmp.ne.s32.totalorder %s85, %s86
      %p95 = scmp.eq.s32.totalorder %s28, 0
      %p96 = por %p94, %p95
      %p97 = scmp.ne.s32.totalorder %s85, %s86
      %p98 = scmp.eq.s32.totalorder %s29, 1
      %p99 = por %p97, %p98
      %p101 = scmp.ne.s32.totalorder %s86, %s100
      %p102 = scmp.eq.s32.totalorder %s29, 0
      %p103 = por %p101, %p102
      %s105 = sadd.s32 %s104, 1
      %p108 = scmp.eq.s32.totalorder %s23, 1
      %p109 = scmp.ne.s32.totalorder %s104, %s106
      %p110 = scmp.eq.s32.totalorder %s23, 0
      %p111 = por %p109, %p110
      %p112 = scmp.ne.s32.totalorder %s104, %s106
      %p113 = scmp.eq.s32.totalorder %s28, 1
      %p114 = por %p112, %p113
      %p115 = scmp.ne.s32.totalorder %s106, %s107
      %p116 = scmp.eq.s32.totalorder %s28, 0
      %p117 = por %p115, %p116
      %p118 = scmp.ne.s32.totalorder %s106, %s107
      %p119 = scmp.eq.s32.totalorder %s29, 1
      %p120 = por %p118, %p119
      %p122 = scmp.ne.s32.totalorder %s107, %s121
      %p123 = scmp.eq.s32.totalorder %s29, 0
      %p124 = por %p122, %p123
      %s126 = sadd.s32 %s125, 1
      %p129 = scmp.eq.s32.totalorder %s23, 1
      %p130 = scmp.ne.s32.totalorder %s125, %s127
      %p131 = scmp.eq.s32.totalorder %s23, 0
      %p132 = por %p130, %p131
      %p133 = scmp.ne.s32.totalorder %s125, %s127
      %p134 = scmp.eq.s32.totalorder %s28, 1
      %p135 = por %p133, %p134
      %p136 = scmp.ne.s32.totalorder %s127, %s128
      %p137 = scmp.eq.s32.totalorder %s28, 0
      %p138 = por %p136, %p137
      %p139 = scmp.ne.s32.totalorder %s127, %s128
      %p140 = scmp.eq.s32.totalorder %s29, 1
      %p141 = por %p139, %p140
      %p143 = scmp.ne.s32.totalorder %s128, %s142
      %p144 = scmp.eq.s32.totalorder %s29, 0
      %p145 = por %p143, %p144
      %s147 = sadd.s32 %s146, 1
      %p150 = scmp.eq.s32.totalorder %s23, 1
      %p151 = scmp.ne.s32.totalorder %s146, %s148
      %p152 = scmp.eq.s32.totalorder %s23, 0
      %p153 = por %p151, %p152
      %p154 = scmp.ne.s32.totalorder %s146, %s148
      %p155 = scmp.eq.s32.totalorder %s28, 1
      %p156 = por %p154, %p155
      %p157 = scmp.ne.s32.totalorder %s148, %s149
      %p158 = scmp.eq.s32.totalorder %s28, 0
      %p159 = por %p157, %p158
      %p160 = scmp.ne.s32.totalorder %s148, %s149
      %p161 = scmp.eq.s32.totalorder %s29, 1
      %p162 = por %p160, %p161
      %p164 = scmp.ne.s32.totalorder %s149, %s163
      %p165 = scmp.eq.s32.totalorder %s29, 0
      %p166 = por %p164, %p165
      %s168 = sadd.s32 %s167, 1
      %p171 = scmp.eq.s32.totalorder %s23, 1
      %p172 = scmp.ne.s32.totalorder %s167, %s169
      %p173 = scmp.eq.s32.totalorder %s23, 0
      %p174 = por %p172, %p173
      %p175 = scmp.ne.s32.totalorder %s167, %s169
      %p176 = scmp.eq.s32.totalorder %s28, 1
      %p177 = por %p175, %p176
      %p178 = scmp.ne.s32.totalorder %s169, %s170
      %p179 = scmp.eq.s32.totalorder %s28, 0
      %p180 = por %p178, %p179
      %p181 = scmp.ne.s32.totalorder %s169, %s170
      %p182 = scmp.eq.s32.totalorder %s29, 1
      %p183 = por %p181, %p182
      %p185 = scmp.ne.s32.totalorder %s170, %s184
      %p186 = scmp.eq.s32.totalorder %s29, 0
      %p187 = por %p185, %p186
      %s189 = sadd.s32 %s188, 1
      %p192 = scmp.eq.s32.totalorder %s23, 1
      %p193 = scmp.ne.s32.totalorder %s188, %s190
      %p194 = scmp.eq.s32.totalorder %s23, 0
      %p195 = por %p193, %p194
      %p196 = scmp.ne.s32.totalorder %s188, %s190
      %p197 = scmp.eq.s32.totalorder %s28, 1
      %p198 = por %p196, %p197
      %p199 = scmp.ne.s32.totalorder %s190, %s191
      %p200 = scmp.eq.s32.totalorder %s28, 0
      %p201 = por %p199, %p200
      %p202 = scmp.ne.s32.totalorder %s190, %s191
      %p203 = scmp.eq.s32.totalorder %s29, 1
      %p204 = por %p202, %p203
      %p206 = scmp.ne.s32.totalorder %s191, %s205
      %p207 = scmp.eq.s32.totalorder %s29, 0
      %p208 = por %p206, %p207
      %s210 = sadd.s32 %s209, 1
      %p213 = scmp.eq.s32.totalorder %s23, 1
      %p214 = scmp.ne.s32.totalorder %s209, %s211
      %p215 = scmp.eq.s32.totalorder %s23, 0
      %p216 = por %p214, %p215
      %p217 = scmp.ne.s32.totalorder %s209, %s211
      %p218 = scmp.eq.s32.totalorder %s28, 1
      %p219 = por %p217, %p218
      %p220 = scmp.ne.s32.totalorder %s211, %s212
      %p221 = scmp.eq.s32.totalorder %s28, 0
      %p222 = por %p220, %p221
      %p223 = scmp.ne.s32.totalorder %s211, %s212
      %p224 = scmp.eq.s32.totalorder %s29, 1
      %p225 = por %p223, %p224
      %p227 = scmp.ne.s32.totalorder %s212, %s226
      %p228 = scmp.eq.s32.totalorder %s29, 0
      %p229 = por %p227, %p228
      %s231 = sadd.s32 %s230, 1
      %p234 = scmp.eq.s32.totalorder %s23, 1
      %p235 = scmp.ne.s32.totalorder %s230, %s232
      %p236 = scmp.eq.s32.totalorder %s23, 0
      %p237 = por %p235, %p236
      %p238 = scmp.ne.s32.totalorder %s230, %s232
      %p239 = scmp.eq.s32.totalorder %s28, 1
      %p240 = por %p238, %p239
      %p241 = scmp.ne.s32.totalorder %s232, %s233
      %p242 = scmp.eq.s32.totalorder %s28, 0
      %p243 = por %p241, %p242
      %p244 = scmp.ne.s32.totalorder %s232, %s233
      %p245 = scmp.eq.s32.totalorder %s29, 1
      %p246 = por %p244, %p245
      %p248 = scmp.ne.s32.totalorder %s233, %s247
      %p249 = scmp.eq.s32.totalorder %s29, 0
      %p250 = por %p248, %p249
      %s252 = sadd.s32 %s251, 1
      %p255 = scmp.eq.s32.totalorder %s23, 1
      %p256 = scmp.ne.s32.totalorder %s251, %s253
      %p257 = scmp.eq.s32.totalorder %s23, 0
      %p258 = por %p256, %p257
      %p259 = scmp.ne.s32.totalorder %s251, %s253
      %p260 = scmp.eq.s32.totalorder %s28, 1
      %p261 = por %p259, %p260
      %p262 = scmp.ne.s32.totalorder %s253, %s254
      %p263 = scmp.eq.s32.totalorder %s28, 0
      %p264 = por %p262, %p263
      %p265 = scmp.ne.s32.totalorder %s253, %s254
      %p266 = scmp.eq.s32.totalorder %s29, 1
      %p267 = por %p265, %p266
      %p269 = scmp.ne.s32.totalorder %s254, %s268
      %p270 = scmp.eq.s32.totalorder %s29, 0
      %p271 = por %p269, %p270
      %s273 = sadd.s32 %s272, 1
      %p276 = scmp.eq.s32.totalorder %s23, 1
      %p277 = scmp.ne.s32.totalorder %s272, %s274
      %p278 = scmp.eq.s32.totalorder %s23, 0
      %p279 = por %p277, %p278
      %p280 = scmp.ne.s32.totalorder %s272, %s274
      %p281 = scmp.eq.s32.totalorder %s28, 1
      %p282 = por %p280, %p281
      %p283 = scmp.ne.s32.totalorder %s274, %s275
      %p284 = scmp.eq.s32.totalorder %s28, 0
      %p285 = por %p283, %p284
      %p286 = scmp.ne.s32.totalorder %s274, %s275
      %p287 = scmp.eq.s32.totalorder %s29, 1
      %p288 = por %p286, %p287
      %p290 = scmp.ne.s32.totalorder %s275, %s289
      %p291 = scmp.eq.s32.totalorder %s29, 0
      %p292 = por %p290, %p291
      %s294 = sadd.s32 %s293, 1
      %p297 = scmp.eq.s32.totalorder %s23, 1
      %p298 = scmp.ne.s32.totalorder %s293, %s295
      %p299 = scmp.eq.s32.totalorder %s23, 0
      %p300 = por %p298, %p299
      %p301 = scmp.ne.s32.totalorder %s293, %s295
      %p302 = scmp.eq.s32.totalorder %s28, 1
      %p303 = por %p301, %p302
      %p304 = scmp.ne.s32.totalorder %s295, %s296
      %p305 = scmp.eq.s32.totalorder %s28, 0
      %p306 = por %p304, %p305
      %p307 = scmp.ne.s32.totalorder %s295, %s296
      %p308 = scmp.eq.s32.totalorder %s29, 1
      %p309 = por %p307, %p308
      %p311 = scmp.ne.s32.totalorder %s296, %s310
      %p312 = scmp.eq.s32.totalorder %s29, 0
      %p313 = por %p311, %p312
      %s315 = sadd.s32 %s314, 1
      %p318 = scmp.eq.s32.totalorder %s23, 1
      %p319 = scmp.ne.s32.totalorder %s314, %s316
      %p320 = scmp.eq.s32.totalorder %s23, 0
      %p321 = por %p319, %p320
      %p322 = scmp.ne.s32.totalorder %s314, %s316
      %p323 = scmp.eq.s32.totalorder %s28, 1
      %p324 = por %p322, %p323
      %p325 = scmp.ne.s32.totalorder %s316, %s317
      %p326 = scmp.eq.s32.totalorder %s28, 0
      %p327 = por %p325, %p326
      %p328 = scmp.ne.s32.totalorder %s316, %s317
      %p329 = scmp.eq.s32.totalorder %s29, 1
      %p330 = por %p328, %p329
      %p332 = scmp.ne.s32.totalorder %s317, %s331
      %p333 = scmp.eq.s32.totalorder %s29, 0
      %p334 = por %p332, %p333
      %s335 = ssub.s32 %s23, %s30
      %p336 = scmp.eq.s32.totalorder %s335, 0
      %s338 = sadd.s32 %s337, 1
      %s339 = scalar_select %p336, %s337, %s338
      %p342 = pneg %p336
      %p343 = scmp.eq.s32.totalorder %s23, 1
      %p344 = por %p342, %p343
      %p345 = scmp.ne.s32.totalorder %s337, %s340
      %p346 = scmp.eq.s32.totalorder %s23, 0
      %p347 = por %p345, %p346
      %p348 = scmp.ne.s32.totalorder %s337, %s340
      %p349 = scmp.eq.s32.totalorder %s28, 1
      %p350 = por %p348, %p349
      %p351 = scmp.ne.s32.totalorder %s340, %s341
      %p352 = scmp.eq.s32.totalorder %s28, 0
      %p353 = por %p351, %p352
      %p354 = scmp.ne.s32.totalorder %s340, %s341
      %p355 = scmp.eq.s32.totalorder %s29, 1
      %p356 = por %p354, %p355
      %p358 = scmp.ne.s32.totalorder %s341, %s357
      %p359 = scmp.eq.s32.totalorder %s29, 0
      %p360 = por %p358, %p359
      %p361 = scmp.le.s32.totalorder 1, %s23
      %p362 = scmp.lt.s32.totalorder %s23, 3
      %p363 = pnand %p361, %p362
      %p364 = pneg %p363
      // Predicated region
      $region9: #{tpu_custom_call.1} parent=5 // pred_check
        _
      $region10: #{tpu_custom_call.1} parent=5 // pred_check_branch
        %366 = sbr.rel (%p363) target = $region12
      $region11: #{tpu_custom_call.1} parent=5 // pred_region
        %s367 = ssub.s32 %s23, 1
        // Predicated region
        $region13: #{tpu_custom_call.1} parent=11 // pred_check
          %p368 = pneg %p96
        $region14: #{tpu_custom_call.1} parent=11 // pred_check_branch
          %370 = sbr.rel (%p368) target = $region16
        $region15: #{tpu_custom_call.1} parent=11 // pred_region
          _
        $region16: #{tpu_custom_call.1} parent=11 // pred_fallthru
          _
        // Predicated region
        $region17: #{tpu_custom_call.1} parent=11 // pred_check
          %p371 = pneg %p117
        $region18: #{tpu_custom_call.1} parent=11 // pred_check_branch
          %373 = sbr.rel (%p371) target = $region20
        $region19: #{tpu_custom_call.1} parent=11 // pred_region
          _
        $region20: #{tpu_custom_call.1} parent=11 // pred_fallthru
          _
        // Predicated region
        $region21: #{tpu_custom_call.1} parent=11 // pred_check
          %p374 = pneg %p138
        $region22: #{tpu_custom_call.1} parent=11 // pred_check_branch
          %376 = sbr.rel (%p374) target = $region24
        $region23: #{tpu_custom_call.1} parent=11 // pred_region
          _
        $region24: #{tpu_custom_call.1} parent=11 // pred_fallthru
          _
        // Predicated region
        $region25: #{tpu_custom_call.1} parent=11 // pred_check
          %p377 = pneg %p159
        $region26: #{tpu_custom_call.1} parent=11 // pred_check_branch
          %379 = sbr.rel (%p377) target = $region28
        $region27: #{tpu_custom_call.1} parent=11 // pred_region
          _
        $region28: #{tpu_custom_call.1} parent=11 // pred_fallthru
          _
        // Predicated region
        $region29: #{tpu_custom_call.1} parent=11 // pred_check
          %p380 = pneg %p180
        $region30: #{tpu_custom_call.1} parent=11 // pred_check_branch
          %382 = sbr.rel (%p380) target = $region32
        $region31: #{tpu_custom_call.1} parent=11 // pred_region
          _
        $region32: #{tpu_custom_call.1} parent=11 // pred_fallthru
          _
        // Predicated region
        $region33: #{tpu_custom_call.1} parent=11 // pred_check
          %p383 = pneg %p201
        $region34: #{tpu_custom_call.1} parent=11 // pred_check_branch
          %385 = sbr.rel (%p383) target = $region36
        $region35: #{tpu_custom_call.1} parent=11 // pred_region
          _
        $region36: #{tpu_custom_call.1} parent=11 // pred_fallthru
          _
        // Predicated region
        $region37: #{tpu_custom_call.1} parent=11 // pred_check
          %p386 = pneg %p222
        $region38: #{tpu_custom_call.1} parent=11 // pred_check_branch
          %388 = sbr.rel (%p386) target = $region40
        $region39: #{tpu_custom_call.1} parent=11 // pred_region
          _
        $region40: #{tpu_custom_call.1} parent=11 // pred_fallthru
          _
        // Predicated region
        $region41: #{tpu_custom_call.1} parent=11 // pred_check
          %p389 = pneg %p243
        $region42: #{tpu_custom_call.1} parent=11 // pred_check_branch
          %391 = sbr.rel (%p389) target = $region44
        $region43: #{tpu_custom_call.1} parent=11 // pred_region
          _
        $region44: #{tpu_custom_call.1} parent=11 // pred_fallthru
          _
        // Predicated region
        $region45: #{tpu_custom_call.1} parent=11 // pred_check
          %p392 = pneg %p264
        $region46: #{tpu_custom_call.1} parent=11 // pred_check_branch
          %394 = sbr.rel (%p392) target = $region48
        $region47: #{tpu_custom_call.1} parent=11 // pred_region
          _
        $region48: #{tpu_custom_call.1} parent=11 // pred_fallthru
          _
        // Predicated region
        $region49: #{tpu_custom_call.1} parent=11 // pred_check
          %p395 = pneg %p285
        $region50: #{tpu_custom_call.1} parent=11 // pred_check_branch
          %397 = sbr.rel (%p395) target = $region52
        $region51: #{tpu_custom_call.1} parent=11 // pred_region
          _
        $region52: #{tpu_custom_call.1} parent=11 // pred_fallthru
          _
        // Predicated region
        $region53: #{tpu_custom_call.1} parent=11 // pred_check
          %p398 = pneg %p306
        $region54: #{tpu_custom_call.1} parent=11 // pred_check_branch
          %400 = sbr.rel (%p398) target = $region56
        $region55: #{tpu_custom_call.1} parent=11 // pred_region
          _
        $region56: #{tpu_custom_call.1} parent=11 // pred_fallthru
          _
        // Predicated region
        $region57: #{tpu_custom_call.1} parent=11 // pred_check
          %p401 = pneg %p327
        $region58: #{tpu_custom_call.1} parent=11 // pred_check_branch
          %403 = sbr.rel (%p401) target = $region60
        $region59: #{tpu_custom_call.1} parent=11 // pred_region
          _
        $region60: #{tpu_custom_call.1} parent=11 // pred_fallthru
          _
      $region12: #{tpu_custom_call.1} parent=5 // pred_fallthru
        _
      %p404 = scmp.lt.s32.totalorder %s23, 2
      // Predicated region
      $region61: #{tpu_custom_call.1} parent=5 // pred_check
        %p405 = pneg %p404
      $region62: #{tpu_custom_call.1} parent=5 // pred_check_branch
        %407 = sbr.rel (%p405) target = $region64
      $region63: #{tpu_custom_call.1} parent=5 // pred_region
        // Predicated region
        $region65: #{tpu_custom_call.1} parent=63 // pred_check
          %p408 = pneg %p43
        $region66: #{tpu_custom_call.1} parent=63 // pred_check_branch
          %410 = sbr.rel (%p408) target = $region68
        $region67: #{tpu_custom_call.1} parent=63 // pred_region
          %s411 = smul.u32 32, %s23
          %p412 = scmp.lt.s32.totalorder %s411, 63
          %s413 = scalar_select %p412, %s411, 63
          %s414 = smul.addr %s413, 8
          %s415 = scalar_lea.vmem %s0, %s414
          %s416 = smul.u32 32, %s23
        $region68: #{tpu_custom_call.1} parent=63 // pred_fallthru
          _
        // Predicated region
        $region69: #{tpu_custom_call.1} parent=63 // pred_check
          %p417 = pneg %p69
        $region70: #{tpu_custom_call.1} parent=63 // pred_check_branch
          %419 = sbr.rel (%p417) target = $region72
        $region71: #{tpu_custom_call.1} parent=63 // pred_region
          %s420 = smul.u32 4, %s23
          %p421 = scmp.lt.s32.totalorder %s420, 7
          %s422 = scalar_select %p421, %s420, 7
          %s423 = smul.addr %s422, 8
          %s424 = scalar_lea.vmem %s1, %s423
          %s425 = smul.u32 4, %s23
        $region72: #{tpu_custom_call.1} parent=63 // pred_fallthru
          _
      $region64: #{tpu_custom_call.1} parent=5 // pred_fallthru
        _
      %p426 = scmp.le.s32.totalorder 1, %s23
      %p427 = scmp.lt.s32.totalorder %s23, 3
      %p428 = pnand %p426, %p427
      %p429 = pneg %p428
      // Predicated region
      $region73: #{tpu_custom_call.1} parent=5 // pred_check
        _
      $region74: #{tpu_custom_call.1} parent=5 // pred_check_branch
        %431 = sbr.rel (%p428) target = $region76
      $region75: #{tpu_custom_call.1} parent=5 // pred_region
        %s432 = ssub.s32 %s23, 1
        %s433 = smul.u32 32, %s28
        %p434 = scmp.lt.s32.totalorder %s433, 63
        %s435 = scalar_select %p434, %s433, 63
        %s436 = smul.addr %s435, 8
        %s437 = scalar_lea.vmem %s0, %s436
        %p438 = pneg %p49
        %p439 = pneg %p46
        %s440 = smul.u32 4, %s28
        %p441 = scmp.lt.s32.totalorder %s440, 7
        %s442 = scalar_select %p441, %s440, 7
        %s443 = smul.addr %s442, 8
        %s444 = scalar_lea.vmem %s1, %s443
        %p445 = pneg %p75
        %p446 = pneg %p72
        %p447 = pneg %p96
        %p448 = pneg %p93
        %p449 = pneg %p117
        %p450 = pneg %p114
        %p451 = pneg %p138
        %p452 = pneg %p135
        %p453 = pneg %p159
        %p454 = pneg %p156
        %p455 = pneg %p180
        %p456 = pneg %p177
        %p457 = pneg %p201
        %p458 = pneg %p198
        %p459 = pneg %p222
        %p460 = pneg %p219
        %p461 = pneg %p243
        %p462 = pneg %p240
        %p463 = pneg %p264
        %p464 = pneg %p261
        %p465 = pneg %p285
        %p466 = pneg %p282
        %p467 = pneg %p306
        %p468 = pneg %p303
        %p469 = pneg %p327
        %p470 = pneg %p324
        %p471 = pneg %p353
        %p472 = pneg %p350
        %s473 = sand.u32 %s340, 1
        %s474 = scalar_lea.sflag [#allocation3], %s473
        %s475 = sand.u32 %s340, 1
        %s476 = smul.addr %s475, 32
        %s477 = scalar_lea.vmem [#allocation2], %s476
        %s478 = smul.u32 32, %s28
        %p479 = scmp.lt.s32.totalorder %s478, 63
        %s480 = scalar_select %p479, %s478, 63
        %s481 = smul.addr %s480, 8
        %s482 = scalar_lea.vmem %s0, %s481
        %s483 = smul.u32 32, %s28
        %s484 = smul.u32 4, %s28
        %p485 = scmp.lt.s32.totalorder %s484, 7
        %s486 = scalar_select %p485, %s484, 7
        %s487 = smul.addr %s486, 8
        %s488 = scalar_lea.vmem %s1, %s487
        %s489 = smul.u32 4, %s28
        %s490 = smul.u32 4, %s28
        %v491 = vld [vmem:[%s482] sm:$0xff]
        %v492 = vld [vmem:[%s482 + $0x8] sm:$0xff]
        %v493 = vld [vmem:[%s482 + $0x10] sm:$0xff]
        %v494 = vld [vmem:[%s482 + $0x18] sm:$0xff]
        %v495 = vld [vmem:[%s482 + $0x20] sm:$0xff]
        %v496 = vld [vmem:[%s482 + $0x28] sm:$0xff]
        %v497 = vld [vmem:[%s482 + $0x30] sm:$0xff]
        %v498 = vld [vmem:[%s482 + $0x38] sm:$0xff]
        %v499 = vld [vmem:[%s482 + $0x40] sm:$0xff]
        %v500 = vld [vmem:[%s482 + $0x48] sm:$0xff]
        %v501 = vld [vmem:[%s482 + $0x50] sm:$0xff]
        %v502 = vld [vmem:[%s482 + $0x58] sm:$0xff]
        %v503 = vld [vmem:[%s482 + $0x60] sm:$0xff]
        %v504 = vld [vmem:[%s482 + $0x68] sm:$0xff]
        %v505 = vld [vmem:[%s482 + $0x70] sm:$0xff]
        %v506 = vld [vmem:[%s482 + $0x78] sm:$0xff]
        %v507 = vld [vmem:[%s482 + $0x80] sm:$0xff]
        %v508 = vld [vmem:[%s482 + $0x88] sm:$0xff]
        %v509 = vld [vmem:[%s482 + $0x90] sm:$0xff]
        %v510 = vld [vmem:[%s482 + $0x98] sm:$0xff]
        %v511 = vld [vmem:[%s482 + $0xa0] sm:$0xff]
        %v512 = vld [vmem:[%s482 + $0xa8] sm:$0xff]
        %v513 = vld [vmem:[%s482 + $0xb0] sm:$0xff]
        %v514 = vld [vmem:[%s482 + $0xb8] sm:$0xff]
        %v515 = vld [vmem:[%s482 + $0xc0] sm:$0xff]
        %v516 = vld [vmem:[%s482 + $0xc8] sm:$0xff]
        %v517 = vld [vmem:[%s482 + $0xd0] sm:$0xff]
        %v518 = vld [vmem:[%s482 + $0xd8] sm:$0xff]
        %v519 = vld [vmem:[%s482 + $0xe0] sm:$0xff]
        %v520 = vld [vmem:[%s482 + $0xe8] sm:$0xff]
        %v521 = vld [vmem:[%s482 + $0xf0] sm:$0xff]
        %v522 = vld [vmem:[%s482 + $0xf8] sm:$0xff]
        %v523 = vld [vmem:[%s3] sm:$0xff]
        %v524 = vld [vmem:[%s3 + $0x8] sm:$0xff]
        %v525 = vld [vmem:[%s3 + $0x10] sm:$0xff]
        %v526 = vld [vmem:[%s2] sm:$0xff]
        %v527 = vld [vmem:[%s2 + $0x8] sm:$0xff]
        %v528 = vld [vmem:[%s2 + $0x10] sm:$0xff]
        %v529 = vld [vmem:[%s2 + $0x18] sm:$0xff]
        %v530 = vld [vmem:[%s2 + $0x20] sm:$0xff]
        %v531 = vld [vmem:[%s2 + $0x28] sm:$0xff]
        %v532 = vld [vmem:[%s2 + $0x30] sm:$0xff]
        %v533 = vld [vmem:[%s2 + $0x38] sm:$0xff]
        %v534 = vld [vmem:[%s2 + $0x40] sm:$0xff]
        %v535 = vld [vmem:[%s2 + $0x48] sm:$0xff]
        %v536 = vld [vmem:[%s2 + $0x50] sm:$0xff]
        %v537 = vld [vmem:[%s2 + $0x58] sm:$0xff]
        %v538 = vld [vmem:[%s2 + $0x60] sm:$0xff]
        %v539 = vld [vmem:[%s2 + $0x68] sm:$0xff]
        %v540 = vld [vmem:[%s2 + $0x70] sm:$0xff]
        %v541 = vld [vmem:[%s2 + $0x78] sm:$0xff]
        %v542 = vld [vmem:[%s2 + $0x80] sm:$0xff]
        %v543 = vld [vmem:[%s2 + $0x88] sm:$0xff]
        %v544 = vld [vmem:[%s2 + $0x90] sm:$0xff]
        %v545 = vld [vmem:[%s2 + $0x98] sm:$0xff]
        %v546 = vld [vmem:[%s2 + $0xa0] sm:$0xff]
        %v547 = vld [vmem:[%s2 + $0xa8] sm:$0xff]
        %v548 = vld [vmem:[%s2 + $0xb0] sm:$0xff]
        %v549 = vld [vmem:[%s2 + $0xb8] sm:$0xff]
        %v550 = vld [vmem:[%s2 + $0xc0] sm:$0xff]
        %v551 = vld [vmem:[%s2 + $0xc8] sm:$0xff]
        %v552 = vld [vmem:[%s2 + $0xd0] sm:$0xff]
        %v553 = vld [vmem:[%s2 + $0xd8] sm:$0xff]
        %v554 = vld [vmem:[%s2 + $0xe0] sm:$0xff]
        %v555 = vld [vmem:[%s2 + $0xe8] sm:$0xff]
        %v556 = vld [vmem:[%s2 + $0xf0] sm:$0xff]
        %v557 = vld [vmem:[%s2 + $0xf8] sm:$0xff]
        %vm558 = vcmask 195584
        %v560 = vsel %vm558, %v491, 0
        %v563 = vsel %vm558, %v492, 0
        %v566 = vsel %vm558, %v493, 0
        %v569 = vsel %vm558, %v494, 0
        %v572 = vsel %vm558, %v495, 0
        %v575 = vsel %vm558, %v496, 0
        %v578 = vsel %vm558, %v497, 0
        %v581 = vsel %vm558, %v498, 0
        %v584 = vsel %vm558, %v499, 0
        %v587 = vsel %vm558, %v500, 0
        %v590 = vsel %vm558, %v501, 0
        %v593 = vsel %vm558, %v502, 0
        %v596 = vsel %vm558, %v503, 0
        %v599 = vsel %vm558, %v504, 0
        %v602 = vsel %vm558, %v505, 0
        %v605 = vsel %vm558, %v506, 0
        %v608 = vsel %vm558, %v507, 0
        %v611 = vsel %vm558, %v508, 0
        %v614 = vsel %vm558, %v509, 0
        %v617 = vsel %vm558, %v510, 0
        %v620 = vsel %vm558, %v511, 0
        %v623 = vsel %vm558, %v512, 0
        %v626 = vsel %vm558, %v513, 0
        %v629 = vsel %vm558, %v514, 0
        %v632 = vsel %vm558, %v515, 0
        %v635 = vsel %vm558, %v516, 0
        %v638 = vsel %vm558, %v517, 0
        %v641 = vsel %vm558, %v518, 0
        %v644 = vsel %vm558, %v519, 0
        %v647 = vsel %vm558, %v520, 0
        %v650 = vsel %vm558, %v521, 0
        %v653 = vsel %vm558, %v522, 0
        %655 = vmatprep.subr.mxu0 0.0
        %656 = vmatpush1.msra.mxu0 0.0
        %657 = vmatprep.subr.mxu0 0.0
        %658 = vmatpush1.msra.mxu0 0.0
        %659 = vmatprep.subr.mxu0 0.0
        %660 = vmatpush1.msra.mxu0 0.0
        %661 = vmatprep.subr.mxu0 0.0
        %662 = vmatpush1.msra.mxu0 0.0
        %663 = vmatprep.subr.mxu0 0.0
        %664 = vmatpush1.msra.mxu0 0.0
        %665 = vmatprep.subr.mxu0 0.0
        %666 = vmatpush1.msra.mxu0 0.0
        %667 = vmatprep.subr.mxu0 0.0
        %668 = vmatpush1.msra.mxu0 0.0
        %669 = vmatprep.subr.mxu0 0.0
        %670 = vmatpush1.msra.mxu0 0.0
        %671 = vmatprep.subr.mxu0 0.0
        %672 = vmatpush1.msra.mxu0 0.0
        %673 = vmatprep.subr.mxu0 0.0
        %674 = vmatpush1.msra.mxu0 0.0
        %675 = vmatprep.subr.mxu0 0.0
        %676 = vmatpush1.msra.mxu0 0.0
        %677 = vmatprep.subr.mxu0 0.0
        %678 = vmatpush1.msra.mxu0 0.0
        %679 = vmatprep.subr.mxu0 0.0
        %680 = vmatpush1.msra.mxu0 0.0
        %681 = vmatprep.subr.mxu0 0.0
        %682 = vmatpush1.msra.mxu0 %v525
        %683 = vmatprep.subr.mxu0 0.0
        %684 = vmatpush1.msra.mxu0 %v524
        %685 = vmatprep.subr.mxu0 0.0
        %686 = vmatpush1.msra.mxu0 %v523
        %687 = vmatprep.subr.mxu0 0.0
        %688 = vmatpush2.msra.mxu0 0.0
        %689 = vmatprep.subr.mxu0 0.0
        %690 = vmatpush2.msra.mxu0 0.0
        %691 = vmatprep.subr.mxu0 0.0
        %692 = vmatpush2.msra.mxu0 0.0
        %693 = vmatprep.subr.mxu0 0.0
        %694 = vmatpush2.msra.mxu0 0.0
        %695 = vmatprep.subr.mxu0 0.0
        %696 = vmatpush2.msra.mxu0 0.0
        %697 = vmatprep.subr.mxu0 0.0
        %698 = vmatpush2.msra.mxu0 0.0
        %699 = vmatprep.subr.mxu0 0.0
        %700 = vmatpush2.msra.mxu0 0.0
        %701 = vmatprep.subr.mxu0 0.0
        %702 = vmatpush2.msra.mxu0 0.0
        %703 = vmatprep.subr.mxu0 0.0
        %704 = vmatpush2.msra.mxu0 0.0
        %705 = vmatprep.subr.mxu0 0.0
        %706 = vmatpush2.msra.mxu0 0.0
        %707 = vmatprep.subr.mxu0 0.0
        %708 = vmatpush2.msra.mxu0 0.0
        %709 = vmatprep.subr.mxu0 0.0
        %710 = vmatpush2.msra.mxu0 0.0
        %711 = vmatprep.subr.mxu0 0.0
        %712 = vmatpush2.msra.mxu0 0.0
        %713 = vmatprep.subr.mxu0 0.0
        %714 = vmatpush2.msra.mxu0 0.0
        %715 = vmatprep.subr.mxu0 0.0
        %716 = vmatpush2.msra.mxu0 0.0
        %717 = vmatprep.subr.mxu0 0.0
        %718 = vmatpush2.msra.mxu0 0.0
        %719 = vmatprep.mubr.f32.mxu0 0.0
        %720 = vmatmul.mubr.f32.gmra.mxu0 %v560
        %v721 = vpop.f32.mrf.mxu0
        %v722 = vadd.f32 %v526, %v721
        %v723 = vpop.f32.mrf.mxu0
        %724 = vmatprep.mubr.f32.mxu0 0.0
        %725 = vmatmul.mubr.f32.gmra.mxu0 %v563
        %v726 = vpop.f32.mrf.mxu0
        %v727 = vadd.f32 %v527, %v726
        %v728 = vpop.f32.mrf.mxu0
        %729 = vmatprep.mubr.f32.mxu0 0.0
        %730 = vmatmul.mubr.f32.gmra.mxu0 %v566
        %v731 = vpop.f32.mrf.mxu0
        %v732 = vadd.f32 %v528, %v731
        %v733 = vpop.f32.mrf.mxu0
        %734 = vmatprep.mubr.f32.mxu0 0.0
        %735 = vmatmul.mubr.f32.gmra.mxu0 %v569
        %v736 = vpop.f32.mrf.mxu0
        %v737 = vadd.f32 %v529, %v736
        %v738 = vpop.f32.mrf.mxu0
        %739 = vmatprep.mubr.f32.mxu0 0.0
        %740 = vmatmul.mubr.f32.gmra.mxu0 %v572
        %v741 = vpop.f32.mrf.mxu0
        %v742 = vadd.f32 %v530, %v741
        %v743 = vpop.f32.mrf.mxu0
        %744 = vmatprep.mubr.f32.mxu0 0.0
        %745 = vmatmul.mubr.f32.gmra.mxu0 %v575
        %v746 = vpop.f32.mrf.mxu0
        %v747 = vadd.f32 %v531, %v746
        %v748 = vpop.f32.mrf.mxu0
        %749 = vmatprep.mubr.f32.mxu0 0.0
        %750 = vmatmul.mubr.f32.gmra.mxu0 %v578
        %v751 = vpop.f32.mrf.mxu0
        %v752 = vadd.f32 %v532, %v751
        %v753 = vpop.f32.mrf.mxu0
        %754 = vmatprep.mubr.f32.mxu0 0.0
        %755 = vmatmul.mubr.f32.gmra.mxu0 %v581
        %v756 = vpop.f32.mrf.mxu0
        %v757 = vadd.f32 %v533, %v756
        %v758 = vpop.f32.mrf.mxu0
        %759 = vmatprep.mubr.f32.mxu0 0.0
        %760 = vmatmul.mubr.f32.gmra.mxu0 %v584
        %v761 = vpop.f32.mrf.mxu0
        %v762 = vadd.f32 %v534, %v761
        %v763 = vpop.f32.mrf.mxu0
        %764 = vmatprep.mubr.f32.mxu0 0.0
        %765 = vmatmul.mubr.f32.gmra.mxu0 %v587
        %v766 = vpop.f32.mrf.mxu0
        %v767 = vadd.f32 %v535, %v766
        %v768 = vpop.f32.mrf.mxu0
        %769 = vmatprep.mubr.f32.mxu0 0.0
        %770 = vmatmul.mubr.f32.gmra.mxu0 %v590
        %v771 = vpop.f32.mrf.mxu0
        %v772 = vadd.f32 %v536, %v771
        %v773 = vpop.f32.mrf.mxu0
        %774 = vmatprep.mubr.f32.mxu0 0.0
        %775 = vmatmul.mubr.f32.gmra.mxu0 %v593
        %v776 = vpop.f32.mrf.mxu0
        %v777 = vadd.f32 %v537, %v776
        %v778 = vpop.f32.mrf.mxu0
        %779 = vmatprep.mubr.f32.mxu0 0.0
        %780 = vmatmul.mubr.f32.gmra.mxu0 %v596
        %v781 = vpop.f32.mrf.mxu0
        %v782 = vadd.f32 %v538, %v781
        %v783 = vpop.f32.mrf.mxu0
        %784 = vmatprep.mubr.f32.mxu0 0.0
        %785 = vmatmul.mubr.f32.gmra.mxu0 %v599
        %v786 = vpop.f32.mrf.mxu0
        %v787 = vadd.f32 %v539, %v786
        %v788 = vpop.f32.mrf.mxu0
        %789 = vmatprep.mubr.f32.mxu0 0.0
        %790 = vmatmul.mubr.f32.gmra.mxu0 %v602
        %v791 = vpop.f32.mrf.mxu0
        %v792 = vadd.f32 %v540, %v791
        %v793 = vpop.f32.mrf.mxu0
        %794 = vmatprep.mubr.f32.mxu0 0.0
        %795 = vmatmul.mubr.f32.gmra.mxu0 %v605
        %v796 = vpop.f32.mrf.mxu0
        %v797 = vadd.f32 %v541, %v796
        %v798 = vpop.f32.mrf.mxu0
        %799 = vmatprep.mubr.f32.mxu0 0.0
        %800 = vmatmul.mubr.f32.gmra.mxu0 %v608
        %v801 = vpop.f32.mrf.mxu0
        %v802 = vadd.f32 %v542, %v801
        %v803 = vpop.f32.mrf.mxu0
        %804 = vmatprep.mubr.f32.mxu0 0.0
        %805 = vmatmul.mubr.f32.gmra.mxu0 %v611
        %v806 = vpop.f32.mrf.mxu0
        %v807 = vadd.f32 %v543, %v806
        %v808 = vpop.f32.mrf.mxu0
        %809 = vmatprep.mubr.f32.mxu0 0.0
        %810 = vmatmul.mubr.f32.gmra.mxu0 %v614
        %v811 = vpop.f32.mrf.mxu0
        %v812 = vadd.f32 %v544, %v811
        %v813 = vpop.f32.mrf.mxu0
        %814 = vmatprep.mubr.f32.mxu0 0.0
        %815 = vmatmul.mubr.f32.gmra.mxu0 %v617
        %v816 = vpop.f32.mrf.mxu0
        %v817 = vadd.f32 %v545, %v816
        %v818 = vpop.f32.mrf.mxu0
        %819 = vmatprep.mubr.f32.mxu0 0.0
        %820 = vmatmul.mubr.f32.gmra.mxu0 %v620
        %v821 = vpop.f32.mrf.mxu0
        %v822 = vadd.f32 %v546, %v821
        %v823 = vpop.f32.mrf.mxu0
        %824 = vmatprep.mubr.f32.mxu0 0.0
        %825 = vmatmul.mubr.f32.gmra.mxu0 %v623
        %v826 = vpop.f32.mrf.mxu0
        %v827 = vadd.f32 %v547, %v826
        %v828 = vpop.f32.mrf.mxu0
        %829 = vmatprep.mubr.f32.mxu0 0.0
        %830 = vmatmul.mubr.f32.gmra.mxu0 %v626
        %v831 = vpop.f32.mrf.mxu0
        %v832 = vadd.f32 %v548, %v831
        %v833 = vpop.f32.mrf.mxu0
        %834 = vmatprep.mubr.f32.mxu0 0.0
        %835 = vmatmul.mubr.f32.gmra.mxu0 %v629
        %v836 = vpop.f32.mrf.mxu0
        %v837 = vadd.f32 %v549, %v836
        %v838 = vpop.f32.mrf.mxu0
        %839 = vmatprep.mubr.f32.mxu0 0.0
        %840 = vmatmul.mubr.f32.gmra.mxu0 %v632
        %v841 = vpop.f32.mrf.mxu0
        %v842 = vadd.f32 %v550, %v841
        %v843 = vpop.f32.mrf.mxu0
        %844 = vmatprep.mubr.f32.mxu0 0.0
        %845 = vmatmul.mubr.f32.gmra.mxu0 %v635
        %v846 = vpop.f32.mrf.mxu0
        %v847 = vadd.f32 %v551, %v846
        %v848 = vpop.f32.mrf.mxu0
        %849 = vmatprep.mubr.f32.mxu0 0.0
        %850 = vmatmul.mubr.f32.gmra.mxu0 %v638
        %v851 = vpop.f32.mrf.mxu0
        %v852 = vadd.f32 %v552, %v851
        %v853 = vpop.f32.mrf.mxu0
        %854 = vmatprep.mubr.f32.mxu0 0.0
        %855 = vmatmul.mubr.f32.gmra.mxu0 %v641
        %v856 = vpop.f32.mrf.mxu0
        %v857 = vadd.f32 %v553, %v856
        %v858 = vpop.f32.mrf.mxu0
        %859 = vmatprep.mubr.f32.mxu0 0.0
        %860 = vmatmul.mubr.f32.gmra.mxu0 %v644
        %v861 = vpop.f32.mrf.mxu0
        %v862 = vadd.f32 %v554, %v861
        %v863 = vpop.f32.mrf.mxu0
        %864 = vmatprep.mubr.f32.mxu0 0.0
        %865 = vmatmul.mubr.f32.gmra.mxu0 %v647
        %v866 = vpop.f32.mrf.mxu0
        %v867 = vadd.f32 %v555, %v866
        %v868 = vpop.f32.mrf.mxu0
        %869 = vmatprep.mubr.f32.mxu0 0.0
        %870 = vmatmul.mubr.f32.gmra.mxu0 %v650
        %v871 = vpop.f32.mrf.mxu0
        %v872 = vadd.f32 %v556, %v871
        %v873 = vpop.f32.mrf.mxu0
        %874 = vmatprep.mubr.f32.mxu0 0.0
        %875 = vmatmul.mubr.f32.gmra.mxu0 %v653
        %v876 = vpop.f32.mrf.mxu0
        %v877 = vadd.f32 %v557, %v876
        %v878 = vpop.f32.mrf.mxu0
        %879 = vdwg.mxu0
        %v880 = vld [vmem:[%s488] sm:$0xff]
        %v881 = vld [vmem:[%s488 + $0x8] sm:$0xff]
        %v882 = vld [vmem:[%s488 + $0x10] sm:$0xff]
        %v883 = vld [vmem:[%s488 + $0x18] sm:$0xff]
        %v884 = vld [vmem:[%s9] sm:$0x1]
        %v885 = vlaneseq
        %v886 = vshrl.u32 %v885, 7
        %v887 = vsub.s32 0, %v886
        %v888 = vrot.slane %v884, %v887
        %v890 = vsel %vm558, %v880, 0
        %v893 = vsel %vm558, %v881, 0
        %v896 = vsel %vm558, %v882, 0
        %v899 = vsel %vm558, %v883, 0
        %901 = vmatprep.subr.mxu0 0.0
        %902 = vmatpush1.msra.mxu0 0.0
        %903 = vmatprep.subr.mxu0 0.0
        %904 = vmatpush1.msra.mxu0 0.0
        %905 = vmatprep.subr.mxu0 0.0
        %906 = vmatpush1.msra.mxu0 0.0
        %907 = vmatprep.subr.mxu0 0.0
        %908 = vmatpush1.msra.mxu0 0.0
        %909 = vmatprep.subr.mxu0 0.0
        %910 = vmatpush1.msra.mxu0 0.0
        %911 = vmatprep.subr.mxu0 0.0
        %912 = vmatpush1.msra.mxu0 0.0
        %913 = vmatprep.subr.mxu0 0.0
        %914 = vmatpush1.msra.mxu0 0.0
        %915 = vmatprep.subr.mxu0 0.0
        %916 = vmatpush1.msra.mxu0 0.0
        %917 = vmatprep.subr.mxu0 0.0
        %918 = vmatpush1.msra.mxu0 0.0
        %919 = vmatprep.subr.mxu0 0.0
        %920 = vmatpush1.msra.mxu0 0.0
        %921 = vmatprep.subr.mxu0 0.0
        %922 = vmatpush1.msra.mxu0 0.0
        %923 = vmatprep.subr.mxu0 0.0
        %924 = vmatpush1.msra.mxu0 0.0
        %925 = vmatprep.subr.mxu0 0.0
        %926 = vmatpush1.msra.mxu0 0.0
        %927 = vmatprep.subr.mxu0 0.0
        %928 = vmatpush1.msra.mxu0 %v525
        %929 = vmatprep.subr.mxu0 0.0
        %930 = vmatpush1.msra.mxu0 %v524
        %931 = vmatprep.subr.mxu0 0.0
        %932 = vmatpush1.msra.mxu0 %v523
        %933 = vmatprep.subr.mxu0 0.0
        %934 = vmatpush2.msra.mxu0 0.0
        %935 = vmatprep.subr.mxu0 0.0
        %936 = vmatpush2.msra.mxu0 0.0
        %937 = vmatprep.subr.mxu0 0.0
        %938 = vmatpush2.msra.mxu0 0.0
        %939 = vmatprep.subr.mxu0 0.0
        %940 = vmatpush2.msra.mxu0 0.0
        %941 = vmatprep.subr.mxu0 0.0
        %942 = vmatpush2.msra.mxu0 0.0
        %943 = vmatprep.subr.mxu0 0.0
        %944 = vmatpush2.msra.mxu0 0.0
        %945 = vmatprep.subr.mxu0 0.0
        %946 = vmatpush2.msra.mxu0 0.0
        %947 = vmatprep.subr.mxu0 0.0
        %948 = vmatpush2.msra.mxu0 0.0
        %949 = vmatprep.subr.mxu0 0.0
        %950 = vmatpush2.msra.mxu0 0.0
        %951 = vmatprep.subr.mxu0 0.0
        %952 = vmatpush2.msra.mxu0 0.0
        %953 = vmatprep.subr.mxu0 0.0
        %954 = vmatpush2.msra.mxu0 0.0
        %955 = vmatprep.subr.mxu0 0.0
        %956 = vmatpush2.msra.mxu0 0.0
        %957 = vmatprep.subr.mxu0 0.0
        %958 = vmatpush2.msra.mxu0 0.0
        %959 = vmatprep.subr.mxu0 0.0
        %960 = vmatpush2.msra.mxu0 0.0
        %961 = vmatprep.subr.mxu0 0.0
        %962 = vmatpush2.msra.mxu0 0.0
        %963 = vmatprep.subr.mxu0 0.0
        %964 = vmatpush2.msra.mxu0 0.0
        %965 = vmatprep.mubr.f32.mxu0 0.0
        %966 = vmatmul.mubr.f32.gmra.mxu0 %v890
        %v967 = vpop.f32.mrf.mxu0
        %v968 = vadd.f32 %v888, %v967
        %v969 = vpop.f32.mrf.mxu0
        %970 = vmatprep.mubr.f32.mxu0 0.0
        %971 = vmatmul.mubr.f32.gmra.mxu0 %v893
        %v972 = vpop.f32.mrf.mxu0
        %v973 = vadd.f32 %v888, %v972
        %v974 = vpop.f32.mrf.mxu0
        %975 = vmatprep.mubr.f32.mxu0 0.0
        %976 = vmatmul.mubr.f32.gmra.mxu0 %v896
        %v977 = vpop.f32.mrf.mxu0
        %v978 = vadd.f32 %v888, %v977
        %v979 = vpop.f32.mrf.mxu0
        %980 = vmatprep.mubr.f32.mxu0 0.0
        %981 = vmatmul.mubr.f32.gmra.mxu0 %v899
        %v982 = vpop.f32.mrf.mxu0
        %v983 = vadd.f32 %v888, %v982
        %v984 = vpop.f32.mrf.mxu0
        %985 = vdwg.mxu0
        %v986 = vld [vmem:[%s4] sm:$0xff]
        %v987 = vld [vmem:[%s4 + $0x8] sm:$0xff]
        %v988 = vld [vmem:[%s4 + $0x10] sm:$0xff]
        %v989 = vld [vmem:[%s4 + $0x18] sm:$0xff]
        %v990 = vld [vmem:[%s4 + $0x20] sm:$0xff]
        %v991 = vld [vmem:[%s4 + $0x28] sm:$0xff]
        %v992 = vld [vmem:[%s4 + $0x30] sm:$0xff]
        %v993 = vld [vmem:[%s4 + $0x38] sm:$0xff]
        %v994 = vld [vmem:[%s4 + $0x40] sm:$0xff]
        %v995 = vld [vmem:[%s4 + $0x48] sm:$0xff]
        %v996 = vld [vmem:[%s4 + $0x50] sm:$0xff]
        %v997 = vld [vmem:[%s4 + $0x58] sm:$0xff]
        %v998 = vld [vmem:[%s4 + $0x60] sm:$0xff]
        %v999 = vld [vmem:[%s4 + $0x68] sm:$0xff]
        %v1000 = vld [vmem:[%s4 + $0x70] sm:$0xff]
        %v1001 = vld [vmem:[%s4 + $0x78] sm:$0xff]
        %v1002 = vld [vmem:[%s4 + $0x80] sm:$0xff]
        %v1003 = vld [vmem:[%s4 + $0x88] sm:$0xff]
        %v1004 = vld [vmem:[%s4 + $0x90] sm:$0xff]
        %v1005 = vld [vmem:[%s4 + $0x98] sm:$0xff]
        %v1006 = vld [vmem:[%s4 + $0xa0] sm:$0xff]
        %v1007 = vld [vmem:[%s4 + $0xa8] sm:$0xff]
        %v1008 = vld [vmem:[%s4 + $0xb0] sm:$0xff]
        %v1009 = vld [vmem:[%s4 + $0xb8] sm:$0xff]
        %v1010 = vld [vmem:[%s5] sm:$0x3]
        %v1012 = vlaneseq
        %v1013 = vshrl.u32 %v1012, 7
        %v1014 = vsub.s32 0, %v1013
        %v1015 = vrot.slane %v1010, %v1014
        %v1016 = vlaneseq
        %v1017 = vshrl.u32 %v1016, 7
        %v1018 = vsub.s32 1, %v1017
        %v1019 = vrot.slane %v1010, %v1018
        %vm1022 = vcmask 785408
        %v1024 = vsel %vm1022, %v722, 0
        %v1027 = vsel %vm1022, %v727, 0
        %v1030 = vsel %vm1022, %v732, 0
        %v1033 = vsel %vm1022, %v737, 0
        %v1036 = vsel %vm1022, %v742, 0
        %v1039 = vsel %vm1022, %v747, 0
        %v1042 = vsel %vm1022, %v752, 0
        %v1045 = vsel %vm1022, %v757, 0
        %v1048 = vsel %vm1022, %v762, 0
        %v1051 = vsel %vm1022, %v767, 0
        %v1054 = vsel %vm1022, %v772, 0
        %v1057 = vsel %vm1022, %v777, 0
        %v1060 = vsel %vm1022, %v782, 0
        %v1063 = vsel %vm1022, %v787, 0
        %v1066 = vsel %vm1022, %v792, 0
        %v1069 = vsel %vm1022, %v797, 0
        %v1072 = vsel %vm1022, %v802, 0
        %v1075 = vsel %vm1022, %v807, 0
        %v1078 = vsel %vm1022, %v812, 0
        %v1081 = vsel %vm1022, %v817, 0
        %v1084 = vsel %vm1022, %v822, 0
        %v1087 = vsel %vm1022, %v827, 0
        %v1090 = vsel %vm1022, %v832, 0
        %v1093 = vsel %vm1022, %v837, 0
        %v1096 = vsel %vm1022, %v842, 0
        %v1099 = vsel %vm1022, %v847, 0
        %v1102 = vsel %vm1022, %v852, 0
        %v1105 = vsel %vm1022, %v857, 0
        %v1108 = vsel %vm1022, %v862, 0
        %v1111 = vsel %vm1022, %v867, 0
        %v1114 = vsel %vm1022, %v872, 0
        %v1117 = vsel %vm1022, %v877, 0
        %1119 = vmatprep.subr.mxu0 0.0
        %1120 = vmatpush1.msra.mxu0 0.0
        %1121 = vmatprep.subr.mxu0 0.0
        %1122 = vmatpush1.msra.mxu0 0.0
        %1123 = vmatprep.subr.mxu0 0.0
        %1124 = vmatpush1.msra.mxu0 0.0
        %1125 = vmatprep.subr.mxu0 0.0
        %1126 = vmatpush1.msra.mxu0 0.0
        %1127 = vmatprep.subr.mxu0 %v1009
        %1128 = vmatpush1.msra.mxu0 %v1008
        %1129 = vmatprep.subr.mxu0 %v1007
        %1130 = vmatpush1.msra.mxu0 %v1006
        %1131 = vmatprep.subr.mxu0 %v1005
        %1132 = vmatpush1.msra.mxu0 %v1004
        %1133 = vmatprep.subr.mxu0 %v1003
        %1134 = vmatpush1.msra.mxu0 %v1002
        %1135 = vmatprep.subr.mxu0 %v1001
        %1136 = vmatpush1.msra.mxu0 %v1000
        %1137 = vmatprep.subr.mxu0 %v999
        %1138 = vmatpush1.msra.mxu0 %v998
        %1139 = vmatprep.subr.mxu0 %v997
        %1140 = vmatpush1.msra.mxu0 %v996
        %1141 = vmatprep.subr.mxu0 %v995
        %1142 = vmatpush1.msra.mxu0 %v994
        %1143 = vmatprep.subr.mxu0 %v993
        %1144 = vmatpush1.msra.mxu0 %v992
        %1145 = vmatprep.subr.mxu0 %v991
        %1146 = vmatpush1.msra.mxu0 %v990
        %1147 = vmatprep.subr.mxu0 %v989
        %1148 = vmatpush1.msra.mxu0 %v988
        %1149 = vmatprep.subr.mxu0 %v987
        %1150 = vmatpush1.msra.mxu0 %v986
        %1151 = vmatprep.subr.mxu0 0.0
        %1152 = vmatpush2.msra.mxu0 0.0
        %1153 = vmatprep.subr.mxu0 0.0
        %1154 = vmatpush2.msra.mxu0 0.0
        %1155 = vmatprep.subr.mxu0 0.0
        %1156 = vmatpush2.msra.mxu0 0.0
        %1157 = vmatprep.subr.mxu0 0.0
        %1158 = vmatpush2.msra.mxu0 0.0
        %1159 = vmatprep.subr.mxu0 0.0
        %1160 = vmatpush2.msra.mxu0 0.0
        %1161 = vmatprep.subr.mxu0 0.0
        %1162 = vmatpush2.msra.mxu0 0.0
        %1163 = vmatprep.subr.mxu0 0.0
        %1164 = vmatpush2.msra.mxu0 0.0
        %1165 = vmatprep.subr.mxu0 0.0
        %1166 = vmatpush2.msra.mxu0 0.0
        %1167 = vmatprep.subr.mxu0 0.0
        %1168 = vmatpush2.msra.mxu0 0.0
        %1169 = vmatprep.subr.mxu0 0.0
        %1170 = vmatpush2.msra.mxu0 0.0
        %1171 = vmatprep.subr.mxu0 0.0
        %1172 = vmatpush2.msra.mxu0 0.0
        %1173 = vmatprep.subr.mxu0 0.0
        %1174 = vmatpush2.msra.mxu0 0.0
        %1175 = vmatprep.subr.mxu0 0.0
        %1176 = vmatpush2.msra.mxu0 0.0
        %1177 = vmatprep.subr.mxu0 0.0
        %1178 = vmatpush2.msra.mxu0 0.0
        %1179 = vmatprep.subr.mxu0 0.0
        %1180 = vmatpush2.msra.mxu0 0.0
        %1181 = vmatprep.subr.mxu0 0.0
        %1182 = vmatpush2.msra.mxu0 0.0
        %1183 = vmatprep.mubr.f32.mxu0 0.0
        %1184 = vmatmul.mubr.f32.gmra.mxu0 %v1024
        %v1185 = vpop.f32.mrf.mxu0
        %v1186 = vadd.f32 %v1015, %v1185
        %v1187 = vpop.f32.mrf.mxu0
        %v1188 = vadd.f32 %v1019, %v1187
        %1189 = vmatprep.mubr.f32.mxu0 0.0
        %1190 = vmatmul.mubr.f32.gmra.mxu0 %v1027
        %v1191 = vpop.f32.mrf.mxu0
        %v1192 = vadd.f32 %v1015, %v1191
        %v1193 = vpop.f32.mrf.mxu0
        %v1194 = vadd.f32 %v1019, %v1193
        %1195 = vmatprep.mubr.f32.mxu0 0.0
        %1196 = vmatmul.mubr.f32.gmra.mxu0 %v1030
        %v1197 = vpop.f32.mrf.mxu0
        %v1198 = vadd.f32 %v1015, %v1197
        %v1199 = vpop.f32.mrf.mxu0
        %v1200 = vadd.f32 %v1019, %v1199
        %1201 = vmatprep.mubr.f32.mxu0 0.0
        %1202 = vmatmul.mubr.f32.gmra.mxu0 %v1033
        %v1203 = vpop.f32.mrf.mxu0
        %v1204 = vadd.f32 %v1015, %v1203
        %v1205 = vpop.f32.mrf.mxu0
        %v1206 = vadd.f32 %v1019, %v1205
        %1207 = vmatprep.mubr.f32.mxu0 0.0
        %1208 = vmatmul.mubr.f32.gmra.mxu0 %v1036
        %v1209 = vpop.f32.mrf.mxu0
        %v1210 = vadd.f32 %v1015, %v1209
        %v1211 = vpop.f32.mrf.mxu0
        %v1212 = vadd.f32 %v1019, %v1211
        %1213 = vmatprep.mubr.f32.mxu0 0.0
        %1214 = vmatmul.mubr.f32.gmra.mxu0 %v1039
        %v1215 = vpop.f32.mrf.mxu0
        %v1216 = vadd.f32 %v1015, %v1215
        %v1217 = vpop.f32.mrf.mxu0
        %v1218 = vadd.f32 %v1019, %v1217
        %1219 = vmatprep.mubr.f32.mxu0 0.0
        %1220 = vmatmul.mubr.f32.gmra.mxu0 %v1042
        %v1221 = vpop.f32.mrf.mxu0
        %v1222 = vadd.f32 %v1015, %v1221
        %v1223 = vpop.f32.mrf.mxu0
        %v1224 = vadd.f32 %v1019, %v1223
        %1225 = vmatprep.mubr.f32.mxu0 0.0
        %1226 = vmatmul.mubr.f32.gmra.mxu0 %v1045
        %v1227 = vpop.f32.mrf.mxu0
        %v1228 = vadd.f32 %v1015, %v1227
        %v1229 = vpop.f32.mrf.mxu0
        %v1230 = vadd.f32 %v1019, %v1229
        %1231 = vmatprep.mubr.f32.mxu0 0.0
        %1232 = vmatmul.mubr.f32.gmra.mxu0 %v1048
        %v1233 = vpop.f32.mrf.mxu0
        %v1234 = vadd.f32 %v1015, %v1233
        %v1235 = vpop.f32.mrf.mxu0
        %v1236 = vadd.f32 %v1019, %v1235
        %1237 = vmatprep.mubr.f32.mxu0 0.0
        %1238 = vmatmul.mubr.f32.gmra.mxu0 %v1051
        %v1239 = vpop.f32.mrf.mxu0
        %v1240 = vadd.f32 %v1015, %v1239
        %v1241 = vpop.f32.mrf.mxu0
        %v1242 = vadd.f32 %v1019, %v1241
        %1243 = vmatprep.mubr.f32.mxu0 0.0
        %1244 = vmatmul.mubr.f32.gmra.mxu0 %v1054
        %v1245 = vpop.f32.mrf.mxu0
        %v1246 = vadd.f32 %v1015, %v1245
        %v1247 = vpop.f32.mrf.mxu0
        %v1248 = vadd.f32 %v1019, %v1247
        %1249 = vmatprep.mubr.f32.mxu0 0.0
        %1250 = vmatmul.mubr.f32.gmra.mxu0 %v1057
        %v1251 = vpop.f32.mrf.mxu0
        %v1252 = vadd.f32 %v1015, %v1251
        %v1253 = vpop.f32.mrf.mxu0
        %v1254 = vadd.f32 %v1019, %v1253
        %1255 = vmatprep.mubr.f32.mxu0 0.0
        %1256 = vmatmul.mubr.f32.gmra.mxu0 %v1060
        %v1257 = vpop.f32.mrf.mxu0
        %v1258 = vadd.f32 %v1015, %v1257
        %v1259 = vpop.f32.mrf.mxu0
        %v1260 = vadd.f32 %v1019, %v1259
        %1261 = vmatprep.mubr.f32.mxu0 0.0
        %1262 = vmatmul.mubr.f32.gmra.mxu0 %v1063
        %v1263 = vpop.f32.mrf.mxu0
        %v1264 = vadd.f32 %v1015, %v1263
        %v1265 = vpop.f32.mrf.mxu0
        %v1266 = vadd.f32 %v1019, %v1265
        %1267 = vmatprep.mubr.f32.mxu0 0.0
        %1268 = vmatmul.mubr.f32.gmra.mxu0 %v1066
        %v1269 = vpop.f32.mrf.mxu0
        %v1270 = vadd.f32 %v1015, %v1269
        %v1271 = vpop.f32.mrf.mxu0
        %v1272 = vadd.f32 %v1019, %v1271
        %1273 = vmatprep.mubr.f32.mxu0 0.0
        %1274 = vmatmul.mubr.f32.gmra.mxu0 %v1069
        %v1275 = vpop.f32.mrf.mxu0
        %v1276 = vadd.f32 %v1015, %v1275
        %v1277 = vpop.f32.mrf.mxu0
        %v1278 = vadd.f32 %v1019, %v1277
        %1279 = vmatprep.mubr.f32.mxu0 0.0
        %1280 = vmatmul.mubr.f32.gmra.mxu0 %v1072
        %v1281 = vpop.f32.mrf.mxu0
        %v1282 = vadd.f32 %v1015, %v1281
        %v1283 = vpop.f32.mrf.mxu0
        %v1284 = vadd.f32 %v1019, %v1283
        %1285 = vmatprep.mubr.f32.mxu0 0.0
        %1286 = vmatmul.mubr.f32.gmra.mxu0 %v1075
        %v1287 = vpop.f32.mrf.mxu0
        %v1288 = vadd.f32 %v1015, %v1287
        %v1289 = vpop.f32.mrf.mxu0
        %v1290 = vadd.f32 %v1019, %v1289
        %1291 = vmatprep.mubr.f32.mxu0 0.0
        %1292 = vmatmul.mubr.f32.gmra.mxu0 %v1078
        %v1293 = vpop.f32.mrf.mxu0
        %v1294 = vadd.f32 %v1015, %v1293
        %v1295 = vpop.f32.mrf.mxu0
        %v1296 = vadd.f32 %v1019, %v1295
        %1297 = vmatprep.mubr.f32.mxu0 0.0
        %1298 = vmatmul.mubr.f32.gmra.mxu0 %v1081
        %v1299 = vpop.f32.mrf.mxu0
        %v1300 = vadd.f32 %v1015, %v1299
        %v1301 = vpop.f32.mrf.mxu0
        %v1302 = vadd.f32 %v1019, %v1301
        %1303 = vmatprep.mubr.f32.mxu0 0.0
        %1304 = vmatmul.mubr.f32.gmra.mxu0 %v1084
        %v1305 = vpop.f32.mrf.mxu0
        %v1306 = vadd.f32 %v1015, %v1305
        %v1307 = vpop.f32.mrf.mxu0
        %v1308 = vadd.f32 %v1019, %v1307
        %1309 = vmatprep.mubr.f32.mxu0 0.0
        %1310 = vmatmul.mubr.f32.gmra.mxu0 %v1087
        %v1311 = vpop.f32.mrf.mxu0
        %v1312 = vadd.f32 %v1015, %v1311
        %v1313 = vpop.f32.mrf.mxu0
        %v1314 = vadd.f32 %v1019, %v1313
        %1315 = vmatprep.mubr.f32.mxu0 0.0
        %1316 = vmatmul.mubr.f32.gmra.mxu0 %v1090
        %v1317 = vpop.f32.mrf.mxu0
        %v1318 = vadd.f32 %v1015, %v1317
        %v1319 = vpop.f32.mrf.mxu0
        %v1320 = vadd.f32 %v1019, %v1319
        %1321 = vmatprep.mubr.f32.mxu0 0.0
        %1322 = vmatmul.mubr.f32.gmra.mxu0 %v1093
        %v1323 = vpop.f32.mrf.mxu0
        %v1324 = vadd.f32 %v1015, %v1323
        %v1325 = vpop.f32.mrf.mxu0
        %v1326 = vadd.f32 %v1019, %v1325
        %1327 = vmatprep.mubr.f32.mxu0 0.0
        %1328 = vmatmul.mubr.f32.gmra.mxu0 %v1096
        %v1329 = vpop.f32.mrf.mxu0
        %v1330 = vadd.f32 %v1015, %v1329
        %v1331 = vpop.f32.mrf.mxu0
        %v1332 = vadd.f32 %v1019, %v1331
        %1333 = vmatprep.mubr.f32.mxu0 0.0
        %1334 = vmatmul.mubr.f32.gmra.mxu0 %v1099
        %v1335 = vpop.f32.mrf.mxu0
        %v1336 = vadd.f32 %v1015, %v1335
        %v1337 = vpop.f32.mrf.mxu0
        %v1338 = vadd.f32 %v1019, %v1337
        %1339 = vmatprep.mubr.f32.mxu0 0.0
        %1340 = vmatmul.mubr.f32.gmra.mxu0 %v1102
        %v1341 = vpop.f32.mrf.mxu0
        %v1342 = vadd.f32 %v1015, %v1341
        %v1343 = vpop.f32.mrf.mxu0
        %v1344 = vadd.f32 %v1019, %v1343
        %1345 = vmatprep.mubr.f32.mxu0 0.0
        %1346 = vmatmul.mubr.f32.gmra.mxu0 %v1105
        %v1347 = vpop.f32.mrf.mxu0
        %v1348 = vadd.f32 %v1015, %v1347
        %v1349 = vpop.f32.mrf.mxu0
        %v1350 = vadd.f32 %v1019, %v1349
        %1351 = vmatprep.mubr.f32.mxu0 0.0
        %1352 = vmatmul.mubr.f32.gmra.mxu0 %v1108
        %v1353 = vpop.f32.mrf.mxu0
        %v1354 = vadd.f32 %v1015, %v1353
        %v1355 = vpop.f32.mrf.mxu0
        %v1356 = vadd.f32 %v1019, %v1355
        %1357 = vmatprep.mubr.f32.mxu0 0.0
        %1358 = vmatmul.mubr.f32.gmra.mxu0 %v1111
        %v1359 = vpop.f32.mrf.mxu0
        %v1360 = vadd.f32 %v1015, %v1359
        %v1361 = vpop.f32.mrf.mxu0
        %v1362 = vadd.f32 %v1019, %v1361
        %1363 = vmatprep.mubr.f32.mxu0 0.0
        %1364 = vmatmul.mubr.f32.gmra.mxu0 %v1114
        %v1365 = vpop.f32.mrf.mxu0
        %v1366 = vadd.f32 %v1015, %v1365
        %v1367 = vpop.f32.mrf.mxu0
        %v1368 = vadd.f32 %v1019, %v1367
        %1369 = vmatprep.mubr.f32.mxu0 0.0
        %1370 = vmatmul.mubr.f32.gmra.mxu0 %v1117
        %v1371 = vpop.f32.mrf.mxu0
        %v1372 = vadd.f32 %v1015, %v1371
        %v1373 = vpop.f32.mrf.mxu0
        %v1374 = vadd.f32 %v1019, %v1373
        %1375 = vdwg.mxu0
        %v1376 = vld [vmem:[%s6] sm:$0xff]
        %v1377 = vld [vmem:[%s6 + $0x8] sm:$0xff]
        %v1378 = vld [vmem:[%s6 + $0x10] sm:$0xff]
        %v1379 = vld [vmem:[%s6 + $0x18] sm:$0xff]
        %v1380 = vld [vmem:[%s6 + $0x20] sm:$0xff]
        %v1381 = vld [vmem:[%s6 + $0x28] sm:$0xff]
        %v1382 = vld [vmem:[%s6 + $0x30] sm:$0xff]
        %v1383 = vld [vmem:[%s6 + $0x38] sm:$0xff]
        %v1384 = vld [vmem:[%s6 + $0x40] sm:$0xff]
        %v1385 = vld [vmem:[%s6 + $0x48] sm:$0xff]
        %v1386 = vld [vmem:[%s6 + $0x50] sm:$0xff]
        %v1387 = vld [vmem:[%s6 + $0x58] sm:$0xff]
        %v1388 = vld [vmem:[%s7] sm:$0x1]
        %v1390 = vlaneseq
        %v1391 = vshrl.u32 %v1390, 7
        %v1392 = vsub.s32 0, %v1391
        %v1393 = vrot.slane %v1388, %v1392
        %v1396 = vsel %vm1022, %v968, 0
        %v1399 = vsel %vm1022, %v973, 0
        %v1402 = vsel %vm1022, %v978, 0
        %v1405 = vsel %vm1022, %v983, 0
        %1407 = vmatprep.subr.mxu0 0.0
        %1408 = vmatpush1.msra.mxu0 0.0
        %1409 = vmatprep.subr.mxu0 0.0
        %1410 = vmatpush1.msra.mxu0 0.0
        %1411 = vmatprep.subr.mxu0 0.0
        %1412 = vmatpush1.msra.mxu0 0.0
        %1413 = vmatprep.subr.mxu0 0.0
        %1414 = vmatpush1.msra.mxu0 0.0
        %1415 = vmatprep.subr.mxu0 0.0
        %1416 = vmatpush1.msra.mxu0 %v1387
        %1417 = vmatprep.subr.mxu0 0.0
        %1418 = vmatpush1.msra.mxu0 %v1386
        %1419 = vmatprep.subr.mxu0 0.0
        %1420 = vmatpush1.msra.mxu0 %v1385
        %1421 = vmatprep.subr.mxu0 0.0
        %1422 = vmatpush1.msra.mxu0 %v1384
        %1423 = vmatprep.subr.mxu0 0.0
        %1424 = vmatpush1.msra.mxu0 %v1383
        %1425 = vmatprep.subr.mxu0 0.0
        %1426 = vmatpush1.msra.mxu0 %v1382
        %1427 = vmatprep.subr.mxu0 0.0
        %1428 = vmatpush1.msra.mxu0 %v1381
        %1429 = vmatprep.subr.mxu0 0.0
        %1430 = vmatpush1.msra.mxu0 %v1380
        %1431 = vmatprep.subr.mxu0 0.0
        %1432 = vmatpush1.msra.mxu0 %v1379
        %1433 = vmatprep.subr.mxu0 0.0
        %1434 = vmatpush1.msra.mxu0 %v1378
        %1435 = vmatprep.subr.mxu0 0.0
        %1436 = vmatpush1.msra.mxu0 %v1377
        %1437 = vmatprep.subr.mxu0 0.0
        %1438 = vmatpush1.msra.mxu0 %v1376
        %1439 = vmatprep.subr.mxu0 0.0
        %1440 = vmatpush2.msra.mxu0 0.0
        %1441 = vmatprep.subr.mxu0 0.0
        %1442 = vmatpush2.msra.mxu0 0.0
        %1443 = vmatprep.subr.mxu0 0.0
        %1444 = vmatpush2.msra.mxu0 0.0
        %1445 = vmatprep.subr.mxu0 0.0
        %1446 = vmatpush2.msra.mxu0 0.0
        %1447 = vmatprep.subr.mxu0 0.0
        %1448 = vmatpush2.msra.mxu0 0.0
        %1449 = vmatprep.subr.mxu0 0.0
        %1450 = vmatpush2.msra.mxu0 0.0
        %1451 = vmatprep.subr.mxu0 0.0
        %1452 = vmatpush2.msra.mxu0 0.0
        %1453 = vmatprep.subr.mxu0 0.0
        %1454 = vmatpush2.msra.mxu0 0.0
        %1455 = vmatprep.subr.mxu0 0.0
        %1456 = vmatpush2.msra.mxu0 0.0
        %1457 = vmatprep.subr.mxu0 0.0
        %1458 = vmatpush2.msra.mxu0 0.0
        %1459 = vmatprep.subr.mxu0 0.0
        %1460 = vmatpush2.msra.mxu0 0.0
        %1461 = vmatprep.subr.mxu0 0.0
        %1462 = vmatpush2.msra.mxu0 0.0
        %1463 = vmatprep.subr.mxu0 0.0
        %1464 = vmatpush2.msra.mxu0 0.0
        %1465 = vmatprep.subr.mxu0 0.0
        %1466 = vmatpush2.msra.mxu0 0.0
        %1467 = vmatprep.subr.mxu0 0.0
        %1468 = vmatpush2.msra.mxu0 0.0
        %1469 = vmatprep.subr.mxu0 0.0
        %1470 = vmatpush2.msra.mxu0 0.0
        %1471 = vmatprep.mubr.f32.mxu0 0.0
        %1472 = vmatmul.mubr.f32.gmra.mxu0 %v1396
        %v1473 = vpop.f32.mrf.mxu0
        %v1474 = vadd.f32 %v1393, %v1473
        %v1475 = vpop.f32.mrf.mxu0
        %1476 = vmatprep.mubr.f32.mxu0 0.0
        %1477 = vmatmul.mubr.f32.gmra.mxu0 %v1399
        %v1478 = vpop.f32.mrf.mxu0
        %v1479 = vadd.f32 %v1393, %v1478
        %v1480 = vpop.f32.mrf.mxu0
        %1481 = vmatprep.mubr.f32.mxu0 0.0
        %1482 = vmatmul.mubr.f32.gmra.mxu0 %v1402
        %v1483 = vpop.f32.mrf.mxu0
        %v1484 = vadd.f32 %v1393, %v1483
        %v1485 = vpop.f32.mrf.mxu0
        %1486 = vmatprep.mubr.f32.mxu0 0.0
        %1487 = vmatmul.mubr.f32.gmra.mxu0 %v1405
        %v1488 = vpop.f32.mrf.mxu0
        %v1489 = vadd.f32 %v1393, %v1488
        %v1490 = vpop.f32.mrf.mxu0
        %1491 = vdwg.mxu0
        %v1496 = vcombine.high %v1474, %v1474
        %v1498 = vunpack.c.l.s4 1966171168
        %v1499 = vunpack.c.0.s8 %v1498
        %v1500 = vlaneseq
        %v1501 = vshrl.u32 %v1500, 7
        %v1502 = vsub.s32 %v1499, %v1501
        %v1503 = vrot.slane %v1474, %v1502
        %v1505 = vunpack.c.l.s4 1966171168
        %v1506 = vunpack.c.0.s8 %v1505
        %v1507 = vlaneseq
        %v1508 = vshrl.u32 %v1507, 7
        %v1509 = vsub.s32 %v1506, %v1508
        %v1510 = vrot.slane %v1496, %v1509
        %v1511 = vcombine.high %v1503, %v1503
        %v1512 = vcombine.high %v1510, %v1510
        %v1514 = vunpack.c.l.s4 1966171168
        %v1515 = vunpack.c.0.s8 %v1514
        %v1516 = vlaneseq
        %v1517 = vshrl.u32 %v1516, 7
        %v1518 = vsub.s32 %v1515, %v1517
        %v1519 = vrot.slane %v1503, %v1518
        %v1521 = vunpack.c.l.s4 1966171168
        %v1522 = vunpack.c.0.s8 %v1521
        %v1523 = vlaneseq
        %v1524 = vshrl.u32 %v1523, 7
        %v1525 = vsub.s32 %v1522, %v1524
        %v1526 = vrot.slane %v1510, %v1525
        %v1528 = vunpack.c.l.s4 1966171168
        %v1529 = vunpack.c.0.s8 %v1528
        %v1530 = vlaneseq
        %v1531 = vshrl.u32 %v1530, 7
        %v1532 = vsub.s32 %v1529, %v1531
        %v1533 = vrot.slane %v1511, %v1532
        %v1535 = vunpack.c.l.s4 1966171168
        %v1536 = vunpack.c.0.s8 %v1535
        %v1537 = vlaneseq
        %v1538 = vshrl.u32 %v1537, 7
        %v1539 = vsub.s32 %v1536, %v1538
        %v1540 = vrot.slane %v1512, %v1539
        %v1541 = vcombine.high %v1519, %v1519
        %v1542 = vcombine.high %v1526, %v1526
        %v1543 = vcombine.high %v1533, %v1533
        %v1544 = vcombine.high %v1540, %v1540
        %v1545 = vcombine.high %v1479, %v1479
        %v1547 = vunpack.c.l.s4 1966171168
        %v1548 = vunpack.c.0.s8 %v1547
        %v1549 = vlaneseq
        %v1550 = vshrl.u32 %v1549, 7
        %v1551 = vsub.s32 %v1548, %v1550
        %v1552 = vrot.slane %v1479, %v1551
        %v1554 = vunpack.c.l.s4 1966171168
        %v1555 = vunpack.c.0.s8 %v1554
        %v1556 = vlaneseq
        %v1557 = vshrl.u32 %v1556, 7
        %v1558 = vsub.s32 %v1555, %v1557
        %v1559 = vrot.slane %v1545, %v1558
        %v1560 = vcombine.high %v1552, %v1552
        %v1561 = vcombine.high %v1559, %v1559
        %v1563 = vunpack.c.l.s4 1966171168
        %v1564 = vunpack.c.0.s8 %v1563
        %v1565 = vlaneseq
        %v1566 = vshrl.u32 %v1565, 7
        %v1567 = vsub.s32 %v1564, %v1566
        %v1568 = vrot.slane %v1552, %v1567
        %v1570 = vunpack.c.l.s4 1966171168
        %v1571 = vunpack.c.0.s8 %v1570
        %v1572 = vlaneseq
        %v1573 = vshrl.u32 %v1572, 7
        %v1574 = vsub.s32 %v1571, %v1573
        %v1575 = vrot.slane %v1559, %v1574
        %v1577 = vunpack.c.l.s4 1966171168
        %v1578 = vunpack.c.0.s8 %v1577
        %v1579 = vlaneseq
        %v1580 = vshrl.u32 %v1579, 7
        %v1581 = vsub.s32 %v1578, %v1580
        %v1582 = vrot.slane %v1560, %v1581
        %v1584 = vunpack.c.l.s4 1966171168
        %v1585 = vunpack.c.0.s8 %v1584
        %v1586 = vlaneseq
        %v1587 = vshrl.u32 %v1586, 7
        %v1588 = vsub.s32 %v1585, %v1587
        %v1589 = vrot.slane %v1561, %v1588
        %v1590 = vcombine.high %v1568, %v1568
        %v1591 = vcombine.high %v1575, %v1575
        %v1592 = vcombine.high %v1582, %v1582
        %v1593 = vcombine.high %v1589, %v1589
        %v1594 = vcombine.high %v1484, %v1484
        %v1596 = vunpack.c.l.s4 1966171168
        %v1597 = vunpack.c.0.s8 %v1596
        %v1598 = vlaneseq
        %v1599 = vshrl.u32 %v1598, 7
        %v1600 = vsub.s32 %v1597, %v1599
        %v1601 = vrot.slane %v1484, %v1600
        %v1603 = vunpack.c.l.s4 1966171168
        %v1604 = vunpack.c.0.s8 %v1603
        %v1605 = vlaneseq
        %v1606 = vshrl.u32 %v1605, 7
        %v1607 = vsub.s32 %v1604, %v1606
        %v1608 = vrot.slane %v1594, %v1607
        %v1609 = vcombine.high %v1601, %v1601
        %v1610 = vcombine.high %v1608, %v1608
        %v1612 = vunpack.c.l.s4 1966171168
        %v1613 = vunpack.c.0.s8 %v1612
        %v1614 = vlaneseq
        %v1615 = vshrl.u32 %v1614, 7
        %v1616 = vsub.s32 %v1613, %v1615
        %v1617 = vrot.slane %v1601, %v1616
        %v1619 = vunpack.c.l.s4 1966171168
        %v1620 = vunpack.c.0.s8 %v1619
        %v1621 = vlaneseq
        %v1622 = vshrl.u32 %v1621, 7
        %v1623 = vsub.s32 %v1620, %v1622
        %v1624 = vrot.slane %v1608, %v1623
        %v1626 = vunpack.c.l.s4 1966171168
        %v1627 = vunpack.c.0.s8 %v1626
        %v1628 = vlaneseq
        %v1629 = vshrl.u32 %v1628, 7
        %v1630 = vsub.s32 %v1627, %v1629
        %v1631 = vrot.slane %v1609, %v1630
        %v1633 = vunpack.c.l.s4 1966171168
        %v1634 = vunpack.c.0.s8 %v1633
        %v1635 = vlaneseq
        %v1636 = vshrl.u32 %v1635, 7
        %v1637 = vsub.s32 %v1634, %v1636
        %v1638 = vrot.slane %v1610, %v1637
        %v1639 = vcombine.high %v1617, %v1617
        %v1640 = vcombine.high %v1624, %v1624
        %v1641 = vcombine.high %v1631, %v1631
        %v1642 = vcombine.high %v1638, %v1638
        %v1643 = vcombine.high %v1489, %v1489
        %v1645 = vunpack.c.l.s4 1966171168
        %v1646 = vunpack.c.0.s8 %v1645
        %v1647 = vlaneseq
        %v1648 = vshrl.u32 %v1647, 7
        %v1649 = vsub.s32 %v1646, %v1648
        %v1650 = vrot.slane %v1489, %v1649
        %v1652 = vunpack.c.l.s4 1966171168
        %v1653 = vunpack.c.0.s8 %v1652
        %v1654 = vlaneseq
        %v1655 = vshrl.u32 %v1654, 7
        %v1656 = vsub.s32 %v1653, %v1655
        %v1657 = vrot.slane %v1643, %v1656
        %v1658 = vcombine.high %v1650, %v1650
        %v1659 = vcombine.high %v1657, %v1657
        %v1661 = vunpack.c.l.s4 1966171168
        %v1662 = vunpack.c.0.s8 %v1661
        %v1663 = vlaneseq
        %v1664 = vshrl.u32 %v1663, 7
        %v1665 = vsub.s32 %v1662, %v1664
        %v1666 = vrot.slane %v1650, %v1665
        %v1668 = vunpack.c.l.s4 1966171168
        %v1669 = vunpack.c.0.s8 %v1668
        %v1670 = vlaneseq
        %v1671 = vshrl.u32 %v1670, 7
        %v1672 = vsub.s32 %v1669, %v1671
        %v1673 = vrot.slane %v1657, %v1672
        %v1675 = vunpack.c.l.s4 1966171168
        %v1676 = vunpack.c.0.s8 %v1675
        %v1677 = vlaneseq
        %v1678 = vshrl.u32 %v1677, 7
        %v1679 = vsub.s32 %v1676, %v1678
        %v1680 = vrot.slane %v1658, %v1679
        %v1682 = vunpack.c.l.s4 1966171168
        %v1683 = vunpack.c.0.s8 %v1682
        %v1684 = vlaneseq
        %v1685 = vshrl.u32 %v1684, 7
        %v1686 = vsub.s32 %v1683, %v1685
        %v1687 = vrot.slane %v1659, %v1686
        %v1688 = vcombine.high %v1666, %v1666
        %v1689 = vcombine.high %v1673, %v1673
        %v1690 = vcombine.high %v1680, %v1680
        %v1691 = vcombine.high %v1687, %v1687
        %v1692 = vlaneseq
        %v1693 = vshrl.u32 %v1692, 7
        %v1694 = vsub.s32 0, %v1693
        %v1695 = vrot.slane %v1519, %v1694
        %v1696 = vlaneseq
        %v1697 = vshrl.u32 %v1696, 7
        %v1698 = vsub.s32 0, %v1697
        %v1699 = vrot.slane %v1533, %v1698
        %v1700 = vlaneseq
        %v1701 = vshrl.u32 %v1700, 7
        %v1702 = vsub.s32 0, %v1701
        %v1703 = vrot.slane %v1541, %v1702
        %v1704 = vlaneseq
        %v1705 = vshrl.u32 %v1704, 7
        %v1706 = vsub.s32 0, %v1705
        %v1707 = vrot.slane %v1543, %v1706
        %v1708 = vlaneseq
        %v1709 = vshrl.u32 %v1708, 7
        %v1710 = vsub.s32 0, %v1709
        %v1711 = vrot.slane %v1526, %v1710
        %v1712 = vlaneseq
        %v1713 = vshrl.u32 %v1712, 7
        %v1714 = vsub.s32 0, %v1713
        %v1715 = vrot.slane %v1540, %v1714
        %v1716 = vlaneseq
        %v1717 = vshrl.u32 %v1716, 7
        %v1718 = vsub.s32 0, %v1717
        %v1719 = vrot.slane %v1542, %v1718
        %v1720 = vlaneseq
        %v1721 = vshrl.u32 %v1720, 7
        %v1722 = vsub.s32 0, %v1721
        %v1723 = vrot.slane %v1544, %v1722
        %v1724 = vlaneseq
        %v1725 = vshrl.u32 %v1724, 7
        %v1726 = vsub.s32 0, %v1725
        %v1727 = vrot.slane %v1568, %v1726
        %v1728 = vlaneseq
        %v1729 = vshrl.u32 %v1728, 7
        %v1730 = vsub.s32 0, %v1729
        %v1731 = vrot.slane %v1582, %v1730
        %v1732 = vlaneseq
        %v1733 = vshrl.u32 %v1732, 7
        %v1734 = vsub.s32 0, %v1733
        %v1735 = vrot.slane %v1590, %v1734
        %v1736 = vlaneseq
        %v1737 = vshrl.u32 %v1736, 7
        %v1738 = vsub.s32 0, %v1737
        %v1739 = vrot.slane %v1592, %v1738
        %v1740 = vlaneseq
        %v1741 = vshrl.u32 %v1740, 7
        %v1742 = vsub.s32 0, %v1741
        %v1743 = vrot.slane %v1575, %v1742
        %v1744 = vlaneseq
        %v1745 = vshrl.u32 %v1744, 7
        %v1746 = vsub.s32 0, %v1745
        %v1747 = vrot.slane %v1589, %v1746
        %v1748 = vlaneseq
        %v1749 = vshrl.u32 %v1748, 7
        %v1750 = vsub.s32 0, %v1749
        %v1751 = vrot.slane %v1591, %v1750
        %v1752 = vlaneseq
        %v1753 = vshrl.u32 %v1752, 7
        %v1754 = vsub.s32 0, %v1753
        %v1755 = vrot.slane %v1593, %v1754
        %v1756 = vlaneseq
        %v1757 = vshrl.u32 %v1756, 7
        %v1758 = vsub.s32 0, %v1757
        %v1759 = vrot.slane %v1617, %v1758
        %v1760 = vlaneseq
        %v1761 = vshrl.u32 %v1760, 7
        %v1762 = vsub.s32 0, %v1761
        %v1763 = vrot.slane %v1631, %v1762
        %v1764 = vlaneseq
        %v1765 = vshrl.u32 %v1764, 7
        %v1766 = vsub.s32 0, %v1765
        %v1767 = vrot.slane %v1639, %v1766
        %v1768 = vlaneseq
        %v1769 = vshrl.u32 %v1768, 7
        %v1770 = vsub.s32 0, %v1769
        %v1771 = vrot.slane %v1641, %v1770
        %v1772 = vlaneseq
        %v1773 = vshrl.u32 %v1772, 7
        %v1774 = vsub.s32 0, %v1773
        %v1775 = vrot.slane %v1624, %v1774
        %v1776 = vlaneseq
        %v1777 = vshrl.u32 %v1776, 7
        %v1778 = vsub.s32 0, %v1777
        %v1779 = vrot.slane %v1638, %v1778
        %v1780 = vlaneseq
        %v1781 = vshrl.u32 %v1780, 7
        %v1782 = vsub.s32 0, %v1781
        %v1783 = vrot.slane %v1640, %v1782
        %v1784 = vlaneseq
        %v1785 = vshrl.u32 %v1784, 7
        %v1786 = vsub.s32 0, %v1785
        %v1787 = vrot.slane %v1642, %v1786
        %v1788 = vlaneseq
        %v1789 = vshrl.u32 %v1788, 7
        %v1790 = vsub.s32 0, %v1789
        %v1791 = vrot.slane %v1666, %v1790
        %v1792 = vlaneseq
        %v1793 = vshrl.u32 %v1792, 7
        %v1794 = vsub.s32 0, %v1793
        %v1795 = vrot.slane %v1680, %v1794
        %v1796 = vlaneseq
        %v1797 = vshrl.u32 %v1796, 7
        %v1798 = vsub.s32 0, %v1797
        %v1799 = vrot.slane %v1688, %v1798
        %v1800 = vlaneseq
        %v1801 = vshrl.u32 %v1800, 7
        %v1802 = vsub.s32 0, %v1801
        %v1803 = vrot.slane %v1690, %v1802
        %v1804 = vlaneseq
        %v1805 = vshrl.u32 %v1804, 7
        %v1806 = vsub.s32 0, %v1805
        %v1807 = vrot.slane %v1673, %v1806
        %v1808 = vlaneseq
        %v1809 = vshrl.u32 %v1808, 7
        %v1810 = vsub.s32 0, %v1809
        %v1811 = vrot.slane %v1687, %v1810
        %v1812 = vlaneseq
        %v1813 = vshrl.u32 %v1812, 7
        %v1814 = vsub.s32 0, %v1813
        %v1815 = vrot.slane %v1689, %v1814
        %v1816 = vlaneseq
        %v1817 = vshrl.u32 %v1816, 7
        %v1818 = vsub.s32 0, %v1817
        %v1819 = vrot.slane %v1691, %v1818
        %v1852 = vmul.f32 %v1695, %v1186
        %v1853 = vmul.f32 %v1699, %v1192
        %v1854 = vmul.f32 %v1703, %v1198
        %v1855 = vmul.f32 %v1707, %v1204
        %v1856 = vmul.f32 %v1711, %v1210
        %v1857 = vmul.f32 %v1715, %v1216
        %v1858 = vmul.f32 %v1719, %v1222
        %v1859 = vmul.f32 %v1723, %v1228
        %v1860 = vmul.f32 %v1727, %v1234
        %v1861 = vmul.f32 %v1731, %v1240
        %v1862 = vmul.f32 %v1735, %v1246
        %v1863 = vmul.f32 %v1739, %v1252
        %v1864 = vmul.f32 %v1743, %v1258
        %v1865 = vmul.f32 %v1747, %v1264
        %v1866 = vmul.f32 %v1751, %v1270
        %v1867 = vmul.f32 %v1755, %v1276
        %v1868 = vmul.f32 %v1759, %v1282
        %v1869 = vmul.f32 %v1763, %v1288
        %v1870 = vmul.f32 %v1767, %v1294
        %v1871 = vmul.f32 %v1771, %v1300
        %v1872 = vmul.f32 %v1775, %v1306
        %v1873 = vmul.f32 %v1779, %v1312
        %v1874 = vmul.f32 %v1783, %v1318
        %v1875 = vmul.f32 %v1787, %v1324
        %v1876 = vmul.f32 %v1791, %v1330
        %v1877 = vmul.f32 %v1795, %v1336
        %v1878 = vmul.f32 %v1799, %v1342
        %v1879 = vmul.f32 %v1803, %v1348
        %v1880 = vmul.f32 %v1807, %v1354
        %v1881 = vmul.f32 %v1811, %v1360
        %v1882 = vmul.f32 %v1815, %v1366
        %v1883 = vmul.f32 %v1819, %v1372
        %vm1884 = vcmask 261120
        %v1885 = vsel %vm1884, %v1852, 0.0
        %1886 = vadd.xlane.f32.xlu0 %v1885
        %v1887 = vpop.xlane.xlu0 %1886
        %v1888 = vsel %vm1884, %v1853, 0.0
        %1889 = vadd.xlane.f32.xlu0 %v1888
        %v1890 = vpop.xlane.xlu0 %1889
        %v1891 = vsel %vm1884, %v1854, 0.0
        %1892 = vadd.xlane.f32.xlu0 %v1891
        %v1893 = vpop.xlane.xlu0 %1892
        %v1894 = vsel %vm1884, %v1855, 0.0
        %1895 = vadd.xlane.f32.xlu0 %v1894
        %v1896 = vpop.xlane.xlu0 %1895
        %v1897 = vsel %vm1884, %v1856, 0.0
        %1898 = vadd.xlane.f32.xlu0 %v1897
        %v1899 = vpop.xlane.xlu0 %1898
        %v1900 = vsel %vm1884, %v1857, 0.0
        %1901 = vadd.xlane.f32.xlu0 %v1900
        %v1902 = vpop.xlane.xlu0 %1901
        %v1903 = vsel %vm1884, %v1858, 0.0
        %1904 = vadd.xlane.f32.xlu0 %v1903
        %v1905 = vpop.xlane.xlu0 %1904
        %v1906 = vsel %vm1884, %v1859, 0.0
        %1907 = vadd.xlane.f32.xlu0 %v1906
        %v1908 = vpop.xlane.xlu0 %1907
        %v1909 = vsel %vm1884, %v1860, 0.0
        %1910 = vadd.xlane.f32.xlu0 %v1909
        %v1911 = vpop.xlane.xlu0 %1910
        %v1912 = vsel %vm1884, %v1861, 0.0
        %1913 = vadd.xlane.f32.xlu0 %v1912
        %v1914 = vpop.xlane.xlu0 %1913
        %v1915 = vsel %vm1884, %v1862, 0.0
        %1916 = vadd.xlane.f32.xlu0 %v1915
        %v1917 = vpop.xlane.xlu0 %1916
        %v1918 = vsel %vm1884, %v1863, 0.0
        %1919 = vadd.xlane.f32.xlu0 %v1918
        %v1920 = vpop.xlane.xlu0 %1919
        %v1921 = vsel %vm1884, %v1864, 0.0
        %1922 = vadd.xlane.f32.xlu0 %v1921
        %v1923 = vpop.xlane.xlu0 %1922
        %v1924 = vsel %vm1884, %v1865, 0.0
        %1925 = vadd.xlane.f32.xlu0 %v1924
        %v1926 = vpop.xlane.xlu0 %1925
        %v1927 = vsel %vm1884, %v1866, 0.0
        %1928 = vadd.xlane.f32.xlu0 %v1927
        %v1929 = vpop.xlane.xlu0 %1928
        %v1930 = vsel %vm1884, %v1867, 0.0
        %1931 = vadd.xlane.f32.xlu0 %v1930
        %v1932 = vpop.xlane.xlu0 %1931
        %v1933 = vsel %vm1884, %v1868, 0.0
        %1934 = vadd.xlane.f32.xlu0 %v1933
        %v1935 = vpop.xlane.xlu0 %1934
        %v1936 = vsel %vm1884, %v1869, 0.0
        %1937 = vadd.xlane.f32.xlu0 %v1936
        %v1938 = vpop.xlane.xlu0 %1937
        %v1939 = vsel %vm1884, %v1870, 0.0
        %1940 = vadd.xlane.f32.xlu0 %v1939
        %v1941 = vpop.xlane.xlu0 %1940
        %v1942 = vsel %vm1884, %v1871, 0.0
        %1943 = vadd.xlane.f32.xlu0 %v1942
        %v1944 = vpop.xlane.xlu0 %1943
        %v1945 = vsel %vm1884, %v1872, 0.0
        %1946 = vadd.xlane.f32.xlu0 %v1945
        %v1947 = vpop.xlane.xlu0 %1946
        %v1948 = vsel %vm1884, %v1873, 0.0
        %1949 = vadd.xlane.f32.xlu0 %v1948
        %v1950 = vpop.xlane.xlu0 %1949
        %v1951 = vsel %vm1884, %v1874, 0.0
        %1952 = vadd.xlane.f32.xlu0 %v1951
        %v1953 = vpop.xlane.xlu0 %1952
        %v1954 = vsel %vm1884, %v1875, 0.0
        %1955 = vadd.xlane.f32.xlu0 %v1954
        %v1956 = vpop.xlane.xlu0 %1955
        %v1957 = vsel %vm1884, %v1876, 0.0
        %1958 = vadd.xlane.f32.xlu0 %v1957
        %v1959 = vpop.xlane.xlu0 %1958
        %v1960 = vsel %vm1884, %v1877, 0.0
        %1961 = vadd.xlane.f32.xlu0 %v1960
        %v1962 = vpop.xlane.xlu0 %1961
        %v1963 = vsel %vm1884, %v1878, 0.0
        %1964 = vadd.xlane.f32.xlu0 %v1963
        %v1965 = vpop.xlane.xlu0 %1964
        %v1966 = vsel %vm1884, %v1879, 0.0
        %1967 = vadd.xlane.f32.xlu0 %v1966
        %v1968 = vpop.xlane.xlu0 %1967
        %v1969 = vsel %vm1884, %v1880, 0.0
        %1970 = vadd.xlane.f32.xlu0 %v1969
        %v1971 = vpop.xlane.xlu0 %1970
        %v1972 = vsel %vm1884, %v1881, 0.0
        %1973 = vadd.xlane.f32.xlu0 %v1972
        %v1974 = vpop.xlane.xlu0 %1973
        %v1975 = vsel %vm1884, %v1882, 0.0
        %1976 = vadd.xlane.f32.xlu0 %v1975
        %v1977 = vpop.xlane.xlu0 %1976
        %v1978 = vsel %vm1884, %v1883, 0.0
        %1979 = vadd.xlane.f32.xlu0 %v1978
        %v1980 = vpop.xlane.xlu0 %1979
        %v2013 = vlaneseq
        %v2014 = vand.u32 %v2013, 127
        %v2015 = vlaneseq
        %v2016 = vshrl.u32 %v2015, 7
        %v2017 = vsub.s32 %v2014, %v2016
        %v2018 = vrot.slane %v1887, %v2017
        %v2019 = vlaneseq
        %v2020 = vshrl.u32 %v2019, 7
        %v2021 = vsub.s32 %v2014, %v2020
        %v2022 = vrot.slane %v1890, %v2021
        %v2023 = vlaneseq
        %v2024 = vshrl.u32 %v2023, 7
        %v2025 = vsub.s32 %v2014, %v2024
        %v2026 = vrot.slane %v1893, %v2025
        %v2027 = vlaneseq
        %v2028 = vshrl.u32 %v2027, 7
        %v2029 = vsub.s32 %v2014, %v2028
        %v2030 = vrot.slane %v1896, %v2029
        %v2031 = vlaneseq
        %v2032 = vshrl.u32 %v2031, 7
        %v2033 = vsub.s32 %v2014, %v2032
        %v2034 = vrot.slane %v1899, %v2033
        %v2035 = vlaneseq
        %v2036 = vshrl.u32 %v2035, 7
        %v2037 = vsub.s32 %v2014, %v2036
        %v2038 = vrot.slane %v1902, %v2037
        %v2039 = vlaneseq
        %v2040 = vshrl.u32 %v2039, 7
        %v2041 = vsub.s32 %v2014, %v2040
        %v2042 = vrot.slane %v1905, %v2041
        %v2043 = vlaneseq
        %v2044 = vshrl.u32 %v2043, 7
        %v2045 = vsub.s32 %v2014, %v2044
        %v2046 = vrot.slane %v1908, %v2045
        %v2047 = vlaneseq
        %v2048 = vshrl.u32 %v2047, 7
        %v2049 = vsub.s32 %v2014, %v2048
        %v2050 = vrot.slane %v1911, %v2049
        %v2051 = vlaneseq
        %v2052 = vshrl.u32 %v2051, 7
        %v2053 = vsub.s32 %v2014, %v2052
        %v2054 = vrot.slane %v1914, %v2053
        %v2055 = vlaneseq
        %v2056 = vshrl.u32 %v2055, 7
        %v2057 = vsub.s32 %v2014, %v2056
        %v2058 = vrot.slane %v1917, %v2057
        %v2059 = vlaneseq
        %v2060 = vshrl.u32 %v2059, 7
        %v2061 = vsub.s32 %v2014, %v2060
        %v2062 = vrot.slane %v1920, %v2061
        %v2063 = vlaneseq
        %v2064 = vshrl.u32 %v2063, 7
        %v2065 = vsub.s32 %v2014, %v2064
        %v2066 = vrot.slane %v1923, %v2065
        %v2067 = vlaneseq
        %v2068 = vshrl.u32 %v2067, 7
        %v2069 = vsub.s32 %v2014, %v2068
        %v2070 = vrot.slane %v1926, %v2069
        %v2071 = vlaneseq
        %v2072 = vshrl.u32 %v2071, 7
        %v2073 = vsub.s32 %v2014, %v2072
        %v2074 = vrot.slane %v1929, %v2073
        %v2075 = vlaneseq
        %v2076 = vshrl.u32 %v2075, 7
        %v2077 = vsub.s32 %v2014, %v2076
        %v2078 = vrot.slane %v1932, %v2077
        %v2079 = vlaneseq
        %v2080 = vshrl.u32 %v2079, 7
        %v2081 = vsub.s32 %v2014, %v2080
        %v2082 = vrot.slane %v1935, %v2081
        %v2083 = vlaneseq
        %v2084 = vshrl.u32 %v2083, 7
        %v2085 = vsub.s32 %v2014, %v2084
        %v2086 = vrot.slane %v1938, %v2085
        %v2087 = vlaneseq
        %v2088 = vshrl.u32 %v2087, 7
        %v2089 = vsub.s32 %v2014, %v2088
        %v2090 = vrot.slane %v1941, %v2089
        %v2091 = vlaneseq
        %v2092 = vshrl.u32 %v2091, 7
        %v2093 = vsub.s32 %v2014, %v2092
        %v2094 = vrot.slane %v1944, %v2093
        %v2095 = vlaneseq
        %v2096 = vshrl.u32 %v2095, 7
        %v2097 = vsub.s32 %v2014, %v2096
        %v2098 = vrot.slane %v1947, %v2097
        %v2099 = vlaneseq
        %v2100 = vshrl.u32 %v2099, 7
        %v2101 = vsub.s32 %v2014, %v2100
        %v2102 = vrot.slane %v1950, %v2101
        %v2103 = vlaneseq
        %v2104 = vshrl.u32 %v2103, 7
        %v2105 = vsub.s32 %v2014, %v2104
        %v2106 = vrot.slane %v1953, %v2105
        %v2107 = vlaneseq
        %v2108 = vshrl.u32 %v2107, 7
        %v2109 = vsub.s32 %v2014, %v2108
        %v2110 = vrot.slane %v1956, %v2109
        %v2111 = vlaneseq
        %v2112 = vshrl.u32 %v2111, 7
        %v2113 = vsub.s32 %v2014, %v2112
        %v2114 = vrot.slane %v1959, %v2113
        %v2115 = vlaneseq
        %v2116 = vshrl.u32 %v2115, 7
        %v2117 = vsub.s32 %v2014, %v2116
        %v2118 = vrot.slane %v1962, %v2117
        %v2119 = vlaneseq
        %v2120 = vshrl.u32 %v2119, 7
        %v2121 = vsub.s32 %v2014, %v2120
        %v2122 = vrot.slane %v1965, %v2121
        %v2123 = vlaneseq
        %v2124 = vshrl.u32 %v2123, 7
        %v2125 = vsub.s32 %v2014, %v2124
        %v2126 = vrot.slane %v1968, %v2125
        %v2127 = vlaneseq
        %v2128 = vshrl.u32 %v2127, 7
        %v2129 = vsub.s32 %v2014, %v2128
        %v2130 = vrot.slane %v1971, %v2129
        %v2131 = vlaneseq
        %v2132 = vshrl.u32 %v2131, 7
        %v2133 = vsub.s32 %v2014, %v2132
        %v2134 = vrot.slane %v1974, %v2133
        %v2135 = vlaneseq
        %v2136 = vshrl.u32 %v2135, 7
        %v2137 = vsub.s32 %v2014, %v2136
        %v2138 = vrot.slane %v1977, %v2137
        %v2139 = vlaneseq
        %v2140 = vshrl.u32 %v2139, 7
        %v2141 = vsub.s32 %v2014, %v2140
        %v2142 = vrot.slane %v1980, %v2141
        %vm2143 = vcmask 1041409
        %v2144 = vsel %vm2143, %v2022, %v2018
        %vm2145 = vcmask 1042434
        %v2146 = vsel %vm2145, %v2026, %v2144
        %vm2147 = vcmask 1043459
        %v2148 = vsel %vm2147, %v2030, %v2146
        %vm2149 = vcmask 1044484
        %v2150 = vsel %vm2149, %v2034, %v2148
        %vm2151 = vcmask 1045509
        %v2152 = vsel %vm2151, %v2038, %v2150
        %vm2153 = vcmask 1046534
        %v2154 = vsel %vm2153, %v2042, %v2152
        %vm2155 = vcmask 1047559
        %v2156 = vsel %vm2155, %v2046, %v2154
        %v2157 = vsel %vm2143, %v2054, %v2050
        %v2158 = vsel %vm2145, %v2058, %v2157
        %v2159 = vsel %vm2147, %v2062, %v2158
        %v2160 = vsel %vm2149, %v2066, %v2159
        %v2161 = vsel %vm2151, %v2070, %v2160
        %v2162 = vsel %vm2153, %v2074, %v2161
        %v2163 = vsel %vm2155, %v2078, %v2162
        %v2164 = vsel %vm2143, %v2086, %v2082
        %v2165 = vsel %vm2145, %v2090, %v2164
        %v2166 = vsel %vm2147, %v2094, %v2165
        %v2167 = vsel %vm2149, %v2098, %v2166
        %v2168 = vsel %vm2151, %v2102, %v2167
        %v2169 = vsel %vm2153, %v2106, %v2168
        %v2170 = vsel %vm2155, %v2110, %v2169
        %v2171 = vsel %vm2143, %v2118, %v2114
        %v2172 = vsel %vm2145, %v2122, %v2171
        %v2173 = vsel %vm2147, %v2126, %v2172
        %v2174 = vsel %vm2149, %v2130, %v2173
        %v2175 = vsel %vm2151, %v2134, %v2174
        %v2176 = vsel %vm2153, %v2138, %v2175
        %v2177 = vsel %vm2155, %v2142, %v2176
        %vm2182 = vcmask 64512
        %v2183 = vsel %vm2182, %v2156, -inf
        %2184 = vmax.xlane.f32.xlu0 %v2183
        %v2185 = vpop.xlane.xlu0 %2184
        %v2186 = vsel %vm2182, %v2163, -inf
        %2187 = vmax.xlane.f32.xlu0 %v2186
        %v2188 = vpop.xlane.xlu0 %2187
        %v2189 = vsel %vm2182, %v2170, -inf
        %2190 = vmax.xlane.f32.xlu0 %v2189
        %v2191 = vpop.xlane.xlu0 %2190
        %v2192 = vsel %vm2182, %v2177, -inf
        %2193 = vmax.xlane.f32.xlu0 %v2192
        %v2194 = vpop.xlane.xlu0 %2193
        %v2199 = vlaneseq
        %v2200 = vshrl.u32 %v2199, 7
        %v2201 = vsub.s32 0, %v2200
        %v2202 = vrot.slane %v2185, %v2201
        %v2203 = vlaneseq
        %v2204 = vshrl.u32 %v2203, 7
        %v2205 = vsub.s32 1, %v2204
        %v2206 = vrot.slane %v2185, %v2205
        %v2207 = vlaneseq
        %v2208 = vshrl.u32 %v2207, 7
        %v2209 = vsub.s32 2, %v2208
        %v2210 = vrot.slane %v2185, %v2209
        %v2211 = vlaneseq
        %v2212 = vshrl.u32 %v2211, 7
        %v2213 = vsub.s32 3, %v2212
        %v2214 = vrot.slane %v2185, %v2213
        %v2215 = vlaneseq
        %v2216 = vshrl.u32 %v2215, 7
        %v2217 = vsub.s32 4, %v2216
        %v2218 = vrot.slane %v2185, %v2217
        %v2219 = vlaneseq
        %v2220 = vshrl.u32 %v2219, 7
        %v2221 = vsub.s32 5, %v2220
        %v2222 = vrot.slane %v2185, %v2221
        %v2223 = vlaneseq
        %v2224 = vshrl.u32 %v2223, 7
        %v2225 = vsub.s32 6, %v2224
        %v2226 = vrot.slane %v2185, %v2225
        %v2227 = vlaneseq
        %v2228 = vshrl.u32 %v2227, 7
        %v2229 = vsub.s32 7, %v2228
        %v2230 = vrot.slane %v2185, %v2229
        %v2231 = vlaneseq
        %v2232 = vshrl.u32 %v2231, 7
        %v2233 = vsub.s32 0, %v2232
        %v2234 = vrot.slane %v2188, %v2233
        %v2235 = vlaneseq
        %v2236 = vshrl.u32 %v2235, 7
        %v2237 = vsub.s32 1, %v2236
        %v2238 = vrot.slane %v2188, %v2237
        %v2239 = vlaneseq
        %v2240 = vshrl.u32 %v2239, 7
        %v2241 = vsub.s32 2, %v2240
        %v2242 = vrot.slane %v2188, %v2241
        %v2243 = vlaneseq
        %v2244 = vshrl.u32 %v2243, 7
        %v2245 = vsub.s32 3, %v2244
        %v2246 = vrot.slane %v2188, %v2245
        %v2247 = vlaneseq
        %v2248 = vshrl.u32 %v2247, 7
        %v2249 = vsub.s32 4, %v2248
        %v2250 = vrot.slane %v2188, %v2249
        %v2251 = vlaneseq
        %v2252 = vshrl.u32 %v2251, 7
        %v2253 = vsub.s32 5, %v2252
        %v2254 = vrot.slane %v2188, %v2253
        %v2255 = vlaneseq
        %v2256 = vshrl.u32 %v2255, 7
        %v2257 = vsub.s32 6, %v2256
        %v2258 = vrot.slane %v2188, %v2257
        %v2259 = vlaneseq
        %v2260 = vshrl.u32 %v2259, 7
        %v2261 = vsub.s32 7, %v2260
        %v2262 = vrot.slane %v2188, %v2261
        %v2263 = vlaneseq
        %v2264 = vshrl.u32 %v2263, 7
        %v2265 = vsub.s32 0, %v2264
        %v2266 = vrot.slane %v2191, %v2265
        %v2267 = vlaneseq
        %v2268 = vshrl.u32 %v2267, 7
        %v2269 = vsub.s32 1, %v2268
        %v2270 = vrot.slane %v2191, %v2269
        %v2271 = vlaneseq
        %v2272 = vshrl.u32 %v2271, 7
        %v2273 = vsub.s32 2, %v2272
        %v2274 = vrot.slane %v2191, %v2273
        %v2275 = vlaneseq
        %v2276 = vshrl.u32 %v2275, 7
        %v2277 = vsub.s32 3, %v2276
        %v2278 = vrot.slane %v2191, %v2277
        %v2279 = vlaneseq
        %v2280 = vshrl.u32 %v2279, 7
        %v2281 = vsub.s32 4, %v2280
        %v2282 = vrot.slane %v2191, %v2281
        %v2283 = vlaneseq
        %v2284 = vshrl.u32 %v2283, 7
        %v2285 = vsub.s32 5, %v2284
        %v2286 = vrot.slane %v2191, %v2285
        %v2287 = vlaneseq
        %v2288 = vshrl.u32 %v2287, 7
        %v2289 = vsub.s32 6, %v2288
        %v2290 = vrot.slane %v2191, %v2289
        %v2291 = vlaneseq
        %v2292 = vshrl.u32 %v2291, 7
        %v2293 = vsub.s32 7, %v2292
        %v2294 = vrot.slane %v2191, %v2293
        %v2295 = vlaneseq
        %v2296 = vshrl.u32 %v2295, 7
        %v2297 = vsub.s32 0, %v2296
        %v2298 = vrot.slane %v2194, %v2297
        %v2299 = vlaneseq
        %v2300 = vshrl.u32 %v2299, 7
        %v2301 = vsub.s32 1, %v2300
        %v2302 = vrot.slane %v2194, %v2301
        %v2303 = vlaneseq
        %v2304 = vshrl.u32 %v2303, 7
        %v2305 = vsub.s32 2, %v2304
        %v2306 = vrot.slane %v2194, %v2305
        %v2307 = vlaneseq
        %v2308 = vshrl.u32 %v2307, 7
        %v2309 = vsub.s32 3, %v2308
        %v2310 = vrot.slane %v2194, %v2309
        %v2311 = vlaneseq
        %v2312 = vshrl.u32 %v2311, 7
        %v2313 = vsub.s32 4, %v2312
        %v2314 = vrot.slane %v2194, %v2313
        %v2315 = vlaneseq
        %v2316 = vshrl.u32 %v2315, 7
        %v2317 = vsub.s32 5, %v2316
        %v2318 = vrot.slane %v2194, %v2317
        %v2319 = vlaneseq
        %v2320 = vshrl.u32 %v2319, 7
        %v2321 = vsub.s32 6, %v2320
        %v2322 = vrot.slane %v2194, %v2321
        %v2323 = vlaneseq
        %v2324 = vshrl.u32 %v2323, 7
        %v2325 = vsub.s32 7, %v2324
        %v2326 = vrot.slane %v2194, %v2325
        %v2359 = vsub.f32 %v1887, %v2202
        %v2360 = vsub.f32 %v1890, %v2206
        %v2361 = vsub.f32 %v1893, %v2210
        %v2362 = vsub.f32 %v1896, %v2214
        %v2363 = vsub.f32 %v1899, %v2218
        %v2364 = vsub.f32 %v1902, %v2222
        %v2365 = vsub.f32 %v1905, %v2226
        %v2366 = vsub.f32 %v1908, %v2230
        %v2367 = vsub.f32 %v1911, %v2234
        %v2368 = vsub.f32 %v1914, %v2238
        %v2369 = vsub.f32 %v1917, %v2242
        %v2370 = vsub.f32 %v1920, %v2246
        %v2371 = vsub.f32 %v1923, %v2250
        %v2372 = vsub.f32 %v1926, %v2254
        %v2373 = vsub.f32 %v1929, %v2258
        %v2374 = vsub.f32 %v1932, %v2262
        %v2375 = vsub.f32 %v1935, %v2266
        %v2376 = vsub.f32 %v1938, %v2270
        %v2377 = vsub.f32 %v1941, %v2274
        %v2378 = vsub.f32 %v1944, %v2278
        %v2379 = vsub.f32 %v1947, %v2282
        %v2380 = vsub.f32 %v1950, %v2286
        %v2381 = vsub.f32 %v1953, %v2290
        %v2382 = vsub.f32 %v1956, %v2294
        %v2383 = vsub.f32 %v1959, %v2298
        %v2384 = vsub.f32 %v1962, %v2302
        %v2385 = vsub.f32 %v1965, %v2306
        %v2386 = vsub.f32 %v1968, %v2310
        %v2387 = vsub.f32 %v1971, %v2314
        %v2388 = vsub.f32 %v1974, %v2318
        %v2389 = vsub.f32 %v1977, %v2322
        %v2390 = vsub.f32 %v1980, %v2326
        %v2391 = vmul.f32 %v2359, 1.442695
        %v2392 = vpow.pop %v2391
        %v2393 = vmul.f32 %v2360, 1.442695
        %v2394 = vpow.pop %v2393
        %v2395 = vmul.f32 %v2361, 1.442695
        %v2396 = vpow.pop %v2395
        %v2397 = vmul.f32 %v2362, 1.442695
        %v2398 = vpow.pop %v2397
        %v2399 = vmul.f32 %v2363, 1.442695
        %v2400 = vpow.pop %v2399
        %v2401 = vmul.f32 %v2364, 1.442695
        %v2402 = vpow.pop %v2401
        %v2403 = vmul.f32 %v2365, 1.442695
        %v2404 = vpow.pop %v2403
        %v2405 = vmul.f32 %v2366, 1.442695
        %v2406 = vpow.pop %v2405
        %v2407 = vmul.f32 %v2367, 1.442695
        %v2408 = vpow.pop %v2407
        %v2409 = vmul.f32 %v2368, 1.442695
        %v2410 = vpow.pop %v2409
        %v2411 = vmul.f32 %v2369, 1.442695
        %v2412 = vpow.pop %v2411
        %v2413 = vmul.f32 %v2370, 1.442695
        %v2414 = vpow.pop %v2413
        %v2415 = vmul.f32 %v2371, 1.442695
        %v2416 = vpow.pop %v2415
        %v2417 = vmul.f32 %v2372, 1.442695
        %v2418 = vpow.pop %v2417
        %v2419 = vmul.f32 %v2373, 1.442695
        %v2420 = vpow.pop %v2419
        %v2421 = vmul.f32 %v2374, 1.442695
        %v2422 = vpow.pop %v2421
        %v2423 = vmul.f32 %v2375, 1.442695
        %v2424 = vpow.pop %v2423
        %v2425 = vmul.f32 %v2376, 1.442695
        %v2426 = vpow.pop %v2425
        %v2427 = vmul.f32 %v2377, 1.442695
        %v2428 = vpow.pop %v2427
        %v2429 = vmul.f32 %v2378, 1.442695
        %v2430 = vpow.pop %v2429
        %v2431 = vmul.f32 %v2379, 1.442695
        %v2432 = vpow.pop %v2431
        %v2433 = vmul.f32 %v2380, 1.442695
        %v2434 = vpow.pop %v2433
        %v2435 = vmul.f32 %v2381, 1.442695
        %v2436 = vpow.pop %v2435
        %v2437 = vmul.f32 %v2382, 1.442695
        %v2438 = vpow.pop %v2437
        %v2439 = vmul.f32 %v2383, 1.442695
        %v2440 = vpow.pop %v2439
        %v2441 = vmul.f32 %v2384, 1.442695
        %v2442 = vpow.pop %v2441
        %v2443 = vmul.f32 %v2385, 1.442695
        %v2444 = vpow.pop %v2443
        %v2445 = vmul.f32 %v2386, 1.442695
        %v2446 = vpow.pop %v2445
        %v2447 = vmul.f32 %v2387, 1.442695
        %v2448 = vpow.pop %v2447
        %v2449 = vmul.f32 %v2388, 1.442695
        %v2450 = vpow.pop %v2449
        %v2451 = vmul.f32 %v2389, 1.442695
        %v2452 = vpow.pop %v2451
        %v2453 = vmul.f32 %v2390, 1.442695
        %v2454 = vpow.pop %v2453
        %2487 = vset.pattern.permute.xlu0 0
        %2488 = vperm.xlu0 %2487, %v2392
        %v2489 = vpop.permute.xlu0 %2488
        %2490 = vset.pattern.permute.xlu0 0
        %2491 = vperm.xlu0 %2490, %v2394
        %v2492 = vpop.permute.xlu0 %2491
        %2493 = vset.pattern.permute.xlu0 0
        %2494 = vperm.xlu0 %2493, %v2396
        %v2495 = vpop.permute.xlu0 %2494
        %2496 = vset.pattern.permute.xlu0 0
        %2497 = vperm.xlu0 %2496, %v2398
        %v2498 = vpop.permute.xlu0 %2497
        %2499 = vset.pattern.permute.xlu0 0
        %2500 = vperm.xlu0 %2499, %v2400
        %v2501 = vpop.permute.xlu0 %2500
        %2502 = vset.pattern.permute.xlu0 0
        %2503 = vperm.xlu0 %2502, %v2402
        %v2504 = vpop.permute.xlu0 %2503
        %2505 = vset.pattern.permute.xlu0 0
        %2506 = vperm.xlu0 %2505, %v2404
        %v2507 = vpop.permute.xlu0 %2506
        %2508 = vset.pattern.permute.xlu0 0
        %2509 = vperm.xlu0 %2508, %v2406
        %v2510 = vpop.permute.xlu0 %2509
        %2511 = vset.pattern.permute.xlu0 0
        %2512 = vperm.xlu0 %2511, %v2408
        %v2513 = vpop.permute.xlu0 %2512
        %2514 = vset.pattern.permute.xlu0 0
        %2515 = vperm.xlu0 %2514, %v2410
        %v2516 = vpop.permute.xlu0 %2515
        %2517 = vset.pattern.permute.xlu0 0
        %2518 = vperm.xlu0 %2517, %v2412
        %v2519 = vpop.permute.xlu0 %2518
        %2520 = vset.pattern.permute.xlu0 0
        %2521 = vperm.xlu0 %2520, %v2414
        %v2522 = vpop.permute.xlu0 %2521
        %2523 = vset.pattern.permute.xlu0 0
        %2524 = vperm.xlu0 %2523, %v2416
        %v2525 = vpop.permute.xlu0 %2524
        %2526 = vset.pattern.permute.xlu0 0
        %2527 = vperm.xlu0 %2526, %v2418
        %v2528 = vpop.permute.xlu0 %2527
        %2529 = vset.pattern.permute.xlu0 0
        %2530 = vperm.xlu0 %2529, %v2420
        %v2531 = vpop.permute.xlu0 %2530
        %2532 = vset.pattern.permute.xlu0 0
        %2533 = vperm.xlu0 %2532, %v2422
        %v2534 = vpop.permute.xlu0 %2533
        %2535 = vset.pattern.permute.xlu0 0
        %2536 = vperm.xlu0 %2535, %v2424
        %v2537 = vpop.permute.xlu0 %2536
        %2538 = vset.pattern.permute.xlu0 0
        %2539 = vperm.xlu0 %2538, %v2426
        %v2540 = vpop.permute.xlu0 %2539
        %2541 = vset.pattern.permute.xlu0 0
        %2542 = vperm.xlu0 %2541, %v2428
        %v2543 = vpop.permute.xlu0 %2542
        %2544 = vset.pattern.permute.xlu0 0
        %2545 = vperm.xlu0 %2544, %v2430
        %v2546 = vpop.permute.xlu0 %2545
        %2547 = vset.pattern.permute.xlu0 0
        %2548 = vperm.xlu0 %2547, %v2432
        %v2549 = vpop.permute.xlu0 %2548
        %2550 = vset.pattern.permute.xlu0 0
        %2551 = vperm.xlu0 %2550, %v2434
        %v2552 = vpop.permute.xlu0 %2551
        %2553 = vset.pattern.permute.xlu0 0
        %2554 = vperm.xlu0 %2553, %v2436
        %v2555 = vpop.permute.xlu0 %2554
        %2556 = vset.pattern.permute.xlu0 0
        %2557 = vperm.xlu0 %2556, %v2438
        %v2558 = vpop.permute.xlu0 %2557
        %2559 = vset.pattern.permute.xlu0 0
        %2560 = vperm.xlu0 %2559, %v2440
        %v2561 = vpop.permute.xlu0 %2560
        %2562 = vset.pattern.permute.xlu0 0
        %2563 = vperm.xlu0 %2562, %v2442
        %v2564 = vpop.permute.xlu0 %2563
        %2565 = vset.pattern.permute.xlu0 0
        %2566 = vperm.xlu0 %2565, %v2444
        %v2567 = vpop.permute.xlu0 %2566
        %2568 = vset.pattern.permute.xlu0 0
        %2569 = vperm.xlu0 %2568, %v2446
        %v2570 = vpop.permute.xlu0 %2569
        %2571 = vset.pattern.permute.xlu0 0
        %2572 = vperm.xlu0 %2571, %v2448
        %v2573 = vpop.permute.xlu0 %2572
        %2574 = vset.pattern.permute.xlu0 0
        %2575 = vperm.xlu0 %2574, %v2450
        %v2576 = vpop.permute.xlu0 %2575
        %2577 = vset.pattern.permute.xlu0 0
        %2578 = vperm.xlu0 %2577, %v2452
        %v2579 = vpop.permute.xlu0 %2578
        %2580 = vset.pattern.permute.xlu0 0
        %2581 = vperm.xlu0 %2580, %v2454
        %v2582 = vpop.permute.xlu0 %2581
        %v2583 = vlaneseq
        %v2584 = vshrl.u32 %v2583, 7
        %v2585 = vsub.s32 %v2014, %v2584
        %v2586 = vrot.slane %v2489, %v2585
        %v2587 = vlaneseq
        %v2588 = vshrl.u32 %v2587, 7
        %v2589 = vsub.s32 %v2014, %v2588
        %v2590 = vrot.slane %v2492, %v2589
        %v2591 = vlaneseq
        %v2592 = vshrl.u32 %v2591, 7
        %v2593 = vsub.s32 %v2014, %v2592
        %v2594 = vrot.slane %v2495, %v2593
        %v2595 = vlaneseq
        %v2596 = vshrl.u32 %v2595, 7
        %v2597 = vsub.s32 %v2014, %v2596
        %v2598 = vrot.slane %v2498, %v2597
        %v2599 = vlaneseq
        %v2600 = vshrl.u32 %v2599, 7
        %v2601 = vsub.s32 %v2014, %v2600
        %v2602 = vrot.slane %v2501, %v2601
        %v2603 = vlaneseq
        %v2604 = vshrl.u32 %v2603, 7
        %v2605 = vsub.s32 %v2014, %v2604
        %v2606 = vrot.slane %v2504, %v2605
        %v2607 = vlaneseq
        %v2608 = vshrl.u32 %v2607, 7
        %v2609 = vsub.s32 %v2014, %v2608
        %v2610 = vrot.slane %v2507, %v2609
        %v2611 = vlaneseq
        %v2612 = vshrl.u32 %v2611, 7
        %v2613 = vsub.s32 %v2014, %v2612
        %v2614 = vrot.slane %v2510, %v2613
        %v2615 = vlaneseq
        %v2616 = vshrl.u32 %v2615, 7
        %v2617 = vsub.s32 %v2014, %v2616
        %v2618 = vrot.slane %v2513, %v2617
        %v2619 = vlaneseq
        %v2620 = vshrl.u32 %v2619, 7
        %v2621 = vsub.s32 %v2014, %v2620
        %v2622 = vrot.slane %v2516, %v2621
        %v2623 = vlaneseq
        %v2624 = vshrl.u32 %v2623, 7
        %v2625 = vsub.s32 %v2014, %v2624
        %v2626 = vrot.slane %v2519, %v2625
        %v2627 = vlaneseq
        %v2628 = vshrl.u32 %v2627, 7
        %v2629 = vsub.s32 %v2014, %v2628
        %v2630 = vrot.slane %v2522, %v2629
        %v2631 = vlaneseq
        %v2632 = vshrl.u32 %v2631, 7
        %v2633 = vsub.s32 %v2014, %v2632
        %v2634 = vrot.slane %v2525, %v2633
        %v2635 = vlaneseq
        %v2636 = vshrl.u32 %v2635, 7
        %v2637 = vsub.s32 %v2014, %v2636
        %v2638 = vrot.slane %v2528, %v2637
        %v2639 = vlaneseq
        %v2640 = vshrl.u32 %v2639, 7
        %v2641 = vsub.s32 %v2014, %v2640
        %v2642 = vrot.slane %v2531, %v2641
        %v2643 = vlaneseq
        %v2644 = vshrl.u32 %v2643, 7
        %v2645 = vsub.s32 %v2014, %v2644
        %v2646 = vrot.slane %v2534, %v2645
        %v2647 = vlaneseq
        %v2648 = vshrl.u32 %v2647, 7
        %v2649 = vsub.s32 %v2014, %v2648
        %v2650 = vrot.slane %v2537, %v2649
        %v2651 = vlaneseq
        %v2652 = vshrl.u32 %v2651, 7
        %v2653 = vsub.s32 %v2014, %v2652
        %v2654 = vrot.slane %v2540, %v2653
        %v2655 = vlaneseq
        %v2656 = vshrl.u32 %v2655, 7
        %v2657 = vsub.s32 %v2014, %v2656
        %v2658 = vrot.slane %v2543, %v2657
        %v2659 = vlaneseq
        %v2660 = vshrl.u32 %v2659, 7
        %v2661 = vsub.s32 %v2014, %v2660
        %v2662 = vrot.slane %v2546, %v2661
        %v2663 = vlaneseq
        %v2664 = vshrl.u32 %v2663, 7
        %v2665 = vsub.s32 %v2014, %v2664
        %v2666 = vrot.slane %v2549, %v2665
        %v2667 = vlaneseq
        %v2668 = vshrl.u32 %v2667, 7
        %v2669 = vsub.s32 %v2014, %v2668
        %v2670 = vrot.slane %v2552, %v2669
        %v2671 = vlaneseq
        %v2672 = vshrl.u32 %v2671, 7
        %v2673 = vsub.s32 %v2014, %v2672
        %v2674 = vrot.slane %v2555, %v2673
        %v2675 = vlaneseq
        %v2676 = vshrl.u32 %v2675, 7
        %v2677 = vsub.s32 %v2014, %v2676
        %v2678 = vrot.slane %v2558, %v2677
        %v2679 = vlaneseq
        %v2680 = vshrl.u32 %v2679, 7
        %v2681 = vsub.s32 %v2014, %v2680
        %v2682 = vrot.slane %v2561, %v2681
        %v2683 = vlaneseq
        %v2684 = vshrl.u32 %v2683, 7
        %v2685 = vsub.s32 %v2014, %v2684
        %v2686 = vrot.slane %v2564, %v2685
        %v2687 = vlaneseq
        %v2688 = vshrl.u32 %v2687, 7
        %v2689 = vsub.s32 %v2014, %v2688
        %v2690 = vrot.slane %v2567, %v2689
        %v2691 = vlaneseq
        %v2692 = vshrl.u32 %v2691, 7
        %v2693 = vsub.s32 %v2014, %v2692
        %v2694 = vrot.slane %v2570, %v2693
        %v2695 = vlaneseq
        %v2696 = vshrl.u32 %v2695, 7
        %v2697 = vsub.s32 %v2014, %v2696
        %v2698 = vrot.slane %v2573, %v2697
        %v2699 = vlaneseq
        %v2700 = vshrl.u32 %v2699, 7
        %v2701 = vsub.s32 %v2014, %v2700
        %v2702 = vrot.slane %v2576, %v2701
        %v2703 = vlaneseq
        %v2704 = vshrl.u32 %v2703, 7
        %v2705 = vsub.s32 %v2014, %v2704
        %v2706 = vrot.slane %v2579, %v2705
        %v2707 = vlaneseq
        %v2708 = vshrl.u32 %v2707, 7
        %v2709 = vsub.s32 %v2014, %v2708
        %v2710 = vrot.slane %v2582, %v2709
        %v2711 = vsel %vm2143, %v2590, %v2586
        %v2712 = vsel %vm2145, %v2594, %v2711
        %v2713 = vsel %vm2147, %v2598, %v2712
        %v2714 = vsel %vm2149, %v2602, %v2713
        %v2715 = vsel %vm2151, %v2606, %v2714
        %v2716 = vsel %vm2153, %v2610, %v2715
        %v2717 = vsel %vm2155, %v2614, %v2716
        %v2718 = vsel %vm2143, %v2622, %v2618
        %v2719 = vsel %vm2145, %v2626, %v2718
        %v2720 = vsel %vm2147, %v2630, %v2719
        %v2721 = vsel %vm2149, %v2634, %v2720
        %v2722 = vsel %vm2151, %v2638, %v2721
        %v2723 = vsel %vm2153, %v2642, %v2722
        %v2724 = vsel %vm2155, %v2646, %v2723
        %v2725 = vsel %vm2143, %v2654, %v2650
        %v2726 = vsel %vm2145, %v2658, %v2725
        %v2727 = vsel %vm2147, %v2662, %v2726
        %v2728 = vsel %vm2149, %v2666, %v2727
        %v2729 = vsel %vm2151, %v2670, %v2728
        %v2730 = vsel %vm2153, %v2674, %v2729
        %v2731 = vsel %vm2155, %v2678, %v2730
        %v2732 = vsel %vm2143, %v2686, %v2682
        %v2733 = vsel %vm2145, %v2690, %v2732
        %v2734 = vsel %vm2147, %v2694, %v2733
        %v2735 = vsel %vm2149, %v2698, %v2734
        %v2736 = vsel %vm2151, %v2702, %v2735
        %v2737 = vsel %vm2153, %v2706, %v2736
        %v2738 = vsel %vm2155, %v2710, %v2737
        %v2743 = vsel %vm2182, %v2717, 0.0
        %2744 = vadd.xlane.f32.xlu0 %v2743
        %v2745 = vpop.xlane.xlu0 %2744
        %v2746 = vsel %vm2182, %v2724, 0.0
        %2747 = vadd.xlane.f32.xlu0 %v2746
        %v2748 = vpop.xlane.xlu0 %2747
        %v2749 = vsel %vm2182, %v2731, 0.0
        %2750 = vadd.xlane.f32.xlu0 %v2749
        %v2751 = vpop.xlane.xlu0 %2750
        %v2752 = vsel %vm2182, %v2738, 0.0
        %2753 = vadd.xlane.f32.xlu0 %v2752
        %v2754 = vpop.xlane.xlu0 %2753
        %v2759 = vlaneseq
        %v2760 = vshrl.u32 %v2759, 7
        %v2761 = vsub.s32 0, %v2760
        %v2762 = vrot.slane %v2745, %v2761
        %v2763 = vlaneseq
        %v2764 = vshrl.u32 %v2763, 7
        %v2765 = vsub.s32 1, %v2764
        %v2766 = vrot.slane %v2745, %v2765
        %v2767 = vlaneseq
        %v2768 = vshrl.u32 %v2767, 7
        %v2769 = vsub.s32 2, %v2768
        %v2770 = vrot.slane %v2745, %v2769
        %v2771 = vlaneseq
        %v2772 = vshrl.u32 %v2771, 7
        %v2773 = vsub.s32 3, %v2772
        %v2774 = vrot.slane %v2745, %v2773
        %v2775 = vlaneseq
        %v2776 = vshrl.u32 %v2775, 7
        %v2777 = vsub.s32 4, %v2776
        %v2778 = vrot.slane %v2745, %v2777
        %v2779 = vlaneseq
        %v2780 = vshrl.u32 %v2779, 7
        %v2781 = vsub.s32 5, %v2780
        %v2782 = vrot.slane %v2745, %v2781
        %v2783 = vlaneseq
        %v2784 = vshrl.u32 %v2783, 7
        %v2785 = vsub.s32 6, %v2784
        %v2786 = vrot.slane %v2745, %v2785
        %v2787 = vlaneseq
        %v2788 = vshrl.u32 %v2787, 7
        %v2789 = vsub.s32 7, %v2788
        %v2790 = vrot.slane %v2745, %v2789
        %v2791 = vlaneseq
        %v2792 = vshrl.u32 %v2791, 7
        %v2793 = vsub.s32 0, %v2792
        %v2794 = vrot.slane %v2748, %v2793
        %v2795 = vlaneseq
        %v2796 = vshrl.u32 %v2795, 7
        %v2797 = vsub.s32 1, %v2796
        %v2798 = vrot.slane %v2748, %v2797
        %v2799 = vlaneseq
        %v2800 = vshrl.u32 %v2799, 7
        %v2801 = vsub.s32 2, %v2800
        %v2802 = vrot.slane %v2748, %v2801
        %v2803 = vlaneseq
        %v2804 = vshrl.u32 %v2803, 7
        %v2805 = vsub.s32 3, %v2804
        %v2806 = vrot.slane %v2748, %v2805
        %v2807 = vlaneseq
        %v2808 = vshrl.u32 %v2807, 7
        %v2809 = vsub.s32 4, %v2808
        %v2810 = vrot.slane %v2748, %v2809
        %v2811 = vlaneseq
        %v2812 = vshrl.u32 %v2811, 7
        %v2813 = vsub.s32 5, %v2812
        %v2814 = vrot.slane %v2748, %v2813
        %v2815 = vlaneseq
        %v2816 = vshrl.u32 %v2815, 7
        %v2817 = vsub.s32 6, %v2816
        %v2818 = vrot.slane %v2748, %v2817
        %v2819 = vlaneseq
        %v2820 = vshrl.u32 %v2819, 7
        %v2821 = vsub.s32 7, %v2820
        %v2822 = vrot.slane %v2748, %v2821
        %v2823 = vlaneseq
        %v2824 = vshrl.u32 %v2823, 7
        %v2825 = vsub.s32 0, %v2824
        %v2826 = vrot.slane %v2751, %v2825
        %v2827 = vlaneseq
        %v2828 = vshrl.u32 %v2827, 7
        %v2829 = vsub.s32 1, %v2828
        %v2830 = vrot.slane %v2751, %v2829
        %v2831 = vlaneseq
        %v2832 = vshrl.u32 %v2831, 7
        %v2833 = vsub.s32 2, %v2832
        %v2834 = vrot.slane %v2751, %v2833
        %v2835 = vlaneseq
        %v2836 = vshrl.u32 %v2835, 7
        %v2837 = vsub.s32 3, %v2836
        %v2838 = vrot.slane %v2751, %v2837
        %v2839 = vlaneseq
        %v2840 = vshrl.u32 %v2839, 7
        %v2841 = vsub.s32 4, %v2840
        %v2842 = vrot.slane %v2751, %v2841
        %v2843 = vlaneseq
        %v2844 = vshrl.u32 %v2843, 7
        %v2845 = vsub.s32 5, %v2844
        %v2846 = vrot.slane %v2751, %v2845
        %v2847 = vlaneseq
        %v2848 = vshrl.u32 %v2847, 7
        %v2849 = vsub.s32 6, %v2848
        %v2850 = vrot.slane %v2751, %v2849
        %v2851 = vlaneseq
        %v2852 = vshrl.u32 %v2851, 7
        %v2853 = vsub.s32 7, %v2852
        %v2854 = vrot.slane %v2751, %v2853
        %v2855 = vlaneseq
        %v2856 = vshrl.u32 %v2855, 7
        %v2857 = vsub.s32 0, %v2856
        %v2858 = vrot.slane %v2754, %v2857
        %v2859 = vlaneseq
        %v2860 = vshrl.u32 %v2859, 7
        %v2861 = vsub.s32 1, %v2860
        %v2862 = vrot.slane %v2754, %v2861
        %v2863 = vlaneseq
        %v2864 = vshrl.u32 %v2863, 7
        %v2865 = vsub.s32 2, %v2864
        %v2866 = vrot.slane %v2754, %v2865
        %v2867 = vlaneseq
        %v2868 = vshrl.u32 %v2867, 7
        %v2869 = vsub.s32 3, %v2868
        %v2870 = vrot.slane %v2754, %v2869
        %v2871 = vlaneseq
        %v2872 = vshrl.u32 %v2871, 7
        %v2873 = vsub.s32 4, %v2872
        %v2874 = vrot.slane %v2754, %v2873
        %v2875 = vlaneseq
        %v2876 = vshrl.u32 %v2875, 7
        %v2877 = vsub.s32 5, %v2876
        %v2878 = vrot.slane %v2754, %v2877
        %v2879 = vlaneseq
        %v2880 = vshrl.u32 %v2879, 7
        %v2881 = vsub.s32 6, %v2880
        %v2882 = vrot.slane %v2754, %v2881
        %v2883 = vlaneseq
        %v2884 = vshrl.u32 %v2883, 7
        %v2885 = vsub.s32 7, %v2884
        %v2886 = vrot.slane %v2754, %v2885
        %v2919 = vrcp.pop %v2762
        %v2920 = vmul.f32 %v2392, %v2919
        %v2921 = vrcp.pop %v2766
        %v2922 = vmul.f32 %v2394, %v2921
        %v2923 = vrcp.pop %v2770
        %v2924 = vmul.f32 %v2396, %v2923
        %v2925 = vrcp.pop %v2774
        %v2926 = vmul.f32 %v2398, %v2925
        %v2927 = vrcp.pop %v2778
        %v2928 = vmul.f32 %v2400, %v2927
        %v2929 = vrcp.pop %v2782
        %v2930 = vmul.f32 %v2402, %v2929
        %v2931 = vrcp.pop %v2786
        %v2932 = vmul.f32 %v2404, %v2931
        %v2933 = vrcp.pop %v2790
        %v2934 = vmul.f32 %v2406, %v2933
        %v2935 = vrcp.pop %v2794
        %v2936 = vmul.f32 %v2408, %v2935
        %v2937 = vrcp.pop %v2798
        %v2938 = vmul.f32 %v2410, %v2937
        %v2939 = vrcp.pop %v2802
        %v2940 = vmul.f32 %v2412, %v2939
        %v2941 = vrcp.pop %v2806
        %v2942 = vmul.f32 %v2414, %v2941
        %v2943 = vrcp.pop %v2810
        %v2944 = vmul.f32 %v2416, %v2943
        %v2945 = vrcp.pop %v2814
        %v2946 = vmul.f32 %v2418, %v2945
        %v2947 = vrcp.pop %v2818
        %v2948 = vmul.f32 %v2420, %v2947
        %v2949 = vrcp.pop %v2822
        %v2950 = vmul.f32 %v2422, %v2949
        %v2951 = vrcp.pop %v2826
        %v2952 = vmul.f32 %v2424, %v2951
        %v2953 = vrcp.pop %v2830
        %v2954 = vmul.f32 %v2426, %v2953
        %v2955 = vrcp.pop %v2834
        %v2956 = vmul.f32 %v2428, %v2955
        %v2957 = vrcp.pop %v2838
        %v2958 = vmul.f32 %v2430, %v2957
        %v2959 = vrcp.pop %v2842
        %v2960 = vmul.f32 %v2432, %v2959
        %v2961 = vrcp.pop %v2846
        %v2962 = vmul.f32 %v2434, %v2961
        %v2963 = vrcp.pop %v2850
        %v2964 = vmul.f32 %v2436, %v2963
        %v2965 = vrcp.pop %v2854
        %v2966 = vmul.f32 %v2438, %v2965
        %v2967 = vrcp.pop %v2858
        %v2968 = vmul.f32 %v2440, %v2967
        %v2969 = vrcp.pop %v2862
        %v2970 = vmul.f32 %v2442, %v2969
        %v2971 = vrcp.pop %v2866
        %v2972 = vmul.f32 %v2444, %v2971
        %v2973 = vrcp.pop %v2870
        %v2974 = vmul.f32 %v2446, %v2973
        %v2975 = vrcp.pop %v2874
        %v2976 = vmul.f32 %v2448, %v2975
        %v2977 = vrcp.pop %v2878
        %v2978 = vmul.f32 %v2450, %v2977
        %v2979 = vrcp.pop %v2882
        %v2980 = vmul.f32 %v2452, %v2979
        %v2981 = vrcp.pop %v2886
        %v2982 = vmul.f32 %v2454, %v2981
        %2984 = vset.pattern.permute.xlu0 0
        %2985 = vperm.xlu0 %2984, %v2920
        %v2986 = vpop.permute.xlu0 %2985
        %2989 = vset.pattern.permute.xlu0 0
        %2990 = vperm.xlu0 %2989, %v2922
        %v2991 = vpop.permute.xlu0 %2990
        %2994 = vset.pattern.permute.xlu0 0
        %2995 = vperm.xlu0 %2994, %v2924
        %v2996 = vpop.permute.xlu0 %2995
        %2999 = vset.pattern.permute.xlu0 0
        %3000 = vperm.xlu0 %2999, %v2926
        %v3001 = vpop.permute.xlu0 %3000
        %3004 = vset.pattern.permute.xlu0 0
        %3005 = vperm.xlu0 %3004, %v2928
        %v3006 = vpop.permute.xlu0 %3005
        %3009 = vset.pattern.permute.xlu0 0
        %3010 = vperm.xlu0 %3009, %v2930
        %v3011 = vpop.permute.xlu0 %3010
        %3014 = vset.pattern.permute.xlu0 0
        %3015 = vperm.xlu0 %3014, %v2932
        %v3016 = vpop.permute.xlu0 %3015
        %3019 = vset.pattern.permute.xlu0 0
        %3020 = vperm.xlu0 %3019, %v2934
        %v3021 = vpop.permute.xlu0 %3020
        %3024 = vset.pattern.permute.xlu0 0
        %3025 = vperm.xlu0 %3024, %v2936
        %v3026 = vpop.permute.xlu0 %3025
        %3029 = vset.pattern.permute.xlu0 0
        %3030 = vperm.xlu0 %3029, %v2938
        %v3031 = vpop.permute.xlu0 %3030
        %3034 = vset.pattern.permute.xlu0 0
        %3035 = vperm.xlu0 %3034, %v2940
        %v3036 = vpop.permute.xlu0 %3035
        %3039 = vset.pattern.permute.xlu0 0
        %3040 = vperm.xlu0 %3039, %v2942
        %v3041 = vpop.permute.xlu0 %3040
        %3044 = vset.pattern.permute.xlu0 0
        %3045 = vperm.xlu0 %3044, %v2944
        %v3046 = vpop.permute.xlu0 %3045
        %3049 = vset.pattern.permute.xlu0 0
        %3050 = vperm.xlu0 %3049, %v2946
        %v3051 = vpop.permute.xlu0 %3050
        %3054 = vset.pattern.permute.xlu0 0
        %3055 = vperm.xlu0 %3054, %v2948
        %v3056 = vpop.permute.xlu0 %3055
        %3059 = vset.pattern.permute.xlu0 0
        %3060 = vperm.xlu0 %3059, %v2950
        %v3061 = vpop.permute.xlu0 %3060
        %3064 = vset.pattern.permute.xlu0 0
        %3065 = vperm.xlu0 %3064, %v2952
        %v3066 = vpop.permute.xlu0 %3065
        %3069 = vset.pattern.permute.xlu0 0
        %3070 = vperm.xlu0 %3069, %v2954
        %v3071 = vpop.permute.xlu0 %3070
        %3074 = vset.pattern.permute.xlu0 0
        %3075 = vperm.xlu0 %3074, %v2956
        %v3076 = vpop.permute.xlu0 %3075
        %3079 = vset.pattern.permute.xlu0 0
        %3080 = vperm.xlu0 %3079, %v2958
        %v3081 = vpop.permute.xlu0 %3080
        %3084 = vset.pattern.permute.xlu0 0
        %3085 = vperm.xlu0 %3084, %v2960
        %v3086 = vpop.permute.xlu0 %3085
        %3089 = vset.pattern.permute.xlu0 0
        %3090 = vperm.xlu0 %3089, %v2962
        %v3091 = vpop.permute.xlu0 %3090
        %3094 = vset.pattern.permute.xlu0 0
        %3095 = vperm.xlu0 %3094, %v2964
        %v3096 = vpop.permute.xlu0 %3095
        %3099 = vset.pattern.permute.xlu0 0
        %3100 = vperm.xlu0 %3099, %v2966
        %v3101 = vpop.permute.xlu0 %3100
        %3104 = vset.pattern.permute.xlu0 0
        %3105 = vperm.xlu0 %3104, %v2968
        %v3106 = vpop.permute.xlu0 %3105
        %3109 = vset.pattern.permute.xlu0 0
        %3110 = vperm.xlu0 %3109, %v2970
        %v3111 = vpop.permute.xlu0 %3110
        %3114 = vset.pattern.permute.xlu0 0
        %3115 = vperm.xlu0 %3114, %v2972
        %v3116 = vpop.permute.xlu0 %3115
        %3119 = vset.pattern.permute.xlu0 0
        %3120 = vperm.xlu0 %3119, %v2974
        %v3121 = vpop.permute.xlu0 %3120
        %3124 = vset.pattern.permute.xlu0 0
        %3125 = vperm.xlu0 %3124, %v2976
        %v3126 = vpop.permute.xlu0 %3125
        %3129 = vset.pattern.permute.xlu0 0
        %3130 = vperm.xlu0 %3129, %v2978
        %v3131 = vpop.permute.xlu0 %3130
        %3134 = vset.pattern.permute.xlu0 0
        %3135 = vperm.xlu0 %3134, %v2980
        %v3136 = vpop.permute.xlu0 %3135
        %3139 = vset.pattern.permute.xlu0 0
        %3140 = vperm.xlu0 %3139, %v2982
        %v3141 = vpop.permute.xlu0 %3140
        %v3143 = vmul.f32 %v2986, %v1188
        %v3144 = vmul.f32 %v2991, %v1194
        %v3145 = vmul.f32 %v2996, %v1200
        %v3146 = vmul.f32 %v3001, %v1206
        %v3147 = vmul.f32 %v3006, %v1212
        %v3148 = vmul.f32 %v3011, %v1218
        %v3149 = vmul.f32 %v3016, %v1224
        %v3150 = vmul.f32 %v3021, %v1230
        %v3151 = vmul.f32 %v3026, %v1236
        %v3152 = vmul.f32 %v3031, %v1242
        %v3153 = vmul.f32 %v3036, %v1248
        %v3154 = vmul.f32 %v3041, %v1254
        %v3155 = vmul.f32 %v3046, %v1260
        %v3156 = vmul.f32 %v3051, %v1266
        %v3157 = vmul.f32 %v3056, %v1272
        %v3158 = vmul.f32 %v3061, %v1278
        %v3159 = vmul.f32 %v3066, %v1284
        %v3160 = vmul.f32 %v3071, %v1290
        %v3161 = vmul.f32 %v3076, %v1296
        %v3162 = vmul.f32 %v3081, %v1302
        %v3163 = vmul.f32 %v3086, %v1308
        %v3164 = vmul.f32 %v3091, %v1314
        %v3165 = vmul.f32 %v3096, %v1320
        %v3166 = vmul.f32 %v3101, %v1326
        %v3167 = vmul.f32 %v3106, %v1332
        %v3168 = vmul.f32 %v3111, %v1338
        %v3169 = vmul.f32 %v3116, %v1344
        %v3170 = vmul.f32 %v3121, %v1350
        %v3171 = vmul.f32 %v3126, %v1356
        %v3172 = vmul.f32 %v3131, %v1362
        %v3173 = vmul.f32 %v3136, %v1368
        %v3174 = vmul.f32 %v3141, %v1374
        %v3175 = vsel %vm1884, %v3143, 0.0
        %v3176 = vrot.slane %v3175, 4
        %v3177 = vadd.f32 %v3175, %v3176
        %v3178 = vrot.slane %v3177, 2
        %v3179 = vadd.f32 %v3177, %v3178
        %v3180 = vrot.slane %v3179, 1
        %v3181 = vadd.f32 %v3179, %v3180
        %v3182 = vsel %vm1884, %v3144, 0.0
        %v3183 = vrot.slane %v3182, 4
        %v3184 = vadd.f32 %v3182, %v3183
        %v3185 = vrot.slane %v3184, 2
        %v3186 = vadd.f32 %v3184, %v3185
        %v3187 = vrot.slane %v3186, 1
        %v3188 = vadd.f32 %v3186, %v3187
        %v3189 = vsel %vm1884, %v3145, 0.0
        %v3190 = vrot.slane %v3189, 4
        %v3191 = vadd.f32 %v3189, %v3190
        %v3192 = vrot.slane %v3191, 2
        %v3193 = vadd.f32 %v3191, %v3192
        %v3194 = vrot.slane %v3193, 1
        %v3195 = vadd.f32 %v3193, %v3194
        %v3196 = vsel %vm1884, %v3146, 0.0
        %v3197 = vrot.slane %v3196, 4
        %v3198 = vadd.f32 %v3196, %v3197
        %v3199 = vrot.slane %v3198, 2
        %v3200 = vadd.f32 %v3198, %v3199
        %v3201 = vrot.slane %v3200, 1
        %v3202 = vadd.f32 %v3200, %v3201
        %v3203 = vsel %vm1884, %v3147, 0.0
        %v3204 = vrot.slane %v3203, 4
        %v3205 = vadd.f32 %v3203, %v3204
        %v3206 = vrot.slane %v3205, 2
        %v3207 = vadd.f32 %v3205, %v3206
        %v3208 = vrot.slane %v3207, 1
        %v3209 = vadd.f32 %v3207, %v3208
        %v3210 = vsel %vm1884, %v3148, 0.0
        %v3211 = vrot.slane %v3210, 4
        %v3212 = vadd.f32 %v3210, %v3211
        %v3213 = vrot.slane %v3212, 2
        %v3214 = vadd.f32 %v3212, %v3213
        %v3215 = vrot.slane %v3214, 1
        %v3216 = vadd.f32 %v3214, %v3215
        %v3217 = vsel %vm1884, %v3149, 0.0
        %v3218 = vrot.slane %v3217, 4
        %v3219 = vadd.f32 %v3217, %v3218
        %v3220 = vrot.slane %v3219, 2
        %v3221 = vadd.f32 %v3219, %v3220
        %v3222 = vrot.slane %v3221, 1
        %v3223 = vadd.f32 %v3221, %v3222
        %v3224 = vsel %vm1884, %v3150, 0.0
        %v3225 = vrot.slane %v3224, 4
        %v3226 = vadd.f32 %v3224, %v3225
        %v3227 = vrot.slane %v3226, 2
        %v3228 = vadd.f32 %v3226, %v3227
        %v3229 = vrot.slane %v3228, 1
        %v3230 = vadd.f32 %v3228, %v3229
        %v3231 = vsel %vm1884, %v3151, 0.0
        %v3232 = vrot.slane %v3231, 4
        %v3233 = vadd.f32 %v3231, %v3232
        %v3234 = vrot.slane %v3233, 2
        %v3235 = vadd.f32 %v3233, %v3234
        %v3236 = vrot.slane %v3235, 1
        %v3237 = vadd.f32 %v3235, %v3236
        %v3238 = vsel %vm1884, %v3152, 0.0
        %v3239 = vrot.slane %v3238, 4
        %v3240 = vadd.f32 %v3238, %v3239
        %v3241 = vrot.slane %v3240, 2
        %v3242 = vadd.f32 %v3240, %v3241
        %v3243 = vrot.slane %v3242, 1
        %v3244 = vadd.f32 %v3242, %v3243
        %v3245 = vsel %vm1884, %v3153, 0.0
        %v3246 = vrot.slane %v3245, 4
        %v3247 = vadd.f32 %v3245, %v3246
        %v3248 = vrot.slane %v3247, 2
        %v3249 = vadd.f32 %v3247, %v3248
        %v3250 = vrot.slane %v3249, 1
        %v3251 = vadd.f32 %v3249, %v3250
        %v3252 = vsel %vm1884, %v3154, 0.0
        %v3253 = vrot.slane %v3252, 4
        %v3254 = vadd.f32 %v3252, %v3253
        %v3255 = vrot.slane %v3254, 2
        %v3256 = vadd.f32 %v3254, %v3255
        %v3257 = vrot.slane %v3256, 1
        %v3258 = vadd.f32 %v3256, %v3257
        %v3259 = vsel %vm1884, %v3155, 0.0
        %v3260 = vrot.slane %v3259, 4
        %v3261 = vadd.f32 %v3259, %v3260
        %v3262 = vrot.slane %v3261, 2
        %v3263 = vadd.f32 %v3261, %v3262
        %v3264 = vrot.slane %v3263, 1
        %v3265 = vadd.f32 %v3263, %v3264
        %v3266 = vsel %vm1884, %v3156, 0.0
        %v3267 = vrot.slane %v3266, 4
        %v3268 = vadd.f32 %v3266, %v3267
        %v3269 = vrot.slane %v3268, 2
        %v3270 = vadd.f32 %v3268, %v3269
        %v3271 = vrot.slane %v3270, 1
        %v3272 = vadd.f32 %v3270, %v3271
        %v3273 = vsel %vm1884, %v3157, 0.0
        %v3274 = vrot.slane %v3273, 4
        %v3275 = vadd.f32 %v3273, %v3274
        %v3276 = vrot.slane %v3275, 2
        %v3277 = vadd.f32 %v3275, %v3276
        %v3278 = vrot.slane %v3277, 1
        %v3279 = vadd.f32 %v3277, %v3278
        %v3280 = vsel %vm1884, %v3158, 0.0
        %v3281 = vrot.slane %v3280, 4
        %v3282 = vadd.f32 %v3280, %v3281
        %v3283 = vrot.slane %v3282, 2
        %v3284 = vadd.f32 %v3282, %v3283
        %v3285 = vrot.slane %v3284, 1
        %v3286 = vadd.f32 %v3284, %v3285
        %v3287 = vsel %vm1884, %v3159, 0.0
        %v3288 = vrot.slane %v3287, 4
        %v3289 = vadd.f32 %v3287, %v3288
        %v3290 = vrot.slane %v3289, 2
        %v3291 = vadd.f32 %v3289, %v3290
        %v3292 = vrot.slane %v3291, 1
        %v3293 = vadd.f32 %v3291, %v3292
        %v3294 = vsel %vm1884, %v3160, 0.0
        %v3295 = vrot.slane %v3294, 4
        %v3296 = vadd.f32 %v3294, %v3295
        %v3297 = vrot.slane %v3296, 2
        %v3298 = vadd.f32 %v3296, %v3297
        %v3299 = vrot.slane %v3298, 1
        %v3300 = vadd.f32 %v3298, %v3299
        %v3301 = vsel %vm1884, %v3161, 0.0
        %v3302 = vrot.slane %v3301, 4
        %v3303 = vadd.f32 %v3301, %v3302
        %v3304 = vrot.slane %v3303, 2
        %v3305 = vadd.f32 %v3303, %v3304
        %v3306 = vrot.slane %v3305, 1
        %v3307 = vadd.f32 %v3305, %v3306
        %v3308 = vsel %vm1884, %v3162, 0.0
        %v3309 = vrot.slane %v3308, 4
        %v3310 = vadd.f32 %v3308, %v3309
        %v3311 = vrot.slane %v3310, 2
        %v3312 = vadd.f32 %v3310, %v3311
        %v3313 = vrot.slane %v3312, 1
        %v3314 = vadd.f32 %v3312, %v3313
        %v3315 = vsel %vm1884, %v3163, 0.0
        %v3316 = vrot.slane %v3315, 4
        %v3317 = vadd.f32 %v3315, %v3316
        %v3318 = vrot.slane %v3317, 2
        %v3319 = vadd.f32 %v3317, %v3318
        %v3320 = vrot.slane %v3319, 1
        %v3321 = vadd.f32 %v3319, %v3320
        %v3322 = vsel %vm1884, %v3164, 0.0
        %v3323 = vrot.slane %v3322, 4
        %v3324 = vadd.f32 %v3322, %v3323
        %v3325 = vrot.slane %v3324, 2
        %v3326 = vadd.f32 %v3324, %v3325
        %v3327 = vrot.slane %v3326, 1
        %v3328 = vadd.f32 %v3326, %v3327
        %v3329 = vsel %vm1884, %v3165, 0.0
        %v3330 = vrot.slane %v3329, 4
        %v3331 = vadd.f32 %v3329, %v3330
        %v3332 = vrot.slane %v3331, 2
        %v3333 = vadd.f32 %v3331, %v3332
        %v3334 = vrot.slane %v3333, 1
        %v3335 = vadd.f32 %v3333, %v3334
        %v3336 = vsel %vm1884, %v3166, 0.0
        %v3337 = vrot.slane %v3336, 4
        %v3338 = vadd.f32 %v3336, %v3337
        %v3339 = vrot.slane %v3338, 2
        %v3340 = vadd.f32 %v3338, %v3339
        %v3341 = vrot.slane %v3340, 1
        %v3342 = vadd.f32 %v3340, %v3341
        %v3343 = vsel %vm1884, %v3167, 0.0
        %v3344 = vrot.slane %v3343, 4
        %v3345 = vadd.f32 %v3343, %v3344
        %v3346 = vrot.slane %v3345, 2
        %v3347 = vadd.f32 %v3345, %v3346
        %v3348 = vrot.slane %v3347, 1
        %v3349 = vadd.f32 %v3347, %v3348
        %v3350 = vsel %vm1884, %v3168, 0.0
        %v3351 = vrot.slane %v3350, 4
        %v3352 = vadd.f32 %v3350, %v3351
        %v3353 = vrot.slane %v3352, 2
        %v3354 = vadd.f32 %v3352, %v3353
        %v3355 = vrot.slane %v3354, 1
        %v3356 = vadd.f32 %v3354, %v3355
        %v3357 = vsel %vm1884, %v3169, 0.0
        %v3358 = vrot.slane %v3357, 4
        %v3359 = vadd.f32 %v3357, %v3358
        %v3360 = vrot.slane %v3359, 2
        %v3361 = vadd.f32 %v3359, %v3360
        %v3362 = vrot.slane %v3361, 1
        %v3363 = vadd.f32 %v3361, %v3362
        %v3364 = vsel %vm1884, %v3170, 0.0
        %v3365 = vrot.slane %v3364, 4
        %v3366 = vadd.f32 %v3364, %v3365
        %v3367 = vrot.slane %v3366, 2
        %v3368 = vadd.f32 %v3366, %v3367
        %v3369 = vrot.slane %v3368, 1
        %v3370 = vadd.f32 %v3368, %v3369
        %v3371 = vsel %vm1884, %v3171, 0.0
        %v3372 = vrot.slane %v3371, 4
        %v3373 = vadd.f32 %v3371, %v3372
        %v3374 = vrot.slane %v3373, 2
        %v3375 = vadd.f32 %v3373, %v3374
        %v3376 = vrot.slane %v3375, 1
        %v3377 = vadd.f32 %v3375, %v3376
        %v3378 = vsel %vm1884, %v3172, 0.0
        %v3379 = vrot.slane %v3378, 4
        %v3380 = vadd.f32 %v3378, %v3379
        %v3381 = vrot.slane %v3380, 2
        %v3382 = vadd.f32 %v3380, %v3381
        %v3383 = vrot.slane %v3382, 1
        %v3384 = vadd.f32 %v3382, %v3383
        %v3385 = vsel %vm1884, %v3173, 0.0
        %v3386 = vrot.slane %v3385, 4
        %v3387 = vadd.f32 %v3385, %v3386
        %v3388 = vrot.slane %v3387, 2
        %v3389 = vadd.f32 %v3387, %v3388
        %v3390 = vrot.slane %v3389, 1
        %v3391 = vadd.f32 %v3389, %v3390
        %v3392 = vsel %vm1884, %v3174, 0.0
        %v3393 = vrot.slane %v3392, 4
        %v3394 = vadd.f32 %v3392, %v3393
        %v3395 = vrot.slane %v3394, 2
        %v3396 = vadd.f32 %v3394, %v3395
        %v3397 = vrot.slane %v3396, 1
        %v3398 = vadd.f32 %v3396, %v3397
        %3431 = vrot.lane.b32.xlu0 %v1852, 96
        %v3432 = vpop.permute.xlu0 %3431
        %3433 = vrot.lane.b32.xlu0 %v1853, 96
        %v3434 = vpop.permute.xlu0 %3433
        %3435 = vrot.lane.b32.xlu0 %v1854, 96
        %v3436 = vpop.permute.xlu0 %3435
        %3437 = vrot.lane.b32.xlu0 %v1855, 96
        %v3438 = vpop.permute.xlu0 %3437
        %3439 = vrot.lane.b32.xlu0 %v1856, 96
        %v3440 = vpop.permute.xlu0 %3439
        %3441 = vrot.lane.b32.xlu0 %v1857, 96
        %v3442 = vpop.permute.xlu0 %3441
        %3443 = vrot.lane.b32.xlu0 %v1858, 96
        %v3444 = vpop.permute.xlu0 %3443
        %3445 = vrot.lane.b32.xlu0 %v1859, 96
        %v3446 = vpop.permute.xlu0 %3445
        %3447 = vrot.lane.b32.xlu0 %v1860, 96
        %v3448 = vpop.permute.xlu0 %3447
        %3449 = vrot.lane.b32.xlu0 %v1861, 96
        %v3450 = vpop.permute.xlu0 %3449
        %3451 = vrot.lane.b32.xlu0 %v1862, 96
        %v3452 = vpop.permute.xlu0 %3451
        %3453 = vrot.lane.b32.xlu0 %v1863, 96
        %v3454 = vpop.permute.xlu0 %3453
        %3455 = vrot.lane.b32.xlu0 %v1864, 96
        %v3456 = vpop.permute.xlu0 %3455
        %3457 = vrot.lane.b32.xlu0 %v1865, 96
        %v3458 = vpop.permute.xlu0 %3457
        %3459 = vrot.lane.b32.xlu0 %v1866, 96
        %v3460 = vpop.permute.xlu0 %3459
        %3461 = vrot.lane.b32.xlu0 %v1867, 96
        %v3462 = vpop.permute.xlu0 %3461
        %3463 = vrot.lane.b32.xlu0 %v1868, 96
        %v3464 = vpop.permute.xlu0 %3463
        %3465 = vrot.lane.b32.xlu0 %v1869, 96
        %v3466 = vpop.permute.xlu0 %3465
        %3467 = vrot.lane.b32.xlu0 %v1870, 96
        %v3468 = vpop.permute.xlu0 %3467
        %3469 = vrot.lane.b32.xlu0 %v1871, 96
        %v3470 = vpop.permute.xlu0 %3469
        %3471 = vrot.lane.b32.xlu0 %v1872, 96
        %v3472 = vpop.permute.xlu0 %3471
        %3473 = vrot.lane.b32.xlu0 %v1873, 96
        %v3474 = vpop.permute.xlu0 %3473
        %3475 = vrot.lane.b32.xlu0 %v1874, 96
        %v3476 = vpop.permute.xlu0 %3475
        %3477 = vrot.lane.b32.xlu0 %v1875, 96
        %v3478 = vpop.permute.xlu0 %3477
        %3479 = vrot.lane.b32.xlu0 %v1876, 96
        %v3480 = vpop.permute.xlu0 %3479
        %3481 = vrot.lane.b32.xlu0 %v1877, 96
        %v3482 = vpop.permute.xlu0 %3481
        %3483 = vrot.lane.b32.xlu0 %v1878, 96
        %v3484 = vpop.permute.xlu0 %3483
        %3485 = vrot.lane.b32.xlu0 %v1879, 96
        %v3486 = vpop.permute.xlu0 %3485
        %3487 = vrot.lane.b32.xlu0 %v1880, 96
        %v3488 = vpop.permute.xlu0 %3487
        %3489 = vrot.lane.b32.xlu0 %v1881, 96
        %v3490 = vpop.permute.xlu0 %3489
        %3491 = vrot.lane.b32.xlu0 %v1882, 96
        %v3492 = vpop.permute.xlu0 %3491
        %3493 = vrot.lane.b32.xlu0 %v1883, 96
        %v3494 = vpop.permute.xlu0 %3493
        %v3527 = vsel %vm1884, %v3432, 0.0
        %3528 = vadd.xlane.f32.xlu0 %v3527
        %v3529 = vpop.xlane.xlu0 %3528
        %v3530 = vsel %vm1884, %v3434, 0.0
        %3531 = vadd.xlane.f32.xlu0 %v3530
        %v3532 = vpop.xlane.xlu0 %3531
        %v3533 = vsel %vm1884, %v3436, 0.0
        %3534 = vadd.xlane.f32.xlu0 %v3533
        %v3535 = vpop.xlane.xlu0 %3534
        %v3536 = vsel %vm1884, %v3438, 0.0
        %3537 = vadd.xlane.f32.xlu0 %v3536
        %v3538 = vpop.xlane.xlu0 %3537
        %v3539 = vsel %vm1884, %v3440, 0.0
        %3540 = vadd.xlane.f32.xlu0 %v3539
        %v3541 = vpop.xlane.xlu0 %3540
        %v3542 = vsel %vm1884, %v3442, 0.0
        %3543 = vadd.xlane.f32.xlu0 %v3542
        %v3544 = vpop.xlane.xlu0 %3543
        %v3545 = vsel %vm1884, %v3444, 0.0
        %3546 = vadd.xlane.f32.xlu0 %v3545
        %v3547 = vpop.xlane.xlu0 %3546
        %v3548 = vsel %vm1884, %v3446, 0.0
        %3549 = vadd.xlane.f32.xlu0 %v3548
        %v3550 = vpop.xlane.xlu0 %3549
        %v3551 = vsel %vm1884, %v3448, 0.0
        %3552 = vadd.xlane.f32.xlu0 %v3551
        %v3553 = vpop.xlane.xlu0 %3552
        %v3554 = vsel %vm1884, %v3450, 0.0
        %3555 = vadd.xlane.f32.xlu0 %v3554
        %v3556 = vpop.xlane.xlu0 %3555
        %v3557 = vsel %vm1884, %v3452, 0.0
        %3558 = vadd.xlane.f32.xlu0 %v3557
        %v3559 = vpop.xlane.xlu0 %3558
        %v3560 = vsel %vm1884, %v3454, 0.0
        %3561 = vadd.xlane.f32.xlu0 %v3560
        %v3562 = vpop.xlane.xlu0 %3561
        %v3563 = vsel %vm1884, %v3456, 0.0
        %3564 = vadd.xlane.f32.xlu0 %v3563
        %v3565 = vpop.xlane.xlu0 %3564
        %v3566 = vsel %vm1884, %v3458, 0.0
        %3567 = vadd.xlane.f32.xlu0 %v3566
        %v3568 = vpop.xlane.xlu0 %3567
        %v3569 = vsel %vm1884, %v3460, 0.0
        %3570 = vadd.xlane.f32.xlu0 %v3569
        %v3571 = vpop.xlane.xlu0 %3570
        %v3572 = vsel %vm1884, %v3462, 0.0
        %3573 = vadd.xlane.f32.xlu0 %v3572
        %v3574 = vpop.xlane.xlu0 %3573
        %v3575 = vsel %vm1884, %v3464, 0.0
        %3576 = vadd.xlane.f32.xlu0 %v3575
        %v3577 = vpop.xlane.xlu0 %3576
        %v3578 = vsel %vm1884, %v3466, 0.0
        %3579 = vadd.xlane.f32.xlu0 %v3578
        %v3580 = vpop.xlane.xlu0 %3579
        %v3581 = vsel %vm1884, %v3468, 0.0
        %3582 = vadd.xlane.f32.xlu0 %v3581
        %v3583 = vpop.xlane.xlu0 %3582
        %v3584 = vsel %vm1884, %v3470, 0.0
        %3585 = vadd.xlane.f32.xlu0 %v3584
        %v3586 = vpop.xlane.xlu0 %3585
        %v3587 = vsel %vm1884, %v3472, 0.0
        %3588 = vadd.xlane.f32.xlu0 %v3587
        %v3589 = vpop.xlane.xlu0 %3588
        %v3590 = vsel %vm1884, %v3474, 0.0
        %3591 = vadd.xlane.f32.xlu0 %v3590
        %v3592 = vpop.xlane.xlu0 %3591
        %v3593 = vsel %vm1884, %v3476, 0.0
        %3594 = vadd.xlane.f32.xlu0 %v3593
        %v3595 = vpop.xlane.xlu0 %3594
        %v3596 = vsel %vm1884, %v3478, 0.0
        %3597 = vadd.xlane.f32.xlu0 %v3596
        %v3598 = vpop.xlane.xlu0 %3597
        %v3599 = vsel %vm1884, %v3480, 0.0
        %3600 = vadd.xlane.f32.xlu0 %v3599
        %v3601 = vpop.xlane.xlu0 %3600
        %v3602 = vsel %vm1884, %v3482, 0.0
        %3603 = vadd.xlane.f32.xlu0 %v3602
        %v3604 = vpop.xlane.xlu0 %3603
        %v3605 = vsel %vm1884, %v3484, 0.0
        %3606 = vadd.xlane.f32.xlu0 %v3605
        %v3607 = vpop.xlane.xlu0 %3606
        %v3608 = vsel %vm1884, %v3486, 0.0
        %3609 = vadd.xlane.f32.xlu0 %v3608
        %v3610 = vpop.xlane.xlu0 %3609
        %v3611 = vsel %vm1884, %v3488, 0.0
        %3612 = vadd.xlane.f32.xlu0 %v3611
        %v3613 = vpop.xlane.xlu0 %3612
        %v3614 = vsel %vm1884, %v3490, 0.0
        %3615 = vadd.xlane.f32.xlu0 %v3614
        %v3616 = vpop.xlane.xlu0 %3615
        %v3617 = vsel %vm1884, %v3492, 0.0
        %3618 = vadd.xlane.f32.xlu0 %v3617
        %v3619 = vpop.xlane.xlu0 %3618
        %v3620 = vsel %vm1884, %v3494, 0.0
        %3621 = vadd.xlane.f32.xlu0 %v3620
        %v3622 = vpop.xlane.xlu0 %3621
        %v3655 = vlaneseq
        %v3656 = vshrl.u32 %v3655, 7
        %v3657 = vsub.s32 %v2014, %v3656
        %v3658 = vrot.slane %v3529, %v3657
        %v3659 = vlaneseq
        %v3660 = vshrl.u32 %v3659, 7
        %v3661 = vsub.s32 %v2014, %v3660
        %v3662 = vrot.slane %v3532, %v3661
        %v3663 = vlaneseq
        %v3664 = vshrl.u32 %v3663, 7
        %v3665 = vsub.s32 %v2014, %v3664
        %v3666 = vrot.slane %v3535, %v3665
        %v3667 = vlaneseq
        %v3668 = vshrl.u32 %v3667, 7
        %v3669 = vsub.s32 %v2014, %v3668
        %v3670 = vrot.slane %v3538, %v3669
        %v3671 = vlaneseq
        %v3672 = vshrl.u32 %v3671, 7
        %v3673 = vsub.s32 %v2014, %v3672
        %v3674 = vrot.slane %v3541, %v3673
        %v3675 = vlaneseq
        %v3676 = vshrl.u32 %v3675, 7
        %v3677 = vsub.s32 %v2014, %v3676
        %v3678 = vrot.slane %v3544, %v3677
        %v3679 = vlaneseq
        %v3680 = vshrl.u32 %v3679, 7
        %v3681 = vsub.s32 %v2014, %v3680
        %v3682 = vrot.slane %v3547, %v3681
        %v3683 = vlaneseq
        %v3684 = vshrl.u32 %v3683, 7
        %v3685 = vsub.s32 %v2014, %v3684
        %v3686 = vrot.slane %v3550, %v3685
        %v3687 = vlaneseq
        %v3688 = vshrl.u32 %v3687, 7
        %v3689 = vsub.s32 %v2014, %v3688
        %v3690 = vrot.slane %v3553, %v3689
        %v3691 = vlaneseq
        %v3692 = vshrl.u32 %v3691, 7
        %v3693 = vsub.s32 %v2014, %v3692
        %v3694 = vrot.slane %v3556, %v3693
        %v3695 = vlaneseq
        %v3696 = vshrl.u32 %v3695, 7
        %v3697 = vsub.s32 %v2014, %v3696
        %v3698 = vrot.slane %v3559, %v3697
        %v3699 = vlaneseq
        %v3700 = vshrl.u32 %v3699, 7
        %v3701 = vsub.s32 %v2014, %v3700
        %v3702 = vrot.slane %v3562, %v3701
        %v3703 = vlaneseq
        %v3704 = vshrl.u32 %v3703, 7
        %v3705 = vsub.s32 %v2014, %v3704
        %v3706 = vrot.slane %v3565, %v3705
        %v3707 = vlaneseq
        %v3708 = vshrl.u32 %v3707, 7
        %v3709 = vsub.s32 %v2014, %v3708
        %v3710 = vrot.slane %v3568, %v3709
        %v3711 = vlaneseq
        %v3712 = vshrl.u32 %v3711, 7
        %v3713 = vsub.s32 %v2014, %v3712
        %v3714 = vrot.slane %v3571, %v3713
        %v3715 = vlaneseq
        %v3716 = vshrl.u32 %v3715, 7
        %v3717 = vsub.s32 %v2014, %v3716
        %v3718 = vrot.slane %v3574, %v3717
        %v3719 = vlaneseq
        %v3720 = vshrl.u32 %v3719, 7
        %v3721 = vsub.s32 %v2014, %v3720
        %v3722 = vrot.slane %v3577, %v3721
        %v3723 = vlaneseq
        %v3724 = vshrl.u32 %v3723, 7
        %v3725 = vsub.s32 %v2014, %v3724
        %v3726 = vrot.slane %v3580, %v3725
        %v3727 = vlaneseq
        %v3728 = vshrl.u32 %v3727, 7
        %v3729 = vsub.s32 %v2014, %v3728
        %v3730 = vrot.slane %v3583, %v3729
        %v3731 = vlaneseq
        %v3732 = vshrl.u32 %v3731, 7
        %v3733 = vsub.s32 %v2014, %v3732
        %v3734 = vrot.slane %v3586, %v3733
        %v3735 = vlaneseq
        %v3736 = vshrl.u32 %v3735, 7
        %v3737 = vsub.s32 %v2014, %v3736
        %v3738 = vrot.slane %v3589, %v3737
        %v3739 = vlaneseq
        %v3740 = vshrl.u32 %v3739, 7
        %v3741 = vsub.s32 %v2014, %v3740
        %v3742 = vrot.slane %v3592, %v3741
        %v3743 = vlaneseq
        %v3744 = vshrl.u32 %v3743, 7
        %v3745 = vsub.s32 %v2014, %v3744
        %v3746 = vrot.slane %v3595, %v3745
        %v3747 = vlaneseq
        %v3748 = vshrl.u32 %v3747, 7
        %v3749 = vsub.s32 %v2014, %v3748
        %v3750 = vrot.slane %v3598, %v3749
        %v3751 = vlaneseq
        %v3752 = vshrl.u32 %v3751, 7
        %v3753 = vsub.s32 %v2014, %v3752
        %v3754 = vrot.slane %v3601, %v3753
        %v3755 = vlaneseq
        %v3756 = vshrl.u32 %v3755, 7
        %v3757 = vsub.s32 %v2014, %v3756
        %v3758 = vrot.slane %v3604, %v3757
        %v3759 = vlaneseq
        %v3760 = vshrl.u32 %v3759, 7
        %v3761 = vsub.s32 %v2014, %v3760
        %v3762 = vrot.slane %v3607, %v3761
        %v3763 = vlaneseq
        %v3764 = vshrl.u32 %v3763, 7
        %v3765 = vsub.s32 %v2014, %v3764
        %v3766 = vrot.slane %v3610, %v3765
        %v3767 = vlaneseq
        %v3768 = vshrl.u32 %v3767, 7
        %v3769 = vsub.s32 %v2014, %v3768
        %v3770 = vrot.slane %v3613, %v3769
        %v3771 = vlaneseq
        %v3772 = vshrl.u32 %v3771, 7
        %v3773 = vsub.s32 %v2014, %v3772
        %v3774 = vrot.slane %v3616, %v3773
        %v3775 = vlaneseq
        %v3776 = vshrl.u32 %v3775, 7
        %v3777 = vsub.s32 %v2014, %v3776
        %v3778 = vrot.slane %v3619, %v3777
        %v3779 = vlaneseq
        %v3780 = vshrl.u32 %v3779, 7
        %v3781 = vsub.s32 %v2014, %v3780
        %v3782 = vrot.slane %v3622, %v3781
        %v3783 = vsel %vm2143, %v3662, %v3658
        %v3784 = vsel %vm2145, %v3666, %v3783
        %v3785 = vsel %vm2147, %v3670, %v3784
        %v3786 = vsel %vm2149, %v3674, %v3785
        %v3787 = vsel %vm2151, %v3678, %v3786
        %v3788 = vsel %vm2153, %v3682, %v3787
        %v3789 = vsel %vm2155, %v3686, %v3788
        %v3790 = vsel %vm2143, %v3694, %v3690
        %v3791 = vsel %vm2145, %v3698, %v3790
        %v3792 = vsel %vm2147, %v3702, %v3791
        %v3793 = vsel %vm2149, %v3706, %v3792
        %v3794 = vsel %vm2151, %v3710, %v3793
        %v3795 = vsel %vm2153, %v3714, %v3794
        %v3796 = vsel %vm2155, %v3718, %v3795
        %v3797 = vsel %vm2143, %v3726, %v3722
        %v3798 = vsel %vm2145, %v3730, %v3797
        %v3799 = vsel %vm2147, %v3734, %v3798
        %v3800 = vsel %vm2149, %v3738, %v3799
        %v3801 = vsel %vm2151, %v3742, %v3800
        %v3802 = vsel %vm2153, %v3746, %v3801
        %v3803 = vsel %vm2155, %v3750, %v3802
        %v3804 = vsel %vm2143, %v3758, %v3754
        %v3805 = vsel %vm2145, %v3762, %v3804
        %v3806 = vsel %vm2147, %v3766, %v3805
        %v3807 = vsel %vm2149, %v3770, %v3806
        %v3808 = vsel %vm2151, %v3774, %v3807
        %v3809 = vsel %vm2153, %v3778, %v3808
        %v3810 = vsel %vm2155, %v3782, %v3809
        %v3815 = vsel %vm2182, %v3789, -inf
        %3816 = vmax.xlane.f32.xlu0 %v3815
        %v3817 = vpop.xlane.xlu0 %3816
        %v3818 = vsel %vm2182, %v3796, -inf
        %3819 = vmax.xlane.f32.xlu0 %v3818
        %v3820 = vpop.xlane.xlu0 %3819
        %v3821 = vsel %vm2182, %v3803, -inf
        %3822 = vmax.xlane.f32.xlu0 %v3821
        %v3823 = vpop.xlane.xlu0 %3822
        %v3824 = vsel %vm2182, %v3810, -inf
        %3825 = vmax.xlane.f32.xlu0 %v3824
        %v3826 = vpop.xlane.xlu0 %3825
        %v3831 = vlaneseq
        %v3832 = vshrl.u32 %v3831, 7
        %v3833 = vsub.s32 0, %v3832
        %v3834 = vrot.slane %v3817, %v3833
        %v3835 = vlaneseq
        %v3836 = vshrl.u32 %v3835, 7
        %v3837 = vsub.s32 1, %v3836
        %v3838 = vrot.slane %v3817, %v3837
        %v3839 = vlaneseq
        %v3840 = vshrl.u32 %v3839, 7
        %v3841 = vsub.s32 2, %v3840
        %v3842 = vrot.slane %v3817, %v3841
        %v3843 = vlaneseq
        %v3844 = vshrl.u32 %v3843, 7
        %v3845 = vsub.s32 3, %v3844
        %v3846 = vrot.slane %v3817, %v3845
        %v3847 = vlaneseq
        %v3848 = vshrl.u32 %v3847, 7
        %v3849 = vsub.s32 4, %v3848
        %v3850 = vrot.slane %v3817, %v3849
        %v3851 = vlaneseq
        %v3852 = vshrl.u32 %v3851, 7
        %v3853 = vsub.s32 5, %v3852
        %v3854 = vrot.slane %v3817, %v3853
        %v3855 = vlaneseq
        %v3856 = vshrl.u32 %v3855, 7
        %v3857 = vsub.s32 6, %v3856
        %v3858 = vrot.slane %v3817, %v3857
        %v3859 = vlaneseq
        %v3860 = vshrl.u32 %v3859, 7
        %v3861 = vsub.s32 7, %v3860
        %v3862 = vrot.slane %v3817, %v3861
        %v3863 = vlaneseq
        %v3864 = vshrl.u32 %v3863, 7
        %v3865 = vsub.s32 0, %v3864
        %v3866 = vrot.slane %v3820, %v3865
        %v3867 = vlaneseq
        %v3868 = vshrl.u32 %v3867, 7
        %v3869 = vsub.s32 1, %v3868
        %v3870 = vrot.slane %v3820, %v3869
        %v3871 = vlaneseq
        %v3872 = vshrl.u32 %v3871, 7
        %v3873 = vsub.s32 2, %v3872
        %v3874 = vrot.slane %v3820, %v3873
        %v3875 = vlaneseq
        %v3876 = vshrl.u32 %v3875, 7
        %v3877 = vsub.s32 3, %v3876
        %v3878 = vrot.slane %v3820, %v3877
        %v3879 = vlaneseq
        %v3880 = vshrl.u32 %v3879, 7
        %v3881 = vsub.s32 4, %v3880
        %v3882 = vrot.slane %v3820, %v3881
        %v3883 = vlaneseq
        %v3884 = vshrl.u32 %v3883, 7
        %v3885 = vsub.s32 5, %v3884
        %v3886 = vrot.slane %v3820, %v3885
        %v3887 = vlaneseq
        %v3888 = vshrl.u32 %v3887, 7
        %v3889 = vsub.s32 6, %v3888
        %v3890 = vrot.slane %v3820, %v3889
        %v3891 = vlaneseq
        %v3892 = vshrl.u32 %v3891, 7
        %v3893 = vsub.s32 7, %v3892
        %v3894 = vrot.slane %v3820, %v3893
        %v3895 = vlaneseq
        %v3896 = vshrl.u32 %v3895, 7
        %v3897 = vsub.s32 0, %v3896
        %v3898 = vrot.slane %v3823, %v3897
        %v3899 = vlaneseq
        %v3900 = vshrl.u32 %v3899, 7
        %v3901 = vsub.s32 1, %v3900
        %v3902 = vrot.slane %v3823, %v3901
        %v3903 = vlaneseq
        %v3904 = vshrl.u32 %v3903, 7
        %v3905 = vsub.s32 2, %v3904
        %v3906 = vrot.slane %v3823, %v3905
        %v3907 = vlaneseq
        %v3908 = vshrl.u32 %v3907, 7
        %v3909 = vsub.s32 3, %v3908
        %v3910 = vrot.slane %v3823, %v3909
        %v3911 = vlaneseq
        %v3912 = vshrl.u32 %v3911, 7
        %v3913 = vsub.s32 4, %v3912
        %v3914 = vrot.slane %v3823, %v3913
        %v3915 = vlaneseq
        %v3916 = vshrl.u32 %v3915, 7
        %v3917 = vsub.s32 5, %v3916
        %v3918 = vrot.slane %v3823, %v3917
        %v3919 = vlaneseq
        %v3920 = vshrl.u32 %v3919, 7
        %v3921 = vsub.s32 6, %v3920
        %v3922 = vrot.slane %v3823, %v3921
        %v3923 = vlaneseq
        %v3924 = vshrl.u32 %v3923, 7
        %v3925 = vsub.s32 7, %v3924
        %v3926 = vrot.slane %v3823, %v3925
        %v3927 = vlaneseq
        %v3928 = vshrl.u32 %v3927, 7
        %v3929 = vsub.s32 0, %v3928
        %v3930 = vrot.slane %v3826, %v3929
        %v3931 = vlaneseq
        %v3932 = vshrl.u32 %v3931, 7
        %v3933 = vsub.s32 1, %v3932
        %v3934 = vrot.slane %v3826, %v3933
        %v3935 = vlaneseq
        %v3936 = vshrl.u32 %v3935, 7
        %v3937 = vsub.s32 2, %v3936
        %v3938 = vrot.slane %v3826, %v3937
        %v3939 = vlaneseq
        %v3940 = vshrl.u32 %v3939, 7
        %v3941 = vsub.s32 3, %v3940
        %v3942 = vrot.slane %v3826, %v3941
        %v3943 = vlaneseq
        %v3944 = vshrl.u32 %v3943, 7
        %v3945 = vsub.s32 4, %v3944
        %v3946 = vrot.slane %v3826, %v3945
        %v3947 = vlaneseq
        %v3948 = vshrl.u32 %v3947, 7
        %v3949 = vsub.s32 5, %v3948
        %v3950 = vrot.slane %v3826, %v3949
        %v3951 = vlaneseq
        %v3952 = vshrl.u32 %v3951, 7
        %v3953 = vsub.s32 6, %v3952
        %v3954 = vrot.slane %v3826, %v3953
        %v3955 = vlaneseq
        %v3956 = vshrl.u32 %v3955, 7
        %v3957 = vsub.s32 7, %v3956
        %v3958 = vrot.slane %v3826, %v3957
        %v3991 = vsub.f32 %v3529, %v3834
        %v3992 = vsub.f32 %v3532, %v3838
        %v3993 = vsub.f32 %v3535, %v3842
        %v3994 = vsub.f32 %v3538, %v3846
        %v3995 = vsub.f32 %v3541, %v3850
        %v3996 = vsub.f32 %v3544, %v3854
        %v3997 = vsub.f32 %v3547, %v3858
        %v3998 = vsub.f32 %v3550, %v3862
        %v3999 = vsub.f32 %v3553, %v3866
        %v4000 = vsub.f32 %v3556, %v3870
        %v4001 = vsub.f32 %v3559, %v3874
        %v4002 = vsub.f32 %v3562, %v3878
        %v4003 = vsub.f32 %v3565, %v3882
        %v4004 = vsub.f32 %v3568, %v3886
        %v4005 = vsub.f32 %v3571, %v3890
        %v4006 = vsub.f32 %v3574, %v3894
        %v4007 = vsub.f32 %v3577, %v3898
        %v4008 = vsub.f32 %v3580, %v3902
        %v4009 = vsub.f32 %v3583, %v3906
        %v4010 = vsub.f32 %v3586, %v3910
        %v4011 = vsub.f32 %v3589, %v3914
        %v4012 = vsub.f32 %v3592, %v3918
        %v4013 = vsub.f32 %v3595, %v3922
        %v4014 = vsub.f32 %v3598, %v3926
        %v4015 = vsub.f32 %v3601, %v3930
        %v4016 = vsub.f32 %v3604, %v3934
        %v4017 = vsub.f32 %v3607, %v3938
        %v4018 = vsub.f32 %v3610, %v3942
        %v4019 = vsub.f32 %v3613, %v3946
        %v4020 = vsub.f32 %v3616, %v3950
        %v4021 = vsub.f32 %v3619, %v3954
        %v4022 = vsub.f32 %v3622, %v3958
        %v4023 = vmul.f32 %v3991, 1.442695
        %v4024 = vpow.pop %v4023
        %v4025 = vmul.f32 %v3992, 1.442695
        %v4026 = vpow.pop %v4025
        %v4027 = vmul.f32 %v3993, 1.442695
        %v4028 = vpow.pop %v4027
        %v4029 = vmul.f32 %v3994, 1.442695
        %v4030 = vpow.pop %v4029
        %v4031 = vmul.f32 %v3995, 1.442695
        %v4032 = vpow.pop %v4031
        %v4033 = vmul.f32 %v3996, 1.442695
        %v4034 = vpow.pop %v4033
        %v4035 = vmul.f32 %v3997, 1.442695
        %v4036 = vpow.pop %v4035
        %v4037 = vmul.f32 %v3998, 1.442695
        %v4038 = vpow.pop %v4037
        %v4039 = vmul.f32 %v3999, 1.442695
        %v4040 = vpow.pop %v4039
        %v4041 = vmul.f32 %v4000, 1.442695
        %v4042 = vpow.pop %v4041
        %v4043 = vmul.f32 %v4001, 1.442695
        %v4044 = vpow.pop %v4043
        %v4045 = vmul.f32 %v4002, 1.442695
        %v4046 = vpow.pop %v4045
        %v4047 = vmul.f32 %v4003, 1.442695
        %v4048 = vpow.pop %v4047
        %v4049 = vmul.f32 %v4004, 1.442695
        %v4050 = vpow.pop %v4049
        %v4051 = vmul.f32 %v4005, 1.442695
        %v4052 = vpow.pop %v4051
        %v4053 = vmul.f32 %v4006, 1.442695
        %v4054 = vpow.pop %v4053
        %v4055 = vmul.f32 %v4007, 1.442695
        %v4056 = vpow.pop %v4055
        %v4057 = vmul.f32 %v4008, 1.442695
        %v4058 = vpow.pop %v4057
        %v4059 = vmul.f32 %v4009, 1.442695
        %v4060 = vpow.pop %v4059
        %v4061 = vmul.f32 %v4010, 1.442695
        %v4062 = vpow.pop %v4061
        %v4063 = vmul.f32 %v4011, 1.442695
        %v4064 = vpow.pop %v4063
        %v4065 = vmul.f32 %v4012, 1.442695
        %v4066 = vpow.pop %v4065
        %v4067 = vmul.f32 %v4013, 1.442695
        %v4068 = vpow.pop %v4067
        %v4069 = vmul.f32 %v4014, 1.442695
        %v4070 = vpow.pop %v4069
        %v4071 = vmul.f32 %v4015, 1.442695
        %v4072 = vpow.pop %v4071
        %v4073 = vmul.f32 %v4016, 1.442695
        %v4074 = vpow.pop %v4073
        %v4075 = vmul.f32 %v4017, 1.442695
        %v4076 = vpow.pop %v4075
        %v4077 = vmul.f32 %v4018, 1.442695
        %v4078 = vpow.pop %v4077
        %v4079 = vmul.f32 %v4019, 1.442695
        %v4080 = vpow.pop %v4079
        %v4081 = vmul.f32 %v4020, 1.442695
        %v4082 = vpow.pop %v4081
        %v4083 = vmul.f32 %v4021, 1.442695
        %v4084 = vpow.pop %v4083
        %v4085 = vmul.f32 %v4022, 1.442695
        %v4086 = vpow.pop %v4085
        %4119 = vset.pattern.permute.xlu0 0
        %4120 = vperm.xlu0 %4119, %v4024
        %v4121 = vpop.permute.xlu0 %4120
        %4122 = vset.pattern.permute.xlu0 0
        %4123 = vperm.xlu0 %4122, %v4026
        %v4124 = vpop.permute.xlu0 %4123
        %4125 = vset.pattern.permute.xlu0 0
        %4126 = vperm.xlu0 %4125, %v4028
        %v4127 = vpop.permute.xlu0 %4126
        %4128 = vset.pattern.permute.xlu0 0
        %4129 = vperm.xlu0 %4128, %v4030
        %v4130 = vpop.permute.xlu0 %4129
        %4131 = vset.pattern.permute.xlu0 0
        %4132 = vperm.xlu0 %4131, %v4032
        %v4133 = vpop.permute.xlu0 %4132
        %4134 = vset.pattern.permute.xlu0 0
        %4135 = vperm.xlu0 %4134, %v4034
        %v4136 = vpop.permute.xlu0 %4135
        %4137 = vset.pattern.permute.xlu0 0
        %4138 = vperm.xlu0 %4137, %v4036
        %v4139 = vpop.permute.xlu0 %4138
        %4140 = vset.pattern.permute.xlu0 0
        %4141 = vperm.xlu0 %4140, %v4038
        %v4142 = vpop.permute.xlu0 %4141
        %4143 = vset.pattern.permute.xlu0 0
        %4144 = vperm.xlu0 %4143, %v4040
        %v4145 = vpop.permute.xlu0 %4144
        %4146 = vset.pattern.permute.xlu0 0
        %4147 = vperm.xlu0 %4146, %v4042
        %v4148 = vpop.permute.xlu0 %4147
        %4149 = vset.pattern.permute.xlu0 0
        %4150 = vperm.xlu0 %4149, %v4044
        %v4151 = vpop.permute.xlu0 %4150
        %4152 = vset.pattern.permute.xlu0 0
        %4153 = vperm.xlu0 %4152, %v4046
        %v4154 = vpop.permute.xlu0 %4153
        %4155 = vset.pattern.permute.xlu0 0
        %4156 = vperm.xlu0 %4155, %v4048
        %v4157 = vpop.permute.xlu0 %4156
        %4158 = vset.pattern.permute.xlu0 0
        %4159 = vperm.xlu0 %4158, %v4050
        %v4160 = vpop.permute.xlu0 %4159
        %4161 = vset.pattern.permute.xlu0 0
        %4162 = vperm.xlu0 %4161, %v4052
        %v4163 = vpop.permute.xlu0 %4162
        %4164 = vset.pattern.permute.xlu0 0
        %4165 = vperm.xlu0 %4164, %v4054
        %v4166 = vpop.permute.xlu0 %4165
        %4167 = vset.pattern.permute.xlu0 0
        %4168 = vperm.xlu0 %4167, %v4056
        %v4169 = vpop.permute.xlu0 %4168
        %4170 = vset.pattern.permute.xlu0 0
        %4171 = vperm.xlu0 %4170, %v4058
        %v4172 = vpop.permute.xlu0 %4171
        %4173 = vset.pattern.permute.xlu0 0
        %4174 = vperm.xlu0 %4173, %v4060
        %v4175 = vpop.permute.xlu0 %4174
        %4176 = vset.pattern.permute.xlu0 0
        %4177 = vperm.xlu0 %4176, %v4062
        %v4178 = vpop.permute.xlu0 %4177
        %4179 = vset.pattern.permute.xlu0 0
        %4180 = vperm.xlu0 %4179, %v4064
        %v4181 = vpop.permute.xlu0 %4180
        %4182 = vset.pattern.permute.xlu0 0
        %4183 = vperm.xlu0 %4182, %v4066
        %v4184 = vpop.permute.xlu0 %4183
        %4185 = vset.pattern.permute.xlu0 0
        %4186 = vperm.xlu0 %4185, %v4068
        %v4187 = vpop.permute.xlu0 %4186
        %4188 = vset.pattern.permute.xlu0 0
        %4189 = vperm.xlu0 %4188, %v4070
        %v4190 = vpop.permute.xlu0 %4189
        %4191 = vset.pattern.permute.xlu0 0
        %4192 = vperm.xlu0 %4191, %v4072
        %v4193 = vpop.permute.xlu0 %4192
        %4194 = vset.pattern.permute.xlu0 0
        %4195 = vperm.xlu0 %4194, %v4074
        %v4196 = vpop.permute.xlu0 %4195
        %4197 = vset.pattern.permute.xlu0 0
        %4198 = vperm.xlu0 %4197, %v4076
        %v4199 = vpop.permute.xlu0 %4198
        %4200 = vset.pattern.permute.xlu0 0
        %4201 = vperm.xlu0 %4200, %v4078
        %v4202 = vpop.permute.xlu0 %4201
        %4203 = vset.pattern.permute.xlu0 0
        %4204 = vperm.xlu0 %4203, %v4080
        %v4205 = vpop.permute.xlu0 %4204
        %4206 = vset.pattern.permute.xlu0 0
        %4207 = vperm.xlu0 %4206, %v4082
        %v4208 = vpop.permute.xlu0 %4207
        %4209 = vset.pattern.permute.xlu0 0
        %4210 = vperm.xlu0 %4209, %v4084
        %v4211 = vpop.permute.xlu0 %4210
        %4212 = vset.pattern.permute.xlu0 0
        %4213 = vperm.xlu0 %4212, %v4086
        %v4214 = vpop.permute.xlu0 %4213
        %v4215 = vlaneseq
        %v4216 = vshrl.u32 %v4215, 7
        %v4217 = vsub.s32 %v2014, %v4216
        %v4218 = vrot.slane %v4121, %v4217
        %v4219 = vlaneseq
        %v4220 = vshrl.u32 %v4219, 7
        %v4221 = vsub.s32 %v2014, %v4220
        %v4222 = vrot.slane %v4124, %v4221
        %v4223 = vlaneseq
        %v4224 = vshrl.u32 %v4223, 7
        %v4225 = vsub.s32 %v2014, %v4224
        %v4226 = vrot.slane %v4127, %v4225
        %v4227 = vlaneseq
        %v4228 = vshrl.u32 %v4227, 7
        %v4229 = vsub.s32 %v2014, %v4228
        %v4230 = vrot.slane %v4130, %v4229
        %v4231 = vlaneseq
        %v4232 = vshrl.u32 %v4231, 7
        %v4233 = vsub.s32 %v2014, %v4232
        %v4234 = vrot.slane %v4133, %v4233
        %v4235 = vlaneseq
        %v4236 = vshrl.u32 %v4235, 7
        %v4237 = vsub.s32 %v2014, %v4236
        %v4238 = vrot.slane %v4136, %v4237
        %v4239 = vlaneseq
        %v4240 = vshrl.u32 %v4239, 7
        %v4241 = vsub.s32 %v2014, %v4240
        %v4242 = vrot.slane %v4139, %v4241
        %v4243 = vlaneseq
        %v4244 = vshrl.u32 %v4243, 7
        %v4245 = vsub.s32 %v2014, %v4244
        %v4246 = vrot.slane %v4142, %v4245
        %v4247 = vlaneseq
        %v4248 = vshrl.u32 %v4247, 7
        %v4249 = vsub.s32 %v2014, %v4248
        %v4250 = vrot.slane %v4145, %v4249
        %v4251 = vlaneseq
        %v4252 = vshrl.u32 %v4251, 7
        %v4253 = vsub.s32 %v2014, %v4252
        %v4254 = vrot.slane %v4148, %v4253
        %v4255 = vlaneseq
        %v4256 = vshrl.u32 %v4255, 7
        %v4257 = vsub.s32 %v2014, %v4256
        %v4258 = vrot.slane %v4151, %v4257
        %v4259 = vlaneseq
        %v4260 = vshrl.u32 %v4259, 7
        %v4261 = vsub.s32 %v2014, %v4260
        %v4262 = vrot.slane %v4154, %v4261
        %v4263 = vlaneseq
        %v4264 = vshrl.u32 %v4263, 7
        %v4265 = vsub.s32 %v2014, %v4264
        %v4266 = vrot.slane %v4157, %v4265
        %v4267 = vlaneseq
        %v4268 = vshrl.u32 %v4267, 7
        %v4269 = vsub.s32 %v2014, %v4268
        %v4270 = vrot.slane %v4160, %v4269
        %v4271 = vlaneseq
        %v4272 = vshrl.u32 %v4271, 7
        %v4273 = vsub.s32 %v2014, %v4272
        %v4274 = vrot.slane %v4163, %v4273
        %v4275 = vlaneseq
        %v4276 = vshrl.u32 %v4275, 7
        %v4277 = vsub.s32 %v2014, %v4276
        %v4278 = vrot.slane %v4166, %v4277
        %v4279 = vlaneseq
        %v4280 = vshrl.u32 %v4279, 7
        %v4281 = vsub.s32 %v2014, %v4280
        %v4282 = vrot.slane %v4169, %v4281
        %v4283 = vlaneseq
        %v4284 = vshrl.u32 %v4283, 7
        %v4285 = vsub.s32 %v2014, %v4284
        %v4286 = vrot.slane %v4172, %v4285
        %v4287 = vlaneseq
        %v4288 = vshrl.u32 %v4287, 7
        %v4289 = vsub.s32 %v2014, %v4288
        %v4290 = vrot.slane %v4175, %v4289
        %v4291 = vlaneseq
        %v4292 = vshrl.u32 %v4291, 7
        %v4293 = vsub.s32 %v2014, %v4292
        %v4294 = vrot.slane %v4178, %v4293
        %v4295 = vlaneseq
        %v4296 = vshrl.u32 %v4295, 7
        %v4297 = vsub.s32 %v2014, %v4296
        %v4298 = vrot.slane %v4181, %v4297
        %v4299 = vlaneseq
        %v4300 = vshrl.u32 %v4299, 7
        %v4301 = vsub.s32 %v2014, %v4300
        %v4302 = vrot.slane %v4184, %v4301
        %v4303 = vlaneseq
        %v4304 = vshrl.u32 %v4303, 7
        %v4305 = vsub.s32 %v2014, %v4304
        %v4306 = vrot.slane %v4187, %v4305
        %v4307 = vlaneseq
        %v4308 = vshrl.u32 %v4307, 7
        %v4309 = vsub.s32 %v2014, %v4308
        %v4310 = vrot.slane %v4190, %v4309
        %v4311 = vlaneseq
        %v4312 = vshrl.u32 %v4311, 7
        %v4313 = vsub.s32 %v2014, %v4312
        %v4314 = vrot.slane %v4193, %v4313
        %v4315 = vlaneseq
        %v4316 = vshrl.u32 %v4315, 7
        %v4317 = vsub.s32 %v2014, %v4316
        %v4318 = vrot.slane %v4196, %v4317
        %v4319 = vlaneseq
        %v4320 = vshrl.u32 %v4319, 7
        %v4321 = vsub.s32 %v2014, %v4320
        %v4322 = vrot.slane %v4199, %v4321
        %v4323 = vlaneseq
        %v4324 = vshrl.u32 %v4323, 7
        %v4325 = vsub.s32 %v2014, %v4324
        %v4326 = vrot.slane %v4202, %v4325
        %v4327 = vlaneseq
        %v4328 = vshrl.u32 %v4327, 7
        %v4329 = vsub.s32 %v2014, %v4328
        %v4330 = vrot.slane %v4205, %v4329
        %v4331 = vlaneseq
        %v4332 = vshrl.u32 %v4331, 7
        %v4333 = vsub.s32 %v2014, %v4332
        %v4334 = vrot.slane %v4208, %v4333
        %v4335 = vlaneseq
        %v4336 = vshrl.u32 %v4335, 7
        %v4337 = vsub.s32 %v2014, %v4336
        %v4338 = vrot.slane %v4211, %v4337
        %v4339 = vlaneseq
        %v4340 = vshrl.u32 %v4339, 7
        %v4341 = vsub.s32 %v2014, %v4340
        %v4342 = vrot.slane %v4214, %v4341
        %v4343 = vsel %vm2143, %v4222, %v4218
        %v4344 = vsel %vm2145, %v4226, %v4343
        %v4345 = vsel %vm2147, %v4230, %v4344
        %v4346 = vsel %vm2149, %v4234, %v4345
        %v4347 = vsel %vm2151, %v4238, %v4346
        %v4348 = vsel %vm2153, %v4242, %v4347
        %v4349 = vsel %vm2155, %v4246, %v4348
        %v4350 = vsel %vm2143, %v4254, %v4250
        %v4351 = vsel %vm2145, %v4258, %v4350
        %v4352 = vsel %vm2147, %v4262, %v4351
        %v4353 = vsel %vm2149, %v4266, %v4352
        %v4354 = vsel %vm2151, %v4270, %v4353
        %v4355 = vsel %vm2153, %v4274, %v4354
        %v4356 = vsel %vm2155, %v4278, %v4355
        %v4357 = vsel %vm2143, %v4286, %v4282
        %v4358 = vsel %vm2145, %v4290, %v4357
        %v4359 = vsel %vm2147, %v4294, %v4358
        %v4360 = vsel %vm2149, %v4298, %v4359
        %v4361 = vsel %vm2151, %v4302, %v4360
        %v4362 = vsel %vm2153, %v4306, %v4361
        %v4363 = vsel %vm2155, %v4310, %v4362
        %v4364 = vsel %vm2143, %v4318, %v4314
        %v4365 = vsel %vm2145, %v4322, %v4364
        %v4366 = vsel %vm2147, %v4326, %v4365
        %v4367 = vsel %vm2149, %v4330, %v4366
        %v4368 = vsel %vm2151, %v4334, %v4367
        %v4369 = vsel %vm2153, %v4338, %v4368
        %v4370 = vsel %vm2155, %v4342, %v4369
        %v4375 = vsel %vm2182, %v4349, 0.0
        %4376 = vadd.xlane.f32.xlu0 %v4375
        %v4377 = vpop.xlane.xlu0 %4376
        %v4378 = vsel %vm2182, %v4356, 0.0
        %4379 = vadd.xlane.f32.xlu0 %v4378
        %v4380 = vpop.xlane.xlu0 %4379
        %v4381 = vsel %vm2182, %v4363, 0.0
        %4382 = vadd.xlane.f32.xlu0 %v4381
        %v4383 = vpop.xlane.xlu0 %4382
        %v4384 = vsel %vm2182, %v4370, 0.0
        %4385 = vadd.xlane.f32.xlu0 %v4384
        %v4386 = vpop.xlane.xlu0 %4385
        %v4391 = vlaneseq
        %v4392 = vshrl.u32 %v4391, 7
        %v4393 = vsub.s32 0, %v4392
        %v4394 = vrot.slane %v4377, %v4393
        %v4395 = vlaneseq
        %v4396 = vshrl.u32 %v4395, 7
        %v4397 = vsub.s32 1, %v4396
        %v4398 = vrot.slane %v4377, %v4397
        %v4399 = vlaneseq
        %v4400 = vshrl.u32 %v4399, 7
        %v4401 = vsub.s32 2, %v4400
        %v4402 = vrot.slane %v4377, %v4401
        %v4403 = vlaneseq
        %v4404 = vshrl.u32 %v4403, 7
        %v4405 = vsub.s32 3, %v4404
        %v4406 = vrot.slane %v4377, %v4405
        %v4407 = vlaneseq
        %v4408 = vshrl.u32 %v4407, 7
        %v4409 = vsub.s32 4, %v4408
        %v4410 = vrot.slane %v4377, %v4409
        %v4411 = vlaneseq
        %v4412 = vshrl.u32 %v4411, 7
        %v4413 = vsub.s32 5, %v4412
        %v4414 = vrot.slane %v4377, %v4413
        %v4415 = vlaneseq
        %v4416 = vshrl.u32 %v4415, 7
        %v4417 = vsub.s32 6, %v4416
        %v4418 = vrot.slane %v4377, %v4417
        %v4419 = vlaneseq
        %v4420 = vshrl.u32 %v4419, 7
        %v4421 = vsub.s32 7, %v4420
        %v4422 = vrot.slane %v4377, %v4421
        %v4423 = vlaneseq
        %v4424 = vshrl.u32 %v4423, 7
        %v4425 = vsub.s32 0, %v4424
        %v4426 = vrot.slane %v4380, %v4425
        %v4427 = vlaneseq
        %v4428 = vshrl.u32 %v4427, 7
        %v4429 = vsub.s32 1, %v4428
        %v4430 = vrot.slane %v4380, %v4429
        %v4431 = vlaneseq
        %v4432 = vshrl.u32 %v4431, 7
        %v4433 = vsub.s32 2, %v4432
        %v4434 = vrot.slane %v4380, %v4433
        %v4435 = vlaneseq
        %v4436 = vshrl.u32 %v4435, 7
        %v4437 = vsub.s32 3, %v4436
        %v4438 = vrot.slane %v4380, %v4437
        %v4439 = vlaneseq
        %v4440 = vshrl.u32 %v4439, 7
        %v4441 = vsub.s32 4, %v4440
        %v4442 = vrot.slane %v4380, %v4441
        %v4443 = vlaneseq
        %v4444 = vshrl.u32 %v4443, 7
        %v4445 = vsub.s32 5, %v4444
        %v4446 = vrot.slane %v4380, %v4445
        %v4447 = vlaneseq
        %v4448 = vshrl.u32 %v4447, 7
        %v4449 = vsub.s32 6, %v4448
        %v4450 = vrot.slane %v4380, %v4449
        %v4451 = vlaneseq
        %v4452 = vshrl.u32 %v4451, 7
        %v4453 = vsub.s32 7, %v4452
        %v4454 = vrot.slane %v4380, %v4453
        %v4455 = vlaneseq
        %v4456 = vshrl.u32 %v4455, 7
        %v4457 = vsub.s32 0, %v4456
        %v4458 = vrot.slane %v4383, %v4457
        %v4459 = vlaneseq
        %v4460 = vshrl.u32 %v4459, 7
        %v4461 = vsub.s32 1, %v4460
        %v4462 = vrot.slane %v4383, %v4461
        %v4463 = vlaneseq
        %v4464 = vshrl.u32 %v4463, 7
        %v4465 = vsub.s32 2, %v4464
        %v4466 = vrot.slane %v4383, %v4465
        %v4467 = vlaneseq
        %v4468 = vshrl.u32 %v4467, 7
        %v4469 = vsub.s32 3, %v4468
        %v4470 = vrot.slane %v4383, %v4469
        %v4471 = vlaneseq
        %v4472 = vshrl.u32 %v4471, 7
        %v4473 = vsub.s32 4, %v4472
        %v4474 = vrot.slane %v4383, %v4473
        %v4475 = vlaneseq
        %v4476 = vshrl.u32 %v4475, 7
        %v4477 = vsub.s32 5, %v4476
        %v4478 = vrot.slane %v4383, %v4477
        %v4479 = vlaneseq
        %v4480 = vshrl.u32 %v4479, 7
        %v4481 = vsub.s32 6, %v4480
        %v4482 = vrot.slane %v4383, %v4481
        %v4483 = vlaneseq
        %v4484 = vshrl.u32 %v4483, 7
        %v4485 = vsub.s32 7, %v4484
        %v4486 = vrot.slane %v4383, %v4485
        %v4487 = vlaneseq
        %v4488 = vshrl.u32 %v4487, 7
        %v4489 = vsub.s32 0, %v4488
        %v4490 = vrot.slane %v4386, %v4489
        %v4491 = vlaneseq
        %v4492 = vshrl.u32 %v4491, 7
        %v4493 = vsub.s32 1, %v4492
        %v4494 = vrot.slane %v4386, %v4493
        %v4495 = vlaneseq
        %v4496 = vshrl.u32 %v4495, 7
        %v4497 = vsub.s32 2, %v4496
        %v4498 = vrot.slane %v4386, %v4497
        %v4499 = vlaneseq
        %v4500 = vshrl.u32 %v4499, 7
        %v4501 = vsub.s32 3, %v4500
        %v4502 = vrot.slane %v4386, %v4501
        %v4503 = vlaneseq
        %v4504 = vshrl.u32 %v4503, 7
        %v4505 = vsub.s32 4, %v4504
        %v4506 = vrot.slane %v4386, %v4505
        %v4507 = vlaneseq
        %v4508 = vshrl.u32 %v4507, 7
        %v4509 = vsub.s32 5, %v4508
        %v4510 = vrot.slane %v4386, %v4509
        %v4511 = vlaneseq
        %v4512 = vshrl.u32 %v4511, 7
        %v4513 = vsub.s32 6, %v4512
        %v4514 = vrot.slane %v4386, %v4513
        %v4515 = vlaneseq
        %v4516 = vshrl.u32 %v4515, 7
        %v4517 = vsub.s32 7, %v4516
        %v4518 = vrot.slane %v4386, %v4517
        %v4551 = vrcp.pop %v4394
        %v4552 = vmul.f32 %v4024, %v4551
        %v4553 = vrcp.pop %v4398
        %v4554 = vmul.f32 %v4026, %v4553
        %v4555 = vrcp.pop %v4402
        %v4556 = vmul.f32 %v4028, %v4555
        %v4557 = vrcp.pop %v4406
        %v4558 = vmul.f32 %v4030, %v4557
        %v4559 = vrcp.pop %v4410
        %v4560 = vmul.f32 %v4032, %v4559
        %v4561 = vrcp.pop %v4414
        %v4562 = vmul.f32 %v4034, %v4561
        %v4563 = vrcp.pop %v4418
        %v4564 = vmul.f32 %v4036, %v4563
        %v4565 = vrcp.pop %v4422
        %v4566 = vmul.f32 %v4038, %v4565
        %v4567 = vrcp.pop %v4426
        %v4568 = vmul.f32 %v4040, %v4567
        %v4569 = vrcp.pop %v4430
        %v4570 = vmul.f32 %v4042, %v4569
        %v4571 = vrcp.pop %v4434
        %v4572 = vmul.f32 %v4044, %v4571
        %v4573 = vrcp.pop %v4438
        %v4574 = vmul.f32 %v4046, %v4573
        %v4575 = vrcp.pop %v4442
        %v4576 = vmul.f32 %v4048, %v4575
        %v4577 = vrcp.pop %v4446
        %v4578 = vmul.f32 %v4050, %v4577
        %v4579 = vrcp.pop %v4450
        %v4580 = vmul.f32 %v4052, %v4579
        %v4581 = vrcp.pop %v4454
        %v4582 = vmul.f32 %v4054, %v4581
        %v4583 = vrcp.pop %v4458
        %v4584 = vmul.f32 %v4056, %v4583
        %v4585 = vrcp.pop %v4462
        %v4586 = vmul.f32 %v4058, %v4585
        %v4587 = vrcp.pop %v4466
        %v4588 = vmul.f32 %v4060, %v4587
        %v4589 = vrcp.pop %v4470
        %v4590 = vmul.f32 %v4062, %v4589
        %v4591 = vrcp.pop %v4474
        %v4592 = vmul.f32 %v4064, %v4591
        %v4593 = vrcp.pop %v4478
        %v4594 = vmul.f32 %v4066, %v4593
        %v4595 = vrcp.pop %v4482
        %v4596 = vmul.f32 %v4068, %v4595
        %v4597 = vrcp.pop %v4486
        %v4598 = vmul.f32 %v4070, %v4597
        %v4599 = vrcp.pop %v4490
        %v4600 = vmul.f32 %v4072, %v4599
        %v4601 = vrcp.pop %v4494
        %v4602 = vmul.f32 %v4074, %v4601
        %v4603 = vrcp.pop %v4498
        %v4604 = vmul.f32 %v4076, %v4603
        %v4605 = vrcp.pop %v4502
        %v4606 = vmul.f32 %v4078, %v4605
        %v4607 = vrcp.pop %v4506
        %v4608 = vmul.f32 %v4080, %v4607
        %v4609 = vrcp.pop %v4510
        %v4610 = vmul.f32 %v4082, %v4609
        %v4611 = vrcp.pop %v4514
        %v4612 = vmul.f32 %v4084, %v4611
        %v4613 = vrcp.pop %v4518
        %v4614 = vmul.f32 %v4086, %v4613
        %4616 = vset.pattern.permute.xlu0 0
        %4617 = vperm.xlu0 %4616, %v4552
        %v4618 = vpop.permute.xlu0 %4617
        %4621 = vset.pattern.permute.xlu0 0
        %4622 = vperm.xlu0 %4621, %v4554
        %v4623 = vpop.permute.xlu0 %4622
        %4626 = vset.pattern.permute.xlu0 0
        %4627 = vperm.xlu0 %4626, %v4556
        %v4628 = vpop.permute.xlu0 %4627
        %4631 = vset.pattern.permute.xlu0 0
        %4632 = vperm.xlu0 %4631, %v4558
        %v4633 = vpop.permute.xlu0 %4632
        %4636 = vset.pattern.permute.xlu0 0
        %4637 = vperm.xlu0 %4636, %v4560
        %v4638 = vpop.permute.xlu0 %4637
        %4641 = vset.pattern.permute.xlu0 0
        %4642 = vperm.xlu0 %4641, %v4562
        %v4643 = vpop.permute.xlu0 %4642
        %4646 = vset.pattern.permute.xlu0 0
        %4647 = vperm.xlu0 %4646, %v4564
        %v4648 = vpop.permute.xlu0 %4647
        %4651 = vset.pattern.permute.xlu0 0
        %4652 = vperm.xlu0 %4651, %v4566
        %v4653 = vpop.permute.xlu0 %4652
        %4656 = vset.pattern.permute.xlu0 0
        %4657 = vperm.xlu0 %4656, %v4568
        %v4658 = vpop.permute.xlu0 %4657
        %4661 = vset.pattern.permute.xlu0 0
        %4662 = vperm.xlu0 %4661, %v4570
        %v4663 = vpop.permute.xlu0 %4662
        %4666 = vset.pattern.permute.xlu0 0
        %4667 = vperm.xlu0 %4666, %v4572
        %v4668 = vpop.permute.xlu0 %4667
        %4671 = vset.pattern.permute.xlu0 0
        %4672 = vperm.xlu0 %4671, %v4574
        %v4673 = vpop.permute.xlu0 %4672
        %4676 = vset.pattern.permute.xlu0 0
        %4677 = vperm.xlu0 %4676, %v4576
        %v4678 = vpop.permute.xlu0 %4677
        %4681 = vset.pattern.permute.xlu0 0
        %4682 = vperm.xlu0 %4681, %v4578
        %v4683 = vpop.permute.xlu0 %4682
        %4686 = vset.pattern.permute.xlu0 0
        %4687 = vperm.xlu0 %4686, %v4580
        %v4688 = vpop.permute.xlu0 %4687
        %4691 = vset.pattern.permute.xlu0 0
        %4692 = vperm.xlu0 %4691, %v4582
        %v4693 = vpop.permute.xlu0 %4692
        %4696 = vset.pattern.permute.xlu0 0
        %4697 = vperm.xlu0 %4696, %v4584
        %v4698 = vpop.permute.xlu0 %4697
        %4701 = vset.pattern.permute.xlu0 0
        %4702 = vperm.xlu0 %4701, %v4586
        %v4703 = vpop.permute.xlu0 %4702
        %4706 = vset.pattern.permute.xlu0 0
        %4707 = vperm.xlu0 %4706, %v4588
        %v4708 = vpop.permute.xlu0 %4707
        %4711 = vset.pattern.permute.xlu0 0
        %4712 = vperm.xlu0 %4711, %v4590
        %v4713 = vpop.permute.xlu0 %4712
        %4716 = vset.pattern.permute.xlu0 0
        %4717 = vperm.xlu0 %4716, %v4592
        %v4718 = vpop.permute.xlu0 %4717
        %4721 = vset.pattern.permute.xlu0 0
        %4722 = vperm.xlu0 %4721, %v4594
        %v4723 = vpop.permute.xlu0 %4722
        %4726 = vset.pattern.permute.xlu0 0
        %4727 = vperm.xlu0 %4726, %v4596
        %v4728 = vpop.permute.xlu0 %4727
        %4731 = vset.pattern.permute.xlu0 0
        %4732 = vperm.xlu0 %4731, %v4598
        %v4733 = vpop.permute.xlu0 %4732
        %4736 = vset.pattern.permute.xlu0 0
        %4737 = vperm.xlu0 %4736, %v4600
        %v4738 = vpop.permute.xlu0 %4737
        %4741 = vset.pattern.permute.xlu0 0
        %4742 = vperm.xlu0 %4741, %v4602
        %v4743 = vpop.permute.xlu0 %4742
        %4746 = vset.pattern.permute.xlu0 0
        %4747 = vperm.xlu0 %4746, %v4604
        %v4748 = vpop.permute.xlu0 %4747
        %4751 = vset.pattern.permute.xlu0 0
        %4752 = vperm.xlu0 %4751, %v4606
        %v4753 = vpop.permute.xlu0 %4752
        %4756 = vset.pattern.permute.xlu0 0
        %4757 = vperm.xlu0 %4756, %v4608
        %v4758 = vpop.permute.xlu0 %4757
        %4761 = vset.pattern.permute.xlu0 0
        %4762 = vperm.xlu0 %4761, %v4610
        %v4763 = vpop.permute.xlu0 %4762
        %4766 = vset.pattern.permute.xlu0 0
        %4767 = vperm.xlu0 %4766, %v4612
        %v4768 = vpop.permute.xlu0 %4767
        %4771 = vset.pattern.permute.xlu0 0
        %4772 = vperm.xlu0 %4771, %v4614
        %v4773 = vpop.permute.xlu0 %4772
        %v4775 = vmul.f32 %v4618, %v1188
        %v4776 = vmul.f32 %v4623, %v1194
        %v4777 = vmul.f32 %v4628, %v1200
        %v4778 = vmul.f32 %v4633, %v1206
        %v4779 = vmul.f32 %v4638, %v1212
        %v4780 = vmul.f32 %v4643, %v1218
        %v4781 = vmul.f32 %v4648, %v1224
        %v4782 = vmul.f32 %v4653, %v1230
        %v4783 = vmul.f32 %v4658, %v1236
        %v4784 = vmul.f32 %v4663, %v1242
        %v4785 = vmul.f32 %v4668, %v1248
        %v4786 = vmul.f32 %v4673, %v1254
        %v4787 = vmul.f32 %v4678, %v1260
        %v4788 = vmul.f32 %v4683, %v1266
        %v4789 = vmul.f32 %v4688, %v1272
        %v4790 = vmul.f32 %v4693, %v1278
        %v4791 = vmul.f32 %v4698, %v1284
        %v4792 = vmul.f32 %v4703, %v1290
        %v4793 = vmul.f32 %v4708, %v1296
        %v4794 = vmul.f32 %v4713, %v1302
        %v4795 = vmul.f32 %v4718, %v1308
        %v4796 = vmul.f32 %v4723, %v1314
        %v4797 = vmul.f32 %v4728, %v1320
        %v4798 = vmul.f32 %v4733, %v1326
        %v4799 = vmul.f32 %v4738, %v1332
        %v4800 = vmul.f32 %v4743, %v1338
        %v4801 = vmul.f32 %v4748, %v1344
        %v4802 = vmul.f32 %v4753, %v1350
        %v4803 = vmul.f32 %v4758, %v1356
        %v4804 = vmul.f32 %v4763, %v1362
        %v4805 = vmul.f32 %v4768, %v1368
        %v4806 = vmul.f32 %v4773, %v1374
        %vm4807 = vcmask 523520
        %v4808 = vsel %vm4807, %v4775, 0.0
        %v4809 = vrot.slane %v4808, 4
        %v4810 = vadd.f32 %v4808, %v4809
        %v4811 = vrot.slane %v4810, 2
        %v4812 = vadd.f32 %v4810, %v4811
        %v4813 = vrot.slane %v4812, 1
        %v4814 = vadd.f32 %v4812, %v4813
        %v4815 = vsel %vm4807, %v4776, 0.0
        %v4816 = vrot.slane %v4815, 4
        %v4817 = vadd.f32 %v4815, %v4816
        %v4818 = vrot.slane %v4817, 2
        %v4819 = vadd.f32 %v4817, %v4818
        %v4820 = vrot.slane %v4819, 1
        %v4821 = vadd.f32 %v4819, %v4820
        %v4822 = vsel %vm4807, %v4777, 0.0
        %v4823 = vrot.slane %v4822, 4
        %v4824 = vadd.f32 %v4822, %v4823
        %v4825 = vrot.slane %v4824, 2
        %v4826 = vadd.f32 %v4824, %v4825
        %v4827 = vrot.slane %v4826, 1
        %v4828 = vadd.f32 %v4826, %v4827
        %v4829 = vsel %vm4807, %v4778, 0.0
        %v4830 = vrot.slane %v4829, 4
        %v4831 = vadd.f32 %v4829, %v4830
        %v4832 = vrot.slane %v4831, 2
        %v4833 = vadd.f32 %v4831, %v4832
        %v4834 = vrot.slane %v4833, 1
        %v4835 = vadd.f32 %v4833, %v4834
        %v4836 = vsel %vm4807, %v4779, 0.0
        %v4837 = vrot.slane %v4836, 4
        %v4838 = vadd.f32 %v4836, %v4837
        %v4839 = vrot.slane %v4838, 2
        %v4840 = vadd.f32 %v4838, %v4839
        %v4841 = vrot.slane %v4840, 1
        %v4842 = vadd.f32 %v4840, %v4841
        %v4843 = vsel %vm4807, %v4780, 0.0
        %v4844 = vrot.slane %v4843, 4
        %v4845 = vadd.f32 %v4843, %v4844
        %v4846 = vrot.slane %v4845, 2
        %v4847 = vadd.f32 %v4845, %v4846
        %v4848 = vrot.slane %v4847, 1
        %v4849 = vadd.f32 %v4847, %v4848
        %v4850 = vsel %vm4807, %v4781, 0.0
        %v4851 = vrot.slane %v4850, 4
        %v4852 = vadd.f32 %v4850, %v4851
        %v4853 = vrot.slane %v4852, 2
        %v4854 = vadd.f32 %v4852, %v4853
        %v4855 = vrot.slane %v4854, 1
        %v4856 = vadd.f32 %v4854, %v4855
        %v4857 = vsel %vm4807, %v4782, 0.0
        %v4858 = vrot.slane %v4857, 4
        %v4859 = vadd.f32 %v4857, %v4858
        %v4860 = vrot.slane %v4859, 2
        %v4861 = vadd.f32 %v4859, %v4860
        %v4862 = vrot.slane %v4861, 1
        %v4863 = vadd.f32 %v4861, %v4862
        %v4864 = vsel %vm4807, %v4783, 0.0
        %v4865 = vrot.slane %v4864, 4
        %v4866 = vadd.f32 %v4864, %v4865
        %v4867 = vrot.slane %v4866, 2
        %v4868 = vadd.f32 %v4866, %v4867
        %v4869 = vrot.slane %v4868, 1
        %v4870 = vadd.f32 %v4868, %v4869
        %v4871 = vsel %vm4807, %v4784, 0.0
        %v4872 = vrot.slane %v4871, 4
        %v4873 = vadd.f32 %v4871, %v4872
        %v4874 = vrot.slane %v4873, 2
        %v4875 = vadd.f32 %v4873, %v4874
        %v4876 = vrot.slane %v4875, 1
        %v4877 = vadd.f32 %v4875, %v4876
        %v4878 = vsel %vm4807, %v4785, 0.0
        %v4879 = vrot.slane %v4878, 4
        %v4880 = vadd.f32 %v4878, %v4879
        %v4881 = vrot.slane %v4880, 2
        %v4882 = vadd.f32 %v4880, %v4881
        %v4883 = vrot.slane %v4882, 1
        %v4884 = vadd.f32 %v4882, %v4883
        %v4885 = vsel %vm4807, %v4786, 0.0
        %v4886 = vrot.slane %v4885, 4
        %v4887 = vadd.f32 %v4885, %v4886
        %v4888 = vrot.slane %v4887, 2
        %v4889 = vadd.f32 %v4887, %v4888
        %v4890 = vrot.slane %v4889, 1
        %v4891 = vadd.f32 %v4889, %v4890
        %v4892 = vsel %vm4807, %v4787, 0.0
        %v4893 = vrot.slane %v4892, 4
        %v4894 = vadd.f32 %v4892, %v4893
        %v4895 = vrot.slane %v4894, 2
        %v4896 = vadd.f32 %v4894, %v4895
        %v4897 = vrot.slane %v4896, 1
        %v4898 = vadd.f32 %v4896, %v4897
        %v4899 = vsel %vm4807, %v4788, 0.0
        %v4900 = vrot.slane %v4899, 4
        %v4901 = vadd.f32 %v4899, %v4900
        %v4902 = vrot.slane %v4901, 2
        %v4903 = vadd.f32 %v4901, %v4902
        %v4904 = vrot.slane %v4903, 1
        %v4905 = vadd.f32 %v4903, %v4904
        %v4906 = vsel %vm4807, %v4789, 0.0
        %v4907 = vrot.slane %v4906, 4
        %v4908 = vadd.f32 %v4906, %v4907
        %v4909 = vrot.slane %v4908, 2
        %v4910 = vadd.f32 %v4908, %v4909
        %v4911 = vrot.slane %v4910, 1
        %v4912 = vadd.f32 %v4910, %v4911
        %v4913 = vsel %vm4807, %v4790, 0.0
        %v4914 = vrot.slane %v4913, 4
        %v4915 = vadd.f32 %v4913, %v4914
        %v4916 = vrot.slane %v4915, 2
        %v4917 = vadd.f32 %v4915, %v4916
        %v4918 = vrot.slane %v4917, 1
        %v4919 = vadd.f32 %v4917, %v4918
        %v4920 = vsel %vm4807, %v4791, 0.0
        %v4921 = vrot.slane %v4920, 4
        %v4922 = vadd.f32 %v4920, %v4921
        %v4923 = vrot.slane %v4922, 2
        %v4924 = vadd.f32 %v4922, %v4923
        %v4925 = vrot.slane %v4924, 1
        %v4926 = vadd.f32 %v4924, %v4925
        %v4927 = vsel %vm4807, %v4792, 0.0
        %v4928 = vrot.slane %v4927, 4
        %v4929 = vadd.f32 %v4927, %v4928
        %v4930 = vrot.slane %v4929, 2
        %v4931 = vadd.f32 %v4929, %v4930
        %v4932 = vrot.slane %v4931, 1
        %v4933 = vadd.f32 %v4931, %v4932
        %v4934 = vsel %vm4807, %v4793, 0.0
        %v4935 = vrot.slane %v4934, 4
        %v4936 = vadd.f32 %v4934, %v4935
        %v4937 = vrot.slane %v4936, 2
        %v4938 = vadd.f32 %v4936, %v4937
        %v4939 = vrot.slane %v4938, 1
        %v4940 = vadd.f32 %v4938, %v4939
        %v4941 = vsel %vm4807, %v4794, 0.0
        %v4942 = vrot.slane %v4941, 4
        %v4943 = vadd.f32 %v4941, %v4942
        %v4944 = vrot.slane %v4943, 2
        %v4945 = vadd.f32 %v4943, %v4944
        %v4946 = vrot.slane %v4945, 1
        %v4947 = vadd.f32 %v4945, %v4946
        %v4948 = vsel %vm4807, %v4795, 0.0
        %v4949 = vrot.slane %v4948, 4
        %v4950 = vadd.f32 %v4948, %v4949
        %v4951 = vrot.slane %v4950, 2
        %v4952 = vadd.f32 %v4950, %v4951
        %v4953 = vrot.slane %v4952, 1
        %v4954 = vadd.f32 %v4952, %v4953
        %v4955 = vsel %vm4807, %v4796, 0.0
        %v4956 = vrot.slane %v4955, 4
        %v4957 = vadd.f32 %v4955, %v4956
        %v4958 = vrot.slane %v4957, 2
        %v4959 = vadd.f32 %v4957, %v4958
        %v4960 = vrot.slane %v4959, 1
        %v4961 = vadd.f32 %v4959, %v4960
        %v4962 = vsel %vm4807, %v4797, 0.0
        %v4963 = vrot.slane %v4962, 4
        %v4964 = vadd.f32 %v4962, %v4963
        %v4965 = vrot.slane %v4964, 2
        %v4966 = vadd.f32 %v4964, %v4965
        %v4967 = vrot.slane %v4966, 1
        %v4968 = vadd.f32 %v4966, %v4967
        %v4969 = vsel %vm4807, %v4798, 0.0
        %v4970 = vrot.slane %v4969, 4
        %v4971 = vadd.f32 %v4969, %v4970
        %v4972 = vrot.slane %v4971, 2
        %v4973 = vadd.f32 %v4971, %v4972
        %v4974 = vrot.slane %v4973, 1
        %v4975 = vadd.f32 %v4973, %v4974
        %v4976 = vsel %vm4807, %v4799, 0.0
        %v4977 = vrot.slane %v4976, 4
        %v4978 = vadd.f32 %v4976, %v4977
        %v4979 = vrot.slane %v4978, 2
        %v4980 = vadd.f32 %v4978, %v4979
        %v4981 = vrot.slane %v4980, 1
        %v4982 = vadd.f32 %v4980, %v4981
        %v4983 = vsel %vm4807, %v4800, 0.0
        %v4984 = vrot.slane %v4983, 4
        %v4985 = vadd.f32 %v4983, %v4984
        %v4986 = vrot.slane %v4985, 2
        %v4987 = vadd.f32 %v4985, %v4986
        %v4988 = vrot.slane %v4987, 1
        %v4989 = vadd.f32 %v4987, %v4988
        %v4990 = vsel %vm4807, %v4801, 0.0
        %v4991 = vrot.slane %v4990, 4
        %v4992 = vadd.f32 %v4990, %v4991
        %v4993 = vrot.slane %v4992, 2
        %v4994 = vadd.f32 %v4992, %v4993
        %v4995 = vrot.slane %v4994, 1
        %v4996 = vadd.f32 %v4994, %v4995
        %v4997 = vsel %vm4807, %v4802, 0.0
        %v4998 = vrot.slane %v4997, 4
        %v4999 = vadd.f32 %v4997, %v4998
        %v5000 = vrot.slane %v4999, 2
        %v5001 = vadd.f32 %v4999, %v5000
        %v5002 = vrot.slane %v5001, 1
        %v5003 = vadd.f32 %v5001, %v5002
        %v5004 = vsel %vm4807, %v4803, 0.0
        %v5005 = vrot.slane %v5004, 4
        %v5006 = vadd.f32 %v5004, %v5005
        %v5007 = vrot.slane %v5006, 2
        %v5008 = vadd.f32 %v5006, %v5007
        %v5009 = vrot.slane %v5008, 1
        %v5010 = vadd.f32 %v5008, %v5009
        %v5011 = vsel %vm4807, %v4804, 0.0
        %v5012 = vrot.slane %v5011, 4
        %v5013 = vadd.f32 %v5011, %v5012
        %v5014 = vrot.slane %v5013, 2
        %v5015 = vadd.f32 %v5013, %v5014
        %v5016 = vrot.slane %v5015, 1
        %v5017 = vadd.f32 %v5015, %v5016
        %v5018 = vsel %vm4807, %v4805, 0.0
        %v5019 = vrot.slane %v5018, 4
        %v5020 = vadd.f32 %v5018, %v5019
        %v5021 = vrot.slane %v5020, 2
        %v5022 = vadd.f32 %v5020, %v5021
        %v5023 = vrot.slane %v5022, 1
        %v5024 = vadd.f32 %v5022, %v5023
        %v5025 = vsel %vm4807, %v4806, 0.0
        %v5026 = vrot.slane %v5025, 4
        %v5027 = vadd.f32 %v5025, %v5026
        %v5028 = vrot.slane %v5027, 2
        %v5029 = vadd.f32 %v5027, %v5028
        %v5030 = vrot.slane %v5029, 1
        %v5031 = vadd.f32 %v5029, %v5030
        %5032 = vrot.lane.b32.xlu0 %v1852, 64
        %v5033 = vpop.permute.xlu0 %5032
        %5034 = vrot.lane.b32.xlu0 %v1853, 64
        %v5035 = vpop.permute.xlu0 %5034
        %5036 = vrot.lane.b32.xlu0 %v1854, 64
        %v5037 = vpop.permute.xlu0 %5036
        %5038 = vrot.lane.b32.xlu0 %v1855, 64
        %v5039 = vpop.permute.xlu0 %5038
        %5040 = vrot.lane.b32.xlu0 %v1856, 64
        %v5041 = vpop.permute.xlu0 %5040
        %5042 = vrot.lane.b32.xlu0 %v1857, 64
        %v5043 = vpop.permute.xlu0 %5042
        %5044 = vrot.lane.b32.xlu0 %v1858, 64
        %v5045 = vpop.permute.xlu0 %5044
        %5046 = vrot.lane.b32.xlu0 %v1859, 64
        %v5047 = vpop.permute.xlu0 %5046
        %5048 = vrot.lane.b32.xlu0 %v1860, 64
        %v5049 = vpop.permute.xlu0 %5048
        %5050 = vrot.lane.b32.xlu0 %v1861, 64
        %v5051 = vpop.permute.xlu0 %5050
        %5052 = vrot.lane.b32.xlu0 %v1862, 64
        %v5053 = vpop.permute.xlu0 %5052
        %5054 = vrot.lane.b32.xlu0 %v1863, 64
        %v5055 = vpop.permute.xlu0 %5054
        %5056 = vrot.lane.b32.xlu0 %v1864, 64
        %v5057 = vpop.permute.xlu0 %5056
        %5058 = vrot.lane.b32.xlu0 %v1865, 64
        %v5059 = vpop.permute.xlu0 %5058
        %5060 = vrot.lane.b32.xlu0 %v1866, 64
        %v5061 = vpop.permute.xlu0 %5060
        %5062 = vrot.lane.b32.xlu0 %v1867, 64
        %v5063 = vpop.permute.xlu0 %5062
        %5064 = vrot.lane.b32.xlu0 %v1868, 64
        %v5065 = vpop.permute.xlu0 %5064
        %5066 = vrot.lane.b32.xlu0 %v1869, 64
        %v5067 = vpop.permute.xlu0 %5066
        %5068 = vrot.lane.b32.xlu0 %v1870, 64
        %v5069 = vpop.permute.xlu0 %5068
        %5070 = vrot.lane.b32.xlu0 %v1871, 64
        %v5071 = vpop.permute.xlu0 %5070
        %5072 = vrot.lane.b32.xlu0 %v1872, 64
        %v5073 = vpop.permute.xlu0 %5072
        %5074 = vrot.lane.b32.xlu0 %v1873, 64
        %v5075 = vpop.permute.xlu0 %5074
        %5076 = vrot.lane.b32.xlu0 %v1874, 64
        %v5077 = vpop.permute.xlu0 %5076
        %5078 = vrot.lane.b32.xlu0 %v1875, 64
        %v5079 = vpop.permute.xlu0 %5078
        %5080 = vrot.lane.b32.xlu0 %v1876, 64
        %v5081 = vpop.permute.xlu0 %5080
        %5082 = vrot.lane.b32.xlu0 %v1877, 64
        %v5083 = vpop.permute.xlu0 %5082
        %5084 = vrot.lane.b32.xlu0 %v1878, 64
        %v5085 = vpop.permute.xlu0 %5084
        %5086 = vrot.lane.b32.xlu0 %v1879, 64
        %v5087 = vpop.permute.xlu0 %5086
        %5088 = vrot.lane.b32.xlu0 %v1880, 64
        %v5089 = vpop.permute.xlu0 %5088
        %5090 = vrot.lane.b32.xlu0 %v1881, 64
        %v5091 = vpop.permute.xlu0 %5090
        %5092 = vrot.lane.b32.xlu0 %v1882, 64
        %v5093 = vpop.permute.xlu0 %5092
        %5094 = vrot.lane.b32.xlu0 %v1883, 64
        %v5095 = vpop.permute.xlu0 %5094
        %v5128 = vsel %vm1884, %v5033, 0.0
        %5129 = vadd.xlane.f32.xlu0 %v5128
        %v5130 = vpop.xlane.xlu0 %5129
        %v5131 = vsel %vm1884, %v5035, 0.0
        %5132 = vadd.xlane.f32.xlu0 %v5131
        %v5133 = vpop.xlane.xlu0 %5132
        %v5134 = vsel %vm1884, %v5037, 0.0
        %5135 = vadd.xlane.f32.xlu0 %v5134
        %v5136 = vpop.xlane.xlu0 %5135
        %v5137 = vsel %vm1884, %v5039, 0.0
        %5138 = vadd.xlane.f32.xlu0 %v5137
        %v5139 = vpop.xlane.xlu0 %5138
        %v5140 = vsel %vm1884, %v5041, 0.0
        %5141 = vadd.xlane.f32.xlu0 %v5140
        %v5142 = vpop.xlane.xlu0 %5141
        %v5143 = vsel %vm1884, %v5043, 0.0
        %5144 = vadd.xlane.f32.xlu0 %v5143
        %v5145 = vpop.xlane.xlu0 %5144
        %v5146 = vsel %vm1884, %v5045, 0.0
        %5147 = vadd.xlane.f32.xlu0 %v5146
        %v5148 = vpop.xlane.xlu0 %5147
        %v5149 = vsel %vm1884, %v5047, 0.0
        %5150 = vadd.xlane.f32.xlu0 %v5149
        %v5151 = vpop.xlane.xlu0 %5150
        %v5152 = vsel %vm1884, %v5049, 0.0
        %5153 = vadd.xlane.f32.xlu0 %v5152
        %v5154 = vpop.xlane.xlu0 %5153
        %v5155 = vsel %vm1884, %v5051, 0.0
        %5156 = vadd.xlane.f32.xlu0 %v5155
        %v5157 = vpop.xlane.xlu0 %5156
        %v5158 = vsel %vm1884, %v5053, 0.0
        %5159 = vadd.xlane.f32.xlu0 %v5158
        %v5160 = vpop.xlane.xlu0 %5159
        %v5161 = vsel %vm1884, %v5055, 0.0
        %5162 = vadd.xlane.f32.xlu0 %v5161
        %v5163 = vpop.xlane.xlu0 %5162
        %v5164 = vsel %vm1884, %v5057, 0.0
        %5165 = vadd.xlane.f32.xlu0 %v5164
        %v5166 = vpop.xlane.xlu0 %5165
        %v5167 = vsel %vm1884, %v5059, 0.0
        %5168 = vadd.xlane.f32.xlu0 %v5167
        %v5169 = vpop.xlane.xlu0 %5168
        %v5170 = vsel %vm1884, %v5061, 0.0
        %5171 = vadd.xlane.f32.xlu0 %v5170
        %v5172 = vpop.xlane.xlu0 %5171
        %v5173 = vsel %vm1884, %v5063, 0.0
        %5174 = vadd.xlane.f32.xlu0 %v5173
        %v5175 = vpop.xlane.xlu0 %5174
        %v5176 = vsel %vm1884, %v5065, 0.0
        %5177 = vadd.xlane.f32.xlu0 %v5176
        %v5178 = vpop.xlane.xlu0 %5177
        %v5179 = vsel %vm1884, %v5067, 0.0
        %5180 = vadd.xlane.f32.xlu0 %v5179
        %v5181 = vpop.xlane.xlu0 %5180
        %v5182 = vsel %vm1884, %v5069, 0.0
        %5183 = vadd.xlane.f32.xlu0 %v5182
        %v5184 = vpop.xlane.xlu0 %5183
        %v5185 = vsel %vm1884, %v5071, 0.0
        %5186 = vadd.xlane.f32.xlu0 %v5185
        %v5187 = vpop.xlane.xlu0 %5186
        %v5188 = vsel %vm1884, %v5073, 0.0
        %5189 = vadd.xlane.f32.xlu0 %v5188
        %v5190 = vpop.xlane.xlu0 %5189
        %v5191 = vsel %vm1884, %v5075, 0.0
        %5192 = vadd.xlane.f32.xlu0 %v5191
        %v5193 = vpop.xlane.xlu0 %5192
        %v5194 = vsel %vm1884, %v5077, 0.0
        %5195 = vadd.xlane.f32.xlu0 %v5194
        %v5196 = vpop.xlane.xlu0 %5195
        %v5197 = vsel %vm1884, %v5079, 0.0
        %5198 = vadd.xlane.f32.xlu0 %v5197
        %v5199 = vpop.xlane.xlu0 %5198
        %v5200 = vsel %vm1884, %v5081, 0.0
        %5201 = vadd.xlane.f32.xlu0 %v5200
        %v5202 = vpop.xlane.xlu0 %5201
        %v5203 = vsel %vm1884, %v5083, 0.0
        %5204 = vadd.xlane.f32.xlu0 %v5203
        %v5205 = vpop.xlane.xlu0 %5204
        %v5206 = vsel %vm1884, %v5085, 0.0
        %5207 = vadd.xlane.f32.xlu0 %v5206
        %v5208 = vpop.xlane.xlu0 %5207
        %v5209 = vsel %vm1884, %v5087, 0.0
        %5210 = vadd.xlane.f32.xlu0 %v5209
        %v5211 = vpop.xlane.xlu0 %5210
        %v5212 = vsel %vm1884, %v5089, 0.0
        %5213 = vadd.xlane.f32.xlu0 %v5212
        %v5214 = vpop.xlane.xlu0 %5213
        %v5215 = vsel %vm1884, %v5091, 0.0
        %5216 = vadd.xlane.f32.xlu0 %v5215
        %v5217 = vpop.xlane.xlu0 %5216
        %v5218 = vsel %vm1884, %v5093, 0.0
        %5219 = vadd.xlane.f32.xlu0 %v5218
        %v5220 = vpop.xlane.xlu0 %5219
        %v5221 = vsel %vm1884, %v5095, 0.0
        %5222 = vadd.xlane.f32.xlu0 %v5221
        %v5223 = vpop.xlane.xlu0 %5222
        %v5256 = vlaneseq
        %v5257 = vshrl.u32 %v5256, 7
        %v5258 = vsub.s32 %v2014, %v5257
        %v5259 = vrot.slane %v5130, %v5258
        %v5260 = vlaneseq
        %v5261 = vshrl.u32 %v5260, 7
        %v5262 = vsub.s32 %v2014, %v5261
        %v5263 = vrot.slane %v5133, %v5262
        %v5264 = vlaneseq
        %v5265 = vshrl.u32 %v5264, 7
        %v5266 = vsub.s32 %v2014, %v5265
        %v5267 = vrot.slane %v5136, %v5266
        %v5268 = vlaneseq
        %v5269 = vshrl.u32 %v5268, 7
        %v5270 = vsub.s32 %v2014, %v5269
        %v5271 = vrot.slane %v5139, %v5270
        %v5272 = vlaneseq
        %v5273 = vshrl.u32 %v5272, 7
        %v5274 = vsub.s32 %v2014, %v5273
        %v5275 = vrot.slane %v5142, %v5274
        %v5276 = vlaneseq
        %v5277 = vshrl.u32 %v5276, 7
        %v5278 = vsub.s32 %v2014, %v5277
        %v5279 = vrot.slane %v5145, %v5278
        %v5280 = vlaneseq
        %v5281 = vshrl.u32 %v5280, 7
        %v5282 = vsub.s32 %v2014, %v5281
        %v5283 = vrot.slane %v5148, %v5282
        %v5284 = vlaneseq
        %v5285 = vshrl.u32 %v5284, 7
        %v5286 = vsub.s32 %v2014, %v5285
        %v5287 = vrot.slane %v5151, %v5286
        %v5288 = vlaneseq
        %v5289 = vshrl.u32 %v5288, 7
        %v5290 = vsub.s32 %v2014, %v5289
        %v5291 = vrot.slane %v5154, %v5290
        %v5292 = vlaneseq
        %v5293 = vshrl.u32 %v5292, 7
        %v5294 = vsub.s32 %v2014, %v5293
        %v5295 = vrot.slane %v5157, %v5294
        %v5296 = vlaneseq
        %v5297 = vshrl.u32 %v5296, 7
        %v5298 = vsub.s32 %v2014, %v5297
        %v5299 = vrot.slane %v5160, %v5298
        %v5300 = vlaneseq
        %v5301 = vshrl.u32 %v5300, 7
        %v5302 = vsub.s32 %v2014, %v5301
        %v5303 = vrot.slane %v5163, %v5302
        %v5304 = vlaneseq
        %v5305 = vshrl.u32 %v5304, 7
        %v5306 = vsub.s32 %v2014, %v5305
        %v5307 = vrot.slane %v5166, %v5306
        %v5308 = vlaneseq
        %v5309 = vshrl.u32 %v5308, 7
        %v5310 = vsub.s32 %v2014, %v5309
        %v5311 = vrot.slane %v5169, %v5310
        %v5312 = vlaneseq
        %v5313 = vshrl.u32 %v5312, 7
        %v5314 = vsub.s32 %v2014, %v5313
        %v5315 = vrot.slane %v5172, %v5314
        %v5316 = vlaneseq
        %v5317 = vshrl.u32 %v5316, 7
        %v5318 = vsub.s32 %v2014, %v5317
        %v5319 = vrot.slane %v5175, %v5318
        %v5320 = vlaneseq
        %v5321 = vshrl.u32 %v5320, 7
        %v5322 = vsub.s32 %v2014, %v5321
        %v5323 = vrot.slane %v5178, %v5322
        %v5324 = vlaneseq
        %v5325 = vshrl.u32 %v5324, 7
        %v5326 = vsub.s32 %v2014, %v5325
        %v5327 = vrot.slane %v5181, %v5326
        %v5328 = vlaneseq
        %v5329 = vshrl.u32 %v5328, 7
        %v5330 = vsub.s32 %v2014, %v5329
        %v5331 = vrot.slane %v5184, %v5330
        %v5332 = vlaneseq
        %v5333 = vshrl.u32 %v5332, 7
        %v5334 = vsub.s32 %v2014, %v5333
        %v5335 = vrot.slane %v5187, %v5334
        %v5336 = vlaneseq
        %v5337 = vshrl.u32 %v5336, 7
        %v5338 = vsub.s32 %v2014, %v5337
        %v5339 = vrot.slane %v5190, %v5338
        %v5340 = vlaneseq
        %v5341 = vshrl.u32 %v5340, 7
        %v5342 = vsub.s32 %v2014, %v5341
        %v5343 = vrot.slane %v5193, %v5342
        %v5344 = vlaneseq
        %v5345 = vshrl.u32 %v5344, 7
        %v5346 = vsub.s32 %v2014, %v5345
        %v5347 = vrot.slane %v5196, %v5346
        %v5348 = vlaneseq
        %v5349 = vshrl.u32 %v5348, 7
        %v5350 = vsub.s32 %v2014, %v5349
        %v5351 = vrot.slane %v5199, %v5350
        %v5352 = vlaneseq
        %v5353 = vshrl.u32 %v5352, 7
        %v5354 = vsub.s32 %v2014, %v5353
        %v5355 = vrot.slane %v5202, %v5354
        %v5356 = vlaneseq
        %v5357 = vshrl.u32 %v5356, 7
        %v5358 = vsub.s32 %v2014, %v5357
        %v5359 = vrot.slane %v5205, %v5358
        %v5360 = vlaneseq
        %v5361 = vshrl.u32 %v5360, 7
        %v5362 = vsub.s32 %v2014, %v5361
        %v5363 = vrot.slane %v5208, %v5362
        %v5364 = vlaneseq
        %v5365 = vshrl.u32 %v5364, 7
        %v5366 = vsub.s32 %v2014, %v5365
        %v5367 = vrot.slane %v5211, %v5366
        %v5368 = vlaneseq
        %v5369 = vshrl.u32 %v5368, 7
        %v5370 = vsub.s32 %v2014, %v5369
        %v5371 = vrot.slane %v5214, %v5370
        %v5372 = vlaneseq
        %v5373 = vshrl.u32 %v5372, 7
        %v5374 = vsub.s32 %v2014, %v5373
        %v5375 = vrot.slane %v5217, %v5374
        %v5376 = vlaneseq
        %v5377 = vshrl.u32 %v5376, 7
        %v5378 = vsub.s32 %v2014, %v5377
        %v5379 = vrot.slane %v5220, %v5378
        %v5380 = vlaneseq
        %v5381 = vshrl.u32 %v5380, 7
        %v5382 = vsub.s32 %v2014, %v5381
        %v5383 = vrot.slane %v5223, %v5382
        %v5384 = vsel %vm2143, %v5263, %v5259
        %v5385 = vsel %vm2145, %v5267, %v5384
        %v5386 = vsel %vm2147, %v5271, %v5385
        %v5387 = vsel %vm2149, %v5275, %v5386
        %v5388 = vsel %vm2151, %v5279, %v5387
        %v5389 = vsel %vm2153, %v5283, %v5388
        %v5390 = vsel %vm2155, %v5287, %v5389
        %v5391 = vsel %vm2143, %v5295, %v5291
        %v5392 = vsel %vm2145, %v5299, %v5391
        %v5393 = vsel %vm2147, %v5303, %v5392
        %v5394 = vsel %vm2149, %v5307, %v5393
        %v5395 = vsel %vm2151, %v5311, %v5394
        %v5396 = vsel %vm2153, %v5315, %v5395
        %v5397 = vsel %vm2155, %v5319, %v5396
        %v5398 = vsel %vm2143, %v5327, %v5323
        %v5399 = vsel %vm2145, %v5331, %v5398
        %v5400 = vsel %vm2147, %v5335, %v5399
        %v5401 = vsel %vm2149, %v5339, %v5400
        %v5402 = vsel %vm2151, %v5343, %v5401
        %v5403 = vsel %vm2153, %v5347, %v5402
        %v5404 = vsel %vm2155, %v5351, %v5403
        %v5405 = vsel %vm2143, %v5359, %v5355
        %v5406 = vsel %vm2145, %v5363, %v5405
        %v5407 = vsel %vm2147, %v5367, %v5406
        %v5408 = vsel %vm2149, %v5371, %v5407
        %v5409 = vsel %vm2151, %v5375, %v5408
        %v5410 = vsel %vm2153, %v5379, %v5409
        %v5411 = vsel %vm2155, %v5383, %v5410
        %v5416 = vsel %vm2182, %v5390, -inf
        %5417 = vmax.xlane.f32.xlu0 %v5416
        %v5418 = vpop.xlane.xlu0 %5417
        %v5419 = vsel %vm2182, %v5397, -inf
        %5420 = vmax.xlane.f32.xlu0 %v5419
        %v5421 = vpop.xlane.xlu0 %5420
        %v5422 = vsel %vm2182, %v5404, -inf
        %5423 = vmax.xlane.f32.xlu0 %v5422
        %v5424 = vpop.xlane.xlu0 %5423
        %v5425 = vsel %vm2182, %v5411, -inf
        %5426 = vmax.xlane.f32.xlu0 %v5425
        %v5427 = vpop.xlane.xlu0 %5426
        %v5432 = vlaneseq
        %v5433 = vshrl.u32 %v5432, 7
        %v5434 = vsub.s32 0, %v5433
        %v5435 = vrot.slane %v5418, %v5434
        %v5436 = vlaneseq
        %v5437 = vshrl.u32 %v5436, 7
        %v5438 = vsub.s32 1, %v5437
        %v5439 = vrot.slane %v5418, %v5438
        %v5440 = vlaneseq
        %v5441 = vshrl.u32 %v5440, 7
        %v5442 = vsub.s32 2, %v5441
        %v5443 = vrot.slane %v5418, %v5442
        %v5444 = vlaneseq
        %v5445 = vshrl.u32 %v5444, 7
        %v5446 = vsub.s32 3, %v5445
        %v5447 = vrot.slane %v5418, %v5446
        %v5448 = vlaneseq
        %v5449 = vshrl.u32 %v5448, 7
        %v5450 = vsub.s32 4, %v5449
        %v5451 = vrot.slane %v5418, %v5450
        %v5452 = vlaneseq
        %v5453 = vshrl.u32 %v5452, 7
        %v5454 = vsub.s32 5, %v5453
        %v5455 = vrot.slane %v5418, %v5454
        %v5456 = vlaneseq
        %v5457 = vshrl.u32 %v5456, 7
        %v5458 = vsub.s32 6, %v5457
        %v5459 = vrot.slane %v5418, %v5458
        %v5460 = vlaneseq
        %v5461 = vshrl.u32 %v5460, 7
        %v5462 = vsub.s32 7, %v5461
        %v5463 = vrot.slane %v5418, %v5462
        %v5464 = vlaneseq
        %v5465 = vshrl.u32 %v5464, 7
        %v5466 = vsub.s32 0, %v5465
        %v5467 = vrot.slane %v5421, %v5466
        %v5468 = vlaneseq
        %v5469 = vshrl.u32 %v5468, 7
        %v5470 = vsub.s32 1, %v5469
        %v5471 = vrot.slane %v5421, %v5470
        %v5472 = vlaneseq
        %v5473 = vshrl.u32 %v5472, 7
        %v5474 = vsub.s32 2, %v5473
        %v5475 = vrot.slane %v5421, %v5474
        %v5476 = vlaneseq
        %v5477 = vshrl.u32 %v5476, 7
        %v5478 = vsub.s32 3, %v5477
        %v5479 = vrot.slane %v5421, %v5478
        %v5480 = vlaneseq
        %v5481 = vshrl.u32 %v5480, 7
        %v5482 = vsub.s32 4, %v5481
        %v5483 = vrot.slane %v5421, %v5482
        %v5484 = vlaneseq
        %v5485 = vshrl.u32 %v5484, 7
        %v5486 = vsub.s32 5, %v5485
        %v5487 = vrot.slane %v5421, %v5486
        %v5488 = vlaneseq
        %v5489 = vshrl.u32 %v5488, 7
        %v5490 = vsub.s32 6, %v5489
        %v5491 = vrot.slane %v5421, %v5490
        %v5492 = vlaneseq
        %v5493 = vshrl.u32 %v5492, 7
        %v5494 = vsub.s32 7, %v5493
        %v5495 = vrot.slane %v5421, %v5494
        %v5496 = vlaneseq
        %v5497 = vshrl.u32 %v5496, 7
        %v5498 = vsub.s32 0, %v5497
        %v5499 = vrot.slane %v5424, %v5498
        %v5500 = vlaneseq
        %v5501 = vshrl.u32 %v5500, 7
        %v5502 = vsub.s32 1, %v5501
        %v5503 = vrot.slane %v5424, %v5502
        %v5504 = vlaneseq
        %v5505 = vshrl.u32 %v5504, 7
        %v5506 = vsub.s32 2, %v5505
        %v5507 = vrot.slane %v5424, %v5506
        %v5508 = vlaneseq
        %v5509 = vshrl.u32 %v5508, 7
        %v5510 = vsub.s32 3, %v5509
        %v5511 = vrot.slane %v5424, %v5510
        %v5512 = vlaneseq
        %v5513 = vshrl.u32 %v5512, 7
        %v5514 = vsub.s32 4, %v5513
        %v5515 = vrot.slane %v5424, %v5514
        %v5516 = vlaneseq
        %v5517 = vshrl.u32 %v5516, 7
        %v5518 = vsub.s32 5, %v5517
        %v5519 = vrot.slane %v5424, %v5518
        %v5520 = vlaneseq
        %v5521 = vshrl.u32 %v5520, 7
        %v5522 = vsub.s32 6, %v5521
        %v5523 = vrot.slane %v5424, %v5522
        %v5524 = vlaneseq
        %v5525 = vshrl.u32 %v5524, 7
        %v5526 = vsub.s32 7, %v5525
        %v5527 = vrot.slane %v5424, %v5526
        %v5528 = vlaneseq
        %v5529 = vshrl.u32 %v5528, 7
        %v5530 = vsub.s32 0, %v5529
        %v5531 = vrot.slane %v5427, %v5530
        %v5532 = vlaneseq
        %v5533 = vshrl.u32 %v5532, 7
        %v5534 = vsub.s32 1, %v5533
        %v5535 = vrot.slane %v5427, %v5534
        %v5536 = vlaneseq
        %v5537 = vshrl.u32 %v5536, 7
        %v5538 = vsub.s32 2, %v5537
        %v5539 = vrot.slane %v5427, %v5538
        %v5540 = vlaneseq
        %v5541 = vshrl.u32 %v5540, 7
        %v5542 = vsub.s32 3, %v5541
        %v5543 = vrot.slane %v5427, %v5542
        %v5544 = vlaneseq
        %v5545 = vshrl.u32 %v5544, 7
        %v5546 = vsub.s32 4, %v5545
        %v5547 = vrot.slane %v5427, %v5546
        %v5548 = vlaneseq
        %v5549 = vshrl.u32 %v5548, 7
        %v5550 = vsub.s32 5, %v5549
        %v5551 = vrot.slane %v5427, %v5550
        %v5552 = vlaneseq
        %v5553 = vshrl.u32 %v5552, 7
        %v5554 = vsub.s32 6, %v5553
        %v5555 = vrot.slane %v5427, %v5554
        %v5556 = vlaneseq
        %v5557 = vshrl.u32 %v5556, 7
        %v5558 = vsub.s32 7, %v5557
        %v5559 = vrot.slane %v5427, %v5558
        %v5592 = vsub.f32 %v5130, %v5435
        %v5593 = vsub.f32 %v5133, %v5439
        %v5594 = vsub.f32 %v5136, %v5443
        %v5595 = vsub.f32 %v5139, %v5447
        %v5596 = vsub.f32 %v5142, %v5451
        %v5597 = vsub.f32 %v5145, %v5455
        %v5598 = vsub.f32 %v5148, %v5459
        %v5599 = vsub.f32 %v5151, %v5463
        %v5600 = vsub.f32 %v5154, %v5467
        %v5601 = vsub.f32 %v5157, %v5471
        %v5602 = vsub.f32 %v5160, %v5475
        %v5603 = vsub.f32 %v5163, %v5479
        %v5604 = vsub.f32 %v5166, %v5483
        %v5605 = vsub.f32 %v5169, %v5487
        %v5606 = vsub.f32 %v5172, %v5491
        %v5607 = vsub.f32 %v5175, %v5495
        %v5608 = vsub.f32 %v5178, %v5499
        %v5609 = vsub.f32 %v5181, %v5503
        %v5610 = vsub.f32 %v5184, %v5507
        %v5611 = vsub.f32 %v5187, %v5511
        %v5612 = vsub.f32 %v5190, %v5515
        %v5613 = vsub.f32 %v5193, %v5519
        %v5614 = vsub.f32 %v5196, %v5523
        %v5615 = vsub.f32 %v5199, %v5527
        %v5616 = vsub.f32 %v5202, %v5531
        %v5617 = vsub.f32 %v5205, %v5535
        %v5618 = vsub.f32 %v5208, %v5539
        %v5619 = vsub.f32 %v5211, %v5543
        %v5620 = vsub.f32 %v5214, %v5547
        %v5621 = vsub.f32 %v5217, %v5551
        %v5622 = vsub.f32 %v5220, %v5555
        %v5623 = vsub.f32 %v5223, %v5559
        %v5624 = vmul.f32 %v5592, 1.442695
        %v5625 = vpow.pop %v5624
        %v5626 = vmul.f32 %v5593, 1.442695
        %v5627 = vpow.pop %v5626
        %v5628 = vmul.f32 %v5594, 1.442695
        %v5629 = vpow.pop %v5628
        %v5630 = vmul.f32 %v5595, 1.442695
        %v5631 = vpow.pop %v5630
        %v5632 = vmul.f32 %v5596, 1.442695
        %v5633 = vpow.pop %v5632
        %v5634 = vmul.f32 %v5597, 1.442695
        %v5635 = vpow.pop %v5634
        %v5636 = vmul.f32 %v5598, 1.442695
        %v5637 = vpow.pop %v5636
        %v5638 = vmul.f32 %v5599, 1.442695
        %v5639 = vpow.pop %v5638
        %v5640 = vmul.f32 %v5600, 1.442695
        %v5641 = vpow.pop %v5640
        %v5642 = vmul.f32 %v5601, 1.442695
        %v5643 = vpow.pop %v5642
        %v5644 = vmul.f32 %v5602, 1.442695
        %v5645 = vpow.pop %v5644
        %v5646 = vmul.f32 %v5603, 1.442695
        %v5647 = vpow.pop %v5646
        %v5648 = vmul.f32 %v5604, 1.442695
        %v5649 = vpow.pop %v5648
        %v5650 = vmul.f32 %v5605, 1.442695
        %v5651 = vpow.pop %v5650
        %v5652 = vmul.f32 %v5606, 1.442695
        %v5653 = vpow.pop %v5652
        %v5654 = vmul.f32 %v5607, 1.442695
        %v5655 = vpow.pop %v5654
        %v5656 = vmul.f32 %v5608, 1.442695
        %v5657 = vpow.pop %v5656
        %v5658 = vmul.f32 %v5609, 1.442695
        %v5659 = vpow.pop %v5658
        %v5660 = vmul.f32 %v5610, 1.442695
        %v5661 = vpow.pop %v5660
        %v5662 = vmul.f32 %v5611, 1.442695
        %v5663 = vpow.pop %v5662
        %v5664 = vmul.f32 %v5612, 1.442695
        %v5665 = vpow.pop %v5664
        %v5666 = vmul.f32 %v5613, 1.442695
        %v5667 = vpow.pop %v5666
        %v5668 = vmul.f32 %v5614, 1.442695
        %v5669 = vpow.pop %v5668
        %v5670 = vmul.f32 %v5615, 1.442695
        %v5671 = vpow.pop %v5670
        %v5672 = vmul.f32 %v5616, 1.442695
        %v5673 = vpow.pop %v5672
        %v5674 = vmul.f32 %v5617, 1.442695
        %v5675 = vpow.pop %v5674
        %v5676 = vmul.f32 %v5618, 1.442695
        %v5677 = vpow.pop %v5676
        %v5678 = vmul.f32 %v5619, 1.442695
        %v5679 = vpow.pop %v5678
        %v5680 = vmul.f32 %v5620, 1.442695
        %v5681 = vpow.pop %v5680
        %v5682 = vmul.f32 %v5621, 1.442695
        %v5683 = vpow.pop %v5682
        %v5684 = vmul.f32 %v5622, 1.442695
        %v5685 = vpow.pop %v5684
        %v5686 = vmul.f32 %v5623, 1.442695
        %v5687 = vpow.pop %v5686
        %5720 = vset.pattern.permute.xlu0 0
        %5721 = vperm.xlu0 %5720, %v5625
        %v5722 = vpop.permute.xlu0 %5721
        %5723 = vset.pattern.permute.xlu0 0
        %5724 = vperm.xlu0 %5723, %v5627
        %v5725 = vpop.permute.xlu0 %5724
        %5726 = vset.pattern.permute.xlu0 0
        %5727 = vperm.xlu0 %5726, %v5629
        %v5728 = vpop.permute.xlu0 %5727
        %5729 = vset.pattern.permute.xlu0 0
        %5730 = vperm.xlu0 %5729, %v5631
        %v5731 = vpop.permute.xlu0 %5730
        %5732 = vset.pattern.permute.xlu0 0
        %5733 = vperm.xlu0 %5732, %v5633
        %v5734 = vpop.permute.xlu0 %5733
        %5735 = vset.pattern.permute.xlu0 0
        %5736 = vperm.xlu0 %5735, %v5635
        %v5737 = vpop.permute.xlu0 %5736
        %5738 = vset.pattern.permute.xlu0 0
        %5739 = vperm.xlu0 %5738, %v5637
        %v5740 = vpop.permute.xlu0 %5739
        %5741 = vset.pattern.permute.xlu0 0
        %5742 = vperm.xlu0 %5741, %v5639
        %v5743 = vpop.permute.xlu0 %5742
        %5744 = vset.pattern.permute.xlu0 0
        %5745 = vperm.xlu0 %5744, %v5641
        %v5746 = vpop.permute.xlu0 %5745
        %5747 = vset.pattern.permute.xlu0 0
        %5748 = vperm.xlu0 %5747, %v5643
        %v5749 = vpop.permute.xlu0 %5748
        %5750 = vset.pattern.permute.xlu0 0
        %5751 = vperm.xlu0 %5750, %v5645
        %v5752 = vpop.permute.xlu0 %5751
        %5753 = vset.pattern.permute.xlu0 0
        %5754 = vperm.xlu0 %5753, %v5647
        %v5755 = vpop.permute.xlu0 %5754
        %5756 = vset.pattern.permute.xlu0 0
        %5757 = vperm.xlu0 %5756, %v5649
        %v5758 = vpop.permute.xlu0 %5757
        %5759 = vset.pattern.permute.xlu0 0
        %5760 = vperm.xlu0 %5759, %v5651
        %v5761 = vpop.permute.xlu0 %5760
        %5762 = vset.pattern.permute.xlu0 0
        %5763 = vperm.xlu0 %5762, %v5653
        %v5764 = vpop.permute.xlu0 %5763
        %5765 = vset.pattern.permute.xlu0 0
        %5766 = vperm.xlu0 %5765, %v5655
        %v5767 = vpop.permute.xlu0 %5766
        %5768 = vset.pattern.permute.xlu0 0
        %5769 = vperm.xlu0 %5768, %v5657
        %v5770 = vpop.permute.xlu0 %5769
        %5771 = vset.pattern.permute.xlu0 0
        %5772 = vperm.xlu0 %5771, %v5659
        %v5773 = vpop.permute.xlu0 %5772
        %5774 = vset.pattern.permute.xlu0 0
        %5775 = vperm.xlu0 %5774, %v5661
        %v5776 = vpop.permute.xlu0 %5775
        %5777 = vset.pattern.permute.xlu0 0
        %5778 = vperm.xlu0 %5777, %v5663
        %v5779 = vpop.permute.xlu0 %5778
        %5780 = vset.pattern.permute.xlu0 0
        %5781 = vperm.xlu0 %5780, %v5665
        %v5782 = vpop.permute.xlu0 %5781
        %5783 = vset.pattern.permute.xlu0 0
        %5784 = vperm.xlu0 %5783, %v5667
        %v5785 = vpop.permute.xlu0 %5784
        %5786 = vset.pattern.permute.xlu0 0
        %5787 = vperm.xlu0 %5786, %v5669
        %v5788 = vpop.permute.xlu0 %5787
        %5789 = vset.pattern.permute.xlu0 0
        %5790 = vperm.xlu0 %5789, %v5671
        %v5791 = vpop.permute.xlu0 %5790
        %5792 = vset.pattern.permute.xlu0 0
        %5793 = vperm.xlu0 %5792, %v5673
        %v5794 = vpop.permute.xlu0 %5793
        %5795 = vset.pattern.permute.xlu0 0
        %5796 = vperm.xlu0 %5795, %v5675
        %v5797 = vpop.permute.xlu0 %5796
        %5798 = vset.pattern.permute.xlu0 0
        %5799 = vperm.xlu0 %5798, %v5677
        %v5800 = vpop.permute.xlu0 %5799
        %5801 = vset.pattern.permute.xlu0 0
        %5802 = vperm.xlu0 %5801, %v5679
        %v5803 = vpop.permute.xlu0 %5802
        %5804 = vset.pattern.permute.xlu0 0
        %5805 = vperm.xlu0 %5804, %v5681
        %v5806 = vpop.permute.xlu0 %5805
        %5807 = vset.pattern.permute.xlu0 0
        %5808 = vperm.xlu0 %5807, %v5683
        %v5809 = vpop.permute.xlu0 %5808
        %5810 = vset.pattern.permute.xlu0 0
        %5811 = vperm.xlu0 %5810, %v5685
        %v5812 = vpop.permute.xlu0 %5811
        %5813 = vset.pattern.permute.xlu0 0
        %5814 = vperm.xlu0 %5813, %v5687
        %v5815 = vpop.permute.xlu0 %5814
        %v5816 = vlaneseq
        %v5817 = vshrl.u32 %v5816, 7
        %v5818 = vsub.s32 %v2014, %v5817
        %v5819 = vrot.slane %v5722, %v5818
        %v5820 = vlaneseq
        %v5821 = vshrl.u32 %v5820, 7
        %v5822 = vsub.s32 %v2014, %v5821
        %v5823 = vrot.slane %v5725, %v5822
        %v5824 = vlaneseq
        %v5825 = vshrl.u32 %v5824, 7
        %v5826 = vsub.s32 %v2014, %v5825
        %v5827 = vrot.slane %v5728, %v5826
        %v5828 = vlaneseq
        %v5829 = vshrl.u32 %v5828, 7
        %v5830 = vsub.s32 %v2014, %v5829
        %v5831 = vrot.slane %v5731, %v5830
        %v5832 = vlaneseq
        %v5833 = vshrl.u32 %v5832, 7
        %v5834 = vsub.s32 %v2014, %v5833
        %v5835 = vrot.slane %v5734, %v5834
        %v5836 = vlaneseq
        %v5837 = vshrl.u32 %v5836, 7
        %v5838 = vsub.s32 %v2014, %v5837
        %v5839 = vrot.slane %v5737, %v5838
        %v5840 = vlaneseq
        %v5841 = vshrl.u32 %v5840, 7
        %v5842 = vsub.s32 %v2014, %v5841
        %v5843 = vrot.slane %v5740, %v5842
        %v5844 = vlaneseq
        %v5845 = vshrl.u32 %v5844, 7
        %v5846 = vsub.s32 %v2014, %v5845
        %v5847 = vrot.slane %v5743, %v5846
        %v5848 = vlaneseq
        %v5849 = vshrl.u32 %v5848, 7
        %v5850 = vsub.s32 %v2014, %v5849
        %v5851 = vrot.slane %v5746, %v5850
        %v5852 = vlaneseq
        %v5853 = vshrl.u32 %v5852, 7
        %v5854 = vsub.s32 %v2014, %v5853
        %v5855 = vrot.slane %v5749, %v5854
        %v5856 = vlaneseq
        %v5857 = vshrl.u32 %v5856, 7
        %v5858 = vsub.s32 %v2014, %v5857
        %v5859 = vrot.slane %v5752, %v5858
        %v5860 = vlaneseq
        %v5861 = vshrl.u32 %v5860, 7
        %v5862 = vsub.s32 %v2014, %v5861
        %v5863 = vrot.slane %v5755, %v5862
        %v5864 = vlaneseq
        %v5865 = vshrl.u32 %v5864, 7
        %v5866 = vsub.s32 %v2014, %v5865
        %v5867 = vrot.slane %v5758, %v5866
        %v5868 = vlaneseq
        %v5869 = vshrl.u32 %v5868, 7
        %v5870 = vsub.s32 %v2014, %v5869
        %v5871 = vrot.slane %v5761, %v5870
        %v5872 = vlaneseq
        %v5873 = vshrl.u32 %v5872, 7
        %v5874 = vsub.s32 %v2014, %v5873
        %v5875 = vrot.slane %v5764, %v5874
        %v5876 = vlaneseq
        %v5877 = vshrl.u32 %v5876, 7
        %v5878 = vsub.s32 %v2014, %v5877
        %v5879 = vrot.slane %v5767, %v5878
        %v5880 = vlaneseq
        %v5881 = vshrl.u32 %v5880, 7
        %v5882 = vsub.s32 %v2014, %v5881
        %v5883 = vrot.slane %v5770, %v5882
        %v5884 = vlaneseq
        %v5885 = vshrl.u32 %v5884, 7
        %v5886 = vsub.s32 %v2014, %v5885
        %v5887 = vrot.slane %v5773, %v5886
        %v5888 = vlaneseq
        %v5889 = vshrl.u32 %v5888, 7
        %v5890 = vsub.s32 %v2014, %v5889
        %v5891 = vrot.slane %v5776, %v5890
        %v5892 = vlaneseq
        %v5893 = vshrl.u32 %v5892, 7
        %v5894 = vsub.s32 %v2014, %v5893
        %v5895 = vrot.slane %v5779, %v5894
        %v5896 = vlaneseq
        %v5897 = vshrl.u32 %v5896, 7
        %v5898 = vsub.s32 %v2014, %v5897
        %v5899 = vrot.slane %v5782, %v5898
        %v5900 = vlaneseq
        %v5901 = vshrl.u32 %v5900, 7
        %v5902 = vsub.s32 %v2014, %v5901
        %v5903 = vrot.slane %v5785, %v5902
        %v5904 = vlaneseq
        %v5905 = vshrl.u32 %v5904, 7
        %v5906 = vsub.s32 %v2014, %v5905
        %v5907 = vrot.slane %v5788, %v5906
        %v5908 = vlaneseq
        %v5909 = vshrl.u32 %v5908, 7
        %v5910 = vsub.s32 %v2014, %v5909
        %v5911 = vrot.slane %v5791, %v5910
        %v5912 = vlaneseq
        %v5913 = vshrl.u32 %v5912, 7
        %v5914 = vsub.s32 %v2014, %v5913
        %v5915 = vrot.slane %v5794, %v5914
        %v5916 = vlaneseq
        %v5917 = vshrl.u32 %v5916, 7
        %v5918 = vsub.s32 %v2014, %v5917
        %v5919 = vrot.slane %v5797, %v5918
        %v5920 = vlaneseq
        %v5921 = vshrl.u32 %v5920, 7
        %v5922 = vsub.s32 %v2014, %v5921
        %v5923 = vrot.slane %v5800, %v5922
        %v5924 = vlaneseq
        %v5925 = vshrl.u32 %v5924, 7
        %v5926 = vsub.s32 %v2014, %v5925
        %v5927 = vrot.slane %v5803, %v5926
        %v5928 = vlaneseq
        %v5929 = vshrl.u32 %v5928, 7
        %v5930 = vsub.s32 %v2014, %v5929
        %v5931 = vrot.slane %v5806, %v5930
        %v5932 = vlaneseq
        %v5933 = vshrl.u32 %v5932, 7
        %v5934 = vsub.s32 %v2014, %v5933
        %v5935 = vrot.slane %v5809, %v5934
        %v5936 = vlaneseq
        %v5937 = vshrl.u32 %v5936, 7
        %v5938 = vsub.s32 %v2014, %v5937
        %v5939 = vrot.slane %v5812, %v5938
        %v5940 = vlaneseq
        %v5941 = vshrl.u32 %v5940, 7
        %v5942 = vsub.s32 %v2014, %v5941
        %v5943 = vrot.slane %v5815, %v5942
        %v5944 = vsel %vm2143, %v5823, %v5819
        %v5945 = vsel %vm2145, %v5827, %v5944
        %v5946 = vsel %vm2147, %v5831, %v5945
        %v5947 = vsel %vm2149, %v5835, %v5946
        %v5948 = vsel %vm2151, %v5839, %v5947
        %v5949 = vsel %vm2153, %v5843, %v5948
        %v5950 = vsel %vm2155, %v5847, %v5949
        %v5951 = vsel %vm2143, %v5855, %v5851
        %v5952 = vsel %vm2145, %v5859, %v5951
        %v5953 = vsel %vm2147, %v5863, %v5952
        %v5954 = vsel %vm2149, %v5867, %v5953
        %v5955 = vsel %vm2151, %v5871, %v5954
        %v5956 = vsel %vm2153, %v5875, %v5955
        %v5957 = vsel %vm2155, %v5879, %v5956
        %v5958 = vsel %vm2143, %v5887, %v5883
        %v5959 = vsel %vm2145, %v5891, %v5958
        %v5960 = vsel %vm2147, %v5895, %v5959
        %v5961 = vsel %vm2149, %v5899, %v5960
        %v5962 = vsel %vm2151, %v5903, %v5961
        %v5963 = vsel %vm2153, %v5907, %v5962
        %v5964 = vsel %vm2155, %v5911, %v5963
        %v5965 = vsel %vm2143, %v5919, %v5915
        %v5966 = vsel %vm2145, %v5923, %v5965
        %v5967 = vsel %vm2147, %v5927, %v5966
        %v5968 = vsel %vm2149, %v5931, %v5967
        %v5969 = vsel %vm2151, %v5935, %v5968
        %v5970 = vsel %vm2153, %v5939, %v5969
        %v5971 = vsel %vm2155, %v5943, %v5970
        %v5976 = vsel %vm2182, %v5950, 0.0
        %5977 = vadd.xlane.f32.xlu0 %v5976
        %v5978 = vpop.xlane.xlu0 %5977
        %v5979 = vsel %vm2182, %v5957, 0.0
        %5980 = vadd.xlane.f32.xlu0 %v5979
        %v5981 = vpop.xlane.xlu0 %5980
        %v5982 = vsel %vm2182, %v5964, 0.0
        %5983 = vadd.xlane.f32.xlu0 %v5982
        %v5984 = vpop.xlane.xlu0 %5983
        %v5985 = vsel %vm2182, %v5971, 0.0
        %5986 = vadd.xlane.f32.xlu0 %v5985
        %v5987 = vpop.xlane.xlu0 %5986
        %v5992 = vlaneseq
        %v5993 = vshrl.u32 %v5992, 7
        %v5994 = vsub.s32 0, %v5993
        %v5995 = vrot.slane %v5978, %v5994
        %v5996 = vlaneseq
        %v5997 = vshrl.u32 %v5996, 7
        %v5998 = vsub.s32 1, %v5997
        %v5999 = vrot.slane %v5978, %v5998
        %v6000 = vlaneseq
        %v6001 = vshrl.u32 %v6000, 7
        %v6002 = vsub.s32 2, %v6001
        %v6003 = vrot.slane %v5978, %v6002
        %v6004 = vlaneseq
        %v6005 = vshrl.u32 %v6004, 7
        %v6006 = vsub.s32 3, %v6005
        %v6007 = vrot.slane %v5978, %v6006
        %v6008 = vlaneseq
        %v6009 = vshrl.u32 %v6008, 7
        %v6010 = vsub.s32 4, %v6009
        %v6011 = vrot.slane %v5978, %v6010
        %v6012 = vlaneseq
        %v6013 = vshrl.u32 %v6012, 7
        %v6014 = vsub.s32 5, %v6013
        %v6015 = vrot.slane %v5978, %v6014
        %v6016 = vlaneseq
        %v6017 = vshrl.u32 %v6016, 7
        %v6018 = vsub.s32 6, %v6017
        %v6019 = vrot.slane %v5978, %v6018
        %v6020 = vlaneseq
        %v6021 = vshrl.u32 %v6020, 7
        %v6022 = vsub.s32 7, %v6021
        %v6023 = vrot.slane %v5978, %v6022
        %v6024 = vlaneseq
        %v6025 = vshrl.u32 %v6024, 7
        %v6026 = vsub.s32 0, %v6025
        %v6027 = vrot.slane %v5981, %v6026
        %v6028 = vlaneseq
        %v6029 = vshrl.u32 %v6028, 7
        %v6030 = vsub.s32 1, %v6029
        %v6031 = vrot.slane %v5981, %v6030
        %v6032 = vlaneseq
        %v6033 = vshrl.u32 %v6032, 7
        %v6034 = vsub.s32 2, %v6033
        %v6035 = vrot.slane %v5981, %v6034
        %v6036 = vlaneseq
        %v6037 = vshrl.u32 %v6036, 7
        %v6038 = vsub.s32 3, %v6037
        %v6039 = vrot.slane %v5981, %v6038
        %v6040 = vlaneseq
        %v6041 = vshrl.u32 %v6040, 7
        %v6042 = vsub.s32 4, %v6041
        %v6043 = vrot.slane %v5981, %v6042
        %v6044 = vlaneseq
        %v6045 = vshrl.u32 %v6044, 7
        %v6046 = vsub.s32 5, %v6045
        %v6047 = vrot.slane %v5981, %v6046
        %v6048 = vlaneseq
        %v6049 = vshrl.u32 %v6048, 7
        %v6050 = vsub.s32 6, %v6049
        %v6051 = vrot.slane %v5981, %v6050
        %v6052 = vlaneseq
        %v6053 = vshrl.u32 %v6052, 7
        %v6054 = vsub.s32 7, %v6053
        %v6055 = vrot.slane %v5981, %v6054
        %v6056 = vlaneseq
        %v6057 = vshrl.u32 %v6056, 7
        %v6058 = vsub.s32 0, %v6057
        %v6059 = vrot.slane %v5984, %v6058
        %v6060 = vlaneseq
        %v6061 = vshrl.u32 %v6060, 7
        %v6062 = vsub.s32 1, %v6061
        %v6063 = vrot.slane %v5984, %v6062
        %v6064 = vlaneseq
        %v6065 = vshrl.u32 %v6064, 7
        %v6066 = vsub.s32 2, %v6065
        %v6067 = vrot.slane %v5984, %v6066
        %v6068 = vlaneseq
        %v6069 = vshrl.u32 %v6068, 7
        %v6070 = vsub.s32 3, %v6069
        %v6071 = vrot.slane %v5984, %v6070
        %v6072 = vlaneseq
        %v6073 = vshrl.u32 %v6072, 7
        %v6074 = vsub.s32 4, %v6073
        %v6075 = vrot.slane %v5984, %v6074
        %v6076 = vlaneseq
        %v6077 = vshrl.u32 %v6076, 7
        %v6078 = vsub.s32 5, %v6077
        %v6079 = vrot.slane %v5984, %v6078
        %v6080 = vlaneseq
        %v6081 = vshrl.u32 %v6080, 7
        %v6082 = vsub.s32 6, %v6081
        %v6083 = vrot.slane %v5984, %v6082
        %v6084 = vlaneseq
        %v6085 = vshrl.u32 %v6084, 7
        %v6086 = vsub.s32 7, %v6085
        %v6087 = vrot.slane %v5984, %v6086
        %v6088 = vlaneseq
        %v6089 = vshrl.u32 %v6088, 7
        %v6090 = vsub.s32 0, %v6089
        %v6091 = vrot.slane %v5987, %v6090
        %v6092 = vlaneseq
        %v6093 = vshrl.u32 %v6092, 7
        %v6094 = vsub.s32 1, %v6093
        %v6095 = vrot.slane %v5987, %v6094
        %v6096 = vlaneseq
        %v6097 = vshrl.u32 %v6096, 7
        %v6098 = vsub.s32 2, %v6097
        %v6099 = vrot.slane %v5987, %v6098
        %v6100 = vlaneseq
        %v6101 = vshrl.u32 %v6100, 7
        %v6102 = vsub.s32 3, %v6101
        %v6103 = vrot.slane %v5987, %v6102
        %v6104 = vlaneseq
        %v6105 = vshrl.u32 %v6104, 7
        %v6106 = vsub.s32 4, %v6105
        %v6107 = vrot.slane %v5987, %v6106
        %v6108 = vlaneseq
        %v6109 = vshrl.u32 %v6108, 7
        %v6110 = vsub.s32 5, %v6109
        %v6111 = vrot.slane %v5987, %v6110
        %v6112 = vlaneseq
        %v6113 = vshrl.u32 %v6112, 7
        %v6114 = vsub.s32 6, %v6113
        %v6115 = vrot.slane %v5987, %v6114
        %v6116 = vlaneseq
        %v6117 = vshrl.u32 %v6116, 7
        %v6118 = vsub.s32 7, %v6117
        %v6119 = vrot.slane %v5987, %v6118
        %v6152 = vrcp.pop %v5995
        %v6153 = vmul.f32 %v5625, %v6152
        %v6154 = vrcp.pop %v5999
        %v6155 = vmul.f32 %v5627, %v6154
        %v6156 = vrcp.pop %v6003
        %v6157 = vmul.f32 %v5629, %v6156
        %v6158 = vrcp.pop %v6007
        %v6159 = vmul.f32 %v5631, %v6158
        %v6160 = vrcp.pop %v6011
        %v6161 = vmul.f32 %v5633, %v6160
        %v6162 = vrcp.pop %v6015
        %v6163 = vmul.f32 %v5635, %v6162
        %v6164 = vrcp.pop %v6019
        %v6165 = vmul.f32 %v5637, %v6164
        %v6166 = vrcp.pop %v6023
        %v6167 = vmul.f32 %v5639, %v6166
        %v6168 = vrcp.pop %v6027
        %v6169 = vmul.f32 %v5641, %v6168
        %v6170 = vrcp.pop %v6031
        %v6171 = vmul.f32 %v5643, %v6170
        %v6172 = vrcp.pop %v6035
        %v6173 = vmul.f32 %v5645, %v6172
        %v6174 = vrcp.pop %v6039
        %v6175 = vmul.f32 %v5647, %v6174
        %v6176 = vrcp.pop %v6043
        %v6177 = vmul.f32 %v5649, %v6176
        %v6178 = vrcp.pop %v6047
        %v6179 = vmul.f32 %v5651, %v6178
        %v6180 = vrcp.pop %v6051
        %v6181 = vmul.f32 %v5653, %v6180
        %v6182 = vrcp.pop %v6055
        %v6183 = vmul.f32 %v5655, %v6182
        %v6184 = vrcp.pop %v6059
        %v6185 = vmul.f32 %v5657, %v6184
        %v6186 = vrcp.pop %v6063
        %v6187 = vmul.f32 %v5659, %v6186
        %v6188 = vrcp.pop %v6067
        %v6189 = vmul.f32 %v5661, %v6188
        %v6190 = vrcp.pop %v6071
        %v6191 = vmul.f32 %v5663, %v6190
        %v6192 = vrcp.pop %v6075
        %v6193 = vmul.f32 %v5665, %v6192
        %v6194 = vrcp.pop %v6079
        %v6195 = vmul.f32 %v5667, %v6194
        %v6196 = vrcp.pop %v6083
        %v6197 = vmul.f32 %v5669, %v6196
        %v6198 = vrcp.pop %v6087
        %v6199 = vmul.f32 %v5671, %v6198
        %v6200 = vrcp.pop %v6091
        %v6201 = vmul.f32 %v5673, %v6200
        %v6202 = vrcp.pop %v6095
        %v6203 = vmul.f32 %v5675, %v6202
        %v6204 = vrcp.pop %v6099
        %v6205 = vmul.f32 %v5677, %v6204
        %v6206 = vrcp.pop %v6103
        %v6207 = vmul.f32 %v5679, %v6206
        %v6208 = vrcp.pop %v6107
        %v6209 = vmul.f32 %v5681, %v6208
        %v6210 = vrcp.pop %v6111
        %v6211 = vmul.f32 %v5683, %v6210
        %v6212 = vrcp.pop %v6115
        %v6213 = vmul.f32 %v5685, %v6212
        %v6214 = vrcp.pop %v6119
        %v6215 = vmul.f32 %v5687, %v6214
        %6217 = vset.pattern.permute.xlu0 0
        %6218 = vperm.xlu0 %6217, %v6153
        %v6219 = vpop.permute.xlu0 %6218
        %6222 = vset.pattern.permute.xlu0 0
        %6223 = vperm.xlu0 %6222, %v6155
        %v6224 = vpop.permute.xlu0 %6223
        %6227 = vset.pattern.permute.xlu0 0
        %6228 = vperm.xlu0 %6227, %v6157
        %v6229 = vpop.permute.xlu0 %6228
        %6232 = vset.pattern.permute.xlu0 0
        %6233 = vperm.xlu0 %6232, %v6159
        %v6234 = vpop.permute.xlu0 %6233
        %6237 = vset.pattern.permute.xlu0 0
        %6238 = vperm.xlu0 %6237, %v6161
        %v6239 = vpop.permute.xlu0 %6238
        %6242 = vset.pattern.permute.xlu0 0
        %6243 = vperm.xlu0 %6242, %v6163
        %v6244 = vpop.permute.xlu0 %6243
        %6247 = vset.pattern.permute.xlu0 0
        %6248 = vperm.xlu0 %6247, %v6165
        %v6249 = vpop.permute.xlu0 %6248
        %6252 = vset.pattern.permute.xlu0 0
        %6253 = vperm.xlu0 %6252, %v6167
        %v6254 = vpop.permute.xlu0 %6253
        %6257 = vset.pattern.permute.xlu0 0
        %6258 = vperm.xlu0 %6257, %v6169
        %v6259 = vpop.permute.xlu0 %6258
        %6262 = vset.pattern.permute.xlu0 0
        %6263 = vperm.xlu0 %6262, %v6171
        %v6264 = vpop.permute.xlu0 %6263
        %6267 = vset.pattern.permute.xlu0 0
        %6268 = vperm.xlu0 %6267, %v6173
        %v6269 = vpop.permute.xlu0 %6268
        %6272 = vset.pattern.permute.xlu0 0
        %6273 = vperm.xlu0 %6272, %v6175
        %v6274 = vpop.permute.xlu0 %6273
        %6277 = vset.pattern.permute.xlu0 0
        %6278 = vperm.xlu0 %6277, %v6177
        %v6279 = vpop.permute.xlu0 %6278
        %6282 = vset.pattern.permute.xlu0 0
        %6283 = vperm.xlu0 %6282, %v6179
        %v6284 = vpop.permute.xlu0 %6283
        %6287 = vset.pattern.permute.xlu0 0
        %6288 = vperm.xlu0 %6287, %v6181
        %v6289 = vpop.permute.xlu0 %6288
        %6292 = vset.pattern.permute.xlu0 0
        %6293 = vperm.xlu0 %6292, %v6183
        %v6294 = vpop.permute.xlu0 %6293
        %6297 = vset.pattern.permute.xlu0 0
        %6298 = vperm.xlu0 %6297, %v6185
        %v6299 = vpop.permute.xlu0 %6298
        %6302 = vset.pattern.permute.xlu0 0
        %6303 = vperm.xlu0 %6302, %v6187
        %v6304 = vpop.permute.xlu0 %6303
        %6307 = vset.pattern.permute.xlu0 0
        %6308 = vperm.xlu0 %6307, %v6189
        %v6309 = vpop.permute.xlu0 %6308
        %6312 = vset.pattern.permute.xlu0 0
        %6313 = vperm.xlu0 %6312, %v6191
        %v6314 = vpop.permute.xlu0 %6313
        %6317 = vset.pattern.permute.xlu0 0
        %6318 = vperm.xlu0 %6317, %v6193
        %v6319 = vpop.permute.xlu0 %6318
        %6322 = vset.pattern.permute.xlu0 0
        %6323 = vperm.xlu0 %6322, %v6195
        %v6324 = vpop.permute.xlu0 %6323
        %6327 = vset.pattern.permute.xlu0 0
        %6328 = vperm.xlu0 %6327, %v6197
        %v6329 = vpop.permute.xlu0 %6328
        %6332 = vset.pattern.permute.xlu0 0
        %6333 = vperm.xlu0 %6332, %v6199
        %v6334 = vpop.permute.xlu0 %6333
        %6337 = vset.pattern.permute.xlu0 0
        %6338 = vperm.xlu0 %6337, %v6201
        %v6339 = vpop.permute.xlu0 %6338
        %6342 = vset.pattern.permute.xlu0 0
        %6343 = vperm.xlu0 %6342, %v6203
        %v6344 = vpop.permute.xlu0 %6343
        %6347 = vset.pattern.permute.xlu0 0
        %6348 = vperm.xlu0 %6347, %v6205
        %v6349 = vpop.permute.xlu0 %6348
        %6352 = vset.pattern.permute.xlu0 0
        %6353 = vperm.xlu0 %6352, %v6207
        %v6354 = vpop.permute.xlu0 %6353
        %6357 = vset.pattern.permute.xlu0 0
        %6358 = vperm.xlu0 %6357, %v6209
        %v6359 = vpop.permute.xlu0 %6358
        %6362 = vset.pattern.permute.xlu0 0
        %6363 = vperm.xlu0 %6362, %v6211
        %v6364 = vpop.permute.xlu0 %6363
        %6367 = vset.pattern.permute.xlu0 0
        %6368 = vperm.xlu0 %6367, %v6213
        %v6369 = vpop.permute.xlu0 %6368
        %6372 = vset.pattern.permute.xlu0 0
        %6373 = vperm.xlu0 %6372, %v6215
        %v6374 = vpop.permute.xlu0 %6373
        %v6376 = vmul.f32 %v6219, %v1188
        %v6377 = vmul.f32 %v6224, %v1194
        %v6378 = vmul.f32 %v6229, %v1200
        %v6379 = vmul.f32 %v6234, %v1206
        %v6380 = vmul.f32 %v6239, %v1212
        %v6381 = vmul.f32 %v6244, %v1218
        %v6382 = vmul.f32 %v6249, %v1224
        %v6383 = vmul.f32 %v6254, %v1230
        %v6384 = vmul.f32 %v6259, %v1236
        %v6385 = vmul.f32 %v6264, %v1242
        %v6386 = vmul.f32 %v6269, %v1248
        %v6387 = vmul.f32 %v6274, %v1254
        %v6388 = vmul.f32 %v6279, %v1260
        %v6389 = vmul.f32 %v6284, %v1266
        %v6390 = vmul.f32 %v6289, %v1272
        %v6391 = vmul.f32 %v6294, %v1278
        %v6392 = vmul.f32 %v6299, %v1284
        %v6393 = vmul.f32 %v6304, %v1290
        %v6394 = vmul.f32 %v6309, %v1296
        %v6395 = vmul.f32 %v6314, %v1302
        %v6396 = vmul.f32 %v6319, %v1308
        %v6397 = vmul.f32 %v6324, %v1314
        %v6398 = vmul.f32 %v6329, %v1320
        %v6399 = vmul.f32 %v6334, %v1326
        %v6400 = vmul.f32 %v6339, %v1332
        %v6401 = vmul.f32 %v6344, %v1338
        %v6402 = vmul.f32 %v6349, %v1344
        %v6403 = vmul.f32 %v6354, %v1350
        %v6404 = vmul.f32 %v6359, %v1356
        %v6405 = vmul.f32 %v6364, %v1362
        %v6406 = vmul.f32 %v6369, %v1368
        %v6407 = vmul.f32 %v6374, %v1374
        %vm6408 = vcmask 785920
        %v6409 = vsel %vm6408, %v6376, 0.0
        %v6410 = vrot.slane %v6409, 4
        %v6411 = vadd.f32 %v6409, %v6410
        %v6412 = vrot.slane %v6411, 2
        %v6413 = vadd.f32 %v6411, %v6412
        %v6414 = vrot.slane %v6413, 1
        %v6415 = vadd.f32 %v6413, %v6414
        %v6416 = vsel %vm6408, %v6377, 0.0
        %v6417 = vrot.slane %v6416, 4
        %v6418 = vadd.f32 %v6416, %v6417
        %v6419 = vrot.slane %v6418, 2
        %v6420 = vadd.f32 %v6418, %v6419
        %v6421 = vrot.slane %v6420, 1
        %v6422 = vadd.f32 %v6420, %v6421
        %v6423 = vsel %vm6408, %v6378, 0.0
        %v6424 = vrot.slane %v6423, 4
        %v6425 = vadd.f32 %v6423, %v6424
        %v6426 = vrot.slane %v6425, 2
        %v6427 = vadd.f32 %v6425, %v6426
        %v6428 = vrot.slane %v6427, 1
        %v6429 = vadd.f32 %v6427, %v6428
        %v6430 = vsel %vm6408, %v6379, 0.0
        %v6431 = vrot.slane %v6430, 4
        %v6432 = vadd.f32 %v6430, %v6431
        %v6433 = vrot.slane %v6432, 2
        %v6434 = vadd.f32 %v6432, %v6433
        %v6435 = vrot.slane %v6434, 1
        %v6436 = vadd.f32 %v6434, %v6435
        %v6437 = vsel %vm6408, %v6380, 0.0
        %v6438 = vrot.slane %v6437, 4
        %v6439 = vadd.f32 %v6437, %v6438
        %v6440 = vrot.slane %v6439, 2
        %v6441 = vadd.f32 %v6439, %v6440
        %v6442 = vrot.slane %v6441, 1
        %v6443 = vadd.f32 %v6441, %v6442
        %v6444 = vsel %vm6408, %v6381, 0.0
        %v6445 = vrot.slane %v6444, 4
        %v6446 = vadd.f32 %v6444, %v6445
        %v6447 = vrot.slane %v6446, 2
        %v6448 = vadd.f32 %v6446, %v6447
        %v6449 = vrot.slane %v6448, 1
        %v6450 = vadd.f32 %v6448, %v6449
        %v6451 = vsel %vm6408, %v6382, 0.0
        %v6452 = vrot.slane %v6451, 4
        %v6453 = vadd.f32 %v6451, %v6452
        %v6454 = vrot.slane %v6453, 2
        %v6455 = vadd.f32 %v6453, %v6454
        %v6456 = vrot.slane %v6455, 1
        %v6457 = vadd.f32 %v6455, %v6456
        %v6458 = vsel %vm6408, %v6383, 0.0
        %v6459 = vrot.slane %v6458, 4
        %v6460 = vadd.f32 %v6458, %v6459
        %v6461 = vrot.slane %v6460, 2
        %v6462 = vadd.f32 %v6460, %v6461
        %v6463 = vrot.slane %v6462, 1
        %v6464 = vadd.f32 %v6462, %v6463
        %v6465 = vsel %vm6408, %v6384, 0.0
        %v6466 = vrot.slane %v6465, 4
        %v6467 = vadd.f32 %v6465, %v6466
        %v6468 = vrot.slane %v6467, 2
        %v6469 = vadd.f32 %v6467, %v6468
        %v6470 = vrot.slane %v6469, 1
        %v6471 = vadd.f32 %v6469, %v6470
        %v6472 = vsel %vm6408, %v6385, 0.0
        %v6473 = vrot.slane %v6472, 4
        %v6474 = vadd.f32 %v6472, %v6473
        %v6475 = vrot.slane %v6474, 2
        %v6476 = vadd.f32 %v6474, %v6475
        %v6477 = vrot.slane %v6476, 1
        %v6478 = vadd.f32 %v6476, %v6477
        %v6479 = vsel %vm6408, %v6386, 0.0
        %v6480 = vrot.slane %v6479, 4
        %v6481 = vadd.f32 %v6479, %v6480
        %v6482 = vrot.slane %v6481, 2
        %v6483 = vadd.f32 %v6481, %v6482
        %v6484 = vrot.slane %v6483, 1
        %v6485 = vadd.f32 %v6483, %v6484
        %v6486 = vsel %vm6408, %v6387, 0.0
        %v6487 = vrot.slane %v6486, 4
        %v6488 = vadd.f32 %v6486, %v6487
        %v6489 = vrot.slane %v6488, 2
        %v6490 = vadd.f32 %v6488, %v6489
        %v6491 = vrot.slane %v6490, 1
        %v6492 = vadd.f32 %v6490, %v6491
        %v6493 = vsel %vm6408, %v6388, 0.0
        %v6494 = vrot.slane %v6493, 4
        %v6495 = vadd.f32 %v6493, %v6494
        %v6496 = vrot.slane %v6495, 2
        %v6497 = vadd.f32 %v6495, %v6496
        %v6498 = vrot.slane %v6497, 1
        %v6499 = vadd.f32 %v6497, %v6498
        %v6500 = vsel %vm6408, %v6389, 0.0
        %v6501 = vrot.slane %v6500, 4
        %v6502 = vadd.f32 %v6500, %v6501
        %v6503 = vrot.slane %v6502, 2
        %v6504 = vadd.f32 %v6502, %v6503
        %v6505 = vrot.slane %v6504, 1
        %v6506 = vadd.f32 %v6504, %v6505
        %v6507 = vsel %vm6408, %v6390, 0.0
        %v6508 = vrot.slane %v6507, 4
        %v6509 = vadd.f32 %v6507, %v6508
        %v6510 = vrot.slane %v6509, 2
        %v6511 = vadd.f32 %v6509, %v6510
        %v6512 = vrot.slane %v6511, 1
        %v6513 = vadd.f32 %v6511, %v6512
        %v6514 = vsel %vm6408, %v6391, 0.0
        %v6515 = vrot.slane %v6514, 4
        %v6516 = vadd.f32 %v6514, %v6515
        %v6517 = vrot.slane %v6516, 2
        %v6518 = vadd.f32 %v6516, %v6517
        %v6519 = vrot.slane %v6518, 1
        %v6520 = vadd.f32 %v6518, %v6519
        %v6521 = vsel %vm6408, %v6392, 0.0
        %v6522 = vrot.slane %v6521, 4
        %v6523 = vadd.f32 %v6521, %v6522
        %v6524 = vrot.slane %v6523, 2
        %v6525 = vadd.f32 %v6523, %v6524
        %v6526 = vrot.slane %v6525, 1
        %v6527 = vadd.f32 %v6525, %v6526
        %v6528 = vsel %vm6408, %v6393, 0.0
        %v6529 = vrot.slane %v6528, 4
        %v6530 = vadd.f32 %v6528, %v6529
        %v6531 = vrot.slane %v6530, 2
        %v6532 = vadd.f32 %v6530, %v6531
        %v6533 = vrot.slane %v6532, 1
        %v6534 = vadd.f32 %v6532, %v6533
        %v6535 = vsel %vm6408, %v6394, 0.0
        %v6536 = vrot.slane %v6535, 4
        %v6537 = vadd.f32 %v6535, %v6536
        %v6538 = vrot.slane %v6537, 2
        %v6539 = vadd.f32 %v6537, %v6538
        %v6540 = vrot.slane %v6539, 1
        %v6541 = vadd.f32 %v6539, %v6540
        %v6542 = vsel %vm6408, %v6395, 0.0
        %v6543 = vrot.slane %v6542, 4
        %v6544 = vadd.f32 %v6542, %v6543
        %v6545 = vrot.slane %v6544, 2
        %v6546 = vadd.f32 %v6544, %v6545
        %v6547 = vrot.slane %v6546, 1
        %v6548 = vadd.f32 %v6546, %v6547
        %v6549 = vsel %vm6408, %v6396, 0.0
        %v6550 = vrot.slane %v6549, 4
        %v6551 = vadd.f32 %v6549, %v6550
        %v6552 = vrot.slane %v6551, 2
        %v6553 = vadd.f32 %v6551, %v6552
        %v6554 = vrot.slane %v6553, 1
        %v6555 = vadd.f32 %v6553, %v6554
        %v6556 = vsel %vm6408, %v6397, 0.0
        %v6557 = vrot.slane %v6556, 4
        %v6558 = vadd.f32 %v6556, %v6557
        %v6559 = vrot.slane %v6558, 2
        %v6560 = vadd.f32 %v6558, %v6559
        %v6561 = vrot.slane %v6560, 1
        %v6562 = vadd.f32 %v6560, %v6561
        %v6563 = vsel %vm6408, %v6398, 0.0
        %v6564 = vrot.slane %v6563, 4
        %v6565 = vadd.f32 %v6563, %v6564
        %v6566 = vrot.slane %v6565, 2
        %v6567 = vadd.f32 %v6565, %v6566
        %v6568 = vrot.slane %v6567, 1
        %v6569 = vadd.f32 %v6567, %v6568
        %v6570 = vsel %vm6408, %v6399, 0.0
        %v6571 = vrot.slane %v6570, 4
        %v6572 = vadd.f32 %v6570, %v6571
        %v6573 = vrot.slane %v6572, 2
        %v6574 = vadd.f32 %v6572, %v6573
        %v6575 = vrot.slane %v6574, 1
        %v6576 = vadd.f32 %v6574, %v6575
        %v6577 = vsel %vm6408, %v6400, 0.0
        %v6578 = vrot.slane %v6577, 4
        %v6579 = vadd.f32 %v6577, %v6578
        %v6580 = vrot.slane %v6579, 2
        %v6581 = vadd.f32 %v6579, %v6580
        %v6582 = vrot.slane %v6581, 1
        %v6583 = vadd.f32 %v6581, %v6582
        %v6584 = vsel %vm6408, %v6401, 0.0
        %v6585 = vrot.slane %v6584, 4
        %v6586 = vadd.f32 %v6584, %v6585
        %v6587 = vrot.slane %v6586, 2
        %v6588 = vadd.f32 %v6586, %v6587
        %v6589 = vrot.slane %v6588, 1
        %v6590 = vadd.f32 %v6588, %v6589
        %v6591 = vsel %vm6408, %v6402, 0.0
        %v6592 = vrot.slane %v6591, 4
        %v6593 = vadd.f32 %v6591, %v6592
        %v6594 = vrot.slane %v6593, 2
        %v6595 = vadd.f32 %v6593, %v6594
        %v6596 = vrot.slane %v6595, 1
        %v6597 = vadd.f32 %v6595, %v6596
        %v6598 = vsel %vm6408, %v6403, 0.0
        %v6599 = vrot.slane %v6598, 4
        %v6600 = vadd.f32 %v6598, %v6599
        %v6601 = vrot.slane %v6600, 2
        %v6602 = vadd.f32 %v6600, %v6601
        %v6603 = vrot.slane %v6602, 1
        %v6604 = vadd.f32 %v6602, %v6603
        %v6605 = vsel %vm6408, %v6404, 0.0
        %v6606 = vrot.slane %v6605, 4
        %v6607 = vadd.f32 %v6605, %v6606
        %v6608 = vrot.slane %v6607, 2
        %v6609 = vadd.f32 %v6607, %v6608
        %v6610 = vrot.slane %v6609, 1
        %v6611 = vadd.f32 %v6609, %v6610
        %v6612 = vsel %vm6408, %v6405, 0.0
        %v6613 = vrot.slane %v6612, 4
        %v6614 = vadd.f32 %v6612, %v6613
        %v6615 = vrot.slane %v6614, 2
        %v6616 = vadd.f32 %v6614, %v6615
        %v6617 = vrot.slane %v6616, 1
        %v6618 = vadd.f32 %v6616, %v6617
        %v6619 = vsel %vm6408, %v6406, 0.0
        %v6620 = vrot.slane %v6619, 4
        %v6621 = vadd.f32 %v6619, %v6620
        %v6622 = vrot.slane %v6621, 2
        %v6623 = vadd.f32 %v6621, %v6622
        %v6624 = vrot.slane %v6623, 1
        %v6625 = vadd.f32 %v6623, %v6624
        %v6626 = vsel %vm6408, %v6407, 0.0
        %v6627 = vrot.slane %v6626, 4
        %v6628 = vadd.f32 %v6626, %v6627
        %v6629 = vrot.slane %v6628, 2
        %v6630 = vadd.f32 %v6628, %v6629
        %v6631 = vrot.slane %v6630, 1
        %v6632 = vadd.f32 %v6630, %v6631
        %6633 = vrot.lane.b32.xlu0 %v1852, 32
        %v6634 = vpop.permute.xlu0 %6633
        %6635 = vrot.lane.b32.xlu0 %v1853, 32
        %v6636 = vpop.permute.xlu0 %6635
        %6637 = vrot.lane.b32.xlu0 %v1854, 32
        %v6638 = vpop.permute.xlu0 %6637
        %6639 = vrot.lane.b32.xlu0 %v1855, 32
        %v6640 = vpop.permute.xlu0 %6639
        %6641 = vrot.lane.b32.xlu0 %v1856, 32
        %v6642 = vpop.permute.xlu0 %6641
        %6643 = vrot.lane.b32.xlu0 %v1857, 32
        %v6644 = vpop.permute.xlu0 %6643
        %6645 = vrot.lane.b32.xlu0 %v1858, 32
        %v6646 = vpop.permute.xlu0 %6645
        %6647 = vrot.lane.b32.xlu0 %v1859, 32
        %v6648 = vpop.permute.xlu0 %6647
        %6649 = vrot.lane.b32.xlu0 %v1860, 32
        %v6650 = vpop.permute.xlu0 %6649
        %6651 = vrot.lane.b32.xlu0 %v1861, 32
        %v6652 = vpop.permute.xlu0 %6651
        %6653 = vrot.lane.b32.xlu0 %v1862, 32
        %v6654 = vpop.permute.xlu0 %6653
        %6655 = vrot.lane.b32.xlu0 %v1863, 32
        %v6656 = vpop.permute.xlu0 %6655
        %6657 = vrot.lane.b32.xlu0 %v1864, 32
        %v6658 = vpop.permute.xlu0 %6657
        %6659 = vrot.lane.b32.xlu0 %v1865, 32
        %v6660 = vpop.permute.xlu0 %6659
        %6661 = vrot.lane.b32.xlu0 %v1866, 32
        %v6662 = vpop.permute.xlu0 %6661
        %6663 = vrot.lane.b32.xlu0 %v1867, 32
        %v6664 = vpop.permute.xlu0 %6663
        %6665 = vrot.lane.b32.xlu0 %v1868, 32
        %v6666 = vpop.permute.xlu0 %6665
        %6667 = vrot.lane.b32.xlu0 %v1869, 32
        %v6668 = vpop.permute.xlu0 %6667
        %6669 = vrot.lane.b32.xlu0 %v1870, 32
        %v6670 = vpop.permute.xlu0 %6669
        %6671 = vrot.lane.b32.xlu0 %v1871, 32
        %v6672 = vpop.permute.xlu0 %6671
        %6673 = vrot.lane.b32.xlu0 %v1872, 32
        %v6674 = vpop.permute.xlu0 %6673
        %6675 = vrot.lane.b32.xlu0 %v1873, 32
        %v6676 = vpop.permute.xlu0 %6675
        %6677 = vrot.lane.b32.xlu0 %v1874, 32
        %v6678 = vpop.permute.xlu0 %6677
        %6679 = vrot.lane.b32.xlu0 %v1875, 32
        %v6680 = vpop.permute.xlu0 %6679
        %6681 = vrot.lane.b32.xlu0 %v1876, 32
        %v6682 = vpop.permute.xlu0 %6681
        %6683 = vrot.lane.b32.xlu0 %v1877, 32
        %v6684 = vpop.permute.xlu0 %6683
        %6685 = vrot.lane.b32.xlu0 %v1878, 32
        %v6686 = vpop.permute.xlu0 %6685
        %6687 = vrot.lane.b32.xlu0 %v1879, 32
        %v6688 = vpop.permute.xlu0 %6687
        %6689 = vrot.lane.b32.xlu0 %v1880, 32
        %v6690 = vpop.permute.xlu0 %6689
        %6691 = vrot.lane.b32.xlu0 %v1881, 32
        %v6692 = vpop.permute.xlu0 %6691
        %6693 = vrot.lane.b32.xlu0 %v1882, 32
        %v6694 = vpop.permute.xlu0 %6693
        %6695 = vrot.lane.b32.xlu0 %v1883, 32
        %v6696 = vpop.permute.xlu0 %6695
        %v6729 = vsel %vm1884, %v6634, 0.0
        %6730 = vadd.xlane.f32.xlu0 %v6729
        %v6731 = vpop.xlane.xlu0 %6730
        %v6732 = vsel %vm1884, %v6636, 0.0
        %6733 = vadd.xlane.f32.xlu0 %v6732
        %v6734 = vpop.xlane.xlu0 %6733
        %v6735 = vsel %vm1884, %v6638, 0.0
        %6736 = vadd.xlane.f32.xlu0 %v6735
        %v6737 = vpop.xlane.xlu0 %6736
        %v6738 = vsel %vm1884, %v6640, 0.0
        %6739 = vadd.xlane.f32.xlu0 %v6738
        %v6740 = vpop.xlane.xlu0 %6739
        %v6741 = vsel %vm1884, %v6642, 0.0
        %6742 = vadd.xlane.f32.xlu0 %v6741
        %v6743 = vpop.xlane.xlu0 %6742
        %v6744 = vsel %vm1884, %v6644, 0.0
        %6745 = vadd.xlane.f32.xlu0 %v6744
        %v6746 = vpop.xlane.xlu0 %6745
        %v6747 = vsel %vm1884, %v6646, 0.0
        %6748 = vadd.xlane.f32.xlu0 %v6747
        %v6749 = vpop.xlane.xlu0 %6748
        %v6750 = vsel %vm1884, %v6648, 0.0
        %6751 = vadd.xlane.f32.xlu0 %v6750
        %v6752 = vpop.xlane.xlu0 %6751
        %v6753 = vsel %vm1884, %v6650, 0.0
        %6754 = vadd.xlane.f32.xlu0 %v6753
        %v6755 = vpop.xlane.xlu0 %6754
        %v6756 = vsel %vm1884, %v6652, 0.0
        %6757 = vadd.xlane.f32.xlu0 %v6756
        %v6758 = vpop.xlane.xlu0 %6757
        %v6759 = vsel %vm1884, %v6654, 0.0
        %6760 = vadd.xlane.f32.xlu0 %v6759
        %v6761 = vpop.xlane.xlu0 %6760
        %v6762 = vsel %vm1884, %v6656, 0.0
        %6763 = vadd.xlane.f32.xlu0 %v6762
        %v6764 = vpop.xlane.xlu0 %6763
        %v6765 = vsel %vm1884, %v6658, 0.0
        %6766 = vadd.xlane.f32.xlu0 %v6765
        %v6767 = vpop.xlane.xlu0 %6766
        %v6768 = vsel %vm1884, %v6660, 0.0
        %6769 = vadd.xlane.f32.xlu0 %v6768
        %v6770 = vpop.xlane.xlu0 %6769
        %v6771 = vsel %vm1884, %v6662, 0.0
        %6772 = vadd.xlane.f32.xlu0 %v6771
        %v6773 = vpop.xlane.xlu0 %6772
        %v6774 = vsel %vm1884, %v6664, 0.0
        %6775 = vadd.xlane.f32.xlu0 %v6774
        %v6776 = vpop.xlane.xlu0 %6775
        %v6777 = vsel %vm1884, %v6666, 0.0
        %6778 = vadd.xlane.f32.xlu0 %v6777
        %v6779 = vpop.xlane.xlu0 %6778
        %v6780 = vsel %vm1884, %v6668, 0.0
        %6781 = vadd.xlane.f32.xlu0 %v6780
        %v6782 = vpop.xlane.xlu0 %6781
        %v6783 = vsel %vm1884, %v6670, 0.0
        %6784 = vadd.xlane.f32.xlu0 %v6783
        %v6785 = vpop.xlane.xlu0 %6784
        %v6786 = vsel %vm1884, %v6672, 0.0
        %6787 = vadd.xlane.f32.xlu0 %v6786
        %v6788 = vpop.xlane.xlu0 %6787
        %v6789 = vsel %vm1884, %v6674, 0.0
        %6790 = vadd.xlane.f32.xlu0 %v6789
        %v6791 = vpop.xlane.xlu0 %6790
        %v6792 = vsel %vm1884, %v6676, 0.0
        %6793 = vadd.xlane.f32.xlu0 %v6792
        %v6794 = vpop.xlane.xlu0 %6793
        %v6795 = vsel %vm1884, %v6678, 0.0
        %6796 = vadd.xlane.f32.xlu0 %v6795
        %v6797 = vpop.xlane.xlu0 %6796
        %v6798 = vsel %vm1884, %v6680, 0.0
        %6799 = vadd.xlane.f32.xlu0 %v6798
        %v6800 = vpop.xlane.xlu0 %6799
        %v6801 = vsel %vm1884, %v6682, 0.0
        %6802 = vadd.xlane.f32.xlu0 %v6801
        %v6803 = vpop.xlane.xlu0 %6802
        %v6804 = vsel %vm1884, %v6684, 0.0
        %6805 = vadd.xlane.f32.xlu0 %v6804
        %v6806 = vpop.xlane.xlu0 %6805
        %v6807 = vsel %vm1884, %v6686, 0.0
        %6808 = vadd.xlane.f32.xlu0 %v6807
        %v6809 = vpop.xlane.xlu0 %6808
        %v6810 = vsel %vm1884, %v6688, 0.0
        %6811 = vadd.xlane.f32.xlu0 %v6810
        %v6812 = vpop.xlane.xlu0 %6811
        %v6813 = vsel %vm1884, %v6690, 0.0
        %6814 = vadd.xlane.f32.xlu0 %v6813
        %v6815 = vpop.xlane.xlu0 %6814
        %v6816 = vsel %vm1884, %v6692, 0.0
        %6817 = vadd.xlane.f32.xlu0 %v6816
        %v6818 = vpop.xlane.xlu0 %6817
        %v6819 = vsel %vm1884, %v6694, 0.0
        %6820 = vadd.xlane.f32.xlu0 %v6819
        %v6821 = vpop.xlane.xlu0 %6820
        %v6822 = vsel %vm1884, %v6696, 0.0
        %6823 = vadd.xlane.f32.xlu0 %v6822
        %v6824 = vpop.xlane.xlu0 %6823
        %v6857 = vlaneseq
        %v6858 = vshrl.u32 %v6857, 7
        %v6859 = vsub.s32 %v2014, %v6858
        %v6860 = vrot.slane %v6731, %v6859
        %v6861 = vlaneseq
        %v6862 = vshrl.u32 %v6861, 7
        %v6863 = vsub.s32 %v2014, %v6862
        %v6864 = vrot.slane %v6734, %v6863
        %v6865 = vlaneseq
        %v6866 = vshrl.u32 %v6865, 7
        %v6867 = vsub.s32 %v2014, %v6866
        %v6868 = vrot.slane %v6737, %v6867
        %v6869 = vlaneseq
        %v6870 = vshrl.u32 %v6869, 7
        %v6871 = vsub.s32 %v2014, %v6870
        %v6872 = vrot.slane %v6740, %v6871
        %v6873 = vlaneseq
        %v6874 = vshrl.u32 %v6873, 7
        %v6875 = vsub.s32 %v2014, %v6874
        %v6876 = vrot.slane %v6743, %v6875
        %v6877 = vlaneseq
        %v6878 = vshrl.u32 %v6877, 7
        %v6879 = vsub.s32 %v2014, %v6878
        %v6880 = vrot.slane %v6746, %v6879
        %v6881 = vlaneseq
        %v6882 = vshrl.u32 %v6881, 7
        %v6883 = vsub.s32 %v2014, %v6882
        %v6884 = vrot.slane %v6749, %v6883
        %v6885 = vlaneseq
        %v6886 = vshrl.u32 %v6885, 7
        %v6887 = vsub.s32 %v2014, %v6886
        %v6888 = vrot.slane %v6752, %v6887
        %v6889 = vlaneseq
        %v6890 = vshrl.u32 %v6889, 7
        %v6891 = vsub.s32 %v2014, %v6890
        %v6892 = vrot.slane %v6755, %v6891
        %v6893 = vlaneseq
        %v6894 = vshrl.u32 %v6893, 7
        %v6895 = vsub.s32 %v2014, %v6894
        %v6896 = vrot.slane %v6758, %v6895
        %v6897 = vlaneseq
        %v6898 = vshrl.u32 %v6897, 7
        %v6899 = vsub.s32 %v2014, %v6898
        %v6900 = vrot.slane %v6761, %v6899
        %v6901 = vlaneseq
        %v6902 = vshrl.u32 %v6901, 7
        %v6903 = vsub.s32 %v2014, %v6902
        %v6904 = vrot.slane %v6764, %v6903
        %v6905 = vlaneseq
        %v6906 = vshrl.u32 %v6905, 7
        %v6907 = vsub.s32 %v2014, %v6906
        %v6908 = vrot.slane %v6767, %v6907
        %v6909 = vlaneseq
        %v6910 = vshrl.u32 %v6909, 7
        %v6911 = vsub.s32 %v2014, %v6910
        %v6912 = vrot.slane %v6770, %v6911
        %v6913 = vlaneseq
        %v6914 = vshrl.u32 %v6913, 7
        %v6915 = vsub.s32 %v2014, %v6914
        %v6916 = vrot.slane %v6773, %v6915
        %v6917 = vlaneseq
        %v6918 = vshrl.u32 %v6917, 7
        %v6919 = vsub.s32 %v2014, %v6918
        %v6920 = vrot.slane %v6776, %v6919
        %v6921 = vlaneseq
        %v6922 = vshrl.u32 %v6921, 7
        %v6923 = vsub.s32 %v2014, %v6922
        %v6924 = vrot.slane %v6779, %v6923
        %v6925 = vlaneseq
        %v6926 = vshrl.u32 %v6925, 7
        %v6927 = vsub.s32 %v2014, %v6926
        %v6928 = vrot.slane %v6782, %v6927
        %v6929 = vlaneseq
        %v6930 = vshrl.u32 %v6929, 7
        %v6931 = vsub.s32 %v2014, %v6930
        %v6932 = vrot.slane %v6785, %v6931
        %v6933 = vlaneseq
        %v6934 = vshrl.u32 %v6933, 7
        %v6935 = vsub.s32 %v2014, %v6934
        %v6936 = vrot.slane %v6788, %v6935
        %v6937 = vlaneseq
        %v6938 = vshrl.u32 %v6937, 7
        %v6939 = vsub.s32 %v2014, %v6938
        %v6940 = vrot.slane %v6791, %v6939
        %v6941 = vlaneseq
        %v6942 = vshrl.u32 %v6941, 7
        %v6943 = vsub.s32 %v2014, %v6942
        %v6944 = vrot.slane %v6794, %v6943
        %v6945 = vlaneseq
        %v6946 = vshrl.u32 %v6945, 7
        %v6947 = vsub.s32 %v2014, %v6946
        %v6948 = vrot.slane %v6797, %v6947
        %v6949 = vlaneseq
        %v6950 = vshrl.u32 %v6949, 7
        %v6951 = vsub.s32 %v2014, %v6950
        %v6952 = vrot.slane %v6800, %v6951
        %v6953 = vlaneseq
        %v6954 = vshrl.u32 %v6953, 7
        %v6955 = vsub.s32 %v2014, %v6954
        %v6956 = vrot.slane %v6803, %v6955
        %v6957 = vlaneseq
        %v6958 = vshrl.u32 %v6957, 7
        %v6959 = vsub.s32 %v2014, %v6958
        %v6960 = vrot.slane %v6806, %v6959
        %v6961 = vlaneseq
        %v6962 = vshrl.u32 %v6961, 7
        %v6963 = vsub.s32 %v2014, %v6962
        %v6964 = vrot.slane %v6809, %v6963
        %v6965 = vlaneseq
        %v6966 = vshrl.u32 %v6965, 7
        %v6967 = vsub.s32 %v2014, %v6966
        %v6968 = vrot.slane %v6812, %v6967
        %v6969 = vlaneseq
        %v6970 = vshrl.u32 %v6969, 7
        %v6971 = vsub.s32 %v2014, %v6970
        %v6972 = vrot.slane %v6815, %v6971
        %v6973 = vlaneseq
        %v6974 = vshrl.u32 %v6973, 7
        %v6975 = vsub.s32 %v2014, %v6974
        %v6976 = vrot.slane %v6818, %v6975
        %v6977 = vlaneseq
        %v6978 = vshrl.u32 %v6977, 7
        %v6979 = vsub.s32 %v2014, %v6978
        %v6980 = vrot.slane %v6821, %v6979
        %v6981 = vlaneseq
        %v6982 = vshrl.u32 %v6981, 7
        %v6983 = vsub.s32 %v2014, %v6982
        %v6984 = vrot.slane %v6824, %v6983
        %v6985 = vsel %vm2143, %v6864, %v6860
        %v6986 = vsel %vm2145, %v6868, %v6985
        %v6987 = vsel %vm2147, %v6872, %v6986
        %v6988 = vsel %vm2149, %v6876, %v6987
        %v6989 = vsel %vm2151, %v6880, %v6988
        %v6990 = vsel %vm2153, %v6884, %v6989
        %v6991 = vsel %vm2155, %v6888, %v6990
        %v6992 = vsel %vm2143, %v6896, %v6892
        %v6993 = vsel %vm2145, %v6900, %v6992
        %v6994 = vsel %vm2147, %v6904, %v6993
        %v6995 = vsel %vm2149, %v6908, %v6994
        %v6996 = vsel %vm2151, %v6912, %v6995
        %v6997 = vsel %vm2153, %v6916, %v6996
        %v6998 = vsel %vm2155, %v6920, %v6997
        %v6999 = vsel %vm2143, %v6928, %v6924
        %v7000 = vsel %vm2145, %v6932, %v6999
        %v7001 = vsel %vm2147, %v6936, %v7000
        %v7002 = vsel %vm2149, %v6940, %v7001
        %v7003 = vsel %vm2151, %v6944, %v7002
        %v7004 = vsel %vm2153, %v6948, %v7003
        %v7005 = vsel %vm2155, %v6952, %v7004
        %v7006 = vsel %vm2143, %v6960, %v6956
        %v7007 = vsel %vm2145, %v6964, %v7006
        %v7008 = vsel %vm2147, %v6968, %v7007
        %v7009 = vsel %vm2149, %v6972, %v7008
        %v7010 = vsel %vm2151, %v6976, %v7009
        %v7011 = vsel %vm2153, %v6980, %v7010
        %v7012 = vsel %vm2155, %v6984, %v7011
        %v7017 = vsel %vm2182, %v6991, -inf
        %7018 = vmax.xlane.f32.xlu0 %v7017
        %v7019 = vpop.xlane.xlu0 %7018
        %v7020 = vsel %vm2182, %v6998, -inf
        %7021 = vmax.xlane.f32.xlu0 %v7020
        %v7022 = vpop.xlane.xlu0 %7021
        %v7023 = vsel %vm2182, %v7005, -inf
        %7024 = vmax.xlane.f32.xlu0 %v7023
        %v7025 = vpop.xlane.xlu0 %7024
        %v7026 = vsel %vm2182, %v7012, -inf
        %7027 = vmax.xlane.f32.xlu0 %v7026
        %v7028 = vpop.xlane.xlu0 %7027
        %v7033 = vlaneseq
        %v7034 = vshrl.u32 %v7033, 7
        %v7035 = vsub.s32 0, %v7034
        %v7036 = vrot.slane %v7019, %v7035
        %v7037 = vlaneseq
        %v7038 = vshrl.u32 %v7037, 7
        %v7039 = vsub.s32 1, %v7038
        %v7040 = vrot.slane %v7019, %v7039
        %v7041 = vlaneseq
        %v7042 = vshrl.u32 %v7041, 7
        %v7043 = vsub.s32 2, %v7042
        %v7044 = vrot.slane %v7019, %v7043
        %v7045 = vlaneseq
        %v7046 = vshrl.u32 %v7045, 7
        %v7047 = vsub.s32 3, %v7046
        %v7048 = vrot.slane %v7019, %v7047
        %v7049 = vlaneseq
        %v7050 = vshrl.u32 %v7049, 7
        %v7051 = vsub.s32 4, %v7050
        %v7052 = vrot.slane %v7019, %v7051
        %v7053 = vlaneseq
        %v7054 = vshrl.u32 %v7053, 7
        %v7055 = vsub.s32 5, %v7054
        %v7056 = vrot.slane %v7019, %v7055
        %v7057 = vlaneseq
        %v7058 = vshrl.u32 %v7057, 7
        %v7059 = vsub.s32 6, %v7058
        %v7060 = vrot.slane %v7019, %v7059
        %v7061 = vlaneseq
        %v7062 = vshrl.u32 %v7061, 7
        %v7063 = vsub.s32 7, %v7062
        %v7064 = vrot.slane %v7019, %v7063
        %v7065 = vlaneseq
        %v7066 = vshrl.u32 %v7065, 7
        %v7067 = vsub.s32 0, %v7066
        %v7068 = vrot.slane %v7022, %v7067
        %v7069 = vlaneseq
        %v7070 = vshrl.u32 %v7069, 7
        %v7071 = vsub.s32 1, %v7070
        %v7072 = vrot.slane %v7022, %v7071
        %v7073 = vlaneseq
        %v7074 = vshrl.u32 %v7073, 7
        %v7075 = vsub.s32 2, %v7074
        %v7076 = vrot.slane %v7022, %v7075
        %v7077 = vlaneseq
        %v7078 = vshrl.u32 %v7077, 7
        %v7079 = vsub.s32 3, %v7078
        %v7080 = vrot.slane %v7022, %v7079
        %v7081 = vlaneseq
        %v7082 = vshrl.u32 %v7081, 7
        %v7083 = vsub.s32 4, %v7082
        %v7084 = vrot.slane %v7022, %v7083
        %v7085 = vlaneseq
        %v7086 = vshrl.u32 %v7085, 7
        %v7087 = vsub.s32 5, %v7086
        %v7088 = vrot.slane %v7022, %v7087
        %v7089 = vlaneseq
        %v7090 = vshrl.u32 %v7089, 7
        %v7091 = vsub.s32 6, %v7090
        %v7092 = vrot.slane %v7022, %v7091
        %v7093 = vlaneseq
        %v7094 = vshrl.u32 %v7093, 7
        %v7095 = vsub.s32 7, %v7094
        %v7096 = vrot.slane %v7022, %v7095
        %v7097 = vlaneseq
        %v7098 = vshrl.u32 %v7097, 7
        %v7099 = vsub.s32 0, %v7098
        %v7100 = vrot.slane %v7025, %v7099
        %v7101 = vlaneseq
        %v7102 = vshrl.u32 %v7101, 7
        %v7103 = vsub.s32 1, %v7102
        %v7104 = vrot.slane %v7025, %v7103
        %v7105 = vlaneseq
        %v7106 = vshrl.u32 %v7105, 7
        %v7107 = vsub.s32 2, %v7106
        %v7108 = vrot.slane %v7025, %v7107
        %v7109 = vlaneseq
        %v7110 = vshrl.u32 %v7109, 7
        %v7111 = vsub.s32 3, %v7110
        %v7112 = vrot.slane %v7025, %v7111
        %v7113 = vlaneseq
        %v7114 = vshrl.u32 %v7113, 7
        %v7115 = vsub.s32 4, %v7114
        %v7116 = vrot.slane %v7025, %v7115
        %v7117 = vlaneseq
        %v7118 = vshrl.u32 %v7117, 7
        %v7119 = vsub.s32 5, %v7118
        %v7120 = vrot.slane %v7025, %v7119
        %v7121 = vlaneseq
        %v7122 = vshrl.u32 %v7121, 7
        %v7123 = vsub.s32 6, %v7122
        %v7124 = vrot.slane %v7025, %v7123
        %v7125 = vlaneseq
        %v7126 = vshrl.u32 %v7125, 7
        %v7127 = vsub.s32 7, %v7126
        %v7128 = vrot.slane %v7025, %v7127
        %v7129 = vlaneseq
        %v7130 = vshrl.u32 %v7129, 7
        %v7131 = vsub.s32 0, %v7130
        %v7132 = vrot.slane %v7028, %v7131
        %v7133 = vlaneseq
        %v7134 = vshrl.u32 %v7133, 7
        %v7135 = vsub.s32 1, %v7134
        %v7136 = vrot.slane %v7028, %v7135
        %v7137 = vlaneseq
        %v7138 = vshrl.u32 %v7137, 7
        %v7139 = vsub.s32 2, %v7138
        %v7140 = vrot.slane %v7028, %v7139
        %v7141 = vlaneseq
        %v7142 = vshrl.u32 %v7141, 7
        %v7143 = vsub.s32 3, %v7142
        %v7144 = vrot.slane %v7028, %v7143
        %v7145 = vlaneseq
        %v7146 = vshrl.u32 %v7145, 7
        %v7147 = vsub.s32 4, %v7146
        %v7148 = vrot.slane %v7028, %v7147
        %v7149 = vlaneseq
        %v7150 = vshrl.u32 %v7149, 7
        %v7151 = vsub.s32 5, %v7150
        %v7152 = vrot.slane %v7028, %v7151
        %v7153 = vlaneseq
        %v7154 = vshrl.u32 %v7153, 7
        %v7155 = vsub.s32 6, %v7154
        %v7156 = vrot.slane %v7028, %v7155
        %v7157 = vlaneseq
        %v7158 = vshrl.u32 %v7157, 7
        %v7159 = vsub.s32 7, %v7158
        %v7160 = vrot.slane %v7028, %v7159
        %v7193 = vsub.f32 %v6731, %v7036
        %v7194 = vsub.f32 %v6734, %v7040
        %v7195 = vsub.f32 %v6737, %v7044
        %v7196 = vsub.f32 %v6740, %v7048
        %v7197 = vsub.f32 %v6743, %v7052
        %v7198 = vsub.f32 %v6746, %v7056
        %v7199 = vsub.f32 %v6749, %v7060
        %v7200 = vsub.f32 %v6752, %v7064
        %v7201 = vsub.f32 %v6755, %v7068
        %v7202 = vsub.f32 %v6758, %v7072
        %v7203 = vsub.f32 %v6761, %v7076
        %v7204 = vsub.f32 %v6764, %v7080
        %v7205 = vsub.f32 %v6767, %v7084
        %v7206 = vsub.f32 %v6770, %v7088
        %v7207 = vsub.f32 %v6773, %v7092
        %v7208 = vsub.f32 %v6776, %v7096
        %v7209 = vsub.f32 %v6779, %v7100
        %v7210 = vsub.f32 %v6782, %v7104
        %v7211 = vsub.f32 %v6785, %v7108
        %v7212 = vsub.f32 %v6788, %v7112
        %v7213 = vsub.f32 %v6791, %v7116
        %v7214 = vsub.f32 %v6794, %v7120
        %v7215 = vsub.f32 %v6797, %v7124
        %v7216 = vsub.f32 %v6800, %v7128
        %v7217 = vsub.f32 %v6803, %v7132
        %v7218 = vsub.f32 %v6806, %v7136
        %v7219 = vsub.f32 %v6809, %v7140
        %v7220 = vsub.f32 %v6812, %v7144
        %v7221 = vsub.f32 %v6815, %v7148
        %v7222 = vsub.f32 %v6818, %v7152
        %v7223 = vsub.f32 %v6821, %v7156
        %v7224 = vsub.f32 %v6824, %v7160
        %v7225 = vmul.f32 %v7193, 1.442695
        %v7226 = vpow.pop %v7225
        %v7227 = vmul.f32 %v7194, 1.442695
        %v7228 = vpow.pop %v7227
        %v7229 = vmul.f32 %v7195, 1.442695
        %v7230 = vpow.pop %v7229
        %v7231 = vmul.f32 %v7196, 1.442695
        %v7232 = vpow.pop %v7231
        %v7233 = vmul.f32 %v7197, 1.442695
        %v7234 = vpow.pop %v7233
        %v7235 = vmul.f32 %v7198, 1.442695
        %v7236 = vpow.pop %v7235
        %v7237 = vmul.f32 %v7199, 1.442695
        %v7238 = vpow.pop %v7237
        %v7239 = vmul.f32 %v7200, 1.442695
        %v7240 = vpow.pop %v7239
        %v7241 = vmul.f32 %v7201, 1.442695
        %v7242 = vpow.pop %v7241
        %v7243 = vmul.f32 %v7202, 1.442695
        %v7244 = vpow.pop %v7243
        %v7245 = vmul.f32 %v7203, 1.442695
        %v7246 = vpow.pop %v7245
        %v7247 = vmul.f32 %v7204, 1.442695
        %v7248 = vpow.pop %v7247
        %v7249 = vmul.f32 %v7205, 1.442695
        %v7250 = vpow.pop %v7249
        %v7251 = vmul.f32 %v7206, 1.442695
        %v7252 = vpow.pop %v7251
        %v7253 = vmul.f32 %v7207, 1.442695
        %v7254 = vpow.pop %v7253
        %v7255 = vmul.f32 %v7208, 1.442695
        %v7256 = vpow.pop %v7255
        %v7257 = vmul.f32 %v7209, 1.442695
        %v7258 = vpow.pop %v7257
        %v7259 = vmul.f32 %v7210, 1.442695
        %v7260 = vpow.pop %v7259
        %v7261 = vmul.f32 %v7211, 1.442695
        %v7262 = vpow.pop %v7261
        %v7263 = vmul.f32 %v7212, 1.442695
        %v7264 = vpow.pop %v7263
        %v7265 = vmul.f32 %v7213, 1.442695
        %v7266 = vpow.pop %v7265
        %v7267 = vmul.f32 %v7214, 1.442695
        %v7268 = vpow.pop %v7267
        %v7269 = vmul.f32 %v7215, 1.442695
        %v7270 = vpow.pop %v7269
        %v7271 = vmul.f32 %v7216, 1.442695
        %v7272 = vpow.pop %v7271
        %v7273 = vmul.f32 %v7217, 1.442695
        %v7274 = vpow.pop %v7273
        %v7275 = vmul.f32 %v7218, 1.442695
        %v7276 = vpow.pop %v7275
        %v7277 = vmul.f32 %v7219, 1.442695
        %v7278 = vpow.pop %v7277
        %v7279 = vmul.f32 %v7220, 1.442695
        %v7280 = vpow.pop %v7279
        %v7281 = vmul.f32 %v7221, 1.442695
        %v7282 = vpow.pop %v7281
        %v7283 = vmul.f32 %v7222, 1.442695
        %v7284 = vpow.pop %v7283
        %v7285 = vmul.f32 %v7223, 1.442695
        %v7286 = vpow.pop %v7285
        %v7287 = vmul.f32 %v7224, 1.442695
        %v7288 = vpow.pop %v7287
        %7321 = vset.pattern.permute.xlu0 0
        %7322 = vperm.xlu0 %7321, %v7226
        %v7323 = vpop.permute.xlu0 %7322
        %7324 = vset.pattern.permute.xlu0 0
        %7325 = vperm.xlu0 %7324, %v7228
        %v7326 = vpop.permute.xlu0 %7325
        %7327 = vset.pattern.permute.xlu0 0
        %7328 = vperm.xlu0 %7327, %v7230
        %v7329 = vpop.permute.xlu0 %7328
        %7330 = vset.pattern.permute.xlu0 0
        %7331 = vperm.xlu0 %7330, %v7232
        %v7332 = vpop.permute.xlu0 %7331
        %7333 = vset.pattern.permute.xlu0 0
        %7334 = vperm.xlu0 %7333, %v7234
        %v7335 = vpop.permute.xlu0 %7334
        %7336 = vset.pattern.permute.xlu0 0
        %7337 = vperm.xlu0 %7336, %v7236
        %v7338 = vpop.permute.xlu0 %7337
        %7339 = vset.pattern.permute.xlu0 0
        %7340 = vperm.xlu0 %7339, %v7238
        %v7341 = vpop.permute.xlu0 %7340
        %7342 = vset.pattern.permute.xlu0 0
        %7343 = vperm.xlu0 %7342, %v7240
        %v7344 = vpop.permute.xlu0 %7343
        %7345 = vset.pattern.permute.xlu0 0
        %7346 = vperm.xlu0 %7345, %v7242
        %v7347 = vpop.permute.xlu0 %7346
        %7348 = vset.pattern.permute.xlu0 0
        %7349 = vperm.xlu0 %7348, %v7244
        %v7350 = vpop.permute.xlu0 %7349
        %7351 = vset.pattern.permute.xlu0 0
        %7352 = vperm.xlu0 %7351, %v7246
        %v7353 = vpop.permute.xlu0 %7352
        %7354 = vset.pattern.permute.xlu0 0
        %7355 = vperm.xlu0 %7354, %v7248
        %v7356 = vpop.permute.xlu0 %7355
        %7357 = vset.pattern.permute.xlu0 0
        %7358 = vperm.xlu0 %7357, %v7250
        %v7359 = vpop.permute.xlu0 %7358
        %7360 = vset.pattern.permute.xlu0 0
        %7361 = vperm.xlu0 %7360, %v7252
        %v7362 = vpop.permute.xlu0 %7361
        %7363 = vset.pattern.permute.xlu0 0
        %7364 = vperm.xlu0 %7363, %v7254
        %v7365 = vpop.permute.xlu0 %7364
        %7366 = vset.pattern.permute.xlu0 0
        %7367 = vperm.xlu0 %7366, %v7256
        %v7368 = vpop.permute.xlu0 %7367
        %7369 = vset.pattern.permute.xlu0 0
        %7370 = vperm.xlu0 %7369, %v7258
        %v7371 = vpop.permute.xlu0 %7370
        %7372 = vset.pattern.permute.xlu0 0
        %7373 = vperm.xlu0 %7372, %v7260
        %v7374 = vpop.permute.xlu0 %7373
        %7375 = vset.pattern.permute.xlu0 0
        %7376 = vperm.xlu0 %7375, %v7262
        %v7377 = vpop.permute.xlu0 %7376
        %7378 = vset.pattern.permute.xlu0 0
        %7379 = vperm.xlu0 %7378, %v7264
        %v7380 = vpop.permute.xlu0 %7379
        %7381 = vset.pattern.permute.xlu0 0
        %7382 = vperm.xlu0 %7381, %v7266
        %v7383 = vpop.permute.xlu0 %7382
        %7384 = vset.pattern.permute.xlu0 0
        %7385 = vperm.xlu0 %7384, %v7268
        %v7386 = vpop.permute.xlu0 %7385
        %7387 = vset.pattern.permute.xlu0 0
        %7388 = vperm.xlu0 %7387, %v7270
        %v7389 = vpop.permute.xlu0 %7388
        %7390 = vset.pattern.permute.xlu0 0
        %7391 = vperm.xlu0 %7390, %v7272
        %v7392 = vpop.permute.xlu0 %7391
        %7393 = vset.pattern.permute.xlu0 0
        %7394 = vperm.xlu0 %7393, %v7274
        %v7395 = vpop.permute.xlu0 %7394
        %7396 = vset.pattern.permute.xlu0 0
        %7397 = vperm.xlu0 %7396, %v7276
        %v7398 = vpop.permute.xlu0 %7397
        %7399 = vset.pattern.permute.xlu0 0
        %7400 = vperm.xlu0 %7399, %v7278
        %v7401 = vpop.permute.xlu0 %7400
        %7402 = vset.pattern.permute.xlu0 0
        %7403 = vperm.xlu0 %7402, %v7280
        %v7404 = vpop.permute.xlu0 %7403
        %7405 = vset.pattern.permute.xlu0 0
        %7406 = vperm.xlu0 %7405, %v7282
        %v7407 = vpop.permute.xlu0 %7406
        %7408 = vset.pattern.permute.xlu0 0
        %7409 = vperm.xlu0 %7408, %v7284
        %v7410 = vpop.permute.xlu0 %7409
        %7411 = vset.pattern.permute.xlu0 0
        %7412 = vperm.xlu0 %7411, %v7286
        %v7413 = vpop.permute.xlu0 %7412
        %7414 = vset.pattern.permute.xlu0 0
        %7415 = vperm.xlu0 %7414, %v7288
        %v7416 = vpop.permute.xlu0 %7415
        %v7417 = vlaneseq
        %v7418 = vshrl.u32 %v7417, 7
        %v7419 = vsub.s32 %v2014, %v7418
        %v7420 = vrot.slane %v7323, %v7419
        %v7421 = vlaneseq
        %v7422 = vshrl.u32 %v7421, 7
        %v7423 = vsub.s32 %v2014, %v7422
        %v7424 = vrot.slane %v7326, %v7423
        %v7425 = vlaneseq
        %v7426 = vshrl.u32 %v7425, 7
        %v7427 = vsub.s32 %v2014, %v7426
        %v7428 = vrot.slane %v7329, %v7427
        %v7429 = vlaneseq
        %v7430 = vshrl.u32 %v7429, 7
        %v7431 = vsub.s32 %v2014, %v7430
        %v7432 = vrot.slane %v7332, %v7431
        %v7433 = vlaneseq
        %v7434 = vshrl.u32 %v7433, 7
        %v7435 = vsub.s32 %v2014, %v7434
        %v7436 = vrot.slane %v7335, %v7435
        %v7437 = vlaneseq
        %v7438 = vshrl.u32 %v7437, 7
        %v7439 = vsub.s32 %v2014, %v7438
        %v7440 = vrot.slane %v7338, %v7439
        %v7441 = vlaneseq
        %v7442 = vshrl.u32 %v7441, 7
        %v7443 = vsub.s32 %v2014, %v7442
        %v7444 = vrot.slane %v7341, %v7443
        %v7445 = vlaneseq
        %v7446 = vshrl.u32 %v7445, 7
        %v7447 = vsub.s32 %v2014, %v7446
        %v7448 = vrot.slane %v7344, %v7447
        %v7449 = vlaneseq
        %v7450 = vshrl.u32 %v7449, 7
        %v7451 = vsub.s32 %v2014, %v7450
        %v7452 = vrot.slane %v7347, %v7451
        %v7453 = vlaneseq
        %v7454 = vshrl.u32 %v7453, 7
        %v7455 = vsub.s32 %v2014, %v7454
        %v7456 = vrot.slane %v7350, %v7455
        %v7457 = vlaneseq
        %v7458 = vshrl.u32 %v7457, 7
        %v7459 = vsub.s32 %v2014, %v7458
        %v7460 = vrot.slane %v7353, %v7459
        %v7461 = vlaneseq
        %v7462 = vshrl.u32 %v7461, 7
        %v7463 = vsub.s32 %v2014, %v7462
        %v7464 = vrot.slane %v7356, %v7463
        %v7465 = vlaneseq
        %v7466 = vshrl.u32 %v7465, 7
        %v7467 = vsub.s32 %v2014, %v7466
        %v7468 = vrot.slane %v7359, %v7467
        %v7469 = vlaneseq
        %v7470 = vshrl.u32 %v7469, 7
        %v7471 = vsub.s32 %v2014, %v7470
        %v7472 = vrot.slane %v7362, %v7471
        %v7473 = vlaneseq
        %v7474 = vshrl.u32 %v7473, 7
        %v7475 = vsub.s32 %v2014, %v7474
        %v7476 = vrot.slane %v7365, %v7475
        %v7477 = vlaneseq
        %v7478 = vshrl.u32 %v7477, 7
        %v7479 = vsub.s32 %v2014, %v7478
        %v7480 = vrot.slane %v7368, %v7479
        %v7481 = vlaneseq
        %v7482 = vshrl.u32 %v7481, 7
        %v7483 = vsub.s32 %v2014, %v7482
        %v7484 = vrot.slane %v7371, %v7483
        %v7485 = vlaneseq
        %v7486 = vshrl.u32 %v7485, 7
        %v7487 = vsub.s32 %v2014, %v7486
        %v7488 = vrot.slane %v7374, %v7487
        %v7489 = vlaneseq
        %v7490 = vshrl.u32 %v7489, 7
        %v7491 = vsub.s32 %v2014, %v7490
        %v7492 = vrot.slane %v7377, %v7491
        %v7493 = vlaneseq
        %v7494 = vshrl.u32 %v7493, 7
        %v7495 = vsub.s32 %v2014, %v7494
        %v7496 = vrot.slane %v7380, %v7495
        %v7497 = vlaneseq
        %v7498 = vshrl.u32 %v7497, 7
        %v7499 = vsub.s32 %v2014, %v7498
        %v7500 = vrot.slane %v7383, %v7499
        %v7501 = vlaneseq
        %v7502 = vshrl.u32 %v7501, 7
        %v7503 = vsub.s32 %v2014, %v7502
        %v7504 = vrot.slane %v7386, %v7503
        %v7505 = vlaneseq
        %v7506 = vshrl.u32 %v7505, 7
        %v7507 = vsub.s32 %v2014, %v7506
        %v7508 = vrot.slane %v7389, %v7507
        %v7509 = vlaneseq
        %v7510 = vshrl.u32 %v7509, 7
        %v7511 = vsub.s32 %v2014, %v7510
        %v7512 = vrot.slane %v7392, %v7511
        %v7513 = vlaneseq
        %v7514 = vshrl.u32 %v7513, 7
        %v7515 = vsub.s32 %v2014, %v7514
        %v7516 = vrot.slane %v7395, %v7515
        %v7517 = vlaneseq
        %v7518 = vshrl.u32 %v7517, 7
        %v7519 = vsub.s32 %v2014, %v7518
        %v7520 = vrot.slane %v7398, %v7519
        %v7521 = vlaneseq
        %v7522 = vshrl.u32 %v7521, 7
        %v7523 = vsub.s32 %v2014, %v7522
        %v7524 = vrot.slane %v7401, %v7523
        %v7525 = vlaneseq
        %v7526 = vshrl.u32 %v7525, 7
        %v7527 = vsub.s32 %v2014, %v7526
        %v7528 = vrot.slane %v7404, %v7527
        %v7529 = vlaneseq
        %v7530 = vshrl.u32 %v7529, 7
        %v7531 = vsub.s32 %v2014, %v7530
        %v7532 = vrot.slane %v7407, %v7531
        %v7533 = vlaneseq
        %v7534 = vshrl.u32 %v7533, 7
        %v7535 = vsub.s32 %v2014, %v7534
        %v7536 = vrot.slane %v7410, %v7535
        %v7537 = vlaneseq
        %v7538 = vshrl.u32 %v7537, 7
        %v7539 = vsub.s32 %v2014, %v7538
        %v7540 = vrot.slane %v7413, %v7539
        %v7541 = vlaneseq
        %v7542 = vshrl.u32 %v7541, 7
        %v7543 = vsub.s32 %v2014, %v7542
        %v7544 = vrot.slane %v7416, %v7543
        %v7545 = vsel %vm2143, %v7424, %v7420
        %v7546 = vsel %vm2145, %v7428, %v7545
        %v7547 = vsel %vm2147, %v7432, %v7546
        %v7548 = vsel %vm2149, %v7436, %v7547
        %v7549 = vsel %vm2151, %v7440, %v7548
        %v7550 = vsel %vm2153, %v7444, %v7549
        %v7551 = vsel %vm2155, %v7448, %v7550
        %v7552 = vsel %vm2143, %v7456, %v7452
        %v7553 = vsel %vm2145, %v7460, %v7552
        %v7554 = vsel %vm2147, %v7464, %v7553
        %v7555 = vsel %vm2149, %v7468, %v7554
        %v7556 = vsel %vm2151, %v7472, %v7555
        %v7557 = vsel %vm2153, %v7476, %v7556
        %v7558 = vsel %vm2155, %v7480, %v7557
        %v7559 = vsel %vm2143, %v7488, %v7484
        %v7560 = vsel %vm2145, %v7492, %v7559
        %v7561 = vsel %vm2147, %v7496, %v7560
        %v7562 = vsel %vm2149, %v7500, %v7561
        %v7563 = vsel %vm2151, %v7504, %v7562
        %v7564 = vsel %vm2153, %v7508, %v7563
        %v7565 = vsel %vm2155, %v7512, %v7564
        %v7566 = vsel %vm2143, %v7520, %v7516
        %v7567 = vsel %vm2145, %v7524, %v7566
        %v7568 = vsel %vm2147, %v7528, %v7567
        %v7569 = vsel %vm2149, %v7532, %v7568
        %v7570 = vsel %vm2151, %v7536, %v7569
        %v7571 = vsel %vm2153, %v7540, %v7570
        %v7572 = vsel %vm2155, %v7544, %v7571
        %v7577 = vsel %vm2182, %v7551, 0.0
        %7578 = vadd.xlane.f32.xlu0 %v7577
        %v7579 = vpop.xlane.xlu0 %7578
        %v7580 = vsel %vm2182, %v7558, 0.0
        %7581 = vadd.xlane.f32.xlu0 %v7580
        %v7582 = vpop.xlane.xlu0 %7581
        %v7583 = vsel %vm2182, %v7565, 0.0
        %7584 = vadd.xlane.f32.xlu0 %v7583
        %v7585 = vpop.xlane.xlu0 %7584
        %v7586 = vsel %vm2182, %v7572, 0.0
        %7587 = vadd.xlane.f32.xlu0 %v7586
        %v7588 = vpop.xlane.xlu0 %7587
        %v7593 = vlaneseq
        %v7594 = vshrl.u32 %v7593, 7
        %v7595 = vsub.s32 0, %v7594
        %v7596 = vrot.slane %v7579, %v7595
        %v7597 = vlaneseq
        %v7598 = vshrl.u32 %v7597, 7
        %v7599 = vsub.s32 1, %v7598
        %v7600 = vrot.slane %v7579, %v7599
        %v7601 = vlaneseq
        %v7602 = vshrl.u32 %v7601, 7
        %v7603 = vsub.s32 2, %v7602
        %v7604 = vrot.slane %v7579, %v7603
        %v7605 = vlaneseq
        %v7606 = vshrl.u32 %v7605, 7
        %v7607 = vsub.s32 3, %v7606
        %v7608 = vrot.slane %v7579, %v7607
        %v7609 = vlaneseq
        %v7610 = vshrl.u32 %v7609, 7
        %v7611 = vsub.s32 4, %v7610
        %v7612 = vrot.slane %v7579, %v7611
        %v7613 = vlaneseq
        %v7614 = vshrl.u32 %v7613, 7
        %v7615 = vsub.s32 5, %v7614
        %v7616 = vrot.slane %v7579, %v7615
        %v7617 = vlaneseq
        %v7618 = vshrl.u32 %v7617, 7
        %v7619 = vsub.s32 6, %v7618
        %v7620 = vrot.slane %v7579, %v7619
        %v7621 = vlaneseq
        %v7622 = vshrl.u32 %v7621, 7
        %v7623 = vsub.s32 7, %v7622
        %v7624 = vrot.slane %v7579, %v7623
        %v7625 = vlaneseq
        %v7626 = vshrl.u32 %v7625, 7
        %v7627 = vsub.s32 0, %v7626
        %v7628 = vrot.slane %v7582, %v7627
        %v7629 = vlaneseq
        %v7630 = vshrl.u32 %v7629, 7
        %v7631 = vsub.s32 1, %v7630
        %v7632 = vrot.slane %v7582, %v7631
        %v7633 = vlaneseq
        %v7634 = vshrl.u32 %v7633, 7
        %v7635 = vsub.s32 2, %v7634
        %v7636 = vrot.slane %v7582, %v7635
        %v7637 = vlaneseq
        %v7638 = vshrl.u32 %v7637, 7
        %v7639 = vsub.s32 3, %v7638
        %v7640 = vrot.slane %v7582, %v7639
        %v7641 = vlaneseq
        %v7642 = vshrl.u32 %v7641, 7
        %v7643 = vsub.s32 4, %v7642
        %v7644 = vrot.slane %v7582, %v7643
        %v7645 = vlaneseq
        %v7646 = vshrl.u32 %v7645, 7
        %v7647 = vsub.s32 5, %v7646
        %v7648 = vrot.slane %v7582, %v7647
        %v7649 = vlaneseq
        %v7650 = vshrl.u32 %v7649, 7
        %v7651 = vsub.s32 6, %v7650
        %v7652 = vrot.slane %v7582, %v7651
        %v7653 = vlaneseq
        %v7654 = vshrl.u32 %v7653, 7
        %v7655 = vsub.s32 7, %v7654
        %v7656 = vrot.slane %v7582, %v7655
        %v7657 = vlaneseq
        %v7658 = vshrl.u32 %v7657, 7
        %v7659 = vsub.s32 0, %v7658
        %v7660 = vrot.slane %v7585, %v7659
        %v7661 = vlaneseq
        %v7662 = vshrl.u32 %v7661, 7
        %v7663 = vsub.s32 1, %v7662
        %v7664 = vrot.slane %v7585, %v7663
        %v7665 = vlaneseq
        %v7666 = vshrl.u32 %v7665, 7
        %v7667 = vsub.s32 2, %v7666
        %v7668 = vrot.slane %v7585, %v7667
        %v7669 = vlaneseq
        %v7670 = vshrl.u32 %v7669, 7
        %v7671 = vsub.s32 3, %v7670
        %v7672 = vrot.slane %v7585, %v7671
        %v7673 = vlaneseq
        %v7674 = vshrl.u32 %v7673, 7
        %v7675 = vsub.s32 4, %v7674
        %v7676 = vrot.slane %v7585, %v7675
        %v7677 = vlaneseq
        %v7678 = vshrl.u32 %v7677, 7
        %v7679 = vsub.s32 5, %v7678
        %v7680 = vrot.slane %v7585, %v7679
        %v7681 = vlaneseq
        %v7682 = vshrl.u32 %v7681, 7
        %v7683 = vsub.s32 6, %v7682
        %v7684 = vrot.slane %v7585, %v7683
        %v7685 = vlaneseq
        %v7686 = vshrl.u32 %v7685, 7
        %v7687 = vsub.s32 7, %v7686
        %v7688 = vrot.slane %v7585, %v7687
        %v7689 = vlaneseq
        %v7690 = vshrl.u32 %v7689, 7
        %v7691 = vsub.s32 0, %v7690
        %v7692 = vrot.slane %v7588, %v7691
        %v7693 = vlaneseq
        %v7694 = vshrl.u32 %v7693, 7
        %v7695 = vsub.s32 1, %v7694
        %v7696 = vrot.slane %v7588, %v7695
        %v7697 = vlaneseq
        %v7698 = vshrl.u32 %v7697, 7
        %v7699 = vsub.s32 2, %v7698
        %v7700 = vrot.slane %v7588, %v7699
        %v7701 = vlaneseq
        %v7702 = vshrl.u32 %v7701, 7
        %v7703 = vsub.s32 3, %v7702
        %v7704 = vrot.slane %v7588, %v7703
        %v7705 = vlaneseq
        %v7706 = vshrl.u32 %v7705, 7
        %v7707 = vsub.s32 4, %v7706
        %v7708 = vrot.slane %v7588, %v7707
        %v7709 = vlaneseq
        %v7710 = vshrl.u32 %v7709, 7
        %v7711 = vsub.s32 5, %v7710
        %v7712 = vrot.slane %v7588, %v7711
        %v7713 = vlaneseq
        %v7714 = vshrl.u32 %v7713, 7
        %v7715 = vsub.s32 6, %v7714
        %v7716 = vrot.slane %v7588, %v7715
        %v7717 = vlaneseq
        %v7718 = vshrl.u32 %v7717, 7
        %v7719 = vsub.s32 7, %v7718
        %v7720 = vrot.slane %v7588, %v7719
        %v7753 = vrcp.pop %v7596
        %v7754 = vmul.f32 %v7226, %v7753
        %v7755 = vrcp.pop %v7600
        %v7756 = vmul.f32 %v7228, %v7755
        %v7757 = vrcp.pop %v7604
        %v7758 = vmul.f32 %v7230, %v7757
        %v7759 = vrcp.pop %v7608
        %v7760 = vmul.f32 %v7232, %v7759
        %v7761 = vrcp.pop %v7612
        %v7762 = vmul.f32 %v7234, %v7761
        %v7763 = vrcp.pop %v7616
        %v7764 = vmul.f32 %v7236, %v7763
        %v7765 = vrcp.pop %v7620
        %v7766 = vmul.f32 %v7238, %v7765
        %v7767 = vrcp.pop %v7624
        %v7768 = vmul.f32 %v7240, %v7767
        %v7769 = vrcp.pop %v7628
        %v7770 = vmul.f32 %v7242, %v7769
        %v7771 = vrcp.pop %v7632
        %v7772 = vmul.f32 %v7244, %v7771
        %v7773 = vrcp.pop %v7636
        %v7774 = vmul.f32 %v7246, %v7773
        %v7775 = vrcp.pop %v7640
        %v7776 = vmul.f32 %v7248, %v7775
        %v7777 = vrcp.pop %v7644
        %v7778 = vmul.f32 %v7250, %v7777
        %v7779 = vrcp.pop %v7648
        %v7780 = vmul.f32 %v7252, %v7779
        %v7781 = vrcp.pop %v7652
        %v7782 = vmul.f32 %v7254, %v7781
        %v7783 = vrcp.pop %v7656
        %v7784 = vmul.f32 %v7256, %v7783
        %v7785 = vrcp.pop %v7660
        %v7786 = vmul.f32 %v7258, %v7785
        %v7787 = vrcp.pop %v7664
        %v7788 = vmul.f32 %v7260, %v7787
        %v7789 = vrcp.pop %v7668
        %v7790 = vmul.f32 %v7262, %v7789
        %v7791 = vrcp.pop %v7672
        %v7792 = vmul.f32 %v7264, %v7791
        %v7793 = vrcp.pop %v7676
        %v7794 = vmul.f32 %v7266, %v7793
        %v7795 = vrcp.pop %v7680
        %v7796 = vmul.f32 %v7268, %v7795
        %v7797 = vrcp.pop %v7684
        %v7798 = vmul.f32 %v7270, %v7797
        %v7799 = vrcp.pop %v7688
        %v7800 = vmul.f32 %v7272, %v7799
        %v7801 = vrcp.pop %v7692
        %v7802 = vmul.f32 %v7274, %v7801
        %v7803 = vrcp.pop %v7696
        %v7804 = vmul.f32 %v7276, %v7803
        %v7805 = vrcp.pop %v7700
        %v7806 = vmul.f32 %v7278, %v7805
        %v7807 = vrcp.pop %v7704
        %v7808 = vmul.f32 %v7280, %v7807
        %v7809 = vrcp.pop %v7708
        %v7810 = vmul.f32 %v7282, %v7809
        %v7811 = vrcp.pop %v7712
        %v7812 = vmul.f32 %v7284, %v7811
        %v7813 = vrcp.pop %v7716
        %v7814 = vmul.f32 %v7286, %v7813
        %v7815 = vrcp.pop %v7720
        %v7816 = vmul.f32 %v7288, %v7815
        %7818 = vset.pattern.permute.xlu0 0
        %7819 = vperm.xlu0 %7818, %v7754
        %v7820 = vpop.permute.xlu0 %7819
        %7823 = vset.pattern.permute.xlu0 0
        %7824 = vperm.xlu0 %7823, %v7756
        %v7825 = vpop.permute.xlu0 %7824
        %7828 = vset.pattern.permute.xlu0 0
        %7829 = vperm.xlu0 %7828, %v7758
        %v7830 = vpop.permute.xlu0 %7829
        %7833 = vset.pattern.permute.xlu0 0
        %7834 = vperm.xlu0 %7833, %v7760
        %v7835 = vpop.permute.xlu0 %7834
        %7838 = vset.pattern.permute.xlu0 0
        %7839 = vperm.xlu0 %7838, %v7762
        %v7840 = vpop.permute.xlu0 %7839
        %7843 = vset.pattern.permute.xlu0 0
        %7844 = vperm.xlu0 %7843, %v7764
        %v7845 = vpop.permute.xlu0 %7844
        %7848 = vset.pattern.permute.xlu0 0
        %7849 = vperm.xlu0 %7848, %v7766
        %v7850 = vpop.permute.xlu0 %7849
        %7853 = vset.pattern.permute.xlu0 0
        %7854 = vperm.xlu0 %7853, %v7768
        %v7855 = vpop.permute.xlu0 %7854
        %7858 = vset.pattern.permute.xlu0 0
        %7859 = vperm.xlu0 %7858, %v7770
        %v7860 = vpop.permute.xlu0 %7859
        %7863 = vset.pattern.permute.xlu0 0
        %7864 = vperm.xlu0 %7863, %v7772
        %v7865 = vpop.permute.xlu0 %7864
        %7868 = vset.pattern.permute.xlu0 0
        %7869 = vperm.xlu0 %7868, %v7774
        %v7870 = vpop.permute.xlu0 %7869
        %7873 = vset.pattern.permute.xlu0 0
        %7874 = vperm.xlu0 %7873, %v7776
        %v7875 = vpop.permute.xlu0 %7874
        %7878 = vset.pattern.permute.xlu0 0
        %7879 = vperm.xlu0 %7878, %v7778
        %v7880 = vpop.permute.xlu0 %7879
        %7883 = vset.pattern.permute.xlu0 0
        %7884 = vperm.xlu0 %7883, %v7780
        %v7885 = vpop.permute.xlu0 %7884
        %7888 = vset.pattern.permute.xlu0 0
        %7889 = vperm.xlu0 %7888, %v7782
        %v7890 = vpop.permute.xlu0 %7889
        %7893 = vset.pattern.permute.xlu0 0
        %7894 = vperm.xlu0 %7893, %v7784
        %v7895 = vpop.permute.xlu0 %7894
        %7898 = vset.pattern.permute.xlu0 0
        %7899 = vperm.xlu0 %7898, %v7786
        %v7900 = vpop.permute.xlu0 %7899
        %7903 = vset.pattern.permute.xlu0 0
        %7904 = vperm.xlu0 %7903, %v7788
        %v7905 = vpop.permute.xlu0 %7904
        %7908 = vset.pattern.permute.xlu0 0
        %7909 = vperm.xlu0 %7908, %v7790
        %v7910 = vpop.permute.xlu0 %7909
        %7913 = vset.pattern.permute.xlu0 0
        %7914 = vperm.xlu0 %7913, %v7792
        %v7915 = vpop.permute.xlu0 %7914
        %7918 = vset.pattern.permute.xlu0 0
        %7919 = vperm.xlu0 %7918, %v7794
        %v7920 = vpop.permute.xlu0 %7919
        %7923 = vset.pattern.permute.xlu0 0
        %7924 = vperm.xlu0 %7923, %v7796
        %v7925 = vpop.permute.xlu0 %7924
        %7928 = vset.pattern.permute.xlu0 0
        %7929 = vperm.xlu0 %7928, %v7798
        %v7930 = vpop.permute.xlu0 %7929
        %7933 = vset.pattern.permute.xlu0 0
        %7934 = vperm.xlu0 %7933, %v7800
        %v7935 = vpop.permute.xlu0 %7934
        %7938 = vset.pattern.permute.xlu0 0
        %7939 = vperm.xlu0 %7938, %v7802
        %v7940 = vpop.permute.xlu0 %7939
        %7943 = vset.pattern.permute.xlu0 0
        %7944 = vperm.xlu0 %7943, %v7804
        %v7945 = vpop.permute.xlu0 %7944
        %7948 = vset.pattern.permute.xlu0 0
        %7949 = vperm.xlu0 %7948, %v7806
        %v7950 = vpop.permute.xlu0 %7949
        %7953 = vset.pattern.permute.xlu0 0
        %7954 = vperm.xlu0 %7953, %v7808
        %v7955 = vpop.permute.xlu0 %7954
        %7958 = vset.pattern.permute.xlu0 0
        %7959 = vperm.xlu0 %7958, %v7810
        %v7960 = vpop.permute.xlu0 %7959
        %7963 = vset.pattern.permute.xlu0 0
        %7964 = vperm.xlu0 %7963, %v7812
        %v7965 = vpop.permute.xlu0 %7964
        %7968 = vset.pattern.permute.xlu0 0
        %7969 = vperm.xlu0 %7968, %v7814
        %v7970 = vpop.permute.xlu0 %7969
        %7973 = vset.pattern.permute.xlu0 0
        %7974 = vperm.xlu0 %7973, %v7816
        %v7975 = vpop.permute.xlu0 %7974
        %v7977 = vmul.f32 %v7820, %v1188
        %v7978 = vmul.f32 %v7825, %v1194
        %v7979 = vmul.f32 %v7830, %v1200
        %v7980 = vmul.f32 %v7835, %v1206
        %v7981 = vmul.f32 %v7840, %v1212
        %v7982 = vmul.f32 %v7845, %v1218
        %v7983 = vmul.f32 %v7850, %v1224
        %v7984 = vmul.f32 %v7855, %v1230
        %v7985 = vmul.f32 %v7860, %v1236
        %v7986 = vmul.f32 %v7865, %v1242
        %v7987 = vmul.f32 %v7870, %v1248
        %v7988 = vmul.f32 %v7875, %v1254
        %v7989 = vmul.f32 %v7880, %v1260
        %v7990 = vmul.f32 %v7885, %v1266
        %v7991 = vmul.f32 %v7890, %v1272
        %v7992 = vmul.f32 %v7895, %v1278
        %v7993 = vmul.f32 %v7900, %v1284
        %v7994 = vmul.f32 %v7905, %v1290
        %v7995 = vmul.f32 %v7910, %v1296
        %v7996 = vmul.f32 %v7915, %v1302
        %v7997 = vmul.f32 %v7920, %v1308
        %v7998 = vmul.f32 %v7925, %v1314
        %v7999 = vmul.f32 %v7930, %v1320
        %v8000 = vmul.f32 %v7935, %v1326
        %v8001 = vmul.f32 %v7940, %v1332
        %v8002 = vmul.f32 %v7945, %v1338
        %v8003 = vmul.f32 %v7950, %v1344
        %v8004 = vmul.f32 %v7955, %v1350
        %v8005 = vmul.f32 %v7960, %v1356
        %v8006 = vmul.f32 %v7965, %v1362
        %v8007 = vmul.f32 %v7970, %v1368
        %v8008 = vmul.f32 %v7975, %v1374
        %vm8009 = vcmask 1048320
        %v8010 = vsel %vm8009, %v7977, 0.0
        %v8011 = vrot.slane %v8010, 4
        %v8012 = vadd.f32 %v8010, %v8011
        %v8013 = vrot.slane %v8012, 2
        %v8014 = vadd.f32 %v8012, %v8013
        %v8015 = vrot.slane %v8014, 1
        %v8016 = vadd.f32 %v8014, %v8015
        %v8017 = vsel %vm8009, %v7978, 0.0
        %v8018 = vrot.slane %v8017, 4
        %v8019 = vadd.f32 %v8017, %v8018
        %v8020 = vrot.slane %v8019, 2
        %v8021 = vadd.f32 %v8019, %v8020
        %v8022 = vrot.slane %v8021, 1
        %v8023 = vadd.f32 %v8021, %v8022
        %v8024 = vsel %vm8009, %v7979, 0.0
        %v8025 = vrot.slane %v8024, 4
        %v8026 = vadd.f32 %v8024, %v8025
        %v8027 = vrot.slane %v8026, 2
        %v8028 = vadd.f32 %v8026, %v8027
        %v8029 = vrot.slane %v8028, 1
        %v8030 = vadd.f32 %v8028, %v8029
        %v8031 = vsel %vm8009, %v7980, 0.0
        %v8032 = vrot.slane %v8031, 4
        %v8033 = vadd.f32 %v8031, %v8032
        %v8034 = vrot.slane %v8033, 2
        %v8035 = vadd.f32 %v8033, %v8034
        %v8036 = vrot.slane %v8035, 1
        %v8037 = vadd.f32 %v8035, %v8036
        %v8038 = vsel %vm8009, %v7981, 0.0
        %v8039 = vrot.slane %v8038, 4
        %v8040 = vadd.f32 %v8038, %v8039
        %v8041 = vrot.slane %v8040, 2
        %v8042 = vadd.f32 %v8040, %v8041
        %v8043 = vrot.slane %v8042, 1
        %v8044 = vadd.f32 %v8042, %v8043
        %v8045 = vsel %vm8009, %v7982, 0.0
        %v8046 = vrot.slane %v8045, 4
        %v8047 = vadd.f32 %v8045, %v8046
        %v8048 = vrot.slane %v8047, 2
        %v8049 = vadd.f32 %v8047, %v8048
        %v8050 = vrot.slane %v8049, 1
        %v8051 = vadd.f32 %v8049, %v8050
        %v8052 = vsel %vm8009, %v7983, 0.0
        %v8053 = vrot.slane %v8052, 4
        %v8054 = vadd.f32 %v8052, %v8053
        %v8055 = vrot.slane %v8054, 2
        %v8056 = vadd.f32 %v8054, %v8055
        %v8057 = vrot.slane %v8056, 1
        %v8058 = vadd.f32 %v8056, %v8057
        %v8059 = vsel %vm8009, %v7984, 0.0
        %v8060 = vrot.slane %v8059, 4
        %v8061 = vadd.f32 %v8059, %v8060
        %v8062 = vrot.slane %v8061, 2
        %v8063 = vadd.f32 %v8061, %v8062
        %v8064 = vrot.slane %v8063, 1
        %v8065 = vadd.f32 %v8063, %v8064
        %v8066 = vsel %vm8009, %v7985, 0.0
        %v8067 = vrot.slane %v8066, 4
        %v8068 = vadd.f32 %v8066, %v8067
        %v8069 = vrot.slane %v8068, 2
        %v8070 = vadd.f32 %v8068, %v8069
        %v8071 = vrot.slane %v8070, 1
        %v8072 = vadd.f32 %v8070, %v8071
        %v8073 = vsel %vm8009, %v7986, 0.0
        %v8074 = vrot.slane %v8073, 4
        %v8075 = vadd.f32 %v8073, %v8074
        %v8076 = vrot.slane %v8075, 2
        %v8077 = vadd.f32 %v8075, %v8076
        %v8078 = vrot.slane %v8077, 1
        %v8079 = vadd.f32 %v8077, %v8078
        %v8080 = vsel %vm8009, %v7987, 0.0
        %v8081 = vrot.slane %v8080, 4
        %v8082 = vadd.f32 %v8080, %v8081
        %v8083 = vrot.slane %v8082, 2
        %v8084 = vadd.f32 %v8082, %v8083
        %v8085 = vrot.slane %v8084, 1
        %v8086 = vadd.f32 %v8084, %v8085
        %v8087 = vsel %vm8009, %v7988, 0.0
        %v8088 = vrot.slane %v8087, 4
        %v8089 = vadd.f32 %v8087, %v8088
        %v8090 = vrot.slane %v8089, 2
        %v8091 = vadd.f32 %v8089, %v8090
        %v8092 = vrot.slane %v8091, 1
        %v8093 = vadd.f32 %v8091, %v8092
        %v8094 = vsel %vm8009, %v7989, 0.0
        %v8095 = vrot.slane %v8094, 4
        %v8096 = vadd.f32 %v8094, %v8095
        %v8097 = vrot.slane %v8096, 2
        %v8098 = vadd.f32 %v8096, %v8097
        %v8099 = vrot.slane %v8098, 1
        %v8100 = vadd.f32 %v8098, %v8099
        %v8101 = vsel %vm8009, %v7990, 0.0
        %v8102 = vrot.slane %v8101, 4
        %v8103 = vadd.f32 %v8101, %v8102
        %v8104 = vrot.slane %v8103, 2
        %v8105 = vadd.f32 %v8103, %v8104
        %v8106 = vrot.slane %v8105, 1
        %v8107 = vadd.f32 %v8105, %v8106
        %v8108 = vsel %vm8009, %v7991, 0.0
        %v8109 = vrot.slane %v8108, 4
        %v8110 = vadd.f32 %v8108, %v8109
        %v8111 = vrot.slane %v8110, 2
        %v8112 = vadd.f32 %v8110, %v8111
        %v8113 = vrot.slane %v8112, 1
        %v8114 = vadd.f32 %v8112, %v8113
        %v8115 = vsel %vm8009, %v7992, 0.0
        %v8116 = vrot.slane %v8115, 4
        %v8117 = vadd.f32 %v8115, %v8116
        %v8118 = vrot.slane %v8117, 2
        %v8119 = vadd.f32 %v8117, %v8118
        %v8120 = vrot.slane %v8119, 1
        %v8121 = vadd.f32 %v8119, %v8120
        %v8122 = vsel %vm8009, %v7993, 0.0
        %v8123 = vrot.slane %v8122, 4
        %v8124 = vadd.f32 %v8122, %v8123
        %v8125 = vrot.slane %v8124, 2
        %v8126 = vadd.f32 %v8124, %v8125
        %v8127 = vrot.slane %v8126, 1
        %v8128 = vadd.f32 %v8126, %v8127
        %v8129 = vsel %vm8009, %v7994, 0.0
        %v8130 = vrot.slane %v8129, 4
        %v8131 = vadd.f32 %v8129, %v8130
        %v8132 = vrot.slane %v8131, 2
        %v8133 = vadd.f32 %v8131, %v8132
        %v8134 = vrot.slane %v8133, 1
        %v8135 = vadd.f32 %v8133, %v8134
        %v8136 = vsel %vm8009, %v7995, 0.0
        %v8137 = vrot.slane %v8136, 4
        %v8138 = vadd.f32 %v8136, %v8137
        %v8139 = vrot.slane %v8138, 2
        %v8140 = vadd.f32 %v8138, %v8139
        %v8141 = vrot.slane %v8140, 1
        %v8142 = vadd.f32 %v8140, %v8141
        %v8143 = vsel %vm8009, %v7996, 0.0
        %v8144 = vrot.slane %v8143, 4
        %v8145 = vadd.f32 %v8143, %v8144
        %v8146 = vrot.slane %v8145, 2
        %v8147 = vadd.f32 %v8145, %v8146
        %v8148 = vrot.slane %v8147, 1
        %v8149 = vadd.f32 %v8147, %v8148
        %v8150 = vsel %vm8009, %v7997, 0.0
        %v8151 = vrot.slane %v8150, 4
        %v8152 = vadd.f32 %v8150, %v8151
        %v8153 = vrot.slane %v8152, 2
        %v8154 = vadd.f32 %v8152, %v8153
        %v8155 = vrot.slane %v8154, 1
        %v8156 = vadd.f32 %v8154, %v8155
        %v8157 = vsel %vm8009, %v7998, 0.0
        %v8158 = vrot.slane %v8157, 4
        %v8159 = vadd.f32 %v8157, %v8158
        %v8160 = vrot.slane %v8159, 2
        %v8161 = vadd.f32 %v8159, %v8160
        %v8162 = vrot.slane %v8161, 1
        %v8163 = vadd.f32 %v8161, %v8162
        %v8164 = vsel %vm8009, %v7999, 0.0
        %v8165 = vrot.slane %v8164, 4
        %v8166 = vadd.f32 %v8164, %v8165
        %v8167 = vrot.slane %v8166, 2
        %v8168 = vadd.f32 %v8166, %v8167
        %v8169 = vrot.slane %v8168, 1
        %v8170 = vadd.f32 %v8168, %v8169
        %v8171 = vsel %vm8009, %v8000, 0.0
        %v8172 = vrot.slane %v8171, 4
        %v8173 = vadd.f32 %v8171, %v8172
        %v8174 = vrot.slane %v8173, 2
        %v8175 = vadd.f32 %v8173, %v8174
        %v8176 = vrot.slane %v8175, 1
        %v8177 = vadd.f32 %v8175, %v8176
        %v8178 = vsel %vm8009, %v8001, 0.0
        %v8179 = vrot.slane %v8178, 4
        %v8180 = vadd.f32 %v8178, %v8179
        %v8181 = vrot.slane %v8180, 2
        %v8182 = vadd.f32 %v8180, %v8181
        %v8183 = vrot.slane %v8182, 1
        %v8184 = vadd.f32 %v8182, %v8183
        %v8185 = vsel %vm8009, %v8002, 0.0
        %v8186 = vrot.slane %v8185, 4
        %v8187 = vadd.f32 %v8185, %v8186
        %v8188 = vrot.slane %v8187, 2
        %v8189 = vadd.f32 %v8187, %v8188
        %v8190 = vrot.slane %v8189, 1
        %v8191 = vadd.f32 %v8189, %v8190
        %v8192 = vsel %vm8009, %v8003, 0.0
        %v8193 = vrot.slane %v8192, 4
        %v8194 = vadd.f32 %v8192, %v8193
        %v8195 = vrot.slane %v8194, 2
        %v8196 = vadd.f32 %v8194, %v8195
        %v8197 = vrot.slane %v8196, 1
        %v8198 = vadd.f32 %v8196, %v8197
        %v8199 = vsel %vm8009, %v8004, 0.0
        %v8200 = vrot.slane %v8199, 4
        %v8201 = vadd.f32 %v8199, %v8200
        %v8202 = vrot.slane %v8201, 2
        %v8203 = vadd.f32 %v8201, %v8202
        %v8204 = vrot.slane %v8203, 1
        %v8205 = vadd.f32 %v8203, %v8204
        %v8206 = vsel %vm8009, %v8005, 0.0
        %v8207 = vrot.slane %v8206, 4
        %v8208 = vadd.f32 %v8206, %v8207
        %v8209 = vrot.slane %v8208, 2
        %v8210 = vadd.f32 %v8208, %v8209
        %v8211 = vrot.slane %v8210, 1
        %v8212 = vadd.f32 %v8210, %v8211
        %v8213 = vsel %vm8009, %v8006, 0.0
        %v8214 = vrot.slane %v8213, 4
        %v8215 = vadd.f32 %v8213, %v8214
        %v8216 = vrot.slane %v8215, 2
        %v8217 = vadd.f32 %v8215, %v8216
        %v8218 = vrot.slane %v8217, 1
        %v8219 = vadd.f32 %v8217, %v8218
        %v8220 = vsel %vm8009, %v8007, 0.0
        %v8221 = vrot.slane %v8220, 4
        %v8222 = vadd.f32 %v8220, %v8221
        %v8223 = vrot.slane %v8222, 2
        %v8224 = vadd.f32 %v8222, %v8223
        %v8225 = vrot.slane %v8224, 1
        %v8226 = vadd.f32 %v8224, %v8225
        %v8227 = vsel %vm8009, %v8008, 0.0
        %v8228 = vrot.slane %v8227, 4
        %v8229 = vadd.f32 %v8227, %v8228
        %v8230 = vrot.slane %v8229, 2
        %v8231 = vadd.f32 %v8229, %v8230
        %v8232 = vrot.slane %v8231, 1
        %v8233 = vadd.f32 %v8231, %v8232
        %v8266 = vsel %vm2143, %v3188, %v3181
        %v8267 = vsel %vm2145, %v3195, %v8266
        %v8268 = vsel %vm2147, %v3202, %v8267
        %v8269 = vsel %vm2149, %v3209, %v8268
        %v8270 = vsel %vm2151, %v3216, %v8269
        %v8271 = vsel %vm2153, %v3223, %v8270
        %v8272 = vsel %vm2155, %v3230, %v8271
        %v8273 = vsel %vm2143, %v3244, %v3237
        %v8274 = vsel %vm2145, %v3251, %v8273
        %v8275 = vsel %vm2147, %v3258, %v8274
        %v8276 = vsel %vm2149, %v3265, %v8275
        %v8277 = vsel %vm2151, %v3272, %v8276
        %v8278 = vsel %vm2153, %v3279, %v8277
        %v8279 = vsel %vm2155, %v3286, %v8278
        %v8280 = vsel %vm2143, %v3300, %v3293
        %v8281 = vsel %vm2145, %v3307, %v8280
        %v8282 = vsel %vm2147, %v3314, %v8281
        %v8283 = vsel %vm2149, %v3321, %v8282
        %v8284 = vsel %vm2151, %v3328, %v8283
        %v8285 = vsel %vm2153, %v3335, %v8284
        %v8286 = vsel %vm2155, %v3342, %v8285
        %v8287 = vsel %vm2143, %v3356, %v3349
        %v8288 = vsel %vm2145, %v3363, %v8287
        %v8289 = vsel %vm2147, %v3370, %v8288
        %v8290 = vsel %vm2149, %v3377, %v8289
        %v8291 = vsel %vm2151, %v3384, %v8290
        %v8292 = vsel %vm2153, %v3391, %v8291
        %v8293 = vsel %vm2155, %v3398, %v8292
        %v8330 = vsel %vm2143, %v4821, %v4814
        %v8331 = vsel %vm2145, %v4828, %v8330
        %v8332 = vsel %vm2147, %v4835, %v8331
        %v8333 = vsel %vm2149, %v4842, %v8332
        %v8334 = vsel %vm2151, %v4849, %v8333
        %v8335 = vsel %vm2153, %v4856, %v8334
        %v8336 = vsel %vm2155, %v4863, %v8335
        %v8337 = vsel %vm2143, %v4877, %v4870
        %v8338 = vsel %vm2145, %v4884, %v8337
        %v8339 = vsel %vm2147, %v4891, %v8338
        %v8340 = vsel %vm2149, %v4898, %v8339
        %v8341 = vsel %vm2151, %v4905, %v8340
        %v8342 = vsel %vm2153, %v4912, %v8341
        %v8343 = vsel %vm2155, %v4919, %v8342
        %v8344 = vsel %vm2143, %v4933, %v4926
        %v8345 = vsel %vm2145, %v4940, %v8344
        %v8346 = vsel %vm2147, %v4947, %v8345
        %v8347 = vsel %vm2149, %v4954, %v8346
        %v8348 = vsel %vm2151, %v4961, %v8347
        %v8349 = vsel %vm2153, %v4968, %v8348
        %v8350 = vsel %vm2155, %v4975, %v8349
        %v8351 = vsel %vm2143, %v4989, %v4982
        %v8352 = vsel %vm2145, %v4996, %v8351
        %v8353 = vsel %vm2147, %v5003, %v8352
        %v8354 = vsel %vm2149, %v5010, %v8353
        %v8355 = vsel %vm2151, %v5017, %v8354
        %v8356 = vsel %vm2153, %v5024, %v8355
        %v8357 = vsel %vm2155, %v5031, %v8356
        %v8394 = vsel %vm2143, %v6422, %v6415
        %v8395 = vsel %vm2145, %v6429, %v8394
        %v8396 = vsel %vm2147, %v6436, %v8395
        %v8397 = vsel %vm2149, %v6443, %v8396
        %v8398 = vsel %vm2151, %v6450, %v8397
        %v8399 = vsel %vm2153, %v6457, %v8398
        %v8400 = vsel %vm2155, %v6464, %v8399
        %v8401 = vsel %vm2143, %v6478, %v6471
        %v8402 = vsel %vm2145, %v6485, %v8401
        %v8403 = vsel %vm2147, %v6492, %v8402
        %v8404 = vsel %vm2149, %v6499, %v8403
        %v8405 = vsel %vm2151, %v6506, %v8404
        %v8406 = vsel %vm2153, %v6513, %v8405
        %v8407 = vsel %vm2155, %v6520, %v8406
        %v8408 = vsel %vm2143, %v6534, %v6527
        %v8409 = vsel %vm2145, %v6541, %v8408
        %v8410 = vsel %vm2147, %v6548, %v8409
        %v8411 = vsel %vm2149, %v6555, %v8410
        %v8412 = vsel %vm2151, %v6562, %v8411
        %v8413 = vsel %vm2153, %v6569, %v8412
        %v8414 = vsel %vm2155, %v6576, %v8413
        %v8415 = vsel %vm2143, %v6590, %v6583
        %v8416 = vsel %vm2145, %v6597, %v8415
        %v8417 = vsel %vm2147, %v6604, %v8416
        %v8418 = vsel %vm2149, %v6611, %v8417
        %v8419 = vsel %vm2151, %v6618, %v8418
        %v8420 = vsel %vm2153, %v6625, %v8419
        %v8421 = vsel %vm2155, %v6632, %v8420
        %v8458 = vsel %vm2143, %v8023, %v8016
        %v8459 = vsel %vm2145, %v8030, %v8458
        %v8460 = vsel %vm2147, %v8037, %v8459
        %v8461 = vsel %vm2149, %v8044, %v8460
        %v8462 = vsel %vm2151, %v8051, %v8461
        %v8463 = vsel %vm2153, %v8058, %v8462
        %v8464 = vsel %vm2155, %v8065, %v8463
        %v8465 = vsel %vm2143, %v8079, %v8072
        %v8466 = vsel %vm2145, %v8086, %v8465
        %v8467 = vsel %vm2147, %v8093, %v8466
        %v8468 = vsel %vm2149, %v8100, %v8467
        %v8469 = vsel %vm2151, %v8107, %v8468
        %v8470 = vsel %vm2153, %v8114, %v8469
        %v8471 = vsel %vm2155, %v8121, %v8470
        %v8472 = vsel %vm2143, %v8135, %v8128
        %v8473 = vsel %vm2145, %v8142, %v8472
        %v8474 = vsel %vm2147, %v8149, %v8473
        %v8475 = vsel %vm2149, %v8156, %v8474
        %v8476 = vsel %vm2151, %v8163, %v8475
        %v8477 = vsel %vm2153, %v8170, %v8476
        %v8478 = vsel %vm2155, %v8177, %v8477
        %v8479 = vsel %vm2143, %v8191, %v8184
        %v8480 = vsel %vm2145, %v8198, %v8479
        %v8481 = vsel %vm2147, %v8205, %v8480
        %v8482 = vsel %vm2149, %v8212, %v8481
        %v8483 = vsel %vm2151, %v8219, %v8482
        %v8484 = vsel %vm2153, %v8226, %v8483
        %v8485 = vsel %vm2155, %v8233, %v8484
        %v8490 = vsel %vm1884, %v8272, %v8336
        %v8491 = vsel %vm1884, %v8279, %v8343
        %v8492 = vsel %vm1884, %v8286, %v8350
        %v8493 = vsel %vm1884, %v8293, %v8357
        %vm8494 = vcmask 523264
        %v8495 = vsel %vm8494, %v8490, %v8400
        %v8496 = vsel %vm8494, %v8491, %v8407
        %v8497 = vsel %vm8494, %v8492, %v8414
        %v8498 = vsel %vm8494, %v8493, %v8421
        %v8499 = vsel %vm1022, %v8495, %v8464
        %v8500 = vsel %vm1022, %v8496, %v8471
        %v8501 = vsel %vm1022, %v8497, %v8478
        %v8502 = vsel %vm1022, %v8498, %v8485
        %v8503 = vld [vmem:[%s8] sm:$0xff]
        %v8504 = vld [vmem:[%s8 + $0x8] sm:$0xff]
        %v8505 = vld [vmem:[%s8 + $0x10] sm:$0xff]
        %v8506 = vld [vmem:[%s8 + $0x18] sm:$0xff]
        %v8507 = vld [vmem:[%s8 + $0x20] sm:$0xff]
        %v8508 = vld [vmem:[%s8 + $0x28] sm:$0xff]
        %v8509 = vld [vmem:[%s8 + $0x30] sm:$0xff]
        %v8510 = vld [vmem:[%s8 + $0x38] sm:$0xff]
        %v8511 = vld [vmem:[%s8 + $0x40] sm:$0xff]
        %v8512 = vld [vmem:[%s8 + $0x48] sm:$0xff]
        %v8513 = vld [vmem:[%s8 + $0x50] sm:$0xff]
        %v8514 = vld [vmem:[%s8 + $0x58] sm:$0xff]
        %v8515 = vld [vmem:[%s8 + $0x60] sm:$0xff]
        %v8516 = vld [vmem:[%s8 + $0x68] sm:$0xff]
        %v8517 = vld [vmem:[%s8 + $0x70] sm:$0xff]
        %v8518 = vld [vmem:[%s8 + $0x78] sm:$0xff]
        %v8519 = vld [vmem:[%s9 + $0x1] sm:$0x1]
        %v8520 = vlaneseq
        %v8521 = vshrl.u32 %v8520, 7
        %v8522 = vsub.s32 0, %v8521
        %v8523 = vrot.slane %v8519, %v8522
        %8524 = vmatprep.subr.mxu0 0.0
        %8525 = vmatpush1.msra.mxu0 %v8518
        %8526 = vmatprep.subr.mxu0 0.0
        %8527 = vmatpush1.msra.mxu0 %v8517
        %8528 = vmatprep.subr.mxu0 0.0
        %8529 = vmatpush1.msra.mxu0 %v8516
        %8530 = vmatprep.subr.mxu0 0.0
        %8531 = vmatpush1.msra.mxu0 %v8515
        %8532 = vmatprep.subr.mxu0 0.0
        %8533 = vmatpush1.msra.mxu0 %v8514
        %8534 = vmatprep.subr.mxu0 0.0
        %8535 = vmatpush1.msra.mxu0 %v8513
        %8536 = vmatprep.subr.mxu0 0.0
        %8537 = vmatpush1.msra.mxu0 %v8512
        %8538 = vmatprep.subr.mxu0 0.0
        %8539 = vmatpush1.msra.mxu0 %v8511
        %8540 = vmatprep.subr.mxu0 0.0
        %8541 = vmatpush1.msra.mxu0 %v8510
        %8542 = vmatprep.subr.mxu0 0.0
        %8543 = vmatpush1.msra.mxu0 %v8509
        %8544 = vmatprep.subr.mxu0 0.0
        %8545 = vmatpush1.msra.mxu0 %v8508
        %8546 = vmatprep.subr.mxu0 0.0
        %8547 = vmatpush1.msra.mxu0 %v8507
        %8548 = vmatprep.subr.mxu0 0.0
        %8549 = vmatpush1.msra.mxu0 %v8506
        %8550 = vmatprep.subr.mxu0 0.0
        %8551 = vmatpush1.msra.mxu0 %v8505
        %8552 = vmatprep.subr.mxu0 0.0
        %8553 = vmatpush1.msra.mxu0 %v8504
        %8554 = vmatprep.subr.mxu0 0.0
        %8555 = vmatpush1.msra.mxu0 %v8503
        %8556 = vmatprep.subr.mxu0 0.0
        %8557 = vmatpush2.msra.mxu0 0.0
        %8558 = vmatprep.subr.mxu0 0.0
        %8559 = vmatpush2.msra.mxu0 0.0
        %8560 = vmatprep.subr.mxu0 0.0
        %8561 = vmatpush2.msra.mxu0 0.0
        %8562 = vmatprep.subr.mxu0 0.0
        %8563 = vmatpush2.msra.mxu0 0.0
        %8564 = vmatprep.subr.mxu0 0.0
        %8565 = vmatpush2.msra.mxu0 0.0
        %8566 = vmatprep.subr.mxu0 0.0
        %8567 = vmatpush2.msra.mxu0 0.0
        %8568 = vmatprep.subr.mxu0 0.0
        %8569 = vmatpush2.msra.mxu0 0.0
        %8570 = vmatprep.subr.mxu0 0.0
        %8571 = vmatpush2.msra.mxu0 0.0
        %8572 = vmatprep.subr.mxu0 0.0
        %8573 = vmatpush2.msra.mxu0 0.0
        %8574 = vmatprep.subr.mxu0 0.0
        %8575 = vmatpush2.msra.mxu0 0.0
        %8576 = vmatprep.subr.mxu0 0.0
        %8577 = vmatpush2.msra.mxu0 0.0
        %8578 = vmatprep.subr.mxu0 0.0
        %8579 = vmatpush2.msra.mxu0 0.0
        %8580 = vmatprep.subr.mxu0 0.0
        %8581 = vmatpush2.msra.mxu0 0.0
        %8582 = vmatprep.subr.mxu0 0.0
        %8583 = vmatpush2.msra.mxu0 0.0
        %8584 = vmatprep.subr.mxu0 0.0
        %8585 = vmatpush2.msra.mxu0 0.0
        %8586 = vmatprep.subr.mxu0 0.0
        %8587 = vmatpush2.msra.mxu0 0.0
        %8588 = vmatprep.mubr.f32.mxu0 0.0
        %8589 = vmatmul.mubr.f32.gmra.mxu0 %v8499
        %v8590 = vpop.f32.mrf.mxu0
        %v8591 = vadd.f32 %v8523, %v8590
        %v8592 = vpop.f32.mrf.mxu0
        %8593 = vmatprep.mubr.f32.mxu0 0.0
        %8594 = vmatmul.mubr.f32.gmra.mxu0 %v8500
        %v8595 = vpop.f32.mrf.mxu0
        %v8596 = vadd.f32 %v8523, %v8595
        %v8597 = vpop.f32.mrf.mxu0
        %8598 = vmatprep.mubr.f32.mxu0 0.0
        %8599 = vmatmul.mubr.f32.gmra.mxu0 %v8501
        %v8600 = vpop.f32.mrf.mxu0
        %v8601 = vadd.f32 %v8523, %v8600
        %v8602 = vpop.f32.mrf.mxu0
        %8603 = vmatprep.mubr.f32.mxu0 0.0
        %8604 = vmatmul.mubr.f32.gmra.mxu0 %v8502
        %v8605 = vpop.f32.mrf.mxu0
        %v8606 = vadd.f32 %v8523, %v8605
        %v8607 = vpop.f32.mrf.mxu0
        %8608 = vdwg.mxu0
        %v8609 = vadd.f32 %v968, %v8591
        %v8610 = vadd.f32 %v973, %v8596
        %v8611 = vadd.f32 %v978, %v8601
        %v8612 = vadd.f32 %v983, %v8606
        %v8613 = vld [vmem:[%s9 + $0x2] sm:$0x1]
        %v8614 = vld [vmem:[%s9 + $0x3] sm:$0x1]
        %v8615 = vsel %vm1022, %v8609, 0.0
        %8616 = vadd.xlane.f32.xlu0 %v8615
        %v8617 = vpop.xlane.xlu0 %8616
        %v8618 = vsel %vm1022, %v8610, 0.0
        %8619 = vadd.xlane.f32.xlu0 %v8618
        %v8620 = vpop.xlane.xlu0 %8619
        %v8621 = vsel %vm1022, %v8611, 0.0
        %8622 = vadd.xlane.f32.xlu0 %v8621
        %v8623 = vpop.xlane.xlu0 %8622
        %v8624 = vsel %vm1022, %v8612, 0.0
        %8625 = vadd.xlane.f32.xlu0 %v8624
        %v8626 = vpop.xlane.xlu0 %8625
        %v8627 = vrcp.pop 96.0
        %v8628 = vmul.f32 %v8617, %v8627
        %v8629 = vmul.f32 %v8620, %v8627
        %v8630 = vmul.f32 %v8623, %v8627
        %v8631 = vmul.f32 %v8626, %v8627
        %v8632 = vsub.f32 %v8609, %v8628
        %v8633 = vsub.f32 %v8610, %v8629
        %v8634 = vsub.f32 %v8611, %v8630
        %v8635 = vsub.f32 %v8612, %v8631
        %v8636 = vmul.f32 %v8632, %v8632
        %v8637 = vmul.f32 %v8633, %v8633
        %v8638 = vmul.f32 %v8634, %v8634
        %v8639 = vmul.f32 %v8635, %v8635
        %v8640 = vsel %vm1022, %v8636, 0.0
        %8641 = vadd.xlane.f32.xlu0 %v8640
        %v8642 = vpop.xlane.xlu0 %8641
        %v8643 = vsel %vm1022, %v8637, 0.0
        %8644 = vadd.xlane.f32.xlu0 %v8643
        %v8645 = vpop.xlane.xlu0 %8644
        %v8646 = vsel %vm1022, %v8638, 0.0
        %8647 = vadd.xlane.f32.xlu0 %v8646
        %v8648 = vpop.xlane.xlu0 %8647
        %v8649 = vsel %vm1022, %v8639, 0.0
        %8650 = vadd.xlane.f32.xlu0 %v8649
        %v8651 = vpop.xlane.xlu0 %8650
        %v8652 = vmul.f32 %v8642, %v8627
        %v8653 = vmul.f32 %v8645, %v8627
        %v8654 = vmul.f32 %v8648, %v8627
        %v8655 = vmul.f32 %v8651, %v8627
        %v8656 = vadd.f32 %v8652, 1e-05
        %v8657 = vadd.f32 %v8653, 1e-05
        %v8658 = vadd.f32 %v8654, 1e-05
        %v8659 = vadd.f32 %v8655, 1e-05
        %v8660 = vrsqrt.pop %v8656
        %v8661 = vrsqrt.pop %v8657
        %v8662 = vrsqrt.pop %v8658
        %v8663 = vrsqrt.pop %v8659
        %v8664 = vmul.f32 %v8632, %v8660
        %v8665 = vmul.f32 %v8633, %v8661
        %v8666 = vmul.f32 %v8634, %v8662
        %v8667 = vmul.f32 %v8635, %v8663
        %v8668 = vlaneseq
        %v8669 = vshrl.u32 %v8668, 7
        %v8670 = vsub.s32 0, %v8669
        %v8671 = vrot.slane %v8613, %v8670
        %v8672 = vmul.f32 %v8664, %v8671
        %v8673 = vmul.f32 %v8665, %v8671
        %v8674 = vmul.f32 %v8666, %v8671
        %v8675 = vmul.f32 %v8667, %v8671
        %v8676 = vlaneseq
        %v8677 = vshrl.u32 %v8676, 7
        %v8678 = vsub.s32 0, %v8677
        %v8679 = vrot.slane %v8614, %v8678
        %v8680 = vadd.f32 %v8672, %v8679
        %v8681 = vadd.f32 %v8673, %v8679
        %v8682 = vadd.f32 %v8674, %v8679
        %v8683 = vadd.f32 %v8675, %v8679
        %v8684 = vld [vmem:[%s10] sm:$0xff]
        %v8685 = vld [vmem:[%s10 + $0x8] sm:$0xff]
        %v8686 = vld [vmem:[%s10 + $0x10] sm:$0xff]
        %v8687 = vld [vmem:[%s10 + $0x18] sm:$0xff]
        %v8688 = vld [vmem:[%s10 + $0x20] sm:$0xff]
        %v8689 = vld [vmem:[%s10 + $0x28] sm:$0xff]
        %v8690 = vld [vmem:[%s10 + $0x30] sm:$0xff]
        %v8691 = vld [vmem:[%s10 + $0x38] sm:$0xff]
        %v8692 = vld [vmem:[%s10 + $0x40] sm:$0xff]
        %v8693 = vld [vmem:[%s10 + $0x48] sm:$0xff]
        %v8694 = vld [vmem:[%s10 + $0x50] sm:$0xff]
        %v8695 = vld [vmem:[%s10 + $0x58] sm:$0xff]
        %v8696 = vld [vmem:[%s10 + $0x60] sm:$0xff]
        %v8697 = vld [vmem:[%s10 + $0x68] sm:$0xff]
        %v8698 = vld [vmem:[%s10 + $0x70] sm:$0xff]
        %v8699 = vld [vmem:[%s10 + $0x78] sm:$0xff]
        %v8700 = vld [vmem:[%s10 + $0x80] sm:$0xff]
        %v8701 = vld [vmem:[%s10 + $0x88] sm:$0xff]
        %v8702 = vld [vmem:[%s10 + $0x90] sm:$0xff]
        %v8703 = vld [vmem:[%s10 + $0x98] sm:$0xff]
        %v8704 = vld [vmem:[%s10 + $0xa0] sm:$0xff]
        %v8705 = vld [vmem:[%s10 + $0xa8] sm:$0xff]
        %v8706 = vld [vmem:[%s10 + $0xb0] sm:$0xff]
        %v8707 = vld [vmem:[%s10 + $0xb8] sm:$0xff]
        %v8708 = vld [vmem:[%s11] sm:$0x3]
        %v8710 = vlaneseq
        %v8711 = vshrl.u32 %v8710, 7
        %v8712 = vsub.s32 0, %v8711
        %v8713 = vrot.slane %v8708, %v8712
        %v8714 = vlaneseq
        %v8715 = vshrl.u32 %v8714, 7
        %v8716 = vsub.s32 1, %v8715
        %v8717 = vrot.slane %v8708, %v8716
        %v8721 = vsel %vm1022, %v8680, 0
        %v8724 = vsel %vm1022, %v8681, 0
        %v8727 = vsel %vm1022, %v8682, 0
        %v8730 = vsel %vm1022, %v8683, 0
        %8732 = vmatprep.subr.mxu0 0.0
        %8733 = vmatpush1.msra.mxu0 0.0
        %8734 = vmatprep.subr.mxu0 0.0
        %8735 = vmatpush1.msra.mxu0 0.0
        %8736 = vmatprep.subr.mxu0 0.0
        %8737 = vmatpush1.msra.mxu0 0.0
        %8738 = vmatprep.subr.mxu0 0.0
        %8739 = vmatpush1.msra.mxu0 0.0
        %8740 = vmatprep.subr.mxu0 %v8707
        %8741 = vmatpush1.msra.mxu0 %v8706
        %8742 = vmatprep.subr.mxu0 %v8705
        %8743 = vmatpush1.msra.mxu0 %v8704
        %8744 = vmatprep.subr.mxu0 %v8703
        %8745 = vmatpush1.msra.mxu0 %v8702
        %8746 = vmatprep.subr.mxu0 %v8701
        %8747 = vmatpush1.msra.mxu0 %v8700
        %8748 = vmatprep.subr.mxu0 %v8699
        %8749 = vmatpush1.msra.mxu0 %v8698
        %8750 = vmatprep.subr.mxu0 %v8697
        %8751 = vmatpush1.msra.mxu0 %v8696
        %8752 = vmatprep.subr.mxu0 %v8695
        %8753 = vmatpush1.msra.mxu0 %v8694
        %8754 = vmatprep.subr.mxu0 %v8693
        %8755 = vmatpush1.msra.mxu0 %v8692
        %8756 = vmatprep.subr.mxu0 %v8691
        %8757 = vmatpush1.msra.mxu0 %v8690
        %8758 = vmatprep.subr.mxu0 %v8689
        %8759 = vmatpush1.msra.mxu0 %v8688
        %8760 = vmatprep.subr.mxu0 %v8687
        %8761 = vmatpush1.msra.mxu0 %v8686
        %8762 = vmatprep.subr.mxu0 %v8685
        %8763 = vmatpush1.msra.mxu0 %v8684
        %8764 = vmatprep.subr.mxu0 0.0
        %8765 = vmatpush2.msra.mxu0 0.0
        %8766 = vmatprep.subr.mxu0 0.0
        %8767 = vmatpush2.msra.mxu0 0.0
        %8768 = vmatprep.subr.mxu0 0.0
        %8769 = vmatpush2.msra.mxu0 0.0
        %8770 = vmatprep.subr.mxu0 0.0
        %8771 = vmatpush2.msra.mxu0 0.0
        %8772 = vmatprep.subr.mxu0 0.0
        %8773 = vmatpush2.msra.mxu0 0.0
        %8774 = vmatprep.subr.mxu0 0.0
        %8775 = vmatpush2.msra.mxu0 0.0
        %8776 = vmatprep.subr.mxu0 0.0
        %8777 = vmatpush2.msra.mxu0 0.0
        %8778 = vmatprep.subr.mxu0 0.0
        %8779 = vmatpush2.msra.mxu0 0.0
        %8780 = vmatprep.subr.mxu0 0.0
        %8781 = vmatpush2.msra.mxu0 0.0
        %8782 = vmatprep.subr.mxu0 0.0
        %8783 = vmatpush2.msra.mxu0 0.0
        %8784 = vmatprep.subr.mxu0 0.0
        %8785 = vmatpush2.msra.mxu0 0.0
        %8786 = vmatprep.subr.mxu0 0.0
        %8787 = vmatpush2.msra.mxu0 0.0
        %8788 = vmatprep.subr.mxu0 0.0
        %8789 = vmatpush2.msra.mxu0 0.0
        %8790 = vmatprep.subr.mxu0 0.0
        %8791 = vmatpush2.msra.mxu0 0.0
        %8792 = vmatprep.subr.mxu0 0.0
        %8793 = vmatpush2.msra.mxu0 0.0
        %8794 = vmatprep.subr.mxu0 0.0
        %8795 = vmatpush2.msra.mxu0 0.0
        %8796 = vmatprep.mubr.f32.mxu0 0.0
        %8797 = vmatmul.mubr.f32.gmra.mxu0 %v8721
        %v8798 = vpop.f32.mrf.mxu0
        %v8799 = vadd.f32 %v8713, %v8798
        %v8800 = vpop.f32.mrf.mxu0
        %v8801 = vadd.f32 %v8717, %v8800
        %8802 = vmatprep.mubr.f32.mxu0 0.0
        %8803 = vmatmul.mubr.f32.gmra.mxu0 %v8724
        %v8804 = vpop.f32.mrf.mxu0
        %v8805 = vadd.f32 %v8713, %v8804
        %v8806 = vpop.f32.mrf.mxu0
        %v8807 = vadd.f32 %v8717, %v8806
        %8808 = vmatprep.mubr.f32.mxu0 0.0
        %8809 = vmatmul.mubr.f32.gmra.mxu0 %v8727
        %v8810 = vpop.f32.mrf.mxu0
        %v8811 = vadd.f32 %v8713, %v8810
        %v8812 = vpop.f32.mrf.mxu0
        %v8813 = vadd.f32 %v8717, %v8812
        %8814 = vmatprep.mubr.f32.mxu0 0.0
        %8815 = vmatmul.mubr.f32.gmra.mxu0 %v8730
        %v8816 = vpop.f32.mrf.mxu0
        %v8817 = vadd.f32 %v8713, %v8816
        %v8818 = vpop.f32.mrf.mxu0
        %v8819 = vadd.f32 %v8717, %v8818
        %8820 = vdwg.mxu0
        %v8821 = vmax.f32 %v8799, 0.0
        %v8822 = vmax.f32 %v8801, 0.0
        %v8823 = vmax.f32 %v8805, 0.0
        %v8824 = vmax.f32 %v8807, 0.0
        %v8825 = vmax.f32 %v8811, 0.0
        %v8826 = vmax.f32 %v8813, 0.0
        %v8827 = vmax.f32 %v8817, 0.0
        %v8828 = vmax.f32 %v8819, 0.0
        %v8829 = vld [vmem:[%s12] sm:$0xff]
        %v8830 = vld [vmem:[%s12 + $0x8] sm:$0xff]
        %v8831 = vld [vmem:[%s12 + $0x10] sm:$0xff]
        %v8832 = vld [vmem:[%s12 + $0x18] sm:$0xff]
        %v8833 = vld [vmem:[%s12 + $0x20] sm:$0xff]
        %v8834 = vld [vmem:[%s12 + $0x28] sm:$0xff]
        %v8835 = vld [vmem:[%s12 + $0x30] sm:$0xff]
        %v8836 = vld [vmem:[%s12 + $0x38] sm:$0xff]
        %v8837 = vld [vmem:[%s12 + $0x40] sm:$0xff]
        %v8838 = vld [vmem:[%s12 + $0x48] sm:$0xff]
        %v8839 = vld [vmem:[%s12 + $0x50] sm:$0xff]
        %v8840 = vld [vmem:[%s12 + $0x58] sm:$0xff]
        %v8841 = vld [vmem:[%s12 + $0x60] sm:$0xff]
        %v8842 = vld [vmem:[%s12 + $0x68] sm:$0xff]
        %v8843 = vld [vmem:[%s12 + $0x70] sm:$0xff]
        %v8844 = vld [vmem:[%s12 + $0x78] sm:$0xff]
        %v8845 = vld [vmem:[%s12 + $0x80] sm:$0xff]
        %v8846 = vld [vmem:[%s12 + $0x88] sm:$0xff]
        %v8847 = vld [vmem:[%s12 + $0x90] sm:$0xff]
        %v8848 = vld [vmem:[%s12 + $0x98] sm:$0xff]
        %v8849 = vld [vmem:[%s12 + $0xa0] sm:$0xff]
        %v8850 = vld [vmem:[%s12 + $0xa8] sm:$0xff]
        %v8851 = vld [vmem:[%s12 + $0xb0] sm:$0xff]
        %v8852 = vld [vmem:[%s12 + $0xb8] sm:$0xff]
        %v8853 = vld [vmem:[%s9 + $0x4] sm:$0x1]
        %v8854 = vlaneseq
        %v8855 = vshrl.u32 %v8854, 7
        %v8856 = vsub.s32 0, %v8855
        %v8857 = vrot.slane %v8853, %v8856
        %v8859 = vsel %vm8494, %v8822, 0
        %v8862 = vsel %vm8494, %v8824, 0
        %v8865 = vsel %vm8494, %v8826, 0
        %v8868 = vsel %vm8494, %v8828, 0
        %8870 = vmatprep.subr.mxu0 0.0
        %8871 = vmatpush1.msra.mxu0 %v8844
        %8872 = vmatprep.subr.mxu0 0.0
        %8873 = vmatpush1.msra.mxu0 %v8843
        %8874 = vmatprep.subr.mxu0 0.0
        %8875 = vmatpush1.msra.mxu0 %v8842
        %8876 = vmatprep.subr.mxu0 0.0
        %8877 = vmatpush1.msra.mxu0 %v8841
        %8878 = vmatprep.subr.mxu0 0.0
        %8879 = vmatpush1.msra.mxu0 %v8840
        %8880 = vmatprep.subr.mxu0 0.0
        %8881 = vmatpush1.msra.mxu0 %v8839
        %8882 = vmatprep.subr.mxu0 0.0
        %8883 = vmatpush1.msra.mxu0 %v8838
        %8884 = vmatprep.subr.mxu0 0.0
        %8885 = vmatpush1.msra.mxu0 %v8837
        %8886 = vmatprep.subr.mxu0 0.0
        %8887 = vmatpush1.msra.mxu0 %v8836
        %8888 = vmatprep.subr.mxu0 0.0
        %8889 = vmatpush1.msra.mxu0 %v8835
        %8890 = vmatprep.subr.mxu0 0.0
        %8891 = vmatpush1.msra.mxu0 %v8834
        %8892 = vmatprep.subr.mxu0 0.0
        %8893 = vmatpush1.msra.mxu0 %v8833
        %8894 = vmatprep.subr.mxu0 0.0
        %8895 = vmatpush1.msra.mxu0 %v8832
        %8896 = vmatprep.subr.mxu0 0.0
        %8897 = vmatpush1.msra.mxu0 %v8831
        %8898 = vmatprep.subr.mxu0 0.0
        %8899 = vmatpush1.msra.mxu0 %v8830
        %8900 = vmatprep.subr.mxu0 0.0
        %8901 = vmatpush1.msra.mxu0 %v8829
        %8902 = vmatprep.subr.mxu0 0.0
        %8903 = vmatpush2.msra.mxu0 0.0
        %8904 = vmatprep.subr.mxu0 0.0
        %8905 = vmatpush2.msra.mxu0 0.0
        %8906 = vmatprep.subr.mxu0 0.0
        %8907 = vmatpush2.msra.mxu0 0.0
        %8908 = vmatprep.subr.mxu0 0.0
        %8909 = vmatpush2.msra.mxu0 0.0
        %8910 = vmatprep.subr.mxu0 0.0
        %8911 = vmatpush2.msra.mxu0 0.0
        %8912 = vmatprep.subr.mxu0 0.0
        %8913 = vmatpush2.msra.mxu0 0.0
        %8914 = vmatprep.subr.mxu0 0.0
        %8915 = vmatpush2.msra.mxu0 0.0
        %8916 = vmatprep.subr.mxu0 0.0
        %8917 = vmatpush2.msra.mxu0 0.0
        %8918 = vmatprep.subr.mxu0 0.0
        %8919 = vmatpush2.msra.mxu0 %v8852
        %8920 = vmatprep.subr.mxu0 0.0
        %8921 = vmatpush2.msra.mxu0 %v8851
        %8922 = vmatprep.subr.mxu0 0.0
        %8923 = vmatpush2.msra.mxu0 %v8850
        %8924 = vmatprep.subr.mxu0 0.0
        %8925 = vmatpush2.msra.mxu0 %v8849
        %8926 = vmatprep.subr.mxu0 0.0
        %8927 = vmatpush2.msra.mxu0 %v8848
        %8928 = vmatprep.subr.mxu0 0.0
        %8929 = vmatpush2.msra.mxu0 %v8847
        %8930 = vmatprep.subr.mxu0 0.0
        %8931 = vmatpush2.msra.mxu0 %v8846
        %8932 = vmatprep.subr.mxu0 0.0
        %8933 = vmatpush2.msra.mxu0 %v8845
        %8934 = vmatprep.mubr.f32.mxu0 %v8859
        %8935 = vmatmul.mubr.f32.gmra.mxu0 %v8821
        %v8936 = vpop.f32.mrf.mxu0
        %v8937 = vadd.f32 %v8857, %v8936
        %v8938 = vpop.f32.mrf.mxu0
        %8939 = vmatprep.mubr.f32.mxu0 %v8862
        %8940 = vmatmul.mubr.f32.gmra.mxu0 %v8823
        %v8941 = vpop.f32.mrf.mxu0
        %v8942 = vadd.f32 %v8857, %v8941
        %v8943 = vpop.f32.mrf.mxu0
        %8944 = vmatprep.mubr.f32.mxu0 %v8865
        %8945 = vmatmul.mubr.f32.gmra.mxu0 %v8825
        %v8946 = vpop.f32.mrf.mxu0
        %v8947 = vadd.f32 %v8857, %v8946
        %v8948 = vpop.f32.mrf.mxu0
        %8949 = vmatprep.mubr.f32.mxu0 %v8868
        %8950 = vmatmul.mubr.f32.gmra.mxu0 %v8827
        %v8951 = vpop.f32.mrf.mxu0
        %v8952 = vadd.f32 %v8857, %v8951
        %v8953 = vpop.f32.mrf.mxu0
        %8954 = vdwg.mxu0
        %v8955 = vadd.f32 %v8680, %v8937
        %v8956 = vadd.f32 %v8681, %v8942
        %v8957 = vadd.f32 %v8682, %v8947
        %v8958 = vadd.f32 %v8683, %v8952
        %v8959 = vld [vmem:[%s9 + $0x5] sm:$0x1]
        %v8960 = vld [vmem:[%s9 + $0x6] sm:$0x1]
        %v8961 = vsel %vm1022, %v8955, 0.0
        %8962 = vadd.xlane.f32.xlu0 %v8961
        %v8963 = vpop.xlane.xlu0 %8962
        %v8964 = vsel %vm1022, %v8956, 0.0
        %8965 = vadd.xlane.f32.xlu0 %v8964
        %v8966 = vpop.xlane.xlu0 %8965
        %v8967 = vsel %vm1022, %v8957, 0.0
        %8968 = vadd.xlane.f32.xlu0 %v8967
        %v8969 = vpop.xlane.xlu0 %8968
        %v8970 = vsel %vm1022, %v8958, 0.0
        %8971 = vadd.xlane.f32.xlu0 %v8970
        %v8972 = vpop.xlane.xlu0 %8971
        %v8973 = vmul.f32 %v8963, %v8627
        %v8974 = vmul.f32 %v8966, %v8627
        %v8975 = vmul.f32 %v8969, %v8627
        %v8976 = vmul.f32 %v8972, %v8627
        %v8977 = vsub.f32 %v8955, %v8973
        %v8978 = vsub.f32 %v8956, %v8974
        %v8979 = vsub.f32 %v8957, %v8975
        %v8980 = vsub.f32 %v8958, %v8976
        %v8981 = vmul.f32 %v8977, %v8977
        %v8982 = vmul.f32 %v8978, %v8978
        %v8983 = vmul.f32 %v8979, %v8979
        %v8984 = vmul.f32 %v8980, %v8980
        %v8985 = vsel %vm1022, %v8981, 0.0
        %8986 = vadd.xlane.f32.xlu0 %v8985
        %v8987 = vpop.xlane.xlu0 %8986
        %v8988 = vsel %vm1022, %v8982, 0.0
        %8989 = vadd.xlane.f32.xlu0 %v8988
        %v8990 = vpop.xlane.xlu0 %8989
        %v8991 = vsel %vm1022, %v8983, 0.0
        %8992 = vadd.xlane.f32.xlu0 %v8991
        %v8993 = vpop.xlane.xlu0 %8992
        %v8994 = vsel %vm1022, %v8984, 0.0
        %8995 = vadd.xlane.f32.xlu0 %v8994
        %v8996 = vpop.xlane.xlu0 %8995
        %v8997 = vmul.f32 %v8987, %v8627
        %v8998 = vmul.f32 %v8990, %v8627
        %v8999 = vmul.f32 %v8993, %v8627
        %v9000 = vmul.f32 %v8996, %v8627
        %v9001 = vadd.f32 %v8997, 1e-05
        %v9002 = vadd.f32 %v8998, 1e-05
        %v9003 = vadd.f32 %v8999, 1e-05
        %v9004 = vadd.f32 %v9000, 1e-05
        %v9005 = vrsqrt.pop %v9001
        %v9006 = vrsqrt.pop %v9002
        %v9007 = vrsqrt.pop %v9003
        %v9008 = vrsqrt.pop %v9004
        %v9009 = vmul.f32 %v8977, %v9005
        %v9010 = vmul.f32 %v8978, %v9006
        %v9011 = vmul.f32 %v8979, %v9007
        %v9012 = vmul.f32 %v8980, %v9008
        %v9013 = vlaneseq
        %v9014 = vshrl.u32 %v9013, 7
        %v9015 = vsub.s32 0, %v9014
        %v9016 = vrot.slane %v8959, %v9015
        %v9017 = vmul.f32 %v9009, %v9016
        %v9018 = vmul.f32 %v9010, %v9016
        %v9019 = vmul.f32 %v9011, %v9016
        %v9020 = vmul.f32 %v9012, %v9016
        %v9021 = vlaneseq
        %v9022 = vshrl.u32 %v9021, 7
        %v9023 = vsub.s32 0, %v9022
        %v9024 = vrot.slane %v8960, %v9023
        %v9025 = vadd.f32 %v9017, %v9024
        %v9026 = vadd.f32 %v9018, %v9024
        %v9027 = vadd.f32 %v9019, %v9024
        %v9028 = vadd.f32 %v9020, %v9024
        %v9029 = vld [vmem:[%s13] sm:$0xff]
        %v9030 = vld [vmem:[%s13 + $0x8] sm:$0xff]
        %v9031 = vld [vmem:[%s13 + $0x10] sm:$0xff]
        %v9032 = vld [vmem:[%s13 + $0x18] sm:$0xff]
        %v9033 = vld [vmem:[%s13 + $0x20] sm:$0xff]
        %v9034 = vld [vmem:[%s13 + $0x28] sm:$0xff]
        %v9035 = vld [vmem:[%s13 + $0x30] sm:$0xff]
        %v9036 = vld [vmem:[%s13 + $0x38] sm:$0xff]
        %v9037 = vld [vmem:[%s13 + $0x40] sm:$0xff]
        %v9038 = vld [vmem:[%s13 + $0x48] sm:$0xff]
        %v9039 = vld [vmem:[%s13 + $0x50] sm:$0xff]
        %v9040 = vld [vmem:[%s13 + $0x58] sm:$0xff]
        %v9042 = vsel %vm1022, %v9025, 0
        %v9045 = vsel %vm1022, %v9026, 0
        %v9048 = vsel %vm1022, %v9027, 0
        %v9051 = vsel %vm1022, %v9028, 0
        %9053 = vmatprep.subr.mxu0 0.0
        %9054 = vmatpush1.msra.mxu0 0.0
        %9055 = vmatprep.subr.mxu0 0.0
        %9056 = vmatpush1.msra.mxu0 0.0
        %9057 = vmatprep.subr.mxu0 0.0
        %9058 = vmatpush1.msra.mxu0 0.0
        %9059 = vmatprep.subr.mxu0 0.0
        %9060 = vmatpush1.msra.mxu0 0.0
        %9061 = vmatprep.subr.mxu0 0.0
        %9062 = vmatpush1.msra.mxu0 %v9040
        %9063 = vmatprep.subr.mxu0 0.0
        %9064 = vmatpush1.msra.mxu0 %v9039
        %9065 = vmatprep.subr.mxu0 0.0
        %9066 = vmatpush1.msra.mxu0 %v9038
        %9067 = vmatprep.subr.mxu0 0.0
        %9068 = vmatpush1.msra.mxu0 %v9037
        %9069 = vmatprep.subr.mxu0 0.0
        %9070 = vmatpush1.msra.mxu0 %v9036
        %9071 = vmatprep.subr.mxu0 0.0
        %9072 = vmatpush1.msra.mxu0 %v9035
        %9073 = vmatprep.subr.mxu0 0.0
        %9074 = vmatpush1.msra.mxu0 %v9034
        %9075 = vmatprep.subr.mxu0 0.0
        %9076 = vmatpush1.msra.mxu0 %v9033
        %9077 = vmatprep.subr.mxu0 0.0
        %9078 = vmatpush1.msra.mxu0 %v9032
        %9079 = vmatprep.subr.mxu0 0.0
        %9080 = vmatpush1.msra.mxu0 %v9031
        %9081 = vmatprep.subr.mxu0 0.0
        %9082 = vmatpush1.msra.mxu0 %v9030
        %9083 = vmatprep.subr.mxu0 0.0
        %9084 = vmatpush1.msra.mxu0 %v9029
        %9085 = vmatprep.subr.mxu0 0.0
        %9086 = vmatpush2.msra.mxu0 0.0
        %9087 = vmatprep.subr.mxu0 0.0
        %9088 = vmatpush2.msra.mxu0 0.0
        %9089 = vmatprep.subr.mxu0 0.0
        %9090 = vmatpush2.msra.mxu0 0.0
        %9091 = vmatprep.subr.mxu0 0.0
        %9092 = vmatpush2.msra.mxu0 0.0
        %9093 = vmatprep.subr.mxu0 0.0
        %9094 = vmatpush2.msra.mxu0 0.0
        %9095 = vmatprep.subr.mxu0 0.0
        %9096 = vmatpush2.msra.mxu0 0.0
        %9097 = vmatprep.subr.mxu0 0.0
        %9098 = vmatpush2.msra.mxu0 0.0
        %9099 = vmatprep.subr.mxu0 0.0
        %9100 = vmatpush2.msra.mxu0 0.0
        %9101 = vmatprep.subr.mxu0 0.0
        %9102 = vmatpush2.msra.mxu0 0.0
        %9103 = vmatprep.subr.mxu0 0.0
        %9104 = vmatpush2.msra.mxu0 0.0
        %9105 = vmatprep.subr.mxu0 0.0
        %9106 = vmatpush2.msra.mxu0 0.0
        %9107 = vmatprep.subr.mxu0 0.0
        %9108 = vmatpush2.msra.mxu0 0.0
        %9109 = vmatprep.subr.mxu0 0.0
        %9110 = vmatpush2.msra.mxu0 0.0
        %9111 = vmatprep.subr.mxu0 0.0
        %9112 = vmatpush2.msra.mxu0 0.0
        %9113 = vmatprep.subr.mxu0 0.0
        %9114 = vmatpush2.msra.mxu0 0.0
        %9115 = vmatprep.subr.mxu0 0.0
        %9116 = vmatpush2.msra.mxu0 0.0
        %9117 = vmatprep.mubr.f32.mxu0 0.0
        %9118 = vmatmul.mubr.f32.gmra.mxu0 %v9042
        %v9119 = vpop.f32.mrf.mxu0
        %v9120 = vadd.f32 0.0, %v9119
        %v9121 = vpop.f32.mrf.mxu0
        %9122 = vmatprep.mubr.f32.mxu0 0.0
        %9123 = vmatmul.mubr.f32.gmra.mxu0 %v9045
        %v9124 = vpop.f32.mrf.mxu0
        %v9125 = vadd.f32 0.0, %v9124
        %v9126 = vpop.f32.mrf.mxu0
        %9127 = vmatprep.mubr.f32.mxu0 0.0
        %9128 = vmatmul.mubr.f32.gmra.mxu0 %v9048
        %v9129 = vpop.f32.mrf.mxu0
        %v9130 = vadd.f32 0.0, %v9129
        %v9131 = vpop.f32.mrf.mxu0
        %9132 = vmatprep.mubr.f32.mxu0 0.0
        %9133 = vmatmul.mubr.f32.gmra.mxu0 %v9051
        %v9134 = vpop.f32.mrf.mxu0
        %v9135 = vadd.f32 0.0, %v9134
        %v9136 = vpop.f32.mrf.mxu0
        %9137 = vdwg.mxu0
        %v9138 = vtanh.pop %v9120
        %v9139 = vtanh.pop %v9125
        %v9140 = vtanh.pop %v9130
        %v9141 = vtanh.pop %v9135
        %9142 = vst [vmem:[%s477] sm:$0xff] %v9138
        %9143 = vst [vmem:[%s477 + $0x8] sm:$0xff] %v9139
        %9144 = vst [vmem:[%s477 + $0x10] sm:$0xff] %v9140
        %9145 = vst [vmem:[%s477 + $0x18] sm:$0xff] %v9141
        %s9146 = sand.u32 %s340, 1
        %s9147 = scalar_lea.sflag [#allocation3], %s9146
        %s9148 = sand.u32 %s340, 1
        %s9149 = smul.addr %s9148, 32
        %s9150 = scalar_lea.vmem [#allocation2], %s9149
        // Predicated region
        $region77: #{tpu_custom_call.1} parent=75 // pred_check
          %p9151 = pneg %p350
        $region78: #{tpu_custom_call.1} parent=75 // pred_check_branch
          %9153 = sbr.rel (%p9151) target = $region80
        $region79: #{tpu_custom_call.1} parent=75 // pred_region
          %s9154 = smul.u32 4, %s28
          %s9156 = ssub.s32 512, 512
          %9157 = vsyncadd %s9147, %s9156
          %s9158 = smul.addr %s9154, 128
          %s9159 = scalar_lea.hbm %s14, %s9158
          %s9160 = sshll.u32 %s9150, 4
          %s9161 = int_to_ptr.vmem [resolvable:$true] %s9160
          %9166 = dma.vmem_to_hbm [thread:$0]  %s9161, 512, %s9159, %s9147, 128, 128, 8
        $region80: #{tpu_custom_call.1} parent=75 // pred_fallthru
          _
      $region76: #{tpu_custom_call.1} parent=5 // pred_fallthru
        _
      %p9167 = scmp.le.s32.totalorder 2, %s23
      // Predicated region
      $region81: #{tpu_custom_call.1} parent=5 // pred_check
        %p9168 = pneg %p9167
      $region82: #{tpu_custom_call.1} parent=5 // pred_check_branch
        %9170 = sbr.rel (%p9168) target = $region84
      $region83: #{tpu_custom_call.1} parent=5 // pred_region
        %s9171 = ssub.s32 %s23, 2
        // Predicated region
        $region85: #{tpu_custom_call.1} parent=83 // pred_check
          %p9172 = pneg %p356
        $region86: #{tpu_custom_call.1} parent=83 // pred_check_branch
          %9174 = sbr.rel (%p9172) target = $region88
        $region87: #{tpu_custom_call.1} parent=83 // pred_region
          %s9175 = sand.u32 %s341, 1
          %s9176 = scalar_lea.sflag [#allocation3], %s9175
          %s9177 = sand.u32 %s341, 1
          %s9178 = smul.addr %s9177, 32
          %s9179 = scalar_lea.vmem [#allocation2], %s9178
          %9180 = dma.done %s9176, 512
        $region88: #{tpu_custom_call.1} parent=83 // pred_fallthru
          _
      $region84: #{tpu_custom_call.1} parent=5 // pred_fallthru
        _
    $region6: #{tpu_custom_call.1} parent=1 // loop_footer
      %s27 = sadd.s32 1, %s23
    $region7: #{tpu_custom_call.1} parent=1 // loop_footer_branch
      %22 = sbr.rel target = $region3
    $region8: #{tpu_custom_call.1} parent=1 // loop_exit
      _
    %9181 = vsyncpa [#allocation3], 1
    %s9182 = scalar_lea.sflag [#allocation3], 1
    %9183 = vsyncpa %s9182, 1

</llo_original>
